<compile_context>
chip_gen: v7x
topology: tpu7x:2x2x1
jax: 0.10.0
libtpu: 0.0.40
codegen_flags: <defaults>
</compile_context>

<pallas_src>
import functools
import math

import jax
import jax.numpy as jnp
from jax import lax
from jax.experimental import pallas as pl
from jax.experimental.pallas import tpu as pltpu


def _madry_kernel(x_nat_ref, noise_ref, w_ref, wt_ref, b_ref, y_ref, loss_ref,
                  *, step_size, epsilon, perturb_steps):
    x_nat = x_nat_ref[...]                      # (TB, D) f32
    w     = w_ref[...]                          # (D, K)  f32
    wt    = wt_ref[...]                         # (K, D)  f32
    y     = y_ref[...]                          # (TB, 1) i32
    TB, _ = x_nat.shape
    K = w.shape[1]

    # ---- loop-invariant values, hoisted out of the PGD loop ----------------
    onehot = (lax.broadcasted_iota(jnp.int32, (TB, K), 1) == y).astype(jnp.float32)
    b_row  = jnp.broadcast_to(b_ref[...], (TB, K))        # bias broadcast, once
    lo = jnp.maximum(x_nat - epsilon, 0.0)                 # l_inf ball ∩ [0,1]
    hi = jnp.minimum(x_nat + epsilon, 1.0)

    # x_adv init: x_natural + step_size * randn (noise supplied by the caller)
    x_adv0 = x_nat + step_size * noise_ref[...]

    # ---- PGD: grad-only softmax path (no log / loss reduce inside the loop) -
    def pgd_step(_, x_adv):
        logits = jnp.dot(x_adv, w, preferred_element_type=jnp.float32) + b_row
        e = jnp.exp(logits - jnp.max(logits, axis=-1, keepdims=True))
        p = e / jnp.sum(e, axis=-1, keepdims=True)          # softmax
        # d(mean CE)/d logits ∝ (p - onehot); positive scaling is irrelevant
        # because only sign(grad_x) is used below.
        grad_x = jnp.dot(p - onehot, wt, preferred_element_type=jnp.float32)
        x_adv = x_adv + jnp.where(grad_x >= 0.0, step_size, -step_size)
        return jnp.minimum(jnp.maximum(x_adv, lo), hi)      # hoisted bounds

    x_adv = lax.fori_loop(0, perturb_steps, pgd_step, x_adv0, unroll=True)

    # ---- final cross-entropy on the adversarial example --------------------
    logits  = jnp.dot(x_adv, w, preferred_element_type=jnp.float32) + b_row
    shifted = logits - jnp.max(logits, axis=-1, keepdims=True)
    lse     = jnp.log(jnp.sum(jnp.exp(shifted), axis=-1, keepdims=True))
    row_ce  = -jnp.sum(onehot * (shifted - lse), axis=-1, keepdims=True)  # (TB,1)
    loss_ref[...] = jnp.broadcast_to(row_ce, loss_ref.shape)  # lane-dense write


def madrys_loss(x_natural, labels, w, b, noise,
                step_size=0.007, epsilon=0.031, perturb_steps=10, tile_b=128):
    """Pallas implementation of MadrysLoss.forward with a linear surrogate model.

    x_natural: [B, C, H, W] f32 in [0, 1]; labels: [B] int; w: [D, K]; b: [K];
    noise: [B, C, H, W] f32 (plays the role of torch.randn for the PGD init).
    Returns a scalar f32 loss (mean CE over the true batch).
    """
    B = x_natural.shape[0]
    D = math.prod(x_natural.shape[1:])
    K = w.shape[-1]

    x_nat = x_natural.reshape(B, D).astype(jnp.float32)
    nz    = noise.reshape(B, D).astype(jnp.float32)
    w32   = w.astype(jnp.float32)
    wt32  = jnp.transpose(w32)                  # host-side transpose; tiny (K, D)
    b2    = b.reshape(1, K).astype(jnp.float32)
    y2    = labels.reshape(B, 1).astype(jnp.int32)

    # Batch tiling (tile_b should be a multiple of 8; 128/256 for real batches).
    tile = B if B <= tile_b else tile_b
    n_tiles = pl.cdiv(B, tile)
    b_pad = n_tiles * tile
    if b_pad != B:                              # remainder tile: zero-pad rows
        pad = b_pad - B
        x_nat = jnp.pad(x_nat, ((0, pad), (0, 0)))
        nz    = jnp.pad(nz,    ((0, pad), (0, 0)))
        y2    = jnp.pad(y2,    ((0, pad), (0, 0)))

    kernel = functools.partial(_madry_kernel, step_size=float(step_size),
                               epsilon=float(epsilon),
                               perturb_steps=int(perturb_steps))

    x_spec  = pl.BlockSpec((tile, D), lambda i: (i, 0))
    y_spec  = pl.BlockSpec((tile, 1), lambda i: (i, 0))
    w_spec  = pl.BlockSpec((D, K),    lambda i: (0, 0))    # resident across tiles
    wt_spec = pl.BlockSpec((K, D),    lambda i: (0, 0))
    b_spec  = pl.BlockSpec((1, K),    lambda i: (0, 0))
    o_spec  = pl.BlockSpec((tile, 128), lambda i: (i, 0))

    # Explicit VMEM budget (sized for v7x's 64 MiB physical / 32 MiB scoped).
    tile_bytes = tile * D * 4
    vmem_limit = int(min(40 * 1024 * 1024, max(16 * 1024 * 1024, 24 * tile_bytes)))

    per_row = pl.pallas_call(
        kernel,
        out_shape=jax.ShapeDtypeStruct((b_pad, 128), jnp.float32),
        grid_spec=pltpu.PrefetchScalarGridSpec(
            num_scalar_prefetch=0,
            grid=(n_tiles,),
            in_specs=[x_spec, x_spec, w_spec, wt_spec, b_spec, y_spec],
            out_specs=o_spec),
        compiler_params=pltpu.CompilerParams(
            dimension_semantics=("parallel",),
            vmem_limit_bytes=vmem_limit),
    )(x_nat, nz, w32, wt32, b2, y2)

    # Mean over the true batch (padded rows excluded, 1/global_B normalization).
    return jnp.sum(per_row[:B, 0]) / B


def _reference_loss(x_natural, labels, w, b, noise,
                    step_size=0.007, epsilon=0.031, perturb_steps=10):
    """Pure-JAX reference (autodiff) mirroring the PyTorch semantics."""
    B = x_natural.shape[0]
    D = math.prod(x_natural.shape[1:])
    x_nat = x_natural.reshape(B, D).astype(jnp.float32)

    def ce(x):
        logits = x @ w + b[None, :]
        logp = jax.nn.log_softmax(logits, axis=-1)
        return -jnp.mean(logp[jnp.arange(B), labels])

    x_adv = x_nat + step_size * noise.reshape(B, D).astype(jnp.float32)
    for _ in range(perturb_steps):
        g = jax.grad(ce)(x_adv)
        x_adv = x_adv + step_size * jnp.sign(g)
        x_adv = jnp.clip(x_adv, x_nat - epsilon, x_nat + epsilon)
        x_adv = jnp.clip(x_adv, 0.0, 1.0)
    return ce(x_adv)


if __name__ == "__main__":
    # TODO(synk): cutout / cutmix branches (default False in the module) are not
    # implemented in the kernel; only the default l_inf PGD path is covered.
    B, C, H, W = 2, 4, 16, 16
    K = 10
    D = C * H * W

    key = jax.random.PRNGKey(0)
    kx, ky, kw, kn = jax.random.split(key, 4)
    x_natural = jax.random.uniform(kx, (B, C, H, W), jnp.float32)          # images in [0,1]
    labels = jax.random.randint(ky, (B,), 0, K, dtype=jnp.int32)
    w_param = jax.random.normal(kw, (D, K), jnp.float32) * 0.05            # deterministic "model"
    b_param = jnp.zeros((K,), jnp.float32)
    noise = jax.random.normal(kn, (B, C, H, W), jnp.float32)               # the torch.randn init

    loss = madrys_loss(x_natural, labels, w_param, b_param, noise)
    loss = jax.block_until_ready(loss)

    ref = _reference_loss(x_natural, labels, w_param, b_param, noise)
    assert jnp.allclose(loss, ref, rtol=1e-4, atol=1e-5), (loss, ref)

    print("KERNEL_OK")
</pallas_src>

<mosaic_0001>
module attributes {stable_mosaic.version = 11 : i64} {
  func.func @_madry_kernel(%arg0: i32, %arg1: memref<2x1024xf32, #tpu.memory_space<vmem>>, %arg2: memref<2x1024xf32, #tpu.memory_space<vmem>>, %arg3: memref<1024x10xf32, #tpu.memory_space<vmem>>, %arg4: memref<10x1024xf32, #tpu.memory_space<vmem>>, %arg5: memref<1x10xf32, #tpu.memory_space<vmem>>, %arg6: memref<2x1xi32, #tpu.memory_space<vmem>>, %arg7: memref<2x128xf32, #tpu.memory_space<vmem>>) attributes {dimension_semantics = [#tpu.dimension_semantics<parallel>], iteration_bounds = array<i64: 1>, scalar_prefetch = 0 : i64, scratch_operands = 0 : i64, tpu.core_type = #tpu.core_type<tc>, window_params = [{transform_indices = @transform_0, window_bounds = array<i64: 2, 1024>}, {transform_indices = @transform_1, window_bounds = array<i64: 2, 1024>}, {pipeline_mode = #tpu.pipeline_mode<synchronous>, transform_indices = @transform_2, window_bounds = array<i64: 1024, 10>}, {pipeline_mode = #tpu.pipeline_mode<synchronous>, transform_indices = @transform_3, window_bounds = array<i64: 10, 1024>}, {pipeline_mode = #tpu.pipeline_mode<synchronous>, transform_indices = @transform_4, window_bounds = array<i64: 1, 10>}, {transform_indices = @transform_5, window_bounds = array<i64: 2, 1>}, {transform_indices = @transform_6, window_bounds = array<i64: 2, 128>}]} {
    %c0 = arith.constant 0 : index
    %c0_0 = arith.constant 0 : index
    %0 = vector.load %arg1[%c0, %c0_0] : memref<2x1024xf32, #tpu.memory_space<vmem>>, vector<2x1024xf32>
    %c0_1 = arith.constant 0 : index
    %c0_2 = arith.constant 0 : index
    %1 = vector.load %arg3[%c0_1, %c0_2] : memref<1024x10xf32, #tpu.memory_space<vmem>>, vector<1024x10xf32>
    %c0_3 = arith.constant 0 : index
    %c0_4 = arith.constant 0 : index
    %2 = vector.load %arg4[%c0_3, %c0_4] : memref<10x1024xf32, #tpu.memory_space<vmem>>, vector<10x1024xf32>
    %c0_5 = arith.constant 0 : index
    %c0_6 = arith.constant 0 : index
    %3 = vector.load %arg6[%c0_5, %c0_6] : memref<2x1xi32, #tpu.memory_space<vmem>>, vector<2x1xi32>
    %4 = tpu.iota {dimensions = array<i32: 1>} : vector<2x10xi32>
    %5 = vector.broadcast %3 : vector<2x1xi32> to vector<2x10xi32>
    %6 = arith.cmpi eq, %4, %5 : vector<2x10xi32>
    %7 = arith.extui %6 : vector<2x10xi1> to vector<2x10xi32>
    %8 = arith.sitofp %7 : vector<2x10xi32> to vector<2x10xf32>
    %c0_7 = arith.constant 0 : index
    %c0_8 = arith.constant 0 : index
    %9 = vector.load %arg5[%c0_7, %c0_8] : memref<1x10xf32, #tpu.memory_space<vmem>>, vector<1x10xf32>
    %10 = vector.shape_cast %9 : vector<1x10xf32> to vector<1x10xf32>
    %11 = vector.broadcast %10 : vector<1x10xf32> to vector<2x10xf32>
    %cst = arith.constant 3.100000e-02 : f32
    %12 = vector.broadcast %cst : f32 to vector<2x1024xf32>
    %13 = arith.subf %0, %12 : vector<2x1024xf32>
    %cst_9 = arith.constant 0.000000e+00 : f32
    %14 = vector.broadcast %cst_9 : f32 to vector<2x1024xf32>
    %15 = arith.maximumf %13, %14 : vector<2x1024xf32>
    %cst_10 = arith.constant 3.100000e-02 : f32
    %16 = vector.broadcast %cst_10 : f32 to vector<2x1024xf32>
    %17 = arith.addf %0, %16 : vector<2x1024xf32>
    %cst_11 = arith.constant 1.000000e+00 : f32
    %18 = vector.broadcast %cst_11 : f32 to vector<2x1024xf32>
    %19 = arith.minimumf %17, %18 : vector<2x1024xf32>
    %c0_12 = arith.constant 0 : index
    %c0_13 = arith.constant 0 : index
    %20 = vector.load %arg2[%c0_12, %c0_13] : memref<2x1024xf32, #tpu.memory_space<vmem>>, vector<2x1024xf32>
    %cst_14 = arith.constant 7.000000e-03 : f32
    %21 = vector.broadcast %cst_14 : f32 to vector<2x1024xf32>
    %22 = arith.mulf %21, %20 : vector<2x1024xf32>
    %23 = arith.addf %0, %22 : vector<2x1024xf32>
    %c0_i32 = arith.constant 0 : i32
    %cst_15 = arith.constant dense<0.000000e+00> : vector<2x10xf32>
    %24 = tpu.matmul %23, %1, %cst_15 {dimension_numbers = #tpu.dot_dimension_numbers<[1], [0], [0], [1], [0, 0, 1, 1], [], []>} : vector<2x1024xf32>, vector<1024x10xf32>, vector<2x10xf32> -> vector<2x10xf32>
    %25 = arith.addf %24, %11 : vector<2x10xf32>
    %cst_16 = arith.constant dense<0xFF800000> : vector<2xf32>
    %26 = vector.multi_reduction <maximumf>, %25, %cst_16 [1] : vector<2x10xf32> to vector<2xf32>
    %27 = vector.shape_cast %26 : vector<2xf32> to vector<2x1xf32>
    %28 = vector.broadcast %27 : vector<2x1xf32> to vector<2x10xf32>
    %29 = arith.subf %25, %28 : vector<2x10xf32>
    %30 = math.exp %29 : vector<2x10xf32>
    %cst_17 = arith.constant dense<0.000000e+00> : vector<2xf32>
    %31 = vector.multi_reduction <add>, %30, %cst_17 [1] : vector<2x10xf32> to vector<2xf32>
    %32 = vector.shape_cast %31 : vector<2xf32> to vector<2x1xf32>
    %33 = vector.broadcast %32 : vector<2x1xf32> to vector<2x10xf32>
    %34 = arith.divf %30, %33 : vector<2x10xf32>
    %35 = arith.subf %34, %8 : vector<2x10xf32>
    %cst_18 = arith.constant dense<0.000000e+00> : vector<2x1024xf32>
    %36 = tpu.matmul %35, %2, %cst_18 {dimension_numbers = #tpu.dot_dimension_numbers<[1], [0], [0], [1], [0, 0, 1, 1], [], []>} : vector<2x10xf32>, vector<10x1024xf32>, vector<2x1024xf32> -> vector<2x1024xf32>
    %cst_19 = arith.constant 0.000000e+00 : f32
    %37 = vector.broadcast %cst_19 : f32 to vector<2x1024xf32>
    %38 = arith.cmpf oge, %36, %37 : vector<2x1024xf32>
    %cst_20 = arith.constant 7.000000e-03 : f32
    %cst_21 = arith.constant -7.000000e-03 : f32
    %39 = vector.broadcast %cst_20 : f32 to vector<2x1024xf32>
    %40 = vector.broadcast %cst_21 : f32 to vector<2x1024xf32>
    %41 = arith.select %38, %39, %40 : vector<2x1024xi1>, vector<2x1024xf32>
    %42 = arith.addf %23, %41 : vector<2x1024xf32>
    %43 = arith.maximumf %42, %15 : vector<2x1024xf32>
    %44 = arith.minimumf %43, %19 : vector<2x1024xf32>
    %c1_i32 = arith.constant 1 : i32
    %cst_22 = arith.constant dense<0.000000e+00> : vector<2x10xf32>
    %45 = tpu.matmul %44, %1, %cst_22 {dimension_numbers = #tpu.dot_dimension_numbers<[1], [0], [0], [1], [0, 0, 1, 1], [], []>} : vector<2x1024xf32>, vector<1024x10xf32>, vector<2x10xf32> -> vector<2x10xf32>
    %46 = arith.addf %45, %11 : vector<2x10xf32>
    %cst_23 = arith.constant dense<0xFF800000> : vector<2xf32>
    %47 = vector.multi_reduction <maximumf>, %46, %cst_23 [1] : vector<2x10xf32> to vector<2xf32>
    %48 = vector.shape_cast %47 : vector<2xf32> to vector<2x1xf32>
    %49 = vector.broadcast %48 : vector<2x1xf32> to vector<2x10xf32>
    %50 = arith.subf %46, %49 : vector<2x10xf32>
    %51 = math.exp %50 : vector<2x10xf32>
    %cst_24 = arith.constant dense<0.000000e+00> : vector<2xf32>
    %52 = vector.multi_reduction <add>, %51, %cst_24 [1] : vector<2x10xf32> to vector<2xf32>
    %53 = vector.shape_cast %52 : vector<2xf32> to vector<2x1xf32>
    %54 = vector.broadcast %53 : vector<2x1xf32> to vector<2x10xf32>
    %55 = arith.divf %51, %54 : vector<2x10xf32>
    %56 = arith.subf %55, %8 : vector<2x10xf32>
    %cst_25 = arith.constant dense<0.000000e+00> : vector<2x1024xf32>
    %57 = tpu.matmul %56, %2, %cst_25 {dimension_numbers = #tpu.dot_dimension_numbers<[1], [0], [0], [1], [0, 0, 1, 1], [], []>} : vector<2x10xf32>, vector<10x1024xf32>, vector<2x1024xf32> -> vector<2x1024xf32>
    %cst_26 = arith.constant 0.000000e+00 : f32
    %58 = vector.broadcast %cst_26 : f32 to vector<2x1024xf32>
    %59 = arith.cmpf oge, %57, %58 : vector<2x1024xf32>
    %cst_27 = arith.constant 7.000000e-03 : f32
    %cst_28 = arith.constant -7.000000e-03 : f32
    %60 = vector.broadcast %cst_27 : f32 to vector<2x1024xf32>
    %61 = vector.broadcast %cst_28 : f32 to vector<2x1024xf32>
    %62 = arith.select %59, %60, %61 : vector<2x1024xi1>, vector<2x1024xf32>
    %63 = arith.addf %44, %62 : vector<2x1024xf32>
    %64 = arith.maximumf %63, %15 : vector<2x1024xf32>
    %65 = arith.minimumf %64, %19 : vector<2x1024xf32>
    %c2_i32 = arith.constant 2 : i32
    %cst_29 = arith.constant dense<0.000000e+00> : vector<2x10xf32>
    %66 = tpu.matmul %65, %1, %cst_29 {dimension_numbers = #tpu.dot_dimension_numbers<[1], [0], [0], [1], [0, 0, 1, 1], [], []>} : vector<2x1024xf32>, vector<1024x10xf32>, vector<2x10xf32> -> vector<2x10xf32>
    %67 = arith.addf %66, %11 : vector<2x10xf32>
    %cst_30 = arith.constant dense<0xFF800000> : vector<2xf32>
    %68 = vector.multi_reduction <maximumf>, %67, %cst_30 [1] : vector<2x10xf32> to vector<2xf32>
    %69 = vector.shape_cast %68 : vector<2xf32> to vector<2x1xf32>
    %70 = vector.broadcast %69 : vector<2x1xf32> to vector<2x10xf32>
    %71 = arith.subf %67, %70 : vector<2x10xf32>
    %72 = math.exp %71 : vector<2x10xf32>
    %cst_31 = arith.constant dense<0.000000e+00> : vector<2xf32>
    %73 = vector.multi_reduction <add>, %72, %cst_31 [1] : vector<2x10xf32> to vector<2xf32>
    %74 = vector.shape_cast %73 : vector<2xf32> to vector<2x1xf32>
    %75 = vector.broadcast %74 : vector<2x1xf32> to vector<2x10xf32>
    %76 = arith.divf %72, %75 : vector<2x10xf32>
    %77 = arith.subf %76, %8 : vector<2x10xf32>
    %cst_32 = arith.constant dense<0.000000e+00> : vector<2x1024xf32>
    %78 = tpu.matmul %77, %2, %cst_32 {dimension_numbers = #tpu.dot_dimension_numbers<[1], [0], [0], [1], [0, 0, 1, 1], [], []>} : vector<2x10xf32>, vector<10x1024xf32>, vector<2x1024xf32> -> vector<2x1024xf32>
    %cst_33 = arith.constant 0.000000e+00 : f32
    %79 = vector.broadcast %cst_33 : f32 to vector<2x1024xf32>
    %80 = arith.cmpf oge, %78, %79 : vector<2x1024xf32>
    %cst_34 = arith.constant 7.000000e-03 : f32
    %cst_35 = arith.constant -7.000000e-03 : f32
    %81 = vector.broadcast %cst_34 : f32 to vector<2x1024xf32>
    %82 = vector.broadcast %cst_35 : f32 to vector<2x1024xf32>
    %83 = arith.select %80, %81, %82 : vector<2x1024xi1>, vector<2x1024xf32>
    %84 = arith.addf %65, %83 : vector<2x1024xf32>
    %85 = arith.maximumf %84, %15 : vector<2x1024xf32>
    %86 = arith.minimumf %85, %19 : vector<2x1024xf32>
    %c3_i32 = arith.constant 3 : i32
    %cst_36 = arith.constant dense<0.000000e+00> : vector<2x10xf32>
    %87 = tpu.matmul %86, %1, %cst_36 {dimension_numbers = #tpu.dot_dimension_numbers<[1], [0], [0], [1], [0, 0, 1, 1], [], []>} : vector<2x1024xf32>, vector<1024x10xf32>, vector<2x10xf32> -> vector<2x10xf32>
    %88 = arith.addf %87, %11 : vector<2x10xf32>
    %cst_37 = arith.constant dense<0xFF800000> : vector<2xf32>
    %89 = vector.multi_reduction <maximumf>, %88, %cst_37 [1] : vector<2x10xf32> to vector<2xf32>
    %90 = vector.shape_cast %89 : vector<2xf32> to vector<2x1xf32>
    %91 = vector.broadcast %90 : vector<2x1xf32> to vector<2x10xf32>
    %92 = arith.subf %88, %91 : vector<2x10xf32>
    %93 = math.exp %92 : vector<2x10xf32>
    %cst_38 = arith.constant dense<0.000000e+00> : vector<2xf32>
    %94 = vector.multi_reduction <add>, %93, %cst_38 [1] : vector<2x10xf32> to vector<2xf32>
    %95 = vector.shape_cast %94 : vector<2xf32> to vector<2x1xf32>
    %96 = vector.broadcast %95 : vector<2x1xf32> to vector<2x10xf32>
    %97 = arith.divf %93, %96 : vector<2x10xf32>
    %98 = arith.subf %97, %8 : vector<2x10xf32>
    %cst_39 = arith.constant dense<0.000000e+00> : vector<2x1024xf32>
    %99 = tpu.matmul %98, %2, %cst_39 {dimension_numbers = #tpu.dot_dimension_numbers<[1], [0], [0], [1], [0, 0, 1, 1], [], []>} : vector<2x10xf32>, vector<10x1024xf32>, vector<2x1024xf32> -> vector<2x1024xf32>
    %cst_40 = arith.constant 0.000000e+00 : f32
    %100 = vector.broadcast %cst_40 : f32 to vector<2x1024xf32>
    %101 = arith.cmpf oge, %99, %100 : vector<2x1024xf32>
    %cst_41 = arith.constant 7.000000e-03 : f32
    %cst_42 = arith.constant -7.000000e-03 : f32
    %102 = vector.broadcast %cst_41 : f32 to vector<2x1024xf32>
    %103 = vector.broadcast %cst_42 : f32 to vector<2x1024xf32>
    %104 = arith.select %101, %102, %103 : vector<2x1024xi1>, vector<2x1024xf32>
    %105 = arith.addf %86, %104 : vector<2x1024xf32>
    %106 = arith.maximumf %105, %15 : vector<2x1024xf32>
    %107 = arith.minimumf %106, %19 : vector<2x1024xf32>
    %c4_i32 = arith.constant 4 : i32
    %cst_43 = arith.constant dense<0.000000e+00> : vector<2x10xf32>
    %108 = tpu.matmul %107, %1, %cst_43 {dimension_numbers = #tpu.dot_dimension_numbers<[1], [0], [0], [1], [0, 0, 1, 1], [], []>} : vector<2x1024xf32>, vector<1024x10xf32>, vector<2x10xf32> -> vector<2x10xf32>
    %109 = arith.addf %108, %11 : vector<2x10xf32>
    %cst_44 = arith.constant dense<0xFF800000> : vector<2xf32>
    %110 = vector.multi_reduction <maximumf>, %109, %cst_44 [1] : vector<2x10xf32> to vector<2xf32>
    %111 = vector.shape_cast %110 : vector<2xf32> to vector<2x1xf32>
    %112 = vector.broadcast %111 : vector<2x1xf32> to vector<2x10xf32>
    %113 = arith.subf %109, %112 : vector<2x10xf32>
    %114 = math.exp %113 : vector<2x10xf32>
    %cst_45 = arith.constant dense<0.000000e+00> : vector<2xf32>
    %115 = vector.multi_reduction <add>, %114, %cst_45 [1] : vector<2x10xf32> to vector<2xf32>
    %116 = vector.shape_cast %115 : vector<2xf32> to vector<2x1xf32>
    %117 = vector.broadcast %116 : vector<2x1xf32> to vector<2x10xf32>
    %118 = arith.divf %114, %117 : vector<2x10xf32>
    %119 = arith.subf %118, %8 : vector<2x10xf32>
    %cst_46 = arith.constant dense<0.000000e+00> : vector<2x1024xf32>
    %120 = tpu.matmul %119, %2, %cst_46 {dimension_numbers = #tpu.dot_dimension_numbers<[1], [0], [0], [1], [0, 0, 1, 1], [], []>} : vector<2x10xf32>, vector<10x1024xf32>, vector<2x1024xf32> -> vector<2x1024xf32>
    %cst_47 = arith.constant 0.000000e+00 : f32
    %121 = vector.broadcast %cst_47 : f32 to vector<2x1024xf32>
    %122 = arith.cmpf oge, %120, %121 : vector<2x1024xf32>
    %cst_48 = arith.constant 7.000000e-03 : f32
    %cst_49 = arith.constant -7.000000e-03 : f32
    %123 = vector.broadcast %cst_48 : f32 to vector<2x1024xf32>
    %124 = vector.broadcast %cst_49 : f32 to vector<2x1024xf32>
    %125 = arith.select %122, %123, %124 : vector<2x1024xi1>, vector<2x1024xf32>
    %126 = arith.addf %107, %125 : vector<2x1024xf32>
    %127 = arith.maximumf %126, %15 : vector<2x1024xf32>
    %128 = arith.minimumf %127, %19 : vector<2x1024xf32>
    %c5_i32 = arith.constant 5 : i32
    %cst_50 = arith.constant dense<0.000000e+00> : vector<2x10xf32>
    %129 = tpu.matmul %128, %1, %cst_50 {dimension_numbers = #tpu.dot_dimension_numbers<[1], [0], [0], [1], [0, 0, 1, 1], [], []>} : vector<2x1024xf32>, vector<1024x10xf32>, vector<2x10xf32> -> vector<2x10xf32>
    %130 = arith.addf %129, %11 : vector<2x10xf32>
    %cst_51 = arith.constant dense<0xFF800000> : vector<2xf32>
    %131 = vector.multi_reduction <maximumf>, %130, %cst_51 [1] : vector<2x10xf32> to vector<2xf32>
    %132 = vector.shape_cast %131 : vector<2xf32> to vector<2x1xf32>
    %133 = vector.broadcast %132 : vector<2x1xf32> to vector<2x10xf32>
    %134 = arith.subf %130, %133 : vector<2x10xf32>
    %135 = math.exp %134 : vector<2x10xf32>
    %cst_52 = arith.constant dense<0.000000e+00> : vector<2xf32>
    %136 = vector.multi_reduction <add>, %135, %cst_52 [1] : vector<2x10xf32> to vector<2xf32>
    %137 = vector.shape_cast %136 : vector<2xf32> to vector<2x1xf32>
    %138 = vector.broadcast %137 : vector<2x1xf32> to vector<2x10xf32>
    %139 = arith.divf %135, %138 : vector<2x10xf32>
    %140 = arith.subf %139, %8 : vector<2x10xf32>
    %cst_53 = arith.constant dense<0.000000e+00> : vector<2x1024xf32>
    %141 = tpu.matmul %140, %2, %cst_53 {dimension_numbers = #tpu.dot_dimension_numbers<[1], [0], [0], [1], [0, 0, 1, 1], [], []>} : vector<2x10xf32>, vector<10x1024xf32>, vector<2x1024xf32> -> vector<2x1024xf32>
    %cst_54 = arith.constant 0.000000e+00 : f32
    %142 = vector.broadcast %cst_54 : f32 to vector<2x1024xf32>
    %143 = arith.cmpf oge, %141, %142 : vector<2x1024xf32>
    %cst_55 = arith.constant 7.000000e-03 : f32
    %cst_56 = arith.constant -7.000000e-03 : f32
    %144 = vector.broadcast %cst_55 : f32 to vector<2x1024xf32>
    %145 = vector.broadcast %cst_56 : f32 to vector<2x1024xf32>
    %146 = arith.select %143, %144, %145 : vector<2x1024xi1>, vector<2x1024xf32>
    %147 = arith.addf %128, %146 : vector<2x1024xf32>
    %148 = arith.maximumf %147, %15 : vector<2x1024xf32>
    %149 = arith.minimumf %148, %19 : vector<2x1024xf32>
    %c6_i32 = arith.constant 6 : i32
    %cst_57 = arith.constant dense<0.000000e+00> : vector<2x10xf32>
    %150 = tpu.matmul %149, %1, %cst_57 {dimension_numbers = #tpu.dot_dimension_numbers<[1], [0], [0], [1], [0, 0, 1, 1], [], []>} : vector<2x1024xf32>, vector<1024x10xf32>, vector<2x10xf32> -> vector<2x10xf32>
    %151 = arith.addf %150, %11 : vector<2x10xf32>
    %cst_58 = arith.constant dense<0xFF800000> : vector<2xf32>
    %152 = vector.multi_reduction <maximumf>, %151, %cst_58 [1] : vector<2x10xf32> to vector<2xf32>
    %153 = vector.shape_cast %152 : vector<2xf32> to vector<2x1xf32>
    %154 = vector.broadcast %153 : vector<2x1xf32> to vector<2x10xf32>
    %155 = arith.subf %151, %154 : vector<2x10xf32>
    %156 = math.exp %155 : vector<2x10xf32>
    %cst_59 = arith.constant dense<0.000000e+00> : vector<2xf32>
    %157 = vector.multi_reduction <add>, %156, %cst_59 [1] : vector<2x10xf32> to vector<2xf32>
    %158 = vector.shape_cast %157 : vector<2xf32> to vector<2x1xf32>
    %159 = vector.broadcast %158 : vector<2x1xf32> to vector<2x10xf32>
    %160 = arith.divf %156, %159 : vector<2x10xf32>
    %161 = arith.subf %160, %8 : vector<2x10xf32>
    %cst_60 = arith.constant dense<0.000000e+00> : vector<2x1024xf32>
    %162 = tpu.matmul %161, %2, %cst_60 {dimension_numbers = #tpu.dot_dimension_numbers<[1], [0], [0], [1], [0, 0, 1, 1], [], []>} : vector<2x10xf32>, vector<10x1024xf32>, vector<2x1024xf32> -> vector<2x1024xf32>
    %cst_61 = arith.constant 0.000000e+00 : f32
    %163 = vector.broadcast %cst_61 : f32 to vector<2x1024xf32>
    %164 = arith.cmpf oge, %162, %163 : vector<2x1024xf32>
    %cst_62 = arith.constant 7.000000e-03 : f32
    %cst_63 = arith.constant -7.000000e-03 : f32
    %165 = vector.broadcast %cst_62 : f32 to vector<2x1024xf32>
    %166 = vector.broadcast %cst_63 : f32 to vector<2x1024xf32>
    %167 = arith.select %164, %165, %166 : vector<2x1024xi1>, vector<2x1024xf32>
    %168 = arith.addf %149, %167 : vector<2x1024xf32>
    %169 = arith.maximumf %168, %15 : vector<2x1024xf32>
    %170 = arith.minimumf %169, %19 : vector<2x1024xf32>
    %c7_i32 = arith.constant 7 : i32
    %cst_64 = arith.constant dense<0.000000e+00> : vector<2x10xf32>
    %171 = tpu.matmul %170, %1, %cst_64 {dimension_numbers = #tpu.dot_dimension_numbers<[1], [0], [0], [1], [0, 0, 1, 1], [], []>} : vector<2x1024xf32>, vector<1024x10xf32>, vector<2x10xf32> -> vector<2x10xf32>
    %172 = arith.addf %171, %11 : vector<2x10xf32>
    %cst_65 = arith.constant dense<0xFF800000> : vector<2xf32>
    %173 = vector.multi_reduction <maximumf>, %172, %cst_65 [1] : vector<2x10xf32> to vector<2xf32>
    %174 = vector.shape_cast %173 : vector<2xf32> to vector<2x1xf32>
    %175 = vector.broadcast %174 : vector<2x1xf32> to vector<2x10xf32>
    %176 = arith.subf %172, %175 : vector<2x10xf32>
    %177 = math.exp %176 : vector<2x10xf32>
    %cst_66 = arith.constant dense<0.000000e+00> : vector<2xf32>
    %178 = vector.multi_reduction <add>, %177, %cst_66 [1] : vector<2x10xf32> to vector<2xf32>
    %179 = vector.shape_cast %178 : vector<2xf32> to vector<2x1xf32>
    %180 = vector.broadcast %179 : vector<2x1xf32> to vector<2x10xf32>
    %181 = arith.divf %177, %180 : vector<2x10xf32>
    %182 = arith.subf %181, %8 : vector<2x10xf32>
    %cst_67 = arith.constant dense<0.000000e+00> : vector<2x1024xf32>
    %183 = tpu.matmul %182, %2, %cst_67 {dimension_numbers = #tpu.dot_dimension_numbers<[1], [0], [0], [1], [0, 0, 1, 1], [], []>} : vector<2x10xf32>, vector<10x1024xf32>, vector<2x1024xf32> -> vector<2x1024xf32>
    %cst_68 = arith.constant 0.000000e+00 : f32
    %184 = vector.broadcast %cst_68 : f32 to vector<2x1024xf32>
    %185 = arith.cmpf oge, %183, %184 : vector<2x1024xf32>
    %cst_69 = arith.constant 7.000000e-03 : f32
    %cst_70 = arith.constant -7.000000e-03 : f32
    %186 = vector.broadcast %cst_69 : f32 to vector<2x1024xf32>
    %187 = vector.broadcast %cst_70 : f32 to vector<2x1024xf32>
    %188 = arith.select %185, %186, %187 : vector<2x1024xi1>, vector<2x1024xf32>
    %189 = arith.addf %170, %188 : vector<2x1024xf32>
    %190 = arith.maximumf %189, %15 : vector<2x1024xf32>
    %191 = arith.minimumf %190, %19 : vector<2x1024xf32>
    %c8_i32 = arith.constant 8 : i32
    %cst_71 = arith.constant dense<0.000000e+00> : vector<2x10xf32>
    %192 = tpu.matmul %191, %1, %cst_71 {dimension_numbers = #tpu.dot_dimension_numbers<[1], [0], [0], [1], [0, 0, 1, 1], [], []>} : vector<2x1024xf32>, vector<1024x10xf32>, vector<2x10xf32> -> vector<2x10xf32>
    %193 = arith.addf %192, %11 : vector<2x10xf32>
    %cst_72 = arith.constant dense<0xFF800000> : vector<2xf32>
    %194 = vector.multi_reduction <maximumf>, %193, %cst_72 [1] : vector<2x10xf32> to vector<2xf32>
    %195 = vector.shape_cast %194 : vector<2xf32> to vector<2x1xf32>
    %196 = vector.broadcast %195 : vector<2x1xf32> to vector<2x10xf32>
    %197 = arith.subf %193, %196 : vector<2x10xf32>
    %198 = math.exp %197 : vector<2x10xf32>
    %cst_73 = arith.constant dense<0.000000e+00> : vector<2xf32>
    %199 = vector.multi_reduction <add>, %198, %cst_73 [1] : vector<2x10xf32> to vector<2xf32>
    %200 = vector.shape_cast %199 : vector<2xf32> to vector<2x1xf32>
    %201 = vector.broadcast %200 : vector<2x1xf32> to vector<2x10xf32>
    %202 = arith.divf %198, %201 : vector<2x10xf32>
    %203 = arith.subf %202, %8 : vector<2x10xf32>
    %cst_74 = arith.constant dense<0.000000e+00> : vector<2x1024xf32>
    %204 = tpu.matmul %203, %2, %cst_74 {dimension_numbers = #tpu.dot_dimension_numbers<[1], [0], [0], [1], [0, 0, 1, 1], [], []>} : vector<2x10xf32>, vector<10x1024xf32>, vector<2x1024xf32> -> vector<2x1024xf32>
    %cst_75 = arith.constant 0.000000e+00 : f32
    %205 = vector.broadcast %cst_75 : f32 to vector<2x1024xf32>
    %206 = arith.cmpf oge, %204, %205 : vector<2x1024xf32>
    %cst_76 = arith.constant 7.000000e-03 : f32
    %cst_77 = arith.constant -7.000000e-03 : f32
    %207 = vector.broadcast %cst_76 : f32 to vector<2x1024xf32>
    %208 = vector.broadcast %cst_77 : f32 to vector<2x1024xf32>
    %209 = arith.select %206, %207, %208 : vector<2x1024xi1>, vector<2x1024xf32>
    %210 = arith.addf %191, %209 : vector<2x1024xf32>
    %211 = arith.maximumf %210, %15 : vector<2x1024xf32>
    %212 = arith.minimumf %211, %19 : vector<2x1024xf32>
    %c9_i32 = arith.constant 9 : i32
    %cst_78 = arith.constant dense<0.000000e+00> : vector<2x10xf32>
    %213 = tpu.matmul %212, %1, %cst_78 {dimension_numbers = #tpu.dot_dimension_numbers<[1], [0], [0], [1], [0, 0, 1, 1], [], []>} : vector<2x1024xf32>, vector<1024x10xf32>, vector<2x10xf32> -> vector<2x10xf32>
    %214 = arith.addf %213, %11 : vector<2x10xf32>
    %cst_79 = arith.constant dense<0xFF800000> : vector<2xf32>
    %215 = vector.multi_reduction <maximumf>, %214, %cst_79 [1] : vector<2x10xf32> to vector<2xf32>
    %216 = vector.shape_cast %215 : vector<2xf32> to vector<2x1xf32>
    %217 = vector.broadcast %216 : vector<2x1xf32> to vector<2x10xf32>
    %218 = arith.subf %214, %217 : vector<2x10xf32>
    %219 = math.exp %218 : vector<2x10xf32>
    %cst_80 = arith.constant dense<0.000000e+00> : vector<2xf32>
    %220 = vector.multi_reduction <add>, %219, %cst_80 [1] : vector<2x10xf32> to vector<2xf32>
    %221 = vector.shape_cast %220 : vector<2xf32> to vector<2x1xf32>
    %222 = vector.broadcast %221 : vector<2x1xf32> to vector<2x10xf32>
    %223 = arith.divf %219, %222 : vector<2x10xf32>
    %224 = arith.subf %223, %8 : vector<2x10xf32>
    %cst_81 = arith.constant dense<0.000000e+00> : vector<2x1024xf32>
    %225 = tpu.matmul %224, %2, %cst_81 {dimension_numbers = #tpu.dot_dimension_numbers<[1], [0], [0], [1], [0, 0, 1, 1], [], []>} : vector<2x10xf32>, vector<10x1024xf32>, vector<2x1024xf32> -> vector<2x1024xf32>
    %cst_82 = arith.constant 0.000000e+00 : f32
    %226 = vector.broadcast %cst_82 : f32 to vector<2x1024xf32>
    %227 = arith.cmpf oge, %225, %226 : vector<2x1024xf32>
    %cst_83 = arith.constant 7.000000e-03 : f32
    %cst_84 = arith.constant -7.000000e-03 : f32
    %228 = vector.broadcast %cst_83 : f32 to vector<2x1024xf32>
    %229 = vector.broadcast %cst_84 : f32 to vector<2x1024xf32>
    %230 = arith.select %227, %228, %229 : vector<2x1024xi1>, vector<2x1024xf32>
    %231 = arith.addf %212, %230 : vector<2x1024xf32>
    %232 = arith.maximumf %231, %15 : vector<2x1024xf32>
    %233 = arith.minimumf %232, %19 : vector<2x1024xf32>
    %cst_85 = arith.constant dense<0.000000e+00> : vector<2x10xf32>
    %234 = tpu.matmul %233, %1, %cst_85 {dimension_numbers = #tpu.dot_dimension_numbers<[1], [0], [0], [1], [0, 0, 1, 1], [], []>} : vector<2x1024xf32>, vector<1024x10xf32>, vector<2x10xf32> -> vector<2x10xf32>
    %235 = arith.addf %234, %11 : vector<2x10xf32>
    %cst_86 = arith.constant dense<0xFF800000> : vector<2xf32>
    %236 = vector.multi_reduction <maximumf>, %235, %cst_86 [1] : vector<2x10xf32> to vector<2xf32>
    %237 = vector.shape_cast %236 : vector<2xf32> to vector<2x1xf32>
    %238 = vector.broadcast %237 : vector<2x1xf32> to vector<2x10xf32>
    %239 = arith.subf %235, %238 : vector<2x10xf32>
    %240 = math.exp %239 : vector<2x10xf32>
    %cst_87 = arith.constant dense<0.000000e+00> : vector<2xf32>
    %241 = vector.multi_reduction <add>, %240, %cst_87 [1] : vector<2x10xf32> to vector<2xf32>
    %242 = vector.shape_cast %241 : vector<2xf32> to vector<2x1xf32>
    %243 = math.log %242 : vector<2x1xf32>
    %244 = vector.broadcast %243 : vector<2x1xf32> to vector<2x10xf32>
    %245 = arith.subf %239, %244 : vector<2x10xf32>
    %246 = arith.mulf %8, %245 : vector<2x10xf32>
    %cst_88 = arith.constant dense<0.000000e+00> : vector<2xf32>
    %247 = vector.multi_reduction <add>, %246, %cst_88 [1] : vector<2x10xf32> to vector<2xf32>
    %248 = vector.shape_cast %247 : vector<2xf32> to vector<2x1xf32>
    %cst_89 = arith.constant 0.000000e+00 : f32
    %249 = vector.broadcast %cst_89 : f32 to vector<2x1xf32>
    %250 = arith.subf %249, %248 : vector<2x1xf32>
    %251 = vector.shape_cast %250 : vector<2x1xf32> to vector<2x1xf32>
    %252 = vector.broadcast %251 : vector<2x1xf32> to vector<2x128xf32>
    %c0_90 = arith.constant 0 : index
    %c0_91 = arith.constant 0 : index
    %253 = vector.load %arg7[%c0_90, %c0_91] : memref<2x128xf32, #tpu.memory_space<vmem>>, vector<2x128xf32>
    tpu.vector_store %arg7[%c0_90, %c0_91], %252 {strides = array<i32>} : memref<2x128xf32, #tpu.memory_space<vmem>>, vector<2x128xf32>,
    return
  }
  func.func @transform_0(%arg0: i32) -> (i32, i32) {
    %c0_i32 = arith.constant 0 : i32
    %c0_i32_0 = arith.constant 0 : i32
    return %arg0, %c0_i32 : i32, i32
  }
  func.func @transform_1(%arg0: i32) -> (i32, i32) {
    %c0_i32 = arith.constant 0 : i32
    %c0_i32_0 = arith.constant 0 : i32
    return %arg0, %c0_i32 : i32, i32
  }
  func.func @transform_2(%arg0: i32) -> (i32, i32) {
    %c0_i32 = arith.constant 0 : i32
    %c0_i32_0 = arith.constant 0 : i32
    %c0_i32_1 = arith.constant 0 : i32
    return %c0_i32, %c0_i32_0 : i32, i32
  }
  func.func @transform_3(%arg0: i32) -> (i32, i32) {
    %c0_i32 = arith.constant 0 : i32
    %c0_i32_0 = arith.constant 0 : i32
    %c0_i32_1 = arith.constant 0 : i32
    return %c0_i32, %c0_i32_0 : i32, i32
  }
  func.func @transform_4(%arg0: i32) -> (i32, i32) {
    %c0_i32 = arith.constant 0 : i32
    %c0_i32_0 = arith.constant 0 : i32
    %c0_i32_1 = arith.constant 0 : i32
    return %c0_i32, %c0_i32_0 : i32, i32
  }
  func.func @transform_5(%arg0: i32) -> (i32, i32) {
    %c0_i32 = arith.constant 0 : i32
    %c0_i32_0 = arith.constant 0 : i32
    return %arg0, %c0_i32 : i32, i32
  }
  func.func @transform_6(%arg0: i32) -> (i32, i32) {
    %c0_i32 = arith.constant 0 : i32
    %c0_i32_0 = arith.constant 0 : i32
    return %arg0, %c0_i32 : i32, i32
  }
}

</mosaic_0001>

<llo_original>
// kernel: tpu_custom_call.1
$region0: #{tpu_custom_call.1}
  #allocation0 [shape = 'u32[]', space=smem, size = 0x4, offset = 0x4, fixed_abs, tag = 'smem constant byte address 0x4 - core index']
  #allocation1 [shape = 'u32[144,128]{1,0:T(1,128)}', space=vmem, size = 0x12000, scoped, tag = 'internal scratch']
  %s0 = inlined_call_operand.vmem [shape: f32[2,1024], index: 0, kind: input, shape index: {}]
  %s1 = inlined_call_operand.vmem [shape: f32[2,1024], index: 1, kind: input, shape index: {}]
  %s2 = inlined_call_operand.vmem [shape: f32[1024,10], index: 2, kind: input, shape index: {}]
  %s3 = inlined_call_operand.vmem [shape: f32[10,1024], index: 3, kind: input, shape index: {}]
  %s4 = inlined_call_operand.vmem [shape: f32[1,10], index: 4, kind: input, shape index: {}]
  %s5 = inlined_call_operand.vmem [shape: s32[2,1], index: 5, kind: input, shape index: {}]
  %s6 = inlined_call_operand.hbm [shape: f32[2,128], index: 6, kind: output, shape index: {}]
  %s7 = sld [smem:[#allocation0]]
  $region34: #{tpu_custom_call.1} parent=0
    _
  %s9 = ssub.s32 1, %s7
  %s10 = scalar_select 0, %s9, %s7
  $region1: #{tpu_custom_call.1} parent=0
    #allocation2 [shape = 'u8[1024]{0}', space=vmem, size = 0x400, scoped, tag = 'output window, operand 0, single buffered']
    #allocation3 [shape = 's32[1]{0}', space=sflag, size = 0x4, scoped, tag = 'scoped memory for tpu_custom_call.1']
    %11 = vsyncpa [#allocation3], 0
    // Predicated region
    $region2: #{tpu_custom_call.1} parent=1 // pred_check
      _
    $region3: #{tpu_custom_call.1} parent=1 // pred_check_branch
      %13 = sbr.rel (0) target = $region5
    $region4: #{tpu_custom_call.1} parent=1 // pred_region
      _
    $region5: #{tpu_custom_call.1} parent=1 // pred_fallthru
      _
    // Predicated region
    $region6: #{tpu_custom_call.1} parent=1 // pred_check
      _
    $region7: #{tpu_custom_call.1} parent=1 // pred_check_branch
      %15 = sbr.rel (0) target = $region9
    $region8: #{tpu_custom_call.1} parent=1 // pred_region
      _
    $region9: #{tpu_custom_call.1} parent=1 // pred_fallthru
      _
    // Predicated region
    $region10: #{tpu_custom_call.1} parent=1 // pred_check
      _
    $region11: #{tpu_custom_call.1} parent=1 // pred_check_branch
      %17 = sbr.rel (0) target = $region13
    $region12: #{tpu_custom_call.1} parent=1 // pred_region
      _
    $region13: #{tpu_custom_call.1} parent=1 // pred_fallthru
      _
    // Predicated region
    $region14: #{tpu_custom_call.1} parent=1 // pred_check
      _
    $region15: #{tpu_custom_call.1} parent=1 // pred_check_branch
      %19 = sbr.rel (0) target = $region17
    $region16: #{tpu_custom_call.1} parent=1 // pred_region
      _
    $region17: #{tpu_custom_call.1} parent=1 // pred_fallthru
      _
    // Predicated region
    $region18: #{tpu_custom_call.1} parent=1 // pred_check
      _
    $region19: #{tpu_custom_call.1} parent=1 // pred_check_branch
      %21 = sbr.rel (0) target = $region21
    $region20: #{tpu_custom_call.1} parent=1 // pred_region
      _
    $region21: #{tpu_custom_call.1} parent=1 // pred_fallthru
      _
    // Predicated region
    $region22: #{tpu_custom_call.1} parent=1 // pred_check
      _
    $region23: #{tpu_custom_call.1} parent=1 // pred_check_branch
      %23 = sbr.rel (0) target = $region25
    $region24: #{tpu_custom_call.1} parent=1 // pred_region
      _
    $region25: #{tpu_custom_call.1} parent=1 // pred_fallthru
      _
    %v24 = vld [vmem:[%s0] sm:$0xff]
    %v25 = vld [vmem:[%s0 + $0x8] sm:$0xff]
    %v26 = vld [vmem:[%s2] sm:$0xff]
    %v27 = vld [vmem:[%s2 + $0x8] sm:$0xff]
    %v28 = vld [vmem:[%s2 + $0x10] sm:$0xff]
    %v29 = vld [vmem:[%s2 + $0x18] sm:$0xff]
    %v30 = vld [vmem:[%s2 + $0x20] sm:$0xff]
    %v31 = vld [vmem:[%s2 + $0x28] sm:$0xff]
    %v32 = vld [vmem:[%s2 + $0x30] sm:$0xff]
    %v33 = vld [vmem:[%s2 + $0x38] sm:$0xff]
    %v34 = vld [vmem:[%s2 + $0x40] sm:$0xff]
    %v35 = vld [vmem:[%s2 + $0x48] sm:$0xff]
    %v36 = vld [vmem:[%s2 + $0x50] sm:$0xff]
    %v37 = vld [vmem:[%s2 + $0x58] sm:$0xff]
    %v38 = vld [vmem:[%s2 + $0x60] sm:$0xff]
    %v39 = vld [vmem:[%s2 + $0x68] sm:$0xff]
    %v40 = vld [vmem:[%s2 + $0x70] sm:$0xff]
    %v41 = vld [vmem:[%s2 + $0x78] sm:$0xff]
    %v42 = vld [vmem:[%s2 + $0x80] sm:$0xff]
    %v43 = vld [vmem:[%s2 + $0x88] sm:$0xff]
    %v44 = vld [vmem:[%s2 + $0x90] sm:$0xff]
    %v45 = vld [vmem:[%s2 + $0x98] sm:$0xff]
    %v46 = vld [vmem:[%s2 + $0xa0] sm:$0xff]
    %v47 = vld [vmem:[%s2 + $0xa8] sm:$0xff]
    %v48 = vld [vmem:[%s2 + $0xb0] sm:$0xff]
    %v49 = vld [vmem:[%s2 + $0xb8] sm:$0xff]
    %v50 = vld [vmem:[%s2 + $0xc0] sm:$0xff]
    %v51 = vld [vmem:[%s2 + $0xc8] sm:$0xff]
    %v52 = vld [vmem:[%s2 + $0xd0] sm:$0xff]
    %v53 = vld [vmem:[%s2 + $0xd8] sm:$0xff]
    %v54 = vld [vmem:[%s2 + $0xe0] sm:$0xff]
    %v55 = vld [vmem:[%s2 + $0xe8] sm:$0xff]
    %v56 = vld [vmem:[%s2 + $0xf0] sm:$0xff]
    %v57 = vld [vmem:[%s2 + $0xf8] sm:$0xff]
    %v58 = vld [vmem:[%s2 + $0x100] sm:$0xff]
    %v59 = vld [vmem:[%s2 + $0x108] sm:$0xff]
    %v60 = vld [vmem:[%s2 + $0x110] sm:$0xff]
    %v61 = vld [vmem:[%s2 + $0x118] sm:$0xff]
    %v62 = vld [vmem:[%s2 + $0x120] sm:$0xff]
    %v63 = vld [vmem:[%s2 + $0x128] sm:$0xff]
    %v64 = vld [vmem:[%s2 + $0x130] sm:$0xff]
    %v65 = vld [vmem:[%s2 + $0x138] sm:$0xff]
    %v66 = vld [vmem:[%s2 + $0x140] sm:$0xff]
    %v67 = vld [vmem:[%s2 + $0x148] sm:$0xff]
    %v68 = vld [vmem:[%s2 + $0x150] sm:$0xff]
    %v69 = vld [vmem:[%s2 + $0x158] sm:$0xff]
    %v70 = vld [vmem:[%s2 + $0x160] sm:$0xff]
    %v71 = vld [vmem:[%s2 + $0x168] sm:$0xff]
    %v72 = vld [vmem:[%s2 + $0x170] sm:$0xff]
    %v73 = vld [vmem:[%s2 + $0x178] sm:$0xff]
    %v74 = vld [vmem:[%s2 + $0x180] sm:$0xff]
    %v75 = vld [vmem:[%s2 + $0x188] sm:$0xff]
    %v76 = vld [vmem:[%s2 + $0x190] sm:$0xff]
    %v77 = vld [vmem:[%s2 + $0x198] sm:$0xff]
    %v78 = vld [vmem:[%s2 + $0x1a0] sm:$0xff]
    %v79 = vld [vmem:[%s2 + $0x1a8] sm:$0xff]
    %v80 = vld [vmem:[%s2 + $0x1b0] sm:$0xff]
    %v81 = vld [vmem:[%s2 + $0x1b8] sm:$0xff]
    %v82 = vld [vmem:[%s2 + $0x1c0] sm:$0xff]
    %v83 = vld [vmem:[%s2 + $0x1c8] sm:$0xff]
    %v84 = vld [vmem:[%s2 + $0x1d0] sm:$0xff]
    %v85 = vld [vmem:[%s2 + $0x1d8] sm:$0xff]
    %v86 = vld [vmem:[%s2 + $0x1e0] sm:$0xff]
    %v87 = vld [vmem:[%s2 + $0x1e8] sm:$0xff]
    %v88 = vld [vmem:[%s2 + $0x1f0] sm:$0xff]
    %v89 = vld [vmem:[%s2 + $0x1f8] sm:$0xff]
    %v90 = vld [vmem:[%s2 + $0x200] sm:$0xff]
    %v91 = vld [vmem:[%s2 + $0x208] sm:$0xff]
    %v92 = vld [vmem:[%s2 + $0x210] sm:$0xff]
    %v93 = vld [vmem:[%s2 + $0x218] sm:$0xff]
    %v94 = vld [vmem:[%s2 + $0x220] sm:$0xff]
    %v95 = vld [vmem:[%s2 + $0x228] sm:$0xff]
    %v96 = vld [vmem:[%s2 + $0x230] sm:$0xff]
    %v97 = vld [vmem:[%s2 + $0x238] sm:$0xff]
    %v98 = vld [vmem:[%s2 + $0x240] sm:$0xff]
    %v99 = vld [vmem:[%s2 + $0x248] sm:$0xff]
    %v100 = vld [vmem:[%s2 + $0x250] sm:$0xff]
    %v101 = vld [vmem:[%s2 + $0x258] sm:$0xff]
    %v102 = vld [vmem:[%s2 + $0x260] sm:$0xff]
    %v103 = vld [vmem:[%s2 + $0x268] sm:$0xff]
    %v104 = vld [vmem:[%s2 + $0x270] sm:$0xff]
    %v105 = vld [vmem:[%s2 + $0x278] sm:$0xff]
    %v106 = vld [vmem:[%s2 + $0x280] sm:$0xff]
    %v107 = vld [vmem:[%s2 + $0x288] sm:$0xff]
    %v108 = vld [vmem:[%s2 + $0x290] sm:$0xff]
    %v109 = vld [vmem:[%s2 + $0x298] sm:$0xff]
    %v110 = vld [vmem:[%s2 + $0x2a0] sm:$0xff]
    %v111 = vld [vmem:[%s2 + $0x2a8] sm:$0xff]
    %v112 = vld [vmem:[%s2 + $0x2b0] sm:$0xff]
    %v113 = vld [vmem:[%s2 + $0x2b8] sm:$0xff]
    %v114 = vld [vmem:[%s2 + $0x2c0] sm:$0xff]
    %v115 = vld [vmem:[%s2 + $0x2c8] sm:$0xff]
    %v116 = vld [vmem:[%s2 + $0x2d0] sm:$0xff]
    %v117 = vld [vmem:[%s2 + $0x2d8] sm:$0xff]
    %v118 = vld [vmem:[%s2 + $0x2e0] sm:$0xff]
    %v119 = vld [vmem:[%s2 + $0x2e8] sm:$0xff]
    %v120 = vld [vmem:[%s2 + $0x2f0] sm:$0xff]
    %v121 = vld [vmem:[%s2 + $0x2f8] sm:$0xff]
    %v122 = vld [vmem:[%s2 + $0x300] sm:$0xff]
    %v123 = vld [vmem:[%s2 + $0x308] sm:$0xff]
    %v124 = vld [vmem:[%s2 + $0x310] sm:$0xff]
    %v125 = vld [vmem:[%s2 + $0x318] sm:$0xff]
    %v126 = vld [vmem:[%s2 + $0x320] sm:$0xff]
    %v127 = vld [vmem:[%s2 + $0x328] sm:$0xff]
    %v128 = vld [vmem:[%s2 + $0x330] sm:$0xff]
    %v129 = vld [vmem:[%s2 + $0x338] sm:$0xff]
    %v130 = vld [vmem:[%s2 + $0x340] sm:$0xff]
    %v131 = vld [vmem:[%s2 + $0x348] sm:$0xff]
    %v132 = vld [vmem:[%s2 + $0x350] sm:$0xff]
    %v133 = vld [vmem:[%s2 + $0x358] sm:$0xff]
    %v134 = vld [vmem:[%s2 + $0x360] sm:$0xff]
    %v135 = vld [vmem:[%s2 + $0x368] sm:$0xff]
    %v136 = vld [vmem:[%s2 + $0x370] sm:$0xff]
    %v137 = vld [vmem:[%s2 + $0x378] sm:$0xff]
    %v138 = vld [vmem:[%s2 + $0x380] sm:$0xff]
    %v139 = vld [vmem:[%s2 + $0x388] sm:$0xff]
    %v140 = vld [vmem:[%s2 + $0x390] sm:$0xff]
    %v141 = vld [vmem:[%s2 + $0x398] sm:$0xff]
    %v142 = vld [vmem:[%s2 + $0x3a0] sm:$0xff]
    %v143 = vld [vmem:[%s2 + $0x3a8] sm:$0xff]
    %v144 = vld [vmem:[%s2 + $0x3b0] sm:$0xff]
    %v145 = vld [vmem:[%s2 + $0x3b8] sm:$0xff]
    %v146 = vld [vmem:[%s2 + $0x3c0] sm:$0xff]
    %v147 = vld [vmem:[%s2 + $0x3c8] sm:$0xff]
    %v148 = vld [vmem:[%s2 + $0x3d0] sm:$0xff]
    %v149 = vld [vmem:[%s2 + $0x3d8] sm:$0xff]
    %v150 = vld [vmem:[%s2 + $0x3e0] sm:$0xff]
    %v151 = vld [vmem:[%s2 + $0x3e8] sm:$0xff]
    %v152 = vld [vmem:[%s2 + $0x3f0] sm:$0xff]
    %v153 = vld [vmem:[%s2 + $0x3f8] sm:$0xff]
    %v154 = vld [vmem:[%s3] sm:$0xff]
    %v155 = vld [vmem:[%s3 + $0x8] sm:$0xff]
    %v156 = vld [vmem:[%s3 + $0x10] sm:$0xff]
    %v157 = vld [vmem:[%s3 + $0x18] sm:$0xff]
    %v158 = vld [vmem:[%s3 + $0x20] sm:$0xff]
    %v159 = vld [vmem:[%s3 + $0x28] sm:$0xff]
    %v160 = vld [vmem:[%s3 + $0x30] sm:$0xff]
    %v161 = vld [vmem:[%s3 + $0x38] sm:$0xff]
    %v162 = vld [vmem:[%s3 + $0x40] sm:$0x3]
    %v163 = vld [vmem:[%s3 + $0x48] sm:$0x3]
    %v164 = vld [vmem:[%s3 + $0x50] sm:$0x3]
    %v165 = vld [vmem:[%s3 + $0x58] sm:$0x3]
    %v166 = vld [vmem:[%s3 + $0x60] sm:$0x3]
    %v167 = vld [vmem:[%s3 + $0x68] sm:$0x3]
    %v168 = vld [vmem:[%s3 + $0x70] sm:$0x3]
    %v169 = vld [vmem:[%s3 + $0x78] sm:$0x3]
    %v170 = vld [vmem:[%s5] sm:$0x3]
    %v171 = vlaneseq
    %v172 = vand.u32 %v171, 127
    %173 = vset.pattern.permute.xlu0 0
    %174 = vperm.xlu0 %173, %v170
    %v175 = vpop.permute.xlu0 %174
    %vm176 = vcmp.eq.s32.totalorder %v172, %v175
    %v177 = vsel %vm176, 1, 0
    %v178 = vcvt.s32.f32 %v177
    %v179 = vld [vmem:[%s4] sm:$0x1]
    %v181 = vlaneseq
    %v182 = vshrl.u32 %v181, 7
    %v183 = vsub.s32 0, %v182
    %v184 = vrot.slane %v179, %v183
    %v186 = vsub.f32 %v24, 0.031
    %v187 = vsub.f32 %v25, 0.031
    %v188 = vmax.f32 %v186, 0.0
    %v189 = vmax.f32 %v187, 0.0
    %v190 = vadd.f32 %v24, 0.031
    %v191 = vadd.f32 %v25, 0.031
    %v192 = vmin.f32 %v190, 1.0
    %v193 = vmin.f32 %v191, 1.0
    %v194 = vld [vmem:[%s1] sm:$0xff]
    %v195 = vld [vmem:[%s1 + $0x8] sm:$0xff]
    %v196 = vmul.f32 %v194, 0.007
    %v197 = vmul.f32 %v195, 0.007
    %v198 = vadd.f32 %v24, %v196
    %v199 = vadd.f32 %v25, %v197
    %v202 = vcombine.high %v198, %v198
    %v204 = vunpack.c.l.s4 1983009808
    %v205 = vunpack.c.0.s8 %v204
    %v206 = vlaneseq
    %v207 = vshrl.u32 %v206, 7
    %v208 = vsub.s32 %v205, %v207
    %v209 = vrot.slane %v198, %v208
    %v211 = vunpack.c.l.s4 1983009808
    %v212 = vunpack.c.0.s8 %v211
    %v213 = vlaneseq
    %v214 = vshrl.u32 %v213, 7
    %v215 = vsub.s32 %v212, %v214
    %v216 = vrot.slane %v202, %v215
    %v217 = vcombine.high %v209, %v209
    %v218 = vcombine.high %v216, %v216
    %v219 = vcombine.high %v199, %v199
    %v221 = vunpack.c.l.s4 1983009808
    %v222 = vunpack.c.0.s8 %v221
    %v223 = vlaneseq
    %v224 = vshrl.u32 %v223, 7
    %v225 = vsub.s32 %v222, %v224
    %v226 = vrot.slane %v199, %v225
    %v228 = vunpack.c.l.s4 1983009808
    %v229 = vunpack.c.0.s8 %v228
    %v230 = vlaneseq
    %v231 = vshrl.u32 %v230, 7
    %v232 = vsub.s32 %v229, %v231
    %v233 = vrot.slane %v219, %v232
    %v234 = vcombine.high %v226, %v226
    %v235 = vcombine.high %v233, %v233
    %244 = vmatprep.subr.mxu0 0.0
    %245 = vmatpush1.msra.mxu0 %v26
    %246 = vmatprep.subr.mxu0 0.0
    %247 = vmatpush1.msra.mxu0 %v27
    %248 = vmatprep.subr.mxu0 0.0
    %249 = vmatpush1.msra.mxu0 %v28
    %250 = vmatprep.subr.mxu0 0.0
    %251 = vmatpush1.msra.mxu0 %v29
    %252 = vmatprep.subr.mxu0 0.0
    %253 = vmatpush1.msra.mxu0 %v30
    %254 = vmatprep.subr.mxu0 0.0
    %255 = vmatpush1.msra.mxu0 %v31
    %256 = vmatprep.subr.mxu0 0.0
    %257 = vmatpush1.msra.mxu0 %v32
    %258 = vmatprep.subr.mxu0 0.0
    %259 = vmatpush1.msra.mxu0 %v33
    %260 = vmatprep.subr.mxu0 0.0
    %261 = vmatpush1.msra.mxu0 %v34
    %262 = vmatprep.subr.mxu0 0.0
    %263 = vmatpush1.msra.mxu0 %v35
    %264 = vmatprep.subr.mxu0 0.0
    %265 = vmatpush1.msra.mxu0 %v36
    %266 = vmatprep.subr.mxu0 0.0
    %267 = vmatpush1.msra.mxu0 %v37
    %268 = vmatprep.subr.mxu0 0.0
    %269 = vmatpush1.msra.mxu0 %v38
    %270 = vmatprep.subr.mxu0 0.0
    %271 = vmatpush1.msra.mxu0 %v39
    %272 = vmatprep.subr.mxu0 0.0
    %273 = vmatpush1.msra.mxu0 %v40
    %274 = vmatprep.subr.mxu0 0.0
    %275 = vmatpush1.msra.mxu0 %v41
    %276 = vmatprep.subr.mxu0 0.0
    %277 = vmatpush1.msra.mxu0 %v42
    %278 = vmatprep.subr.mxu0 0.0
    %279 = vmatpush1.msra.mxu0 %v43
    %280 = vmatprep.subr.mxu0 0.0
    %281 = vmatpush1.msra.mxu0 %v44
    %282 = vmatprep.subr.mxu0 0.0
    %283 = vmatpush1.msra.mxu0 %v45
    %284 = vmatprep.subr.mxu0 0.0
    %285 = vmatpush1.msra.mxu0 %v46
    %286 = vmatprep.subr.mxu0 0.0
    %287 = vmatpush1.msra.mxu0 %v47
    %288 = vmatprep.subr.mxu0 0.0
    %289 = vmatpush1.msra.mxu0 %v48
    %290 = vmatprep.subr.mxu0 0.0
    %291 = vmatpush1.msra.mxu0 %v49
    %292 = vmatprep.subr.mxu0 0.0
    %293 = vmatpush1.msra.mxu0 %v50
    %294 = vmatprep.subr.mxu0 0.0
    %295 = vmatpush1.msra.mxu0 %v51
    %296 = vmatprep.subr.mxu0 0.0
    %297 = vmatpush1.msra.mxu0 %v52
    %298 = vmatprep.subr.mxu0 0.0
    %299 = vmatpush1.msra.mxu0 %v53
    %300 = vmatprep.subr.mxu0 0.0
    %301 = vmatpush1.msra.mxu0 %v54
    %302 = vmatprep.subr.mxu0 0.0
    %303 = vmatpush1.msra.mxu0 %v55
    %304 = vmatprep.subr.mxu0 0.0
    %305 = vmatpush1.msra.mxu0 %v56
    %306 = vmatprep.subr.mxu0 0.0
    %307 = vmatpush1.msra.mxu0 %v57
    %308 = vmatprep.mubr.f32.mxu0 %v217
    %309 = vmatmul.mubr.f32.gmra.mrb[0].mxu0 %v209
    %v310 = vpop.f32.mrb[0].mxu0
    %v311 = vadd.f32 %v184, %v310
    %v312 = vpop.f32.mrb[0].mxu0
    %313 = vdwg.mxu0
    %314 = vmatprep.subr.mxu0 0.0
    %315 = vmatpush1.msra.mxu0 %v58
    %316 = vmatprep.subr.mxu0 0.0
    %317 = vmatpush1.msra.mxu0 %v59
    %318 = vmatprep.subr.mxu0 0.0
    %319 = vmatpush1.msra.mxu0 %v60
    %320 = vmatprep.subr.mxu0 0.0
    %321 = vmatpush1.msra.mxu0 %v61
    %322 = vmatprep.subr.mxu0 0.0
    %323 = vmatpush1.msra.mxu0 %v62
    %324 = vmatprep.subr.mxu0 0.0
    %325 = vmatpush1.msra.mxu0 %v63
    %326 = vmatprep.subr.mxu0 0.0
    %327 = vmatpush1.msra.mxu0 %v64
    %328 = vmatprep.subr.mxu0 0.0
    %329 = vmatpush1.msra.mxu0 %v65
    %330 = vmatprep.subr.mxu0 0.0
    %331 = vmatpush1.msra.mxu0 %v66
    %332 = vmatprep.subr.mxu0 0.0
    %333 = vmatpush1.msra.mxu0 %v67
    %334 = vmatprep.subr.mxu0 0.0
    %335 = vmatpush1.msra.mxu0 %v68
    %336 = vmatprep.subr.mxu0 0.0
    %337 = vmatpush1.msra.mxu0 %v69
    %338 = vmatprep.subr.mxu0 0.0
    %339 = vmatpush1.msra.mxu0 %v70
    %340 = vmatprep.subr.mxu0 0.0
    %341 = vmatpush1.msra.mxu0 %v71
    %342 = vmatprep.subr.mxu0 0.0
    %343 = vmatpush1.msra.mxu0 %v72
    %344 = vmatprep.subr.mxu0 0.0
    %345 = vmatpush1.msra.mxu0 %v73
    %346 = vmatprep.subr.mxu0 0.0
    %347 = vmatpush1.msra.mxu0 %v74
    %348 = vmatprep.subr.mxu0 0.0
    %349 = vmatpush1.msra.mxu0 %v75
    %350 = vmatprep.subr.mxu0 0.0
    %351 = vmatpush1.msra.mxu0 %v76
    %352 = vmatprep.subr.mxu0 0.0
    %353 = vmatpush1.msra.mxu0 %v77
    %354 = vmatprep.subr.mxu0 0.0
    %355 = vmatpush1.msra.mxu0 %v78
    %356 = vmatprep.subr.mxu0 0.0
    %357 = vmatpush1.msra.mxu0 %v79
    %358 = vmatprep.subr.mxu0 0.0
    %359 = vmatpush1.msra.mxu0 %v80
    %360 = vmatprep.subr.mxu0 0.0
    %361 = vmatpush1.msra.mxu0 %v81
    %362 = vmatprep.subr.mxu0 0.0
    %363 = vmatpush1.msra.mxu0 %v82
    %364 = vmatprep.subr.mxu0 0.0
    %365 = vmatpush1.msra.mxu0 %v83
    %366 = vmatprep.subr.mxu0 0.0
    %367 = vmatpush1.msra.mxu0 %v84
    %368 = vmatprep.subr.mxu0 0.0
    %369 = vmatpush1.msra.mxu0 %v85
    %370 = vmatprep.subr.mxu0 0.0
    %371 = vmatpush1.msra.mxu0 %v86
    %372 = vmatprep.subr.mxu0 0.0
    %373 = vmatpush1.msra.mxu0 %v87
    %374 = vmatprep.subr.mxu0 0.0
    %375 = vmatpush1.msra.mxu0 %v88
    %376 = vmatprep.subr.mxu0 0.0
    %377 = vmatpush1.msra.mxu0 %v89
    %378 = vmatprep.mubr.f32.mxu0 %v218
    %379 = vmatmul.mubr.f32.gmra.mrb[0].mxu0 %v216
    %v380 = vpop.f32.mrb[0].mxu0
    %v381 = vadd.f32 %v311, %v380
    %v382 = vpop.f32.mrb[0].mxu0
    %383 = vdwg.mxu0
    %384 = vmatprep.subr.mxu0 0.0
    %385 = vmatpush1.msra.mxu0 %v90
    %386 = vmatprep.subr.mxu0 0.0
    %387 = vmatpush1.msra.mxu0 %v91
    %388 = vmatprep.subr.mxu0 0.0
    %389 = vmatpush1.msra.mxu0 %v92
    %390 = vmatprep.subr.mxu0 0.0
    %391 = vmatpush1.msra.mxu0 %v93
    %392 = vmatprep.subr.mxu0 0.0
    %393 = vmatpush1.msra.mxu0 %v94
    %394 = vmatprep.subr.mxu0 0.0
    %395 = vmatpush1.msra.mxu0 %v95
    %396 = vmatprep.subr.mxu0 0.0
    %397 = vmatpush1.msra.mxu0 %v96
    %398 = vmatprep.subr.mxu0 0.0
    %399 = vmatpush1.msra.mxu0 %v97
    %400 = vmatprep.subr.mxu0 0.0
    %401 = vmatpush1.msra.mxu0 %v98
    %402 = vmatprep.subr.mxu0 0.0
    %403 = vmatpush1.msra.mxu0 %v99
    %404 = vmatprep.subr.mxu0 0.0
    %405 = vmatpush1.msra.mxu0 %v100
    %406 = vmatprep.subr.mxu0 0.0
    %407 = vmatpush1.msra.mxu0 %v101
    %408 = vmatprep.subr.mxu0 0.0
    %409 = vmatpush1.msra.mxu0 %v102
    %410 = vmatprep.subr.mxu0 0.0
    %411 = vmatpush1.msra.mxu0 %v103
    %412 = vmatprep.subr.mxu0 0.0
    %413 = vmatpush1.msra.mxu0 %v104
    %414 = vmatprep.subr.mxu0 0.0
    %415 = vmatpush1.msra.mxu0 %v105
    %416 = vmatprep.subr.mxu0 0.0
    %417 = vmatpush1.msra.mxu0 %v106
    %418 = vmatprep.subr.mxu0 0.0
    %419 = vmatpush1.msra.mxu0 %v107
    %420 = vmatprep.subr.mxu0 0.0
    %421 = vmatpush1.msra.mxu0 %v108
    %422 = vmatprep.subr.mxu0 0.0
    %423 = vmatpush1.msra.mxu0 %v109
    %424 = vmatprep.subr.mxu0 0.0
    %425 = vmatpush1.msra.mxu0 %v110
    %426 = vmatprep.subr.mxu0 0.0
    %427 = vmatpush1.msra.mxu0 %v111
    %428 = vmatprep.subr.mxu0 0.0
    %429 = vmatpush1.msra.mxu0 %v112
    %430 = vmatprep.subr.mxu0 0.0
    %431 = vmatpush1.msra.mxu0 %v113
    %432 = vmatprep.subr.mxu0 0.0
    %433 = vmatpush1.msra.mxu0 %v114
    %434 = vmatprep.subr.mxu0 0.0
    %435 = vmatpush1.msra.mxu0 %v115
    %436 = vmatprep.subr.mxu0 0.0
    %437 = vmatpush1.msra.mxu0 %v116
    %438 = vmatprep.subr.mxu0 0.0
    %439 = vmatpush1.msra.mxu0 %v117
    %440 = vmatprep.subr.mxu0 0.0
    %441 = vmatpush1.msra.mxu0 %v118
    %442 = vmatprep.subr.mxu0 0.0
    %443 = vmatpush1.msra.mxu0 %v119
    %444 = vmatprep.subr.mxu0 0.0
    %445 = vmatpush1.msra.mxu0 %v120
    %446 = vmatprep.subr.mxu0 0.0
    %447 = vmatpush1.msra.mxu0 %v121
    %448 = vmatprep.mubr.f32.mxu0 %v234
    %449 = vmatmul.mubr.f32.gmra.mrb[0].mxu0 %v226
    %v450 = vpop.f32.mrb[0].mxu0
    %v451 = vadd.f32 %v381, %v450
    %v452 = vpop.f32.mrb[0].mxu0
    %453 = vdwg.mxu0
    %454 = vmatprep.subr.mxu0 0.0
    %455 = vmatpush1.msra.mxu0 %v122
    %456 = vmatprep.subr.mxu0 0.0
    %457 = vmatpush1.msra.mxu0 %v123
    %458 = vmatprep.subr.mxu0 0.0
    %459 = vmatpush1.msra.mxu0 %v124
    %460 = vmatprep.subr.mxu0 0.0
    %461 = vmatpush1.msra.mxu0 %v125
    %462 = vmatprep.subr.mxu0 0.0
    %463 = vmatpush1.msra.mxu0 %v126
    %464 = vmatprep.subr.mxu0 0.0
    %465 = vmatpush1.msra.mxu0 %v127
    %466 = vmatprep.subr.mxu0 0.0
    %467 = vmatpush1.msra.mxu0 %v128
    %468 = vmatprep.subr.mxu0 0.0
    %469 = vmatpush1.msra.mxu0 %v129
    %470 = vmatprep.subr.mxu0 0.0
    %471 = vmatpush1.msra.mxu0 %v130
    %472 = vmatprep.subr.mxu0 0.0
    %473 = vmatpush1.msra.mxu0 %v131
    %474 = vmatprep.subr.mxu0 0.0
    %475 = vmatpush1.msra.mxu0 %v132
    %476 = vmatprep.subr.mxu0 0.0
    %477 = vmatpush1.msra.mxu0 %v133
    %478 = vmatprep.subr.mxu0 0.0
    %479 = vmatpush1.msra.mxu0 %v134
    %480 = vmatprep.subr.mxu0 0.0
    %481 = vmatpush1.msra.mxu0 %v135
    %482 = vmatprep.subr.mxu0 0.0
    %483 = vmatpush1.msra.mxu0 %v136
    %484 = vmatprep.subr.mxu0 0.0
    %485 = vmatpush1.msra.mxu0 %v137
    %486 = vmatprep.subr.mxu0 0.0
    %487 = vmatpush1.msra.mxu0 %v138
    %488 = vmatprep.subr.mxu0 0.0
    %489 = vmatpush1.msra.mxu0 %v139
    %490 = vmatprep.subr.mxu0 0.0
    %491 = vmatpush1.msra.mxu0 %v140
    %492 = vmatprep.subr.mxu0 0.0
    %493 = vmatpush1.msra.mxu0 %v141
    %494 = vmatprep.subr.mxu0 0.0
    %495 = vmatpush1.msra.mxu0 %v142
    %496 = vmatprep.subr.mxu0 0.0
    %497 = vmatpush1.msra.mxu0 %v143
    %498 = vmatprep.subr.mxu0 0.0
    %499 = vmatpush1.msra.mxu0 %v144
    %500 = vmatprep.subr.mxu0 0.0
    %501 = vmatpush1.msra.mxu0 %v145
    %502 = vmatprep.subr.mxu0 0.0
    %503 = vmatpush1.msra.mxu0 %v146
    %504 = vmatprep.subr.mxu0 0.0
    %505 = vmatpush1.msra.mxu0 %v147
    %506 = vmatprep.subr.mxu0 0.0
    %507 = vmatpush1.msra.mxu0 %v148
    %508 = vmatprep.subr.mxu0 0.0
    %509 = vmatpush1.msra.mxu0 %v149
    %510 = vmatprep.subr.mxu0 0.0
    %511 = vmatpush1.msra.mxu0 %v150
    %512 = vmatprep.subr.mxu0 0.0
    %513 = vmatpush1.msra.mxu0 %v151
    %514 = vmatprep.subr.mxu0 0.0
    %515 = vmatpush1.msra.mxu0 %v152
    %516 = vmatprep.subr.mxu0 0.0
    %517 = vmatpush1.msra.mxu0 %v153
    %518 = vmatprep.mubr.f32.mxu0 %v235
    %519 = vmatmul.mubr.f32.gmra.mrb[0].mxu0 %v233
    %v520 = vpop.f32.mrb[0].mxu0
    %v521 = vadd.f32 %v451, %v520
    %v522 = vpop.f32.mrb[0].mxu0
    %523 = vdwg.mxu0
    %vm524 = vcmask 74752
    %v525 = vsel %vm524, %v521, -inf
    %526 = vmax.xlane.f32.xlu0 %v525
    %v527 = vpop.xlane.xlu0 %526
    %v528 = vsub.f32 %v521, %v527
    %v529 = vmul.f32 %v528, 1.442695
    %v530 = vpow.pop %v529
    %v531 = vsel %vm524, %v530, 0.0
    %532 = vadd.xlane.f32.xlu0 %v531
    %v533 = vpop.xlane.xlu0 %532
    %v534 = vrcp.pop %v533
    %v535 = vmul.f32 %v530, %v534
    %v536 = vsub.f32 %v535, %v178
    %vm537 = vcmask 80896
    %v539 = vsel %vm537, %v536, 0
    %vm541 = vcmask 1041408
    %v543 = vsel %vm541, %v162, 0
    %v546 = vsel %vm541, %v163, 0
    %v549 = vsel %vm541, %v164, 0
    %v552 = vsel %vm541, %v165, 0
    %v555 = vsel %vm541, %v166, 0
    %v558 = vsel %vm541, %v167, 0
    %v561 = vsel %vm541, %v168, 0
    %v564 = vsel %vm541, %v169, 0
    %566 = vmatprep.subr.mxu0 %v155
    %567 = vmatpush1.msra.mxu0 %v154
    %568 = vmatprep.subr.mxu0 %v546
    %569 = vmatpush1.msra.mxu0 %v543
    %570 = vmatprep.subr.mxu0 0.0
    %571 = vmatpush1.msra.mxu0 0.0
    %572 = vmatprep.subr.mxu0 0.0
    %573 = vmatpush1.msra.mxu0 0.0
    %574 = vmatprep.subr.mxu0 0.0
    %575 = vmatpush1.msra.mxu0 0.0
    %576 = vmatprep.subr.mxu0 0.0
    %577 = vmatpush1.msra.mxu0 0.0
    %578 = vmatprep.subr.mxu0 0.0
    %579 = vmatpush1.msra.mxu0 0.0
    %580 = vmatprep.subr.mxu0 0.0
    %581 = vmatpush1.msra.mxu0 0.0
    %582 = vmatprep.subr.mxu0 0.0
    %583 = vmatpush1.msra.mxu0 0.0
    %584 = vmatprep.subr.mxu0 0.0
    %585 = vmatpush1.msra.mxu0 0.0
    %586 = vmatprep.subr.mxu0 0.0
    %587 = vmatpush1.msra.mxu0 0.0
    %588 = vmatprep.subr.mxu0 0.0
    %589 = vmatpush1.msra.mxu0 0.0
    %590 = vmatprep.subr.mxu0 0.0
    %591 = vmatpush1.msra.mxu0 0.0
    %592 = vmatprep.subr.mxu0 0.0
    %593 = vmatpush1.msra.mxu0 0.0
    %594 = vmatprep.subr.mxu0 0.0
    %595 = vmatpush1.msra.mxu0 0.0
    %596 = vmatprep.subr.mxu0 0.0
    %597 = vmatpush1.msra.mxu0 0.0
    %598 = vmatprep.subr.mxu0 0.0
    %599 = vmatpush1.msra.mxu0 0.0
    %600 = vmatprep.subr.mxu0 0.0
    %601 = vmatpush1.msra.mxu0 0.0
    %602 = vmatprep.subr.mxu0 0.0
    %603 = vmatpush1.msra.mxu0 0.0
    %604 = vmatprep.subr.mxu0 0.0
    %605 = vmatpush1.msra.mxu0 0.0
    %606 = vmatprep.subr.mxu0 0.0
    %607 = vmatpush1.msra.mxu0 0.0
    %608 = vmatprep.subr.mxu0 0.0
    %609 = vmatpush1.msra.mxu0 0.0
    %610 = vmatprep.subr.mxu0 0.0
    %611 = vmatpush1.msra.mxu0 0.0
    %612 = vmatprep.subr.mxu0 0.0
    %613 = vmatpush1.msra.mxu0 0.0
    %614 = vmatprep.subr.mxu0 0.0
    %615 = vmatpush1.msra.mxu0 0.0
    %616 = vmatprep.subr.mxu0 0.0
    %617 = vmatpush1.msra.mxu0 0.0
    %618 = vmatprep.subr.mxu0 0.0
    %619 = vmatpush1.msra.mxu0 0.0
    %620 = vmatprep.subr.mxu0 0.0
    %621 = vmatpush1.msra.mxu0 0.0
    %622 = vmatprep.subr.mxu0 0.0
    %623 = vmatpush1.msra.mxu0 0.0
    %624 = vmatprep.subr.mxu0 0.0
    %625 = vmatpush1.msra.mxu0 0.0
    %626 = vmatprep.subr.mxu0 0.0
    %627 = vmatpush1.msra.mxu0 0.0
    %628 = vmatprep.subr.mxu0 0.0
    %629 = vmatpush1.msra.mxu0 0.0
    %630 = vmatprep.mubr.f32.mxu0 0.0
    %631 = vmatmul.mubr.f32.gmra.mrb[0].mxu0 %v539
    %v632 = vpop.f32.mrb[0].mxu0
    %v633 = vadd.f32 0.0, %v632
    %v634 = vpop.f32.mrb[0].mxu0
    %v635 = vadd.f32 0.0, %v634
    %636 = vdwg.mxu0
    %637 = vmatprep.subr.mxu0 %v157
    %638 = vmatpush1.msra.mxu0 %v156
    %639 = vmatprep.subr.mxu0 %v552
    %640 = vmatpush1.msra.mxu0 %v549
    %641 = vmatprep.subr.mxu0 0.0
    %642 = vmatpush1.msra.mxu0 0.0
    %643 = vmatprep.subr.mxu0 0.0
    %644 = vmatpush1.msra.mxu0 0.0
    %645 = vmatprep.subr.mxu0 0.0
    %646 = vmatpush1.msra.mxu0 0.0
    %647 = vmatprep.subr.mxu0 0.0
    %648 = vmatpush1.msra.mxu0 0.0
    %649 = vmatprep.subr.mxu0 0.0
    %650 = vmatpush1.msra.mxu0 0.0
    %651 = vmatprep.subr.mxu0 0.0
    %652 = vmatpush1.msra.mxu0 0.0
    %653 = vmatprep.subr.mxu0 0.0
    %654 = vmatpush1.msra.mxu0 0.0
    %655 = vmatprep.subr.mxu0 0.0
    %656 = vmatpush1.msra.mxu0 0.0
    %657 = vmatprep.subr.mxu0 0.0
    %658 = vmatpush1.msra.mxu0 0.0
    %659 = vmatprep.subr.mxu0 0.0
    %660 = vmatpush1.msra.mxu0 0.0
    %661 = vmatprep.subr.mxu0 0.0
    %662 = vmatpush1.msra.mxu0 0.0
    %663 = vmatprep.subr.mxu0 0.0
    %664 = vmatpush1.msra.mxu0 0.0
    %665 = vmatprep.subr.mxu0 0.0
    %666 = vmatpush1.msra.mxu0 0.0
    %667 = vmatprep.subr.mxu0 0.0
    %668 = vmatpush1.msra.mxu0 0.0
    %669 = vmatprep.subr.mxu0 0.0
    %670 = vmatpush1.msra.mxu0 0.0
    %671 = vmatprep.subr.mxu0 0.0
    %672 = vmatpush1.msra.mxu0 0.0
    %673 = vmatprep.subr.mxu0 0.0
    %674 = vmatpush1.msra.mxu0 0.0
    %675 = vmatprep.subr.mxu0 0.0
    %676 = vmatpush1.msra.mxu0 0.0
    %677 = vmatprep.subr.mxu0 0.0
    %678 = vmatpush1.msra.mxu0 0.0
    %679 = vmatprep.subr.mxu0 0.0
    %680 = vmatpush1.msra.mxu0 0.0
    %681 = vmatprep.subr.mxu0 0.0
    %682 = vmatpush1.msra.mxu0 0.0
    %683 = vmatprep.subr.mxu0 0.0
    %684 = vmatpush1.msra.mxu0 0.0
    %685 = vmatprep.subr.mxu0 0.0
    %686 = vmatpush1.msra.mxu0 0.0
    %687 = vmatprep.subr.mxu0 0.0
    %688 = vmatpush1.msra.mxu0 0.0
    %689 = vmatprep.subr.mxu0 0.0
    %690 = vmatpush1.msra.mxu0 0.0
    %691 = vmatprep.subr.mxu0 0.0
    %692 = vmatpush1.msra.mxu0 0.0
    %693 = vmatprep.subr.mxu0 0.0
    %694 = vmatpush1.msra.mxu0 0.0
    %695 = vmatprep.subr.mxu0 0.0
    %696 = vmatpush1.msra.mxu0 0.0
    %697 = vmatprep.subr.mxu0 0.0
    %698 = vmatpush1.msra.mxu0 0.0
    %699 = vmatprep.subr.mxu0 0.0
    %700 = vmatpush1.msra.mxu0 0.0
    %701 = vmatprep.mubr.f32.mxu0 0.0
    %702 = vmatmul.mubr.f32.gmra.mrb[0].mxu0 %v539
    %v703 = vpop.f32.mrb[0].mxu0
    %v704 = vadd.f32 0.0, %v703
    %v705 = vpop.f32.mrb[0].mxu0
    %v706 = vadd.f32 0.0, %v705
    %707 = vdwg.mxu0
    %708 = vmatprep.subr.mxu0 %v159
    %709 = vmatpush1.msra.mxu0 %v158
    %710 = vmatprep.subr.mxu0 %v558
    %711 = vmatpush1.msra.mxu0 %v555
    %712 = vmatprep.subr.mxu0 0.0
    %713 = vmatpush1.msra.mxu0 0.0
    %714 = vmatprep.subr.mxu0 0.0
    %715 = vmatpush1.msra.mxu0 0.0
    %716 = vmatprep.subr.mxu0 0.0
    %717 = vmatpush1.msra.mxu0 0.0
    %718 = vmatprep.subr.mxu0 0.0
    %719 = vmatpush1.msra.mxu0 0.0
    %720 = vmatprep.subr.mxu0 0.0
    %721 = vmatpush1.msra.mxu0 0.0
    %722 = vmatprep.subr.mxu0 0.0
    %723 = vmatpush1.msra.mxu0 0.0
    %724 = vmatprep.subr.mxu0 0.0
    %725 = vmatpush1.msra.mxu0 0.0
    %726 = vmatprep.subr.mxu0 0.0
    %727 = vmatpush1.msra.mxu0 0.0
    %728 = vmatprep.subr.mxu0 0.0
    %729 = vmatpush1.msra.mxu0 0.0
    %730 = vmatprep.subr.mxu0 0.0
    %731 = vmatpush1.msra.mxu0 0.0
    %732 = vmatprep.subr.mxu0 0.0
    %733 = vmatpush1.msra.mxu0 0.0
    %734 = vmatprep.subr.mxu0 0.0
    %735 = vmatpush1.msra.mxu0 0.0
    %736 = vmatprep.subr.mxu0 0.0
    %737 = vmatpush1.msra.mxu0 0.0
    %738 = vmatprep.subr.mxu0 0.0
    %739 = vmatpush1.msra.mxu0 0.0
    %740 = vmatprep.subr.mxu0 0.0
    %741 = vmatpush1.msra.mxu0 0.0
    %742 = vmatprep.subr.mxu0 0.0
    %743 = vmatpush1.msra.mxu0 0.0
    %744 = vmatprep.subr.mxu0 0.0
    %745 = vmatpush1.msra.mxu0 0.0
    %746 = vmatprep.subr.mxu0 0.0
    %747 = vmatpush1.msra.mxu0 0.0
    %748 = vmatprep.subr.mxu0 0.0
    %749 = vmatpush1.msra.mxu0 0.0
    %750 = vmatprep.subr.mxu0 0.0
    %751 = vmatpush1.msra.mxu0 0.0
    %752 = vmatprep.subr.mxu0 0.0
    %753 = vmatpush1.msra.mxu0 0.0
    %754 = vmatprep.subr.mxu0 0.0
    %755 = vmatpush1.msra.mxu0 0.0
    %756 = vmatprep.subr.mxu0 0.0
    %757 = vmatpush1.msra.mxu0 0.0
    %758 = vmatprep.subr.mxu0 0.0
    %759 = vmatpush1.msra.mxu0 0.0
    %760 = vmatprep.subr.mxu0 0.0
    %761 = vmatpush1.msra.mxu0 0.0
    %762 = vmatprep.subr.mxu0 0.0
    %763 = vmatpush1.msra.mxu0 0.0
    %764 = vmatprep.subr.mxu0 0.0
    %765 = vmatpush1.msra.mxu0 0.0
    %766 = vmatprep.subr.mxu0 0.0
    %767 = vmatpush1.msra.mxu0 0.0
    %768 = vmatprep.subr.mxu0 0.0
    %769 = vmatpush1.msra.mxu0 0.0
    %770 = vmatprep.subr.mxu0 0.0
    %771 = vmatpush1.msra.mxu0 0.0
    %772 = vmatprep.mubr.f32.mxu0 0.0
    %773 = vmatmul.mubr.f32.gmra.mrb[0].mxu0 %v539
    %v774 = vpop.f32.mrb[0].mxu0
    %v775 = vadd.f32 0.0, %v774
    %v776 = vpop.f32.mrb[0].mxu0
    %v777 = vadd.f32 0.0, %v776
    %778 = vdwg.mxu0
    %779 = vmatprep.subr.mxu0 %v161
    %780 = vmatpush1.msra.mxu0 %v160
    %781 = vmatprep.subr.mxu0 %v564
    %782 = vmatpush1.msra.mxu0 %v561
    %783 = vmatprep.subr.mxu0 0.0
    %784 = vmatpush1.msra.mxu0 0.0
    %785 = vmatprep.subr.mxu0 0.0
    %786 = vmatpush1.msra.mxu0 0.0
    %787 = vmatprep.subr.mxu0 0.0
    %788 = vmatpush1.msra.mxu0 0.0
    %789 = vmatprep.subr.mxu0 0.0
    %790 = vmatpush1.msra.mxu0 0.0
    %791 = vmatprep.subr.mxu0 0.0
    %792 = vmatpush1.msra.mxu0 0.0
    %793 = vmatprep.subr.mxu0 0.0
    %794 = vmatpush1.msra.mxu0 0.0
    %795 = vmatprep.subr.mxu0 0.0
    %796 = vmatpush1.msra.mxu0 0.0
    %797 = vmatprep.subr.mxu0 0.0
    %798 = vmatpush1.msra.mxu0 0.0
    %799 = vmatprep.subr.mxu0 0.0
    %800 = vmatpush1.msra.mxu0 0.0
    %801 = vmatprep.subr.mxu0 0.0
    %802 = vmatpush1.msra.mxu0 0.0
    %803 = vmatprep.subr.mxu0 0.0
    %804 = vmatpush1.msra.mxu0 0.0
    %805 = vmatprep.subr.mxu0 0.0
    %806 = vmatpush1.msra.mxu0 0.0
    %807 = vmatprep.subr.mxu0 0.0
    %808 = vmatpush1.msra.mxu0 0.0
    %809 = vmatprep.subr.mxu0 0.0
    %810 = vmatpush1.msra.mxu0 0.0
    %811 = vmatprep.subr.mxu0 0.0
    %812 = vmatpush1.msra.mxu0 0.0
    %813 = vmatprep.subr.mxu0 0.0
    %814 = vmatpush1.msra.mxu0 0.0
    %815 = vmatprep.subr.mxu0 0.0
    %816 = vmatpush1.msra.mxu0 0.0
    %817 = vmatprep.subr.mxu0 0.0
    %818 = vmatpush1.msra.mxu0 0.0
    %819 = vmatprep.subr.mxu0 0.0
    %820 = vmatpush1.msra.mxu0 0.0
    %821 = vmatprep.subr.mxu0 0.0
    %822 = vmatpush1.msra.mxu0 0.0
    %823 = vmatprep.subr.mxu0 0.0
    %824 = vmatpush1.msra.mxu0 0.0
    %825 = vmatprep.subr.mxu0 0.0
    %826 = vmatpush1.msra.mxu0 0.0
    %827 = vmatprep.subr.mxu0 0.0
    %828 = vmatpush1.msra.mxu0 0.0
    %829 = vmatprep.subr.mxu0 0.0
    %830 = vmatpush1.msra.mxu0 0.0
    %831 = vmatprep.subr.mxu0 0.0
    %832 = vmatpush1.msra.mxu0 0.0
    %833 = vmatprep.subr.mxu0 0.0
    %834 = vmatpush1.msra.mxu0 0.0
    %835 = vmatprep.subr.mxu0 0.0
    %836 = vmatpush1.msra.mxu0 0.0
    %837 = vmatprep.subr.mxu0 0.0
    %838 = vmatpush1.msra.mxu0 0.0
    %839 = vmatprep.subr.mxu0 0.0
    %840 = vmatpush1.msra.mxu0 0.0
    %841 = vmatprep.subr.mxu0 0.0
    %842 = vmatpush1.msra.mxu0 0.0
    %843 = vmatprep.mubr.f32.mxu0 0.0
    %844 = vmatmul.mubr.f32.gmra.mrb[0].mxu0 %v539
    %v845 = vpop.f32.mrb[0].mxu0
    %v846 = vadd.f32 0.0, %v845
    %v847 = vpop.f32.mrb[0].mxu0
    %v848 = vadd.f32 0.0, %v847
    %849 = vdwg.mxu0
    %vm850 = vcmp.ge.f32.partialorder %v633, 0.0
    %vm851 = vcmp.ge.f32.partialorder %v635, 0.0
    %vm852 = vcmp.ge.f32.partialorder %v704, 0.0
    %vm853 = vcmp.ge.f32.partialorder %v706, 0.0
    %vm854 = vcmp.ge.f32.partialorder %v775, 0.0
    %vm855 = vcmp.ge.f32.partialorder %v777, 0.0
    %vm856 = vcmp.ge.f32.partialorder %v846, 0.0
    %vm857 = vcmp.ge.f32.partialorder %v848, 0.0
    %v858 = vsel %vm850, 0.007, -0.007
    %v859 = vsel %vm851, 0.007, -0.007
    %v860 = vsel %vm852, 0.007, -0.007
    %v861 = vsel %vm853, 0.007, -0.007
    %v862 = vsel %vm854, 0.007, -0.007
    %v863 = vsel %vm855, 0.007, -0.007
    %v864 = vsel %vm856, 0.007, -0.007
    %v865 = vsel %vm857, 0.007, -0.007
    %v874 = vcombine.low %v858, %v859
    %v875 = vcombine.low %v860, %v861
    %v877 = vunpack.c.l.s4 1983009808
    %v878 = vunpack.c.0.s8 %v877
    %v879 = vlaneseq
    %v880 = vshrl.u32 %v879, 7
    %v881 = vsub.s32 %v878, %v880
    %v882 = vrot.slane %v874, %v881
    %v884 = vunpack.c.l.s4 1983009808
    %v885 = vunpack.c.0.s8 %v884
    %v886 = vlaneseq
    %v887 = vshrl.u32 %v886, 7
    %v888 = vsub.s32 %v885, %v887
    %v889 = vrot.slane %v875, %v888
    %v890 = vcombine.low %v882, %v889
    %v891 = vcombine.low %v862, %v863
    %v892 = vcombine.low %v864, %v865
    %v894 = vunpack.c.l.s4 1983009808
    %v895 = vunpack.c.0.s8 %v894
    %v896 = vlaneseq
    %v897 = vshrl.u32 %v896, 7
    %v898 = vsub.s32 %v895, %v897
    %v899 = vrot.slane %v891, %v898
    %v901 = vunpack.c.l.s4 1983009808
    %v902 = vunpack.c.0.s8 %v901
    %v903 = vlaneseq
    %v904 = vshrl.u32 %v903, 7
    %v905 = vsub.s32 %v902, %v904
    %v906 = vrot.slane %v892, %v905
    %v907 = vcombine.low %v899, %v906
    %v910 = vadd.f32 %v198, %v890
    %v911 = vadd.f32 %v199, %v907
    %v912 = vmax.f32 %v910, %v188
    %v913 = vmax.f32 %v911, %v189
    %v914 = vmin.f32 %v912, %v192
    %v915 = vmin.f32 %v913, %v193
    %v918 = vcombine.high %v914, %v914
    %v920 = vunpack.c.l.s4 1983009808
    %v921 = vunpack.c.0.s8 %v920
    %v922 = vlaneseq
    %v923 = vshrl.u32 %v922, 7
    %v924 = vsub.s32 %v921, %v923
    %v925 = vrot.slane %v914, %v924
    %v927 = vunpack.c.l.s4 1983009808
    %v928 = vunpack.c.0.s8 %v927
    %v929 = vlaneseq
    %v930 = vshrl.u32 %v929, 7
    %v931 = vsub.s32 %v928, %v930
    %v932 = vrot.slane %v918, %v931
    %v933 = vcombine.high %v925, %v925
    %v934 = vcombine.high %v932, %v932
    %v935 = vcombine.high %v915, %v915
    %v937 = vunpack.c.l.s4 1983009808
    %v938 = vunpack.c.0.s8 %v937
    %v939 = vlaneseq
    %v940 = vshrl.u32 %v939, 7
    %v941 = vsub.s32 %v938, %v940
    %v942 = vrot.slane %v915, %v941
    %v944 = vunpack.c.l.s4 1983009808
    %v945 = vunpack.c.0.s8 %v944
    %v946 = vlaneseq
    %v947 = vshrl.u32 %v946, 7
    %v948 = vsub.s32 %v945, %v947
    %v949 = vrot.slane %v935, %v948
    %v950 = vcombine.high %v942, %v942
    %v951 = vcombine.high %v949, %v949
    %960 = vmatprep.subr.mxu0 0.0
    %961 = vmatpush1.msra.mxu0 %v26
    %962 = vmatprep.subr.mxu0 0.0
    %963 = vmatpush1.msra.mxu0 %v27
    %964 = vmatprep.subr.mxu0 0.0
    %965 = vmatpush1.msra.mxu0 %v28
    %966 = vmatprep.subr.mxu0 0.0
    %967 = vmatpush1.msra.mxu0 %v29
    %968 = vmatprep.subr.mxu0 0.0
    %969 = vmatpush1.msra.mxu0 %v30
    %970 = vmatprep.subr.mxu0 0.0
    %971 = vmatpush1.msra.mxu0 %v31
    %972 = vmatprep.subr.mxu0 0.0
    %973 = vmatpush1.msra.mxu0 %v32
    %974 = vmatprep.subr.mxu0 0.0
    %975 = vmatpush1.msra.mxu0 %v33
    %976 = vmatprep.subr.mxu0 0.0
    %977 = vmatpush1.msra.mxu0 %v34
    %978 = vmatprep.subr.mxu0 0.0
    %979 = vmatpush1.msra.mxu0 %v35
    %980 = vmatprep.subr.mxu0 0.0
    %981 = vmatpush1.msra.mxu0 %v36
    %982 = vmatprep.subr.mxu0 0.0
    %983 = vmatpush1.msra.mxu0 %v37
    %984 = vmatprep.subr.mxu0 0.0
    %985 = vmatpush1.msra.mxu0 %v38
    %986 = vmatprep.subr.mxu0 0.0
    %987 = vmatpush1.msra.mxu0 %v39
    %988 = vmatprep.subr.mxu0 0.0
    %989 = vmatpush1.msra.mxu0 %v40
    %990 = vmatprep.subr.mxu0 0.0
    %991 = vmatpush1.msra.mxu0 %v41
    %992 = vmatprep.subr.mxu0 0.0
    %993 = vmatpush1.msra.mxu0 %v42
    %994 = vmatprep.subr.mxu0 0.0
    %995 = vmatpush1.msra.mxu0 %v43
    %996 = vmatprep.subr.mxu0 0.0
    %997 = vmatpush1.msra.mxu0 %v44
    %998 = vmatprep.subr.mxu0 0.0
    %999 = vmatpush1.msra.mxu0 %v45
    %1000 = vmatprep.subr.mxu0 0.0
    %1001 = vmatpush1.msra.mxu0 %v46
    %1002 = vmatprep.subr.mxu0 0.0
    %1003 = vmatpush1.msra.mxu0 %v47
    %1004 = vmatprep.subr.mxu0 0.0
    %1005 = vmatpush1.msra.mxu0 %v48
    %1006 = vmatprep.subr.mxu0 0.0
    %1007 = vmatpush1.msra.mxu0 %v49
    %1008 = vmatprep.subr.mxu0 0.0
    %1009 = vmatpush1.msra.mxu0 %v50
    %1010 = vmatprep.subr.mxu0 0.0
    %1011 = vmatpush1.msra.mxu0 %v51
    %1012 = vmatprep.subr.mxu0 0.0
    %1013 = vmatpush1.msra.mxu0 %v52
    %1014 = vmatprep.subr.mxu0 0.0
    %1015 = vmatpush1.msra.mxu0 %v53
    %1016 = vmatprep.subr.mxu0 0.0
    %1017 = vmatpush1.msra.mxu0 %v54
    %1018 = vmatprep.subr.mxu0 0.0
    %1019 = vmatpush1.msra.mxu0 %v55
    %1020 = vmatprep.subr.mxu0 0.0
    %1021 = vmatpush1.msra.mxu0 %v56
    %1022 = vmatprep.subr.mxu0 0.0
    %1023 = vmatpush1.msra.mxu0 %v57
    %1024 = vmatprep.mubr.f32.mxu0 %v933
    %1025 = vmatmul.mubr.f32.gmra.mrb[0].mxu0 %v925
    %v1026 = vpop.f32.mrb[0].mxu0
    %v1027 = vadd.f32 %v184, %v1026
    %v1028 = vpop.f32.mrb[0].mxu0
    %1029 = vdwg.mxu0
    %1030 = vmatprep.subr.mxu0 0.0
    %1031 = vmatpush1.msra.mxu0 %v58
    %1032 = vmatprep.subr.mxu0 0.0
    %1033 = vmatpush1.msra.mxu0 %v59
    %1034 = vmatprep.subr.mxu0 0.0
    %1035 = vmatpush1.msra.mxu0 %v60
    %1036 = vmatprep.subr.mxu0 0.0
    %1037 = vmatpush1.msra.mxu0 %v61
    %1038 = vmatprep.subr.mxu0 0.0
    %1039 = vmatpush1.msra.mxu0 %v62
    %1040 = vmatprep.subr.mxu0 0.0
    %1041 = vmatpush1.msra.mxu0 %v63
    %1042 = vmatprep.subr.mxu0 0.0
    %1043 = vmatpush1.msra.mxu0 %v64
    %1044 = vmatprep.subr.mxu0 0.0
    %1045 = vmatpush1.msra.mxu0 %v65
    %1046 = vmatprep.subr.mxu0 0.0
    %1047 = vmatpush1.msra.mxu0 %v66
    %1048 = vmatprep.subr.mxu0 0.0
    %1049 = vmatpush1.msra.mxu0 %v67
    %1050 = vmatprep.subr.mxu0 0.0
    %1051 = vmatpush1.msra.mxu0 %v68
    %1052 = vmatprep.subr.mxu0 0.0
    %1053 = vmatpush1.msra.mxu0 %v69
    %1054 = vmatprep.subr.mxu0 0.0
    %1055 = vmatpush1.msra.mxu0 %v70
    %1056 = vmatprep.subr.mxu0 0.0
    %1057 = vmatpush1.msra.mxu0 %v71
    %1058 = vmatprep.subr.mxu0 0.0
    %1059 = vmatpush1.msra.mxu0 %v72
    %1060 = vmatprep.subr.mxu0 0.0
    %1061 = vmatpush1.msra.mxu0 %v73
    %1062 = vmatprep.subr.mxu0 0.0
    %1063 = vmatpush1.msra.mxu0 %v74
    %1064 = vmatprep.subr.mxu0 0.0
    %1065 = vmatpush1.msra.mxu0 %v75
    %1066 = vmatprep.subr.mxu0 0.0
    %1067 = vmatpush1.msra.mxu0 %v76
    %1068 = vmatprep.subr.mxu0 0.0
    %1069 = vmatpush1.msra.mxu0 %v77
    %1070 = vmatprep.subr.mxu0 0.0
    %1071 = vmatpush1.msra.mxu0 %v78
    %1072 = vmatprep.subr.mxu0 0.0
    %1073 = vmatpush1.msra.mxu0 %v79
    %1074 = vmatprep.subr.mxu0 0.0
    %1075 = vmatpush1.msra.mxu0 %v80
    %1076 = vmatprep.subr.mxu0 0.0
    %1077 = vmatpush1.msra.mxu0 %v81
    %1078 = vmatprep.subr.mxu0 0.0
    %1079 = vmatpush1.msra.mxu0 %v82
    %1080 = vmatprep.subr.mxu0 0.0
    %1081 = vmatpush1.msra.mxu0 %v83
    %1082 = vmatprep.subr.mxu0 0.0
    %1083 = vmatpush1.msra.mxu0 %v84
    %1084 = vmatprep.subr.mxu0 0.0
    %1085 = vmatpush1.msra.mxu0 %v85
    %1086 = vmatprep.subr.mxu0 0.0
    %1087 = vmatpush1.msra.mxu0 %v86
    %1088 = vmatprep.subr.mxu0 0.0
    %1089 = vmatpush1.msra.mxu0 %v87
    %1090 = vmatprep.subr.mxu0 0.0
    %1091 = vmatpush1.msra.mxu0 %v88
    %1092 = vmatprep.subr.mxu0 0.0
    %1093 = vmatpush1.msra.mxu0 %v89
    %1094 = vmatprep.mubr.f32.mxu0 %v934
    %1095 = vmatmul.mubr.f32.gmra.mrb[0].mxu0 %v932
    %v1096 = vpop.f32.mrb[0].mxu0
    %v1097 = vadd.f32 %v1027, %v1096
    %v1098 = vpop.f32.mrb[0].mxu0
    %1099 = vdwg.mxu0
    %1100 = vmatprep.subr.mxu0 0.0
    %1101 = vmatpush1.msra.mxu0 %v90
    %1102 = vmatprep.subr.mxu0 0.0
    %1103 = vmatpush1.msra.mxu0 %v91
    %1104 = vmatprep.subr.mxu0 0.0
    %1105 = vmatpush1.msra.mxu0 %v92
    %1106 = vmatprep.subr.mxu0 0.0
    %1107 = vmatpush1.msra.mxu0 %v93
    %1108 = vmatprep.subr.mxu0 0.0
    %1109 = vmatpush1.msra.mxu0 %v94
    %1110 = vmatprep.subr.mxu0 0.0
    %1111 = vmatpush1.msra.mxu0 %v95
    %1112 = vmatprep.subr.mxu0 0.0
    %1113 = vmatpush1.msra.mxu0 %v96
    %1114 = vmatprep.subr.mxu0 0.0
    %1115 = vmatpush1.msra.mxu0 %v97
    %1116 = vmatprep.subr.mxu0 0.0
    %1117 = vmatpush1.msra.mxu0 %v98
    %1118 = vmatprep.subr.mxu0 0.0
    %1119 = vmatpush1.msra.mxu0 %v99
    %1120 = vmatprep.subr.mxu0 0.0
    %1121 = vmatpush1.msra.mxu0 %v100
    %1122 = vmatprep.subr.mxu0 0.0
    %1123 = vmatpush1.msra.mxu0 %v101
    %1124 = vmatprep.subr.mxu0 0.0
    %1125 = vmatpush1.msra.mxu0 %v102
    %1126 = vmatprep.subr.mxu0 0.0
    %1127 = vmatpush1.msra.mxu0 %v103
    %1128 = vmatprep.subr.mxu0 0.0
    %1129 = vmatpush1.msra.mxu0 %v104
    %1130 = vmatprep.subr.mxu0 0.0
    %1131 = vmatpush1.msra.mxu0 %v105
    %1132 = vmatprep.subr.mxu0 0.0
    %1133 = vmatpush1.msra.mxu0 %v106
    %1134 = vmatprep.subr.mxu0 0.0
    %1135 = vmatpush1.msra.mxu0 %v107
    %1136 = vmatprep.subr.mxu0 0.0
    %1137 = vmatpush1.msra.mxu0 %v108
    %1138 = vmatprep.subr.mxu0 0.0
    %1139 = vmatpush1.msra.mxu0 %v109
    %1140 = vmatprep.subr.mxu0 0.0
    %1141 = vmatpush1.msra.mxu0 %v110
    %1142 = vmatprep.subr.mxu0 0.0
    %1143 = vmatpush1.msra.mxu0 %v111
    %1144 = vmatprep.subr.mxu0 0.0
    %1145 = vmatpush1.msra.mxu0 %v112
    %1146 = vmatprep.subr.mxu0 0.0
    %1147 = vmatpush1.msra.mxu0 %v113
    %1148 = vmatprep.subr.mxu0 0.0
    %1149 = vmatpush1.msra.mxu0 %v114
    %1150 = vmatprep.subr.mxu0 0.0
    %1151 = vmatpush1.msra.mxu0 %v115
    %1152 = vmatprep.subr.mxu0 0.0
    %1153 = vmatpush1.msra.mxu0 %v116
    %1154 = vmatprep.subr.mxu0 0.0
    %1155 = vmatpush1.msra.mxu0 %v117
    %1156 = vmatprep.subr.mxu0 0.0
    %1157 = vmatpush1.msra.mxu0 %v118
    %1158 = vmatprep.subr.mxu0 0.0
    %1159 = vmatpush1.msra.mxu0 %v119
    %1160 = vmatprep.subr.mxu0 0.0
    %1161 = vmatpush1.msra.mxu0 %v120
    %1162 = vmatprep.subr.mxu0 0.0
    %1163 = vmatpush1.msra.mxu0 %v121
    %1164 = vmatprep.mubr.f32.mxu0 %v950
    %1165 = vmatmul.mubr.f32.gmra.mrb[0].mxu0 %v942
    %v1166 = vpop.f32.mrb[0].mxu0
    %v1167 = vadd.f32 %v1097, %v1166
    %v1168 = vpop.f32.mrb[0].mxu0
    %1169 = vdwg.mxu0
    %1170 = vmatprep.subr.mxu0 0.0
    %1171 = vmatpush1.msra.mxu0 %v122
    %1172 = vmatprep.subr.mxu0 0.0
    %1173 = vmatpush1.msra.mxu0 %v123
    %1174 = vmatprep.subr.mxu0 0.0
    %1175 = vmatpush1.msra.mxu0 %v124
    %1176 = vmatprep.subr.mxu0 0.0
    %1177 = vmatpush1.msra.mxu0 %v125
    %1178 = vmatprep.subr.mxu0 0.0
    %1179 = vmatpush1.msra.mxu0 %v126
    %1180 = vmatprep.subr.mxu0 0.0
    %1181 = vmatpush1.msra.mxu0 %v127
    %1182 = vmatprep.subr.mxu0 0.0
    %1183 = vmatpush1.msra.mxu0 %v128
    %1184 = vmatprep.subr.mxu0 0.0
    %1185 = vmatpush1.msra.mxu0 %v129
    %1186 = vmatprep.subr.mxu0 0.0
    %1187 = vmatpush1.msra.mxu0 %v130
    %1188 = vmatprep.subr.mxu0 0.0
    %1189 = vmatpush1.msra.mxu0 %v131
    %1190 = vmatprep.subr.mxu0 0.0
    %1191 = vmatpush1.msra.mxu0 %v132
    %1192 = vmatprep.subr.mxu0 0.0
    %1193 = vmatpush1.msra.mxu0 %v133
    %1194 = vmatprep.subr.mxu0 0.0
    %1195 = vmatpush1.msra.mxu0 %v134
    %1196 = vmatprep.subr.mxu0 0.0
    %1197 = vmatpush1.msra.mxu0 %v135
    %1198 = vmatprep.subr.mxu0 0.0
    %1199 = vmatpush1.msra.mxu0 %v136
    %1200 = vmatprep.subr.mxu0 0.0
    %1201 = vmatpush1.msra.mxu0 %v137
    %1202 = vmatprep.subr.mxu0 0.0
    %1203 = vmatpush1.msra.mxu0 %v138
    %1204 = vmatprep.subr.mxu0 0.0
    %1205 = vmatpush1.msra.mxu0 %v139
    %1206 = vmatprep.subr.mxu0 0.0
    %1207 = vmatpush1.msra.mxu0 %v140
    %1208 = vmatprep.subr.mxu0 0.0
    %1209 = vmatpush1.msra.mxu0 %v141
    %1210 = vmatprep.subr.mxu0 0.0
    %1211 = vmatpush1.msra.mxu0 %v142
    %1212 = vmatprep.subr.mxu0 0.0
    %1213 = vmatpush1.msra.mxu0 %v143
    %1214 = vmatprep.subr.mxu0 0.0
    %1215 = vmatpush1.msra.mxu0 %v144
    %1216 = vmatprep.subr.mxu0 0.0
    %1217 = vmatpush1.msra.mxu0 %v145
    %1218 = vmatprep.subr.mxu0 0.0
    %1219 = vmatpush1.msra.mxu0 %v146
    %1220 = vmatprep.subr.mxu0 0.0
    %1221 = vmatpush1.msra.mxu0 %v147
    %1222 = vmatprep.subr.mxu0 0.0
    %1223 = vmatpush1.msra.mxu0 %v148
    %1224 = vmatprep.subr.mxu0 0.0
    %1225 = vmatpush1.msra.mxu0 %v149
    %1226 = vmatprep.subr.mxu0 0.0
    %1227 = vmatpush1.msra.mxu0 %v150
    %1228 = vmatprep.subr.mxu0 0.0
    %1229 = vmatpush1.msra.mxu0 %v151
    %1230 = vmatprep.subr.mxu0 0.0
    %1231 = vmatpush1.msra.mxu0 %v152
    %1232 = vmatprep.subr.mxu0 0.0
    %1233 = vmatpush1.msra.mxu0 %v153
    %1234 = vmatprep.mubr.f32.mxu0 %v951
    %1235 = vmatmul.mubr.f32.gmra.mrb[0].mxu0 %v949
    %v1236 = vpop.f32.mrb[0].mxu0
    %v1237 = vadd.f32 %v1167, %v1236
    %v1238 = vpop.f32.mrb[0].mxu0
    %1239 = vdwg.mxu0
    %v1240 = vsel %vm524, %v1237, -inf
    %1241 = vmax.xlane.f32.xlu0 %v1240
    %v1242 = vpop.xlane.xlu0 %1241
    %v1243 = vsub.f32 %v1237, %v1242
    %v1244 = vmul.f32 %v1243, 1.442695
    %v1245 = vpow.pop %v1244
    %v1246 = vsel %vm524, %v1245, 0.0
    %1247 = vadd.xlane.f32.xlu0 %v1246
    %v1248 = vpop.xlane.xlu0 %1247
    %v1249 = vrcp.pop %v1248
    %v1250 = vmul.f32 %v1245, %v1249
    %v1251 = vsub.f32 %v1250, %v178
    %v1253 = vsel %vm537, %v1251, 0
    %1255 = vmatprep.subr.mxu0 %v155
    %1256 = vmatpush1.msra.mxu0 %v154
    %1257 = vmatprep.subr.mxu0 %v546
    %1258 = vmatpush1.msra.mxu0 %v543
    %1259 = vmatprep.subr.mxu0 0.0
    %1260 = vmatpush1.msra.mxu0 0.0
    %1261 = vmatprep.subr.mxu0 0.0
    %1262 = vmatpush1.msra.mxu0 0.0
    %1263 = vmatprep.subr.mxu0 0.0
    %1264 = vmatpush1.msra.mxu0 0.0
    %1265 = vmatprep.subr.mxu0 0.0
    %1266 = vmatpush1.msra.mxu0 0.0
    %1267 = vmatprep.subr.mxu0 0.0
    %1268 = vmatpush1.msra.mxu0 0.0
    %1269 = vmatprep.subr.mxu0 0.0
    %1270 = vmatpush1.msra.mxu0 0.0
    %1271 = vmatprep.subr.mxu0 0.0
    %1272 = vmatpush1.msra.mxu0 0.0
    %1273 = vmatprep.subr.mxu0 0.0
    %1274 = vmatpush1.msra.mxu0 0.0
    %1275 = vmatprep.subr.mxu0 0.0
    %1276 = vmatpush1.msra.mxu0 0.0
    %1277 = vmatprep.subr.mxu0 0.0
    %1278 = vmatpush1.msra.mxu0 0.0
    %1279 = vmatprep.subr.mxu0 0.0
    %1280 = vmatpush1.msra.mxu0 0.0
    %1281 = vmatprep.subr.mxu0 0.0
    %1282 = vmatpush1.msra.mxu0 0.0
    %1283 = vmatprep.subr.mxu0 0.0
    %1284 = vmatpush1.msra.mxu0 0.0
    %1285 = vmatprep.subr.mxu0 0.0
    %1286 = vmatpush1.msra.mxu0 0.0
    %1287 = vmatprep.subr.mxu0 0.0
    %1288 = vmatpush1.msra.mxu0 0.0
    %1289 = vmatprep.subr.mxu0 0.0
    %1290 = vmatpush1.msra.mxu0 0.0
    %1291 = vmatprep.subr.mxu0 0.0
    %1292 = vmatpush1.msra.mxu0 0.0
    %1293 = vmatprep.subr.mxu0 0.0
    %1294 = vmatpush1.msra.mxu0 0.0
    %1295 = vmatprep.subr.mxu0 0.0
    %1296 = vmatpush1.msra.mxu0 0.0
    %1297 = vmatprep.subr.mxu0 0.0
    %1298 = vmatpush1.msra.mxu0 0.0
    %1299 = vmatprep.subr.mxu0 0.0
    %1300 = vmatpush1.msra.mxu0 0.0
    %1301 = vmatprep.subr.mxu0 0.0
    %1302 = vmatpush1.msra.mxu0 0.0
    %1303 = vmatprep.subr.mxu0 0.0
    %1304 = vmatpush1.msra.mxu0 0.0
    %1305 = vmatprep.subr.mxu0 0.0
    %1306 = vmatpush1.msra.mxu0 0.0
    %1307 = vmatprep.subr.mxu0 0.0
    %1308 = vmatpush1.msra.mxu0 0.0
    %1309 = vmatprep.subr.mxu0 0.0
    %1310 = vmatpush1.msra.mxu0 0.0
    %1311 = vmatprep.subr.mxu0 0.0
    %1312 = vmatpush1.msra.mxu0 0.0
    %1313 = vmatprep.subr.mxu0 0.0
    %1314 = vmatpush1.msra.mxu0 0.0
    %1315 = vmatprep.subr.mxu0 0.0
    %1316 = vmatpush1.msra.mxu0 0.0
    %1317 = vmatprep.subr.mxu0 0.0
    %1318 = vmatpush1.msra.mxu0 0.0
    %1319 = vmatprep.mubr.f32.mxu0 0.0
    %1320 = vmatmul.mubr.f32.gmra.mrb[0].mxu0 %v1253
    %v1321 = vpop.f32.mrb[0].mxu0
    %v1322 = vadd.f32 0.0, %v1321
    %v1323 = vpop.f32.mrb[0].mxu0
    %v1324 = vadd.f32 0.0, %v1323
    %1325 = vdwg.mxu0
    %1326 = vmatprep.subr.mxu0 %v157
    %1327 = vmatpush1.msra.mxu0 %v156
    %1328 = vmatprep.subr.mxu0 %v552
    %1329 = vmatpush1.msra.mxu0 %v549
    %1330 = vmatprep.subr.mxu0 0.0
    %1331 = vmatpush1.msra.mxu0 0.0
    %1332 = vmatprep.subr.mxu0 0.0
    %1333 = vmatpush1.msra.mxu0 0.0
    %1334 = vmatprep.subr.mxu0 0.0
    %1335 = vmatpush1.msra.mxu0 0.0
    %1336 = vmatprep.subr.mxu0 0.0
    %1337 = vmatpush1.msra.mxu0 0.0
    %1338 = vmatprep.subr.mxu0 0.0
    %1339 = vmatpush1.msra.mxu0 0.0
    %1340 = vmatprep.subr.mxu0 0.0
    %1341 = vmatpush1.msra.mxu0 0.0
    %1342 = vmatprep.subr.mxu0 0.0
    %1343 = vmatpush1.msra.mxu0 0.0
    %1344 = vmatprep.subr.mxu0 0.0
    %1345 = vmatpush1.msra.mxu0 0.0
    %1346 = vmatprep.subr.mxu0 0.0
    %1347 = vmatpush1.msra.mxu0 0.0
    %1348 = vmatprep.subr.mxu0 0.0
    %1349 = vmatpush1.msra.mxu0 0.0
    %1350 = vmatprep.subr.mxu0 0.0
    %1351 = vmatpush1.msra.mxu0 0.0
    %1352 = vmatprep.subr.mxu0 0.0
    %1353 = vmatpush1.msra.mxu0 0.0
    %1354 = vmatprep.subr.mxu0 0.0
    %1355 = vmatpush1.msra.mxu0 0.0
    %1356 = vmatprep.subr.mxu0 0.0
    %1357 = vmatpush1.msra.mxu0 0.0
    %1358 = vmatprep.subr.mxu0 0.0
    %1359 = vmatpush1.msra.mxu0 0.0
    %1360 = vmatprep.subr.mxu0 0.0
    %1361 = vmatpush1.msra.mxu0 0.0
    %1362 = vmatprep.subr.mxu0 0.0
    %1363 = vmatpush1.msra.mxu0 0.0
    %1364 = vmatprep.subr.mxu0 0.0
    %1365 = vmatpush1.msra.mxu0 0.0
    %1366 = vmatprep.subr.mxu0 0.0
    %1367 = vmatpush1.msra.mxu0 0.0
    %1368 = vmatprep.subr.mxu0 0.0
    %1369 = vmatpush1.msra.mxu0 0.0
    %1370 = vmatprep.subr.mxu0 0.0
    %1371 = vmatpush1.msra.mxu0 0.0
    %1372 = vmatprep.subr.mxu0 0.0
    %1373 = vmatpush1.msra.mxu0 0.0
    %1374 = vmatprep.subr.mxu0 0.0
    %1375 = vmatpush1.msra.mxu0 0.0
    %1376 = vmatprep.subr.mxu0 0.0
    %1377 = vmatpush1.msra.mxu0 0.0
    %1378 = vmatprep.subr.mxu0 0.0
    %1379 = vmatpush1.msra.mxu0 0.0
    %1380 = vmatprep.subr.mxu0 0.0
    %1381 = vmatpush1.msra.mxu0 0.0
    %1382 = vmatprep.subr.mxu0 0.0
    %1383 = vmatpush1.msra.mxu0 0.0
    %1384 = vmatprep.subr.mxu0 0.0
    %1385 = vmatpush1.msra.mxu0 0.0
    %1386 = vmatprep.subr.mxu0 0.0
    %1387 = vmatpush1.msra.mxu0 0.0
    %1388 = vmatprep.subr.mxu0 0.0
    %1389 = vmatpush1.msra.mxu0 0.0
    %1390 = vmatprep.mubr.f32.mxu0 0.0
    %1391 = vmatmul.mubr.f32.gmra.mrb[0].mxu0 %v1253
    %v1392 = vpop.f32.mrb[0].mxu0
    %v1393 = vadd.f32 0.0, %v1392
    %v1394 = vpop.f32.mrb[0].mxu0
    %v1395 = vadd.f32 0.0, %v1394
    %1396 = vdwg.mxu0
    %1397 = vmatprep.subr.mxu0 %v159
    %1398 = vmatpush1.msra.mxu0 %v158
    %1399 = vmatprep.subr.mxu0 %v558
    %1400 = vmatpush1.msra.mxu0 %v555
    %1401 = vmatprep.subr.mxu0 0.0
    %1402 = vmatpush1.msra.mxu0 0.0
    %1403 = vmatprep.subr.mxu0 0.0
    %1404 = vmatpush1.msra.mxu0 0.0
    %1405 = vmatprep.subr.mxu0 0.0
    %1406 = vmatpush1.msra.mxu0 0.0
    %1407 = vmatprep.subr.mxu0 0.0
    %1408 = vmatpush1.msra.mxu0 0.0
    %1409 = vmatprep.subr.mxu0 0.0
    %1410 = vmatpush1.msra.mxu0 0.0
    %1411 = vmatprep.subr.mxu0 0.0
    %1412 = vmatpush1.msra.mxu0 0.0
    %1413 = vmatprep.subr.mxu0 0.0
    %1414 = vmatpush1.msra.mxu0 0.0
    %1415 = vmatprep.subr.mxu0 0.0
    %1416 = vmatpush1.msra.mxu0 0.0
    %1417 = vmatprep.subr.mxu0 0.0
    %1418 = vmatpush1.msra.mxu0 0.0
    %1419 = vmatprep.subr.mxu0 0.0
    %1420 = vmatpush1.msra.mxu0 0.0
    %1421 = vmatprep.subr.mxu0 0.0
    %1422 = vmatpush1.msra.mxu0 0.0
    %1423 = vmatprep.subr.mxu0 0.0
    %1424 = vmatpush1.msra.mxu0 0.0
    %1425 = vmatprep.subr.mxu0 0.0
    %1426 = vmatpush1.msra.mxu0 0.0
    %1427 = vmatprep.subr.mxu0 0.0
    %1428 = vmatpush1.msra.mxu0 0.0
    %1429 = vmatprep.subr.mxu0 0.0
    %1430 = vmatpush1.msra.mxu0 0.0
    %1431 = vmatprep.subr.mxu0 0.0
    %1432 = vmatpush1.msra.mxu0 0.0
    %1433 = vmatprep.subr.mxu0 0.0
    %1434 = vmatpush1.msra.mxu0 0.0
    %1435 = vmatprep.subr.mxu0 0.0
    %1436 = vmatpush1.msra.mxu0 0.0
    %1437 = vmatprep.subr.mxu0 0.0
    %1438 = vmatpush1.msra.mxu0 0.0
    %1439 = vmatprep.subr.mxu0 0.0
    %1440 = vmatpush1.msra.mxu0 0.0
    %1441 = vmatprep.subr.mxu0 0.0
    %1442 = vmatpush1.msra.mxu0 0.0
    %1443 = vmatprep.subr.mxu0 0.0
    %1444 = vmatpush1.msra.mxu0 0.0
    %1445 = vmatprep.subr.mxu0 0.0
    %1446 = vmatpush1.msra.mxu0 0.0
    %1447 = vmatprep.subr.mxu0 0.0
    %1448 = vmatpush1.msra.mxu0 0.0
    %1449 = vmatprep.subr.mxu0 0.0
    %1450 = vmatpush1.msra.mxu0 0.0
    %1451 = vmatprep.subr.mxu0 0.0
    %1452 = vmatpush1.msra.mxu0 0.0
    %1453 = vmatprep.subr.mxu0 0.0
    %1454 = vmatpush1.msra.mxu0 0.0
    %1455 = vmatprep.subr.mxu0 0.0
    %1456 = vmatpush1.msra.mxu0 0.0
    %1457 = vmatprep.subr.mxu0 0.0
    %1458 = vmatpush1.msra.mxu0 0.0
    %1459 = vmatprep.subr.mxu0 0.0
    %1460 = vmatpush1.msra.mxu0 0.0
    %1461 = vmatprep.mubr.f32.mxu0 0.0
    %1462 = vmatmul.mubr.f32.gmra.mrb[0].mxu0 %v1253
    %v1463 = vpop.f32.mrb[0].mxu0
    %v1464 = vadd.f32 0.0, %v1463
    %v1465 = vpop.f32.mrb[0].mxu0
    %v1466 = vadd.f32 0.0, %v1465
    %1467 = vdwg.mxu0
    %1468 = vmatprep.subr.mxu0 %v161
    %1469 = vmatpush1.msra.mxu0 %v160
    %1470 = vmatprep.subr.mxu0 %v564
    %1471 = vmatpush1.msra.mxu0 %v561
    %1472 = vmatprep.subr.mxu0 0.0
    %1473 = vmatpush1.msra.mxu0 0.0
    %1474 = vmatprep.subr.mxu0 0.0
    %1475 = vmatpush1.msra.mxu0 0.0
    %1476 = vmatprep.subr.mxu0 0.0
    %1477 = vmatpush1.msra.mxu0 0.0
    %1478 = vmatprep.subr.mxu0 0.0
    %1479 = vmatpush1.msra.mxu0 0.0
    %1480 = vmatprep.subr.mxu0 0.0
    %1481 = vmatpush1.msra.mxu0 0.0
    %1482 = vmatprep.subr.mxu0 0.0
    %1483 = vmatpush1.msra.mxu0 0.0
    %1484 = vmatprep.subr.mxu0 0.0
    %1485 = vmatpush1.msra.mxu0 0.0
    %1486 = vmatprep.subr.mxu0 0.0
    %1487 = vmatpush1.msra.mxu0 0.0
    %1488 = vmatprep.subr.mxu0 0.0
    %1489 = vmatpush1.msra.mxu0 0.0
    %1490 = vmatprep.subr.mxu0 0.0
    %1491 = vmatpush1.msra.mxu0 0.0
    %1492 = vmatprep.subr.mxu0 0.0
    %1493 = vmatpush1.msra.mxu0 0.0
    %1494 = vmatprep.subr.mxu0 0.0
    %1495 = vmatpush1.msra.mxu0 0.0
    %1496 = vmatprep.subr.mxu0 0.0
    %1497 = vmatpush1.msra.mxu0 0.0
    %1498 = vmatprep.subr.mxu0 0.0
    %1499 = vmatpush1.msra.mxu0 0.0
    %1500 = vmatprep.subr.mxu0 0.0
    %1501 = vmatpush1.msra.mxu0 0.0
    %1502 = vmatprep.subr.mxu0 0.0
    %1503 = vmatpush1.msra.mxu0 0.0
    %1504 = vmatprep.subr.mxu0 0.0
    %1505 = vmatpush1.msra.mxu0 0.0
    %1506 = vmatprep.subr.mxu0 0.0
    %1507 = vmatpush1.msra.mxu0 0.0
    %1508 = vmatprep.subr.mxu0 0.0
    %1509 = vmatpush1.msra.mxu0 0.0
    %1510 = vmatprep.subr.mxu0 0.0
    %1511 = vmatpush1.msra.mxu0 0.0
    %1512 = vmatprep.subr.mxu0 0.0
    %1513 = vmatpush1.msra.mxu0 0.0
    %1514 = vmatprep.subr.mxu0 0.0
    %1515 = vmatpush1.msra.mxu0 0.0
    %1516 = vmatprep.subr.mxu0 0.0
    %1517 = vmatpush1.msra.mxu0 0.0
    %1518 = vmatprep.subr.mxu0 0.0
    %1519 = vmatpush1.msra.mxu0 0.0
    %1520 = vmatprep.subr.mxu0 0.0
    %1521 = vmatpush1.msra.mxu0 0.0
    %1522 = vmatprep.subr.mxu0 0.0
    %1523 = vmatpush1.msra.mxu0 0.0
    %1524 = vmatprep.subr.mxu0 0.0
    %1525 = vmatpush1.msra.mxu0 0.0
    %1526 = vmatprep.subr.mxu0 0.0
    %1527 = vmatpush1.msra.mxu0 0.0
    %1528 = vmatprep.subr.mxu0 0.0
    %1529 = vmatpush1.msra.mxu0 0.0
    %1530 = vmatprep.subr.mxu0 0.0
    %1531 = vmatpush1.msra.mxu0 0.0
    %1532 = vmatprep.mubr.f32.mxu0 0.0
    %1533 = vmatmul.mubr.f32.gmra.mrb[0].mxu0 %v1253
    %v1534 = vpop.f32.mrb[0].mxu0
    %v1535 = vadd.f32 0.0, %v1534
    %v1536 = vpop.f32.mrb[0].mxu0
    %v1537 = vadd.f32 0.0, %v1536
    %1538 = vdwg.mxu0
    %vm1539 = vcmp.ge.f32.partialorder %v1322, 0.0
    %vm1540 = vcmp.ge.f32.partialorder %v1324, 0.0
    %vm1541 = vcmp.ge.f32.partialorder %v1393, 0.0
    %vm1542 = vcmp.ge.f32.partialorder %v1395, 0.0
    %vm1543 = vcmp.ge.f32.partialorder %v1464, 0.0
    %vm1544 = vcmp.ge.f32.partialorder %v1466, 0.0
    %vm1545 = vcmp.ge.f32.partialorder %v1535, 0.0
    %vm1546 = vcmp.ge.f32.partialorder %v1537, 0.0
    %v1547 = vsel %vm1539, 0.007, -0.007
    %v1548 = vsel %vm1540, 0.007, -0.007
    %v1549 = vsel %vm1541, 0.007, -0.007
    %v1550 = vsel %vm1542, 0.007, -0.007
    %v1551 = vsel %vm1543, 0.007, -0.007
    %v1552 = vsel %vm1544, 0.007, -0.007
    %v1553 = vsel %vm1545, 0.007, -0.007
    %v1554 = vsel %vm1546, 0.007, -0.007
    %v1563 = vcombine.low %v1547, %v1548
    %v1564 = vcombine.low %v1549, %v1550
    %v1566 = vunpack.c.l.s4 1983009808
    %v1567 = vunpack.c.0.s8 %v1566
    %v1568 = vlaneseq
    %v1569 = vshrl.u32 %v1568, 7
    %v1570 = vsub.s32 %v1567, %v1569
    %v1571 = vrot.slane %v1563, %v1570
    %v1573 = vunpack.c.l.s4 1983009808
    %v1574 = vunpack.c.0.s8 %v1573
    %v1575 = vlaneseq
    %v1576 = vshrl.u32 %v1575, 7
    %v1577 = vsub.s32 %v1574, %v1576
    %v1578 = vrot.slane %v1564, %v1577
    %v1579 = vcombine.low %v1571, %v1578
    %v1580 = vcombine.low %v1551, %v1552
    %v1581 = vcombine.low %v1553, %v1554
    %v1583 = vunpack.c.l.s4 1983009808
    %v1584 = vunpack.c.0.s8 %v1583
    %v1585 = vlaneseq
    %v1586 = vshrl.u32 %v1585, 7
    %v1587 = vsub.s32 %v1584, %v1586
    %v1588 = vrot.slane %v1580, %v1587
    %v1590 = vunpack.c.l.s4 1983009808
    %v1591 = vunpack.c.0.s8 %v1590
    %v1592 = vlaneseq
    %v1593 = vshrl.u32 %v1592, 7
    %v1594 = vsub.s32 %v1591, %v1593
    %v1595 = vrot.slane %v1581, %v1594
    %v1596 = vcombine.low %v1588, %v1595
    %v1599 = vadd.f32 %v914, %v1579
    %v1600 = vadd.f32 %v915, %v1596
    %v1601 = vmax.f32 %v1599, %v188
    %v1602 = vmax.f32 %v1600, %v189
    %v1603 = vmin.f32 %v1601, %v192
    %v1604 = vmin.f32 %v1602, %v193
    %v1607 = vcombine.high %v1603, %v1603
    %v1609 = vunpack.c.l.s4 1983009808
    %v1610 = vunpack.c.0.s8 %v1609
    %v1611 = vlaneseq
    %v1612 = vshrl.u32 %v1611, 7
    %v1613 = vsub.s32 %v1610, %v1612
    %v1614 = vrot.slane %v1603, %v1613
    %v1616 = vunpack.c.l.s4 1983009808
    %v1617 = vunpack.c.0.s8 %v1616
    %v1618 = vlaneseq
    %v1619 = vshrl.u32 %v1618, 7
    %v1620 = vsub.s32 %v1617, %v1619
    %v1621 = vrot.slane %v1607, %v1620
    %v1622 = vcombine.high %v1614, %v1614
    %v1623 = vcombine.high %v1621, %v1621
    %v1624 = vcombine.high %v1604, %v1604
    %v1626 = vunpack.c.l.s4 1983009808
    %v1627 = vunpack.c.0.s8 %v1626
    %v1628 = vlaneseq
    %v1629 = vshrl.u32 %v1628, 7
    %v1630 = vsub.s32 %v1627, %v1629
    %v1631 = vrot.slane %v1604, %v1630
    %v1633 = vunpack.c.l.s4 1983009808
    %v1634 = vunpack.c.0.s8 %v1633
    %v1635 = vlaneseq
    %v1636 = vshrl.u32 %v1635, 7
    %v1637 = vsub.s32 %v1634, %v1636
    %v1638 = vrot.slane %v1624, %v1637
    %v1639 = vcombine.high %v1631, %v1631
    %v1640 = vcombine.high %v1638, %v1638
    %1649 = vmatprep.subr.mxu0 0.0
    %1650 = vmatpush1.msra.mxu0 %v26
    %1651 = vmatprep.subr.mxu0 0.0
    %1652 = vmatpush1.msra.mxu0 %v27
    %1653 = vmatprep.subr.mxu0 0.0
    %1654 = vmatpush1.msra.mxu0 %v28
    %1655 = vmatprep.subr.mxu0 0.0
    %1656 = vmatpush1.msra.mxu0 %v29
    %1657 = vmatprep.subr.mxu0 0.0
    %1658 = vmatpush1.msra.mxu0 %v30
    %1659 = vmatprep.subr.mxu0 0.0
    %1660 = vmatpush1.msra.mxu0 %v31
    %1661 = vmatprep.subr.mxu0 0.0
    %1662 = vmatpush1.msra.mxu0 %v32
    %1663 = vmatprep.subr.mxu0 0.0
    %1664 = vmatpush1.msra.mxu0 %v33
    %1665 = vmatprep.subr.mxu0 0.0
    %1666 = vmatpush1.msra.mxu0 %v34
    %1667 = vmatprep.subr.mxu0 0.0
    %1668 = vmatpush1.msra.mxu0 %v35
    %1669 = vmatprep.subr.mxu0 0.0
    %1670 = vmatpush1.msra.mxu0 %v36
    %1671 = vmatprep.subr.mxu0 0.0
    %1672 = vmatpush1.msra.mxu0 %v37
    %1673 = vmatprep.subr.mxu0 0.0
    %1674 = vmatpush1.msra.mxu0 %v38
    %1675 = vmatprep.subr.mxu0 0.0
    %1676 = vmatpush1.msra.mxu0 %v39
    %1677 = vmatprep.subr.mxu0 0.0
    %1678 = vmatpush1.msra.mxu0 %v40
    %1679 = vmatprep.subr.mxu0 0.0
    %1680 = vmatpush1.msra.mxu0 %v41
    %1681 = vmatprep.subr.mxu0 0.0
    %1682 = vmatpush1.msra.mxu0 %v42
    %1683 = vmatprep.subr.mxu0 0.0
    %1684 = vmatpush1.msra.mxu0 %v43
    %1685 = vmatprep.subr.mxu0 0.0
    %1686 = vmatpush1.msra.mxu0 %v44
    %1687 = vmatprep.subr.mxu0 0.0
    %1688 = vmatpush1.msra.mxu0 %v45
    %1689 = vmatprep.subr.mxu0 0.0
    %1690 = vmatpush1.msra.mxu0 %v46
    %1691 = vmatprep.subr.mxu0 0.0
    %1692 = vmatpush1.msra.mxu0 %v47
    %1693 = vmatprep.subr.mxu0 0.0
    %1694 = vmatpush1.msra.mxu0 %v48
    %1695 = vmatprep.subr.mxu0 0.0
    %1696 = vmatpush1.msra.mxu0 %v49
    %1697 = vmatprep.subr.mxu0 0.0
    %1698 = vmatpush1.msra.mxu0 %v50
    %1699 = vmatprep.subr.mxu0 0.0
    %1700 = vmatpush1.msra.mxu0 %v51
    %1701 = vmatprep.subr.mxu0 0.0
    %1702 = vmatpush1.msra.mxu0 %v52
    %1703 = vmatprep.subr.mxu0 0.0
    %1704 = vmatpush1.msra.mxu0 %v53
    %1705 = vmatprep.subr.mxu0 0.0
    %1706 = vmatpush1.msra.mxu0 %v54
    %1707 = vmatprep.subr.mxu0 0.0
    %1708 = vmatpush1.msra.mxu0 %v55
    %1709 = vmatprep.subr.mxu0 0.0
    %1710 = vmatpush1.msra.mxu0 %v56
    %1711 = vmatprep.subr.mxu0 0.0
    %1712 = vmatpush1.msra.mxu0 %v57
    %1713 = vmatprep.mubr.f32.mxu0 %v1622
    %1714 = vmatmul.mubr.f32.gmra.mrb[0].mxu0 %v1614
    %v1715 = vpop.f32.mrb[0].mxu0
    %v1716 = vadd.f32 %v184, %v1715
    %v1717 = vpop.f32.mrb[0].mxu0
    %1718 = vdwg.mxu0
    %1719 = vmatprep.subr.mxu0 0.0
    %1720 = vmatpush1.msra.mxu0 %v58
    %1721 = vmatprep.subr.mxu0 0.0
    %1722 = vmatpush1.msra.mxu0 %v59
    %1723 = vmatprep.subr.mxu0 0.0
    %1724 = vmatpush1.msra.mxu0 %v60
    %1725 = vmatprep.subr.mxu0 0.0
    %1726 = vmatpush1.msra.mxu0 %v61
    %1727 = vmatprep.subr.mxu0 0.0
    %1728 = vmatpush1.msra.mxu0 %v62
    %1729 = vmatprep.subr.mxu0 0.0
    %1730 = vmatpush1.msra.mxu0 %v63
    %1731 = vmatprep.subr.mxu0 0.0
    %1732 = vmatpush1.msra.mxu0 %v64
    %1733 = vmatprep.subr.mxu0 0.0
    %1734 = vmatpush1.msra.mxu0 %v65
    %1735 = vmatprep.subr.mxu0 0.0
    %1736 = vmatpush1.msra.mxu0 %v66
    %1737 = vmatprep.subr.mxu0 0.0
    %1738 = vmatpush1.msra.mxu0 %v67
    %1739 = vmatprep.subr.mxu0 0.0
    %1740 = vmatpush1.msra.mxu0 %v68
    %1741 = vmatprep.subr.mxu0 0.0
    %1742 = vmatpush1.msra.mxu0 %v69
    %1743 = vmatprep.subr.mxu0 0.0
    %1744 = vmatpush1.msra.mxu0 %v70
    %1745 = vmatprep.subr.mxu0 0.0
    %1746 = vmatpush1.msra.mxu0 %v71
    %1747 = vmatprep.subr.mxu0 0.0
    %1748 = vmatpush1.msra.mxu0 %v72
    %1749 = vmatprep.subr.mxu0 0.0
    %1750 = vmatpush1.msra.mxu0 %v73
    %1751 = vmatprep.subr.mxu0 0.0
    %1752 = vmatpush1.msra.mxu0 %v74
    %1753 = vmatprep.subr.mxu0 0.0
    %1754 = vmatpush1.msra.mxu0 %v75
    %1755 = vmatprep.subr.mxu0 0.0
    %1756 = vmatpush1.msra.mxu0 %v76
    %1757 = vmatprep.subr.mxu0 0.0
    %1758 = vmatpush1.msra.mxu0 %v77
    %1759 = vmatprep.subr.mxu0 0.0
    %1760 = vmatpush1.msra.mxu0 %v78
    %1761 = vmatprep.subr.mxu0 0.0
    %1762 = vmatpush1.msra.mxu0 %v79
    %1763 = vmatprep.subr.mxu0 0.0
    %1764 = vmatpush1.msra.mxu0 %v80
    %1765 = vmatprep.subr.mxu0 0.0
    %1766 = vmatpush1.msra.mxu0 %v81
    %1767 = vmatprep.subr.mxu0 0.0
    %1768 = vmatpush1.msra.mxu0 %v82
    %1769 = vmatprep.subr.mxu0 0.0
    %1770 = vmatpush1.msra.mxu0 %v83
    %1771 = vmatprep.subr.mxu0 0.0
    %1772 = vmatpush1.msra.mxu0 %v84
    %1773 = vmatprep.subr.mxu0 0.0
    %1774 = vmatpush1.msra.mxu0 %v85
    %1775 = vmatprep.subr.mxu0 0.0
    %1776 = vmatpush1.msra.mxu0 %v86
    %1777 = vmatprep.subr.mxu0 0.0
    %1778 = vmatpush1.msra.mxu0 %v87
    %1779 = vmatprep.subr.mxu0 0.0
    %1780 = vmatpush1.msra.mxu0 %v88
    %1781 = vmatprep.subr.mxu0 0.0
    %1782 = vmatpush1.msra.mxu0 %v89
    %1783 = vmatprep.mubr.f32.mxu0 %v1623
    %1784 = vmatmul.mubr.f32.gmra.mrb[0].mxu0 %v1621
    %v1785 = vpop.f32.mrb[0].mxu0
    %v1786 = vadd.f32 %v1716, %v1785
    %v1787 = vpop.f32.mrb[0].mxu0
    %1788 = vdwg.mxu0
    %1789 = vmatprep.subr.mxu0 0.0
    %1790 = vmatpush1.msra.mxu0 %v90
    %1791 = vmatprep.subr.mxu0 0.0
    %1792 = vmatpush1.msra.mxu0 %v91
    %1793 = vmatprep.subr.mxu0 0.0
    %1794 = vmatpush1.msra.mxu0 %v92
    %1795 = vmatprep.subr.mxu0 0.0
    %1796 = vmatpush1.msra.mxu0 %v93
    %1797 = vmatprep.subr.mxu0 0.0
    %1798 = vmatpush1.msra.mxu0 %v94
    %1799 = vmatprep.subr.mxu0 0.0
    %1800 = vmatpush1.msra.mxu0 %v95
    %1801 = vmatprep.subr.mxu0 0.0
    %1802 = vmatpush1.msra.mxu0 %v96
    %1803 = vmatprep.subr.mxu0 0.0
    %1804 = vmatpush1.msra.mxu0 %v97
    %1805 = vmatprep.subr.mxu0 0.0
    %1806 = vmatpush1.msra.mxu0 %v98
    %1807 = vmatprep.subr.mxu0 0.0
    %1808 = vmatpush1.msra.mxu0 %v99
    %1809 = vmatprep.subr.mxu0 0.0
    %1810 = vmatpush1.msra.mxu0 %v100
    %1811 = vmatprep.subr.mxu0 0.0
    %1812 = vmatpush1.msra.mxu0 %v101
    %1813 = vmatprep.subr.mxu0 0.0
    %1814 = vmatpush1.msra.mxu0 %v102
    %1815 = vmatprep.subr.mxu0 0.0
    %1816 = vmatpush1.msra.mxu0 %v103
    %1817 = vmatprep.subr.mxu0 0.0
    %1818 = vmatpush1.msra.mxu0 %v104
    %1819 = vmatprep.subr.mxu0 0.0
    %1820 = vmatpush1.msra.mxu0 %v105
    %1821 = vmatprep.subr.mxu0 0.0
    %1822 = vmatpush1.msra.mxu0 %v106
    %1823 = vmatprep.subr.mxu0 0.0
    %1824 = vmatpush1.msra.mxu0 %v107
    %1825 = vmatprep.subr.mxu0 0.0
    %1826 = vmatpush1.msra.mxu0 %v108
    %1827 = vmatprep.subr.mxu0 0.0
    %1828 = vmatpush1.msra.mxu0 %v109
    %1829 = vmatprep.subr.mxu0 0.0
    %1830 = vmatpush1.msra.mxu0 %v110
    %1831 = vmatprep.subr.mxu0 0.0
    %1832 = vmatpush1.msra.mxu0 %v111
    %1833 = vmatprep.subr.mxu0 0.0
    %1834 = vmatpush1.msra.mxu0 %v112
    %1835 = vmatprep.subr.mxu0 0.0
    %1836 = vmatpush1.msra.mxu0 %v113
    %1837 = vmatprep.subr.mxu0 0.0
    %1838 = vmatpush1.msra.mxu0 %v114
    %1839 = vmatprep.subr.mxu0 0.0
    %1840 = vmatpush1.msra.mxu0 %v115
    %1841 = vmatprep.subr.mxu0 0.0
    %1842 = vmatpush1.msra.mxu0 %v116
    %1843 = vmatprep.subr.mxu0 0.0
    %1844 = vmatpush1.msra.mxu0 %v117
    %1845 = vmatprep.subr.mxu0 0.0
    %1846 = vmatpush1.msra.mxu0 %v118
    %1847 = vmatprep.subr.mxu0 0.0
    %1848 = vmatpush1.msra.mxu0 %v119
    %1849 = vmatprep.subr.mxu0 0.0
    %1850 = vmatpush1.msra.mxu0 %v120
    %1851 = vmatprep.subr.mxu0 0.0
    %1852 = vmatpush1.msra.mxu0 %v121
    %1853 = vmatprep.mubr.f32.mxu0 %v1639
    %1854 = vmatmul.mubr.f32.gmra.mrb[0].mxu0 %v1631
    %v1855 = vpop.f32.mrb[0].mxu0
    %v1856 = vadd.f32 %v1786, %v1855
    %v1857 = vpop.f32.mrb[0].mxu0
    %1858 = vdwg.mxu0
    %1859 = vmatprep.subr.mxu0 0.0
    %1860 = vmatpush1.msra.mxu0 %v122
    %1861 = vmatprep.subr.mxu0 0.0
    %1862 = vmatpush1.msra.mxu0 %v123
    %1863 = vmatprep.subr.mxu0 0.0
    %1864 = vmatpush1.msra.mxu0 %v124
    %1865 = vmatprep.subr.mxu0 0.0
    %1866 = vmatpush1.msra.mxu0 %v125
    %1867 = vmatprep.subr.mxu0 0.0
    %1868 = vmatpush1.msra.mxu0 %v126
    %1869 = vmatprep.subr.mxu0 0.0
    %1870 = vmatpush1.msra.mxu0 %v127
    %1871 = vmatprep.subr.mxu0 0.0
    %1872 = vmatpush1.msra.mxu0 %v128
    %1873 = vmatprep.subr.mxu0 0.0
    %1874 = vmatpush1.msra.mxu0 %v129
    %1875 = vmatprep.subr.mxu0 0.0
    %1876 = vmatpush1.msra.mxu0 %v130
    %1877 = vmatprep.subr.mxu0 0.0
    %1878 = vmatpush1.msra.mxu0 %v131
    %1879 = vmatprep.subr.mxu0 0.0
    %1880 = vmatpush1.msra.mxu0 %v132
    %1881 = vmatprep.subr.mxu0 0.0
    %1882 = vmatpush1.msra.mxu0 %v133
    %1883 = vmatprep.subr.mxu0 0.0
    %1884 = vmatpush1.msra.mxu0 %v134
    %1885 = vmatprep.subr.mxu0 0.0
    %1886 = vmatpush1.msra.mxu0 %v135
    %1887 = vmatprep.subr.mxu0 0.0
    %1888 = vmatpush1.msra.mxu0 %v136
    %1889 = vmatprep.subr.mxu0 0.0
    %1890 = vmatpush1.msra.mxu0 %v137
    %1891 = vmatprep.subr.mxu0 0.0
    %1892 = vmatpush1.msra.mxu0 %v138
    %1893 = vmatprep.subr.mxu0 0.0
    %1894 = vmatpush1.msra.mxu0 %v139
    %1895 = vmatprep.subr.mxu0 0.0
    %1896 = vmatpush1.msra.mxu0 %v140
    %1897 = vmatprep.subr.mxu0 0.0
    %1898 = vmatpush1.msra.mxu0 %v141
    %1899 = vmatprep.subr.mxu0 0.0
    %1900 = vmatpush1.msra.mxu0 %v142
    %1901 = vmatprep.subr.mxu0 0.0
    %1902 = vmatpush1.msra.mxu0 %v143
    %1903 = vmatprep.subr.mxu0 0.0
    %1904 = vmatpush1.msra.mxu0 %v144
    %1905 = vmatprep.subr.mxu0 0.0
    %1906 = vmatpush1.msra.mxu0 %v145
    %1907 = vmatprep.subr.mxu0 0.0
    %1908 = vmatpush1.msra.mxu0 %v146
    %1909 = vmatprep.subr.mxu0 0.0
    %1910 = vmatpush1.msra.mxu0 %v147
    %1911 = vmatprep.subr.mxu0 0.0
    %1912 = vmatpush1.msra.mxu0 %v148
    %1913 = vmatprep.subr.mxu0 0.0
    %1914 = vmatpush1.msra.mxu0 %v149
    %1915 = vmatprep.subr.mxu0 0.0
    %1916 = vmatpush1.msra.mxu0 %v150
    %1917 = vmatprep.subr.mxu0 0.0
    %1918 = vmatpush1.msra.mxu0 %v151
    %1919 = vmatprep.subr.mxu0 0.0
    %1920 = vmatpush1.msra.mxu0 %v152
    %1921 = vmatprep.subr.mxu0 0.0
    %1922 = vmatpush1.msra.mxu0 %v153
    %1923 = vmatprep.mubr.f32.mxu0 %v1640
    %1924 = vmatmul.mubr.f32.gmra.mrb[0].mxu0 %v1638
    %v1925 = vpop.f32.mrb[0].mxu0
    %v1926 = vadd.f32 %v1856, %v1925
    %v1927 = vpop.f32.mrb[0].mxu0
    %1928 = vdwg.mxu0
    %v1929 = vsel %vm524, %v1926, -inf
    %1930 = vmax.xlane.f32.xlu0 %v1929
    %v1931 = vpop.xlane.xlu0 %1930
    %v1932 = vsub.f32 %v1926, %v1931
    %v1933 = vmul.f32 %v1932, 1.442695
    %v1934 = vpow.pop %v1933
    %v1935 = vsel %vm524, %v1934, 0.0
    %1936 = vadd.xlane.f32.xlu0 %v1935
    %v1937 = vpop.xlane.xlu0 %1936
    %v1938 = vrcp.pop %v1937
    %v1939 = vmul.f32 %v1934, %v1938
    %v1940 = vsub.f32 %v1939, %v178
    %v1942 = vsel %vm537, %v1940, 0
    %1944 = vmatprep.subr.mxu0 %v155
    %1945 = vmatpush1.msra.mxu0 %v154
    %1946 = vmatprep.subr.mxu0 %v546
    %1947 = vmatpush1.msra.mxu0 %v543
    %1948 = vmatprep.subr.mxu0 0.0
    %1949 = vmatpush1.msra.mxu0 0.0
    %1950 = vmatprep.subr.mxu0 0.0
    %1951 = vmatpush1.msra.mxu0 0.0
    %1952 = vmatprep.subr.mxu0 0.0
    %1953 = vmatpush1.msra.mxu0 0.0
    %1954 = vmatprep.subr.mxu0 0.0
    %1955 = vmatpush1.msra.mxu0 0.0
    %1956 = vmatprep.subr.mxu0 0.0
    %1957 = vmatpush1.msra.mxu0 0.0
    %1958 = vmatprep.subr.mxu0 0.0
    %1959 = vmatpush1.msra.mxu0 0.0
    %1960 = vmatprep.subr.mxu0 0.0
    %1961 = vmatpush1.msra.mxu0 0.0
    %1962 = vmatprep.subr.mxu0 0.0
    %1963 = vmatpush1.msra.mxu0 0.0
    %1964 = vmatprep.subr.mxu0 0.0
    %1965 = vmatpush1.msra.mxu0 0.0
    %1966 = vmatprep.subr.mxu0 0.0
    %1967 = vmatpush1.msra.mxu0 0.0
    %1968 = vmatprep.subr.mxu0 0.0
    %1969 = vmatpush1.msra.mxu0 0.0
    %1970 = vmatprep.subr.mxu0 0.0
    %1971 = vmatpush1.msra.mxu0 0.0
    %1972 = vmatprep.subr.mxu0 0.0
    %1973 = vmatpush1.msra.mxu0 0.0
    %1974 = vmatprep.subr.mxu0 0.0
    %1975 = vmatpush1.msra.mxu0 0.0
    %1976 = vmatprep.subr.mxu0 0.0
    %1977 = vmatpush1.msra.mxu0 0.0
    %1978 = vmatprep.subr.mxu0 0.0
    %1979 = vmatpush1.msra.mxu0 0.0
    %1980 = vmatprep.subr.mxu0 0.0
    %1981 = vmatpush1.msra.mxu0 0.0
    %1982 = vmatprep.subr.mxu0 0.0
    %1983 = vmatpush1.msra.mxu0 0.0
    %1984 = vmatprep.subr.mxu0 0.0
    %1985 = vmatpush1.msra.mxu0 0.0
    %1986 = vmatprep.subr.mxu0 0.0
    %1987 = vmatpush1.msra.mxu0 0.0
    %1988 = vmatprep.subr.mxu0 0.0
    %1989 = vmatpush1.msra.mxu0 0.0
    %1990 = vmatprep.subr.mxu0 0.0
    %1991 = vmatpush1.msra.mxu0 0.0
    %1992 = vmatprep.subr.mxu0 0.0
    %1993 = vmatpush1.msra.mxu0 0.0
    %1994 = vmatprep.subr.mxu0 0.0
    %1995 = vmatpush1.msra.mxu0 0.0
    %1996 = vmatprep.subr.mxu0 0.0
    %1997 = vmatpush1.msra.mxu0 0.0
    %1998 = vmatprep.subr.mxu0 0.0
    %1999 = vmatpush1.msra.mxu0 0.0
    %2000 = vmatprep.subr.mxu0 0.0
    %2001 = vmatpush1.msra.mxu0 0.0
    %2002 = vmatprep.subr.mxu0 0.0
    %2003 = vmatpush1.msra.mxu0 0.0
    %2004 = vmatprep.subr.mxu0 0.0
    %2005 = vmatpush1.msra.mxu0 0.0
    %2006 = vmatprep.subr.mxu0 0.0
    %2007 = vmatpush1.msra.mxu0 0.0
    %2008 = vmatprep.mubr.f32.mxu0 0.0
    %2009 = vmatmul.mubr.f32.gmra.mrb[0].mxu0 %v1942
    %v2010 = vpop.f32.mrb[0].mxu0
    %v2011 = vadd.f32 0.0, %v2010
    %v2012 = vpop.f32.mrb[0].mxu0
    %v2013 = vadd.f32 0.0, %v2012
    %2014 = vdwg.mxu0
    %2015 = vmatprep.subr.mxu0 %v157
    %2016 = vmatpush1.msra.mxu0 %v156
    %2017 = vmatprep.subr.mxu0 %v552
    %2018 = vmatpush1.msra.mxu0 %v549
    %2019 = vmatprep.subr.mxu0 0.0
    %2020 = vmatpush1.msra.mxu0 0.0
    %2021 = vmatprep.subr.mxu0 0.0
    %2022 = vmatpush1.msra.mxu0 0.0
    %2023 = vmatprep.subr.mxu0 0.0
    %2024 = vmatpush1.msra.mxu0 0.0
    %2025 = vmatprep.subr.mxu0 0.0
    %2026 = vmatpush1.msra.mxu0 0.0
    %2027 = vmatprep.subr.mxu0 0.0
    %2028 = vmatpush1.msra.mxu0 0.0
    %2029 = vmatprep.subr.mxu0 0.0
    %2030 = vmatpush1.msra.mxu0 0.0
    %2031 = vmatprep.subr.mxu0 0.0
    %2032 = vmatpush1.msra.mxu0 0.0
    %2033 = vmatprep.subr.mxu0 0.0
    %2034 = vmatpush1.msra.mxu0 0.0
    %2035 = vmatprep.subr.mxu0 0.0
    %2036 = vmatpush1.msra.mxu0 0.0
    %2037 = vmatprep.subr.mxu0 0.0
    %2038 = vmatpush1.msra.mxu0 0.0
    %2039 = vmatprep.subr.mxu0 0.0
    %2040 = vmatpush1.msra.mxu0 0.0
    %2041 = vmatprep.subr.mxu0 0.0
    %2042 = vmatpush1.msra.mxu0 0.0
    %2043 = vmatprep.subr.mxu0 0.0
    %2044 = vmatpush1.msra.mxu0 0.0
    %2045 = vmatprep.subr.mxu0 0.0
    %2046 = vmatpush1.msra.mxu0 0.0
    %2047 = vmatprep.subr.mxu0 0.0
    %2048 = vmatpush1.msra.mxu0 0.0
    %2049 = vmatprep.subr.mxu0 0.0
    %2050 = vmatpush1.msra.mxu0 0.0
    %2051 = vmatprep.subr.mxu0 0.0
    %2052 = vmatpush1.msra.mxu0 0.0
    %2053 = vmatprep.subr.mxu0 0.0
    %2054 = vmatpush1.msra.mxu0 0.0
    %2055 = vmatprep.subr.mxu0 0.0
    %2056 = vmatpush1.msra.mxu0 0.0
    %2057 = vmatprep.subr.mxu0 0.0
    %2058 = vmatpush1.msra.mxu0 0.0
    %2059 = vmatprep.subr.mxu0 0.0
    %2060 = vmatpush1.msra.mxu0 0.0
    %2061 = vmatprep.subr.mxu0 0.0
    %2062 = vmatpush1.msra.mxu0 0.0
    %2063 = vmatprep.subr.mxu0 0.0
    %2064 = vmatpush1.msra.mxu0 0.0
    %2065 = vmatprep.subr.mxu0 0.0
    %2066 = vmatpush1.msra.mxu0 0.0
    %2067 = vmatprep.subr.mxu0 0.0
    %2068 = vmatpush1.msra.mxu0 0.0
    %2069 = vmatprep.subr.mxu0 0.0
    %2070 = vmatpush1.msra.mxu0 0.0
    %2071 = vmatprep.subr.mxu0 0.0
    %2072 = vmatpush1.msra.mxu0 0.0
    %2073 = vmatprep.subr.mxu0 0.0
    %2074 = vmatpush1.msra.mxu0 0.0
    %2075 = vmatprep.subr.mxu0 0.0
    %2076 = vmatpush1.msra.mxu0 0.0
    %2077 = vmatprep.subr.mxu0 0.0
    %2078 = vmatpush1.msra.mxu0 0.0
    %2079 = vmatprep.mubr.f32.mxu0 0.0
    %2080 = vmatmul.mubr.f32.gmra.mrb[0].mxu0 %v1942
    %v2081 = vpop.f32.mrb[0].mxu0
    %v2082 = vadd.f32 0.0, %v2081
    %v2083 = vpop.f32.mrb[0].mxu0
    %v2084 = vadd.f32 0.0, %v2083
    %2085 = vdwg.mxu0
    %2086 = vmatprep.subr.mxu0 %v159
    %2087 = vmatpush1.msra.mxu0 %v158
    %2088 = vmatprep.subr.mxu0 %v558
    %2089 = vmatpush1.msra.mxu0 %v555
    %2090 = vmatprep.subr.mxu0 0.0
    %2091 = vmatpush1.msra.mxu0 0.0
    %2092 = vmatprep.subr.mxu0 0.0
    %2093 = vmatpush1.msra.mxu0 0.0
    %2094 = vmatprep.subr.mxu0 0.0
    %2095 = vmatpush1.msra.mxu0 0.0
    %2096 = vmatprep.subr.mxu0 0.0
    %2097 = vmatpush1.msra.mxu0 0.0
    %2098 = vmatprep.subr.mxu0 0.0
    %2099 = vmatpush1.msra.mxu0 0.0
    %2100 = vmatprep.subr.mxu0 0.0
    %2101 = vmatpush1.msra.mxu0 0.0
    %2102 = vmatprep.subr.mxu0 0.0
    %2103 = vmatpush1.msra.mxu0 0.0
    %2104 = vmatprep.subr.mxu0 0.0
    %2105 = vmatpush1.msra.mxu0 0.0
    %2106 = vmatprep.subr.mxu0 0.0
    %2107 = vmatpush1.msra.mxu0 0.0
    %2108 = vmatprep.subr.mxu0 0.0
    %2109 = vmatpush1.msra.mxu0 0.0
    %2110 = vmatprep.subr.mxu0 0.0
    %2111 = vmatpush1.msra.mxu0 0.0
    %2112 = vmatprep.subr.mxu0 0.0
    %2113 = vmatpush1.msra.mxu0 0.0
    %2114 = vmatprep.subr.mxu0 0.0
    %2115 = vmatpush1.msra.mxu0 0.0
    %2116 = vmatprep.subr.mxu0 0.0
    %2117 = vmatpush1.msra.mxu0 0.0
    %2118 = vmatprep.subr.mxu0 0.0
    %2119 = vmatpush1.msra.mxu0 0.0
    %2120 = vmatprep.subr.mxu0 0.0
    %2121 = vmatpush1.msra.mxu0 0.0
    %2122 = vmatprep.subr.mxu0 0.0
    %2123 = vmatpush1.msra.mxu0 0.0
    %2124 = vmatprep.subr.mxu0 0.0
    %2125 = vmatpush1.msra.mxu0 0.0
    %2126 = vmatprep.subr.mxu0 0.0
    %2127 = vmatpush1.msra.mxu0 0.0
    %2128 = vmatprep.subr.mxu0 0.0
    %2129 = vmatpush1.msra.mxu0 0.0
    %2130 = vmatprep.subr.mxu0 0.0
    %2131 = vmatpush1.msra.mxu0 0.0
    %2132 = vmatprep.subr.mxu0 0.0
    %2133 = vmatpush1.msra.mxu0 0.0
    %2134 = vmatprep.subr.mxu0 0.0
    %2135 = vmatpush1.msra.mxu0 0.0
    %2136 = vmatprep.subr.mxu0 0.0
    %2137 = vmatpush1.msra.mxu0 0.0
    %2138 = vmatprep.subr.mxu0 0.0
    %2139 = vmatpush1.msra.mxu0 0.0
    %2140 = vmatprep.subr.mxu0 0.0
    %2141 = vmatpush1.msra.mxu0 0.0
    %2142 = vmatprep.subr.mxu0 0.0
    %2143 = vmatpush1.msra.mxu0 0.0
    %2144 = vmatprep.subr.mxu0 0.0
    %2145 = vmatpush1.msra.mxu0 0.0
    %2146 = vmatprep.subr.mxu0 0.0
    %2147 = vmatpush1.msra.mxu0 0.0
    %2148 = vmatprep.subr.mxu0 0.0
    %2149 = vmatpush1.msra.mxu0 0.0
    %2150 = vmatprep.mubr.f32.mxu0 0.0
    %2151 = vmatmul.mubr.f32.gmra.mrb[0].mxu0 %v1942
    %v2152 = vpop.f32.mrb[0].mxu0
    %v2153 = vadd.f32 0.0, %v2152
    %v2154 = vpop.f32.mrb[0].mxu0
    %v2155 = vadd.f32 0.0, %v2154
    %2156 = vdwg.mxu0
    %2157 = vmatprep.subr.mxu0 %v161
    %2158 = vmatpush1.msra.mxu0 %v160
    %2159 = vmatprep.subr.mxu0 %v564
    %2160 = vmatpush1.msra.mxu0 %v561
    %2161 = vmatprep.subr.mxu0 0.0
    %2162 = vmatpush1.msra.mxu0 0.0
    %2163 = vmatprep.subr.mxu0 0.0
    %2164 = vmatpush1.msra.mxu0 0.0
    %2165 = vmatprep.subr.mxu0 0.0
    %2166 = vmatpush1.msra.mxu0 0.0
    %2167 = vmatprep.subr.mxu0 0.0
    %2168 = vmatpush1.msra.mxu0 0.0
    %2169 = vmatprep.subr.mxu0 0.0
    %2170 = vmatpush1.msra.mxu0 0.0
    %2171 = vmatprep.subr.mxu0 0.0
    %2172 = vmatpush1.msra.mxu0 0.0
    %2173 = vmatprep.subr.mxu0 0.0
    %2174 = vmatpush1.msra.mxu0 0.0
    %2175 = vmatprep.subr.mxu0 0.0
    %2176 = vmatpush1.msra.mxu0 0.0
    %2177 = vmatprep.subr.mxu0 0.0
    %2178 = vmatpush1.msra.mxu0 0.0
    %2179 = vmatprep.subr.mxu0 0.0
    %2180 = vmatpush1.msra.mxu0 0.0
    %2181 = vmatprep.subr.mxu0 0.0
    %2182 = vmatpush1.msra.mxu0 0.0
    %2183 = vmatprep.subr.mxu0 0.0
    %2184 = vmatpush1.msra.mxu0 0.0
    %2185 = vmatprep.subr.mxu0 0.0
    %2186 = vmatpush1.msra.mxu0 0.0
    %2187 = vmatprep.subr.mxu0 0.0
    %2188 = vmatpush1.msra.mxu0 0.0
    %2189 = vmatprep.subr.mxu0 0.0
    %2190 = vmatpush1.msra.mxu0 0.0
    %2191 = vmatprep.subr.mxu0 0.0
    %2192 = vmatpush1.msra.mxu0 0.0
    %2193 = vmatprep.subr.mxu0 0.0
    %2194 = vmatpush1.msra.mxu0 0.0
    %2195 = vmatprep.subr.mxu0 0.0
    %2196 = vmatpush1.msra.mxu0 0.0
    %2197 = vmatprep.subr.mxu0 0.0
    %2198 = vmatpush1.msra.mxu0 0.0
    %2199 = vmatprep.subr.mxu0 0.0
    %2200 = vmatpush1.msra.mxu0 0.0
    %2201 = vmatprep.subr.mxu0 0.0
    %2202 = vmatpush1.msra.mxu0 0.0
    %2203 = vmatprep.subr.mxu0 0.0
    %2204 = vmatpush1.msra.mxu0 0.0
    %2205 = vmatprep.subr.mxu0 0.0
    %2206 = vmatpush1.msra.mxu0 0.0
    %2207 = vmatprep.subr.mxu0 0.0
    %2208 = vmatpush1.msra.mxu0 0.0
    %2209 = vmatprep.subr.mxu0 0.0
    %2210 = vmatpush1.msra.mxu0 0.0
    %2211 = vmatprep.subr.mxu0 0.0
    %2212 = vmatpush1.msra.mxu0 0.0
    %2213 = vmatprep.subr.mxu0 0.0
    %2214 = vmatpush1.msra.mxu0 0.0
    %2215 = vmatprep.subr.mxu0 0.0
    %2216 = vmatpush1.msra.mxu0 0.0
    %2217 = vmatprep.subr.mxu0 0.0
    %2218 = vmatpush1.msra.mxu0 0.0
    %2219 = vmatprep.subr.mxu0 0.0
    %2220 = vmatpush1.msra.mxu0 0.0
    %2221 = vmatprep.mubr.f32.mxu0 0.0
    %2222 = vmatmul.mubr.f32.gmra.mrb[0].mxu0 %v1942
    %v2223 = vpop.f32.mrb[0].mxu0
    %v2224 = vadd.f32 0.0, %v2223
    %v2225 = vpop.f32.mrb[0].mxu0
    %v2226 = vadd.f32 0.0, %v2225
    %2227 = vdwg.mxu0
    %vm2228 = vcmp.ge.f32.partialorder %v2011, 0.0
    %vm2229 = vcmp.ge.f32.partialorder %v2013, 0.0
    %vm2230 = vcmp.ge.f32.partialorder %v2082, 0.0
    %vm2231 = vcmp.ge.f32.partialorder %v2084, 0.0
    %vm2232 = vcmp.ge.f32.partialorder %v2153, 0.0
    %vm2233 = vcmp.ge.f32.partialorder %v2155, 0.0
    %vm2234 = vcmp.ge.f32.partialorder %v2224, 0.0
    %vm2235 = vcmp.ge.f32.partialorder %v2226, 0.0
    %v2236 = vsel %vm2228, 0.007, -0.007
    %v2237 = vsel %vm2229, 0.007, -0.007
    %v2238 = vsel %vm2230, 0.007, -0.007
    %v2239 = vsel %vm2231, 0.007, -0.007
    %v2240 = vsel %vm2232, 0.007, -0.007
    %v2241 = vsel %vm2233, 0.007, -0.007
    %v2242 = vsel %vm2234, 0.007, -0.007
    %v2243 = vsel %vm2235, 0.007, -0.007
    %v2252 = vcombine.low %v2236, %v2237
    %v2253 = vcombine.low %v2238, %v2239
    %v2255 = vunpack.c.l.s4 1983009808
    %v2256 = vunpack.c.0.s8 %v2255
    %v2257 = vlaneseq
    %v2258 = vshrl.u32 %v2257, 7
    %v2259 = vsub.s32 %v2256, %v2258
    %v2260 = vrot.slane %v2252, %v2259
    %v2262 = vunpack.c.l.s4 1983009808
    %v2263 = vunpack.c.0.s8 %v2262
    %v2264 = vlaneseq
    %v2265 = vshrl.u32 %v2264, 7
    %v2266 = vsub.s32 %v2263, %v2265
    %v2267 = vrot.slane %v2253, %v2266
    %v2268 = vcombine.low %v2260, %v2267
    %v2269 = vcombine.low %v2240, %v2241
    %v2270 = vcombine.low %v2242, %v2243
    %v2272 = vunpack.c.l.s4 1983009808
    %v2273 = vunpack.c.0.s8 %v2272
    %v2274 = vlaneseq
    %v2275 = vshrl.u32 %v2274, 7
    %v2276 = vsub.s32 %v2273, %v2275
    %v2277 = vrot.slane %v2269, %v2276
    %v2279 = vunpack.c.l.s4 1983009808
    %v2280 = vunpack.c.0.s8 %v2279
    %v2281 = vlaneseq
    %v2282 = vshrl.u32 %v2281, 7
    %v2283 = vsub.s32 %v2280, %v2282
    %v2284 = vrot.slane %v2270, %v2283
    %v2285 = vcombine.low %v2277, %v2284
    %v2288 = vadd.f32 %v1603, %v2268
    %v2289 = vadd.f32 %v1604, %v2285
    %v2290 = vmax.f32 %v2288, %v188
    %v2291 = vmax.f32 %v2289, %v189
    %v2292 = vmin.f32 %v2290, %v192
    %v2293 = vmin.f32 %v2291, %v193
    %v2296 = vcombine.high %v2292, %v2292
    %v2298 = vunpack.c.l.s4 1983009808
    %v2299 = vunpack.c.0.s8 %v2298
    %v2300 = vlaneseq
    %v2301 = vshrl.u32 %v2300, 7
    %v2302 = vsub.s32 %v2299, %v2301
    %v2303 = vrot.slane %v2292, %v2302
    %v2305 = vunpack.c.l.s4 1983009808
    %v2306 = vunpack.c.0.s8 %v2305
    %v2307 = vlaneseq
    %v2308 = vshrl.u32 %v2307, 7
    %v2309 = vsub.s32 %v2306, %v2308
    %v2310 = vrot.slane %v2296, %v2309
    %v2311 = vcombine.high %v2303, %v2303
    %v2312 = vcombine.high %v2310, %v2310
    %v2313 = vcombine.high %v2293, %v2293
    %v2315 = vunpack.c.l.s4 1983009808
    %v2316 = vunpack.c.0.s8 %v2315
    %v2317 = vlaneseq
    %v2318 = vshrl.u32 %v2317, 7
    %v2319 = vsub.s32 %v2316, %v2318
    %v2320 = vrot.slane %v2293, %v2319
    %v2322 = vunpack.c.l.s4 1983009808
    %v2323 = vunpack.c.0.s8 %v2322
    %v2324 = vlaneseq
    %v2325 = vshrl.u32 %v2324, 7
    %v2326 = vsub.s32 %v2323, %v2325
    %v2327 = vrot.slane %v2313, %v2326
    %v2328 = vcombine.high %v2320, %v2320
    %v2329 = vcombine.high %v2327, %v2327
    %2338 = vmatprep.subr.mxu0 0.0
    %2339 = vmatpush1.msra.mxu0 %v26
    %2340 = vmatprep.subr.mxu0 0.0
    %2341 = vmatpush1.msra.mxu0 %v27
    %2342 = vmatprep.subr.mxu0 0.0
    %2343 = vmatpush1.msra.mxu0 %v28
    %2344 = vmatprep.subr.mxu0 0.0
    %2345 = vmatpush1.msra.mxu0 %v29
    %2346 = vmatprep.subr.mxu0 0.0
    %2347 = vmatpush1.msra.mxu0 %v30
    %2348 = vmatprep.subr.mxu0 0.0
    %2349 = vmatpush1.msra.mxu0 %v31
    %2350 = vmatprep.subr.mxu0 0.0
    %2351 = vmatpush1.msra.mxu0 %v32
    %2352 = vmatprep.subr.mxu0 0.0
    %2353 = vmatpush1.msra.mxu0 %v33
    %2354 = vmatprep.subr.mxu0 0.0
    %2355 = vmatpush1.msra.mxu0 %v34
    %2356 = vmatprep.subr.mxu0 0.0
    %2357 = vmatpush1.msra.mxu0 %v35
    %2358 = vmatprep.subr.mxu0 0.0
    %2359 = vmatpush1.msra.mxu0 %v36
    %2360 = vmatprep.subr.mxu0 0.0
    %2361 = vmatpush1.msra.mxu0 %v37
    %2362 = vmatprep.subr.mxu0 0.0
    %2363 = vmatpush1.msra.mxu0 %v38
    %2364 = vmatprep.subr.mxu0 0.0
    %2365 = vmatpush1.msra.mxu0 %v39
    %2366 = vmatprep.subr.mxu0 0.0
    %2367 = vmatpush1.msra.mxu0 %v40
    %2368 = vmatprep.subr.mxu0 0.0
    %2369 = vmatpush1.msra.mxu0 %v41
    %2370 = vmatprep.subr.mxu0 0.0
    %2371 = vmatpush1.msra.mxu0 %v42
    %2372 = vmatprep.subr.mxu0 0.0
    %2373 = vmatpush1.msra.mxu0 %v43
    %2374 = vmatprep.subr.mxu0 0.0
    %2375 = vmatpush1.msra.mxu0 %v44
    %2376 = vmatprep.subr.mxu0 0.0
    %2377 = vmatpush1.msra.mxu0 %v45
    %2378 = vmatprep.subr.mxu0 0.0
    %2379 = vmatpush1.msra.mxu0 %v46
    %2380 = vmatprep.subr.mxu0 0.0
    %2381 = vmatpush1.msra.mxu0 %v47
    %2382 = vmatprep.subr.mxu0 0.0
    %2383 = vmatpush1.msra.mxu0 %v48
    %2384 = vmatprep.subr.mxu0 0.0
    %2385 = vmatpush1.msra.mxu0 %v49
    %2386 = vmatprep.subr.mxu0 0.0
    %2387 = vmatpush1.msra.mxu0 %v50
    %2388 = vmatprep.subr.mxu0 0.0
    %2389 = vmatpush1.msra.mxu0 %v51
    %2390 = vmatprep.subr.mxu0 0.0
    %2391 = vmatpush1.msra.mxu0 %v52
    %2392 = vmatprep.subr.mxu0 0.0
    %2393 = vmatpush1.msra.mxu0 %v53
    %2394 = vmatprep.subr.mxu0 0.0
    %2395 = vmatpush1.msra.mxu0 %v54
    %2396 = vmatprep.subr.mxu0 0.0
    %2397 = vmatpush1.msra.mxu0 %v55
    %2398 = vmatprep.subr.mxu0 0.0
    %2399 = vmatpush1.msra.mxu0 %v56
    %2400 = vmatprep.subr.mxu0 0.0
    %2401 = vmatpush1.msra.mxu0 %v57
    %2402 = vmatprep.mubr.f32.mxu0 %v2311
    %2403 = vmatmul.mubr.f32.gmra.mrb[0].mxu0 %v2303
    %v2404 = vpop.f32.mrb[0].mxu0
    %v2405 = vadd.f32 %v184, %v2404
    %v2406 = vpop.f32.mrb[0].mxu0
    %2407 = vdwg.mxu0
    %2408 = vmatprep.subr.mxu0 0.0
    %2409 = vmatpush1.msra.mxu0 %v58
    %2410 = vmatprep.subr.mxu0 0.0
    %2411 = vmatpush1.msra.mxu0 %v59
    %2412 = vmatprep.subr.mxu0 0.0
    %2413 = vmatpush1.msra.mxu0 %v60
    %2414 = vmatprep.subr.mxu0 0.0
    %2415 = vmatpush1.msra.mxu0 %v61
    %2416 = vmatprep.subr.mxu0 0.0
    %2417 = vmatpush1.msra.mxu0 %v62
    %2418 = vmatprep.subr.mxu0 0.0
    %2419 = vmatpush1.msra.mxu0 %v63
    %2420 = vmatprep.subr.mxu0 0.0
    %2421 = vmatpush1.msra.mxu0 %v64
    %2422 = vmatprep.subr.mxu0 0.0
    %2423 = vmatpush1.msra.mxu0 %v65
    %2424 = vmatprep.subr.mxu0 0.0
    %2425 = vmatpush1.msra.mxu0 %v66
    %2426 = vmatprep.subr.mxu0 0.0
    %2427 = vmatpush1.msra.mxu0 %v67
    %2428 = vmatprep.subr.mxu0 0.0
    %2429 = vmatpush1.msra.mxu0 %v68
    %2430 = vmatprep.subr.mxu0 0.0
    %2431 = vmatpush1.msra.mxu0 %v69
    %2432 = vmatprep.subr.mxu0 0.0
    %2433 = vmatpush1.msra.mxu0 %v70
    %2434 = vmatprep.subr.mxu0 0.0
    %2435 = vmatpush1.msra.mxu0 %v71
    %2436 = vmatprep.subr.mxu0 0.0
    %2437 = vmatpush1.msra.mxu0 %v72
    %2438 = vmatprep.subr.mxu0 0.0
    %2439 = vmatpush1.msra.mxu0 %v73
    %2440 = vmatprep.subr.mxu0 0.0
    %2441 = vmatpush1.msra.mxu0 %v74
    %2442 = vmatprep.subr.mxu0 0.0
    %2443 = vmatpush1.msra.mxu0 %v75
    %2444 = vmatprep.subr.mxu0 0.0
    %2445 = vmatpush1.msra.mxu0 %v76
    %2446 = vmatprep.subr.mxu0 0.0
    %2447 = vmatpush1.msra.mxu0 %v77
    %2448 = vmatprep.subr.mxu0 0.0
    %2449 = vmatpush1.msra.mxu0 %v78
    %2450 = vmatprep.subr.mxu0 0.0
    %2451 = vmatpush1.msra.mxu0 %v79
    %2452 = vmatprep.subr.mxu0 0.0
    %2453 = vmatpush1.msra.mxu0 %v80
    %2454 = vmatprep.subr.mxu0 0.0
    %2455 = vmatpush1.msra.mxu0 %v81
    %2456 = vmatprep.subr.mxu0 0.0
    %2457 = vmatpush1.msra.mxu0 %v82
    %2458 = vmatprep.subr.mxu0 0.0
    %2459 = vmatpush1.msra.mxu0 %v83
    %2460 = vmatprep.subr.mxu0 0.0
    %2461 = vmatpush1.msra.mxu0 %v84
    %2462 = vmatprep.subr.mxu0 0.0
    %2463 = vmatpush1.msra.mxu0 %v85
    %2464 = vmatprep.subr.mxu0 0.0
    %2465 = vmatpush1.msra.mxu0 %v86
    %2466 = vmatprep.subr.mxu0 0.0
    %2467 = vmatpush1.msra.mxu0 %v87
    %2468 = vmatprep.subr.mxu0 0.0
    %2469 = vmatpush1.msra.mxu0 %v88
    %2470 = vmatprep.subr.mxu0 0.0
    %2471 = vmatpush1.msra.mxu0 %v89
    %2472 = vmatprep.mubr.f32.mxu0 %v2312
    %2473 = vmatmul.mubr.f32.gmra.mrb[0].mxu0 %v2310
    %v2474 = vpop.f32.mrb[0].mxu0
    %v2475 = vadd.f32 %v2405, %v2474
    %v2476 = vpop.f32.mrb[0].mxu0
    %2477 = vdwg.mxu0
    %2478 = vmatprep.subr.mxu0 0.0
    %2479 = vmatpush1.msra.mxu0 %v90
    %2480 = vmatprep.subr.mxu0 0.0
    %2481 = vmatpush1.msra.mxu0 %v91
    %2482 = vmatprep.subr.mxu0 0.0
    %2483 = vmatpush1.msra.mxu0 %v92
    %2484 = vmatprep.subr.mxu0 0.0
    %2485 = vmatpush1.msra.mxu0 %v93
    %2486 = vmatprep.subr.mxu0 0.0
    %2487 = vmatpush1.msra.mxu0 %v94
    %2488 = vmatprep.subr.mxu0 0.0
    %2489 = vmatpush1.msra.mxu0 %v95
    %2490 = vmatprep.subr.mxu0 0.0
    %2491 = vmatpush1.msra.mxu0 %v96
    %2492 = vmatprep.subr.mxu0 0.0
    %2493 = vmatpush1.msra.mxu0 %v97
    %2494 = vmatprep.subr.mxu0 0.0
    %2495 = vmatpush1.msra.mxu0 %v98
    %2496 = vmatprep.subr.mxu0 0.0
    %2497 = vmatpush1.msra.mxu0 %v99
    %2498 = vmatprep.subr.mxu0 0.0
    %2499 = vmatpush1.msra.mxu0 %v100
    %2500 = vmatprep.subr.mxu0 0.0
    %2501 = vmatpush1.msra.mxu0 %v101
    %2502 = vmatprep.subr.mxu0 0.0
    %2503 = vmatpush1.msra.mxu0 %v102
    %2504 = vmatprep.subr.mxu0 0.0
    %2505 = vmatpush1.msra.mxu0 %v103
    %2506 = vmatprep.subr.mxu0 0.0
    %2507 = vmatpush1.msra.mxu0 %v104
    %2508 = vmatprep.subr.mxu0 0.0
    %2509 = vmatpush1.msra.mxu0 %v105
    %2510 = vmatprep.subr.mxu0 0.0
    %2511 = vmatpush1.msra.mxu0 %v106
    %2512 = vmatprep.subr.mxu0 0.0
    %2513 = vmatpush1.msra.mxu0 %v107
    %2514 = vmatprep.subr.mxu0 0.0
    %2515 = vmatpush1.msra.mxu0 %v108
    %2516 = vmatprep.subr.mxu0 0.0
    %2517 = vmatpush1.msra.mxu0 %v109
    %2518 = vmatprep.subr.mxu0 0.0
    %2519 = vmatpush1.msra.mxu0 %v110
    %2520 = vmatprep.subr.mxu0 0.0
    %2521 = vmatpush1.msra.mxu0 %v111
    %2522 = vmatprep.subr.mxu0 0.0
    %2523 = vmatpush1.msra.mxu0 %v112
    %2524 = vmatprep.subr.mxu0 0.0
    %2525 = vmatpush1.msra.mxu0 %v113
    %2526 = vmatprep.subr.mxu0 0.0
    %2527 = vmatpush1.msra.mxu0 %v114
    %2528 = vmatprep.subr.mxu0 0.0
    %2529 = vmatpush1.msra.mxu0 %v115
    %2530 = vmatprep.subr.mxu0 0.0
    %2531 = vmatpush1.msra.mxu0 %v116
    %2532 = vmatprep.subr.mxu0 0.0
    %2533 = vmatpush1.msra.mxu0 %v117
    %2534 = vmatprep.subr.mxu0 0.0
    %2535 = vmatpush1.msra.mxu0 %v118
    %2536 = vmatprep.subr.mxu0 0.0
    %2537 = vmatpush1.msra.mxu0 %v119
    %2538 = vmatprep.subr.mxu0 0.0
    %2539 = vmatpush1.msra.mxu0 %v120
    %2540 = vmatprep.subr.mxu0 0.0
    %2541 = vmatpush1.msra.mxu0 %v121
    %2542 = vmatprep.mubr.f32.mxu0 %v2328
    %2543 = vmatmul.mubr.f32.gmra.mrb[0].mxu0 %v2320
    %v2544 = vpop.f32.mrb[0].mxu0
    %v2545 = vadd.f32 %v2475, %v2544
    %v2546 = vpop.f32.mrb[0].mxu0
    %2547 = vdwg.mxu0
    %2548 = vmatprep.subr.mxu0 0.0
    %2549 = vmatpush1.msra.mxu0 %v122
    %2550 = vmatprep.subr.mxu0 0.0
    %2551 = vmatpush1.msra.mxu0 %v123
    %2552 = vmatprep.subr.mxu0 0.0
    %2553 = vmatpush1.msra.mxu0 %v124
    %2554 = vmatprep.subr.mxu0 0.0
    %2555 = vmatpush1.msra.mxu0 %v125
    %2556 = vmatprep.subr.mxu0 0.0
    %2557 = vmatpush1.msra.mxu0 %v126
    %2558 = vmatprep.subr.mxu0 0.0
    %2559 = vmatpush1.msra.mxu0 %v127
    %2560 = vmatprep.subr.mxu0 0.0
    %2561 = vmatpush1.msra.mxu0 %v128
    %2562 = vmatprep.subr.mxu0 0.0
    %2563 = vmatpush1.msra.mxu0 %v129
    %2564 = vmatprep.subr.mxu0 0.0
    %2565 = vmatpush1.msra.mxu0 %v130
    %2566 = vmatprep.subr.mxu0 0.0
    %2567 = vmatpush1.msra.mxu0 %v131
    %2568 = vmatprep.subr.mxu0 0.0
    %2569 = vmatpush1.msra.mxu0 %v132
    %2570 = vmatprep.subr.mxu0 0.0
    %2571 = vmatpush1.msra.mxu0 %v133
    %2572 = vmatprep.subr.mxu0 0.0
    %2573 = vmatpush1.msra.mxu0 %v134
    %2574 = vmatprep.subr.mxu0 0.0
    %2575 = vmatpush1.msra.mxu0 %v135
    %2576 = vmatprep.subr.mxu0 0.0
    %2577 = vmatpush1.msra.mxu0 %v136
    %2578 = vmatprep.subr.mxu0 0.0
    %2579 = vmatpush1.msra.mxu0 %v137
    %2580 = vmatprep.subr.mxu0 0.0
    %2581 = vmatpush1.msra.mxu0 %v138
    %2582 = vmatprep.subr.mxu0 0.0
    %2583 = vmatpush1.msra.mxu0 %v139
    %2584 = vmatprep.subr.mxu0 0.0
    %2585 = vmatpush1.msra.mxu0 %v140
    %2586 = vmatprep.subr.mxu0 0.0
    %2587 = vmatpush1.msra.mxu0 %v141
    %2588 = vmatprep.subr.mxu0 0.0
    %2589 = vmatpush1.msra.mxu0 %v142
    %2590 = vmatprep.subr.mxu0 0.0
    %2591 = vmatpush1.msra.mxu0 %v143
    %2592 = vmatprep.subr.mxu0 0.0
    %2593 = vmatpush1.msra.mxu0 %v144
    %2594 = vmatprep.subr.mxu0 0.0
    %2595 = vmatpush1.msra.mxu0 %v145
    %2596 = vmatprep.subr.mxu0 0.0
    %2597 = vmatpush1.msra.mxu0 %v146
    %2598 = vmatprep.subr.mxu0 0.0
    %2599 = vmatpush1.msra.mxu0 %v147
    %2600 = vmatprep.subr.mxu0 0.0
    %2601 = vmatpush1.msra.mxu0 %v148
    %2602 = vmatprep.subr.mxu0 0.0
    %2603 = vmatpush1.msra.mxu0 %v149
    %2604 = vmatprep.subr.mxu0 0.0
    %2605 = vmatpush1.msra.mxu0 %v150
    %2606 = vmatprep.subr.mxu0 0.0
    %2607 = vmatpush1.msra.mxu0 %v151
    %2608 = vmatprep.subr.mxu0 0.0
    %2609 = vmatpush1.msra.mxu0 %v152
    %2610 = vmatprep.subr.mxu0 0.0
    %2611 = vmatpush1.msra.mxu0 %v153
    %2612 = vmatprep.mubr.f32.mxu0 %v2329
    %2613 = vmatmul.mubr.f32.gmra.mrb[0].mxu0 %v2327
    %v2614 = vpop.f32.mrb[0].mxu0
    %v2615 = vadd.f32 %v2545, %v2614
    %v2616 = vpop.f32.mrb[0].mxu0
    %2617 = vdwg.mxu0
    %v2618 = vsel %vm524, %v2615, -inf
    %2619 = vmax.xlane.f32.xlu0 %v2618
    %v2620 = vpop.xlane.xlu0 %2619
    %v2621 = vsub.f32 %v2615, %v2620
    %v2622 = vmul.f32 %v2621, 1.442695
    %v2623 = vpow.pop %v2622
    %v2624 = vsel %vm524, %v2623, 0.0
    %2625 = vadd.xlane.f32.xlu0 %v2624
    %v2626 = vpop.xlane.xlu0 %2625
    %v2627 = vrcp.pop %v2626
    %v2628 = vmul.f32 %v2623, %v2627
    %v2629 = vsub.f32 %v2628, %v178
    %v2631 = vsel %vm537, %v2629, 0
    %2633 = vmatprep.subr.mxu0 %v155
    %2634 = vmatpush1.msra.mxu0 %v154
    %2635 = vmatprep.subr.mxu0 %v546
    %2636 = vmatpush1.msra.mxu0 %v543
    %2637 = vmatprep.subr.mxu0 0.0
    %2638 = vmatpush1.msra.mxu0 0.0
    %2639 = vmatprep.subr.mxu0 0.0
    %2640 = vmatpush1.msra.mxu0 0.0
    %2641 = vmatprep.subr.mxu0 0.0
    %2642 = vmatpush1.msra.mxu0 0.0
    %2643 = vmatprep.subr.mxu0 0.0
    %2644 = vmatpush1.msra.mxu0 0.0
    %2645 = vmatprep.subr.mxu0 0.0
    %2646 = vmatpush1.msra.mxu0 0.0
    %2647 = vmatprep.subr.mxu0 0.0
    %2648 = vmatpush1.msra.mxu0 0.0
    %2649 = vmatprep.subr.mxu0 0.0
    %2650 = vmatpush1.msra.mxu0 0.0
    %2651 = vmatprep.subr.mxu0 0.0
    %2652 = vmatpush1.msra.mxu0 0.0
    %2653 = vmatprep.subr.mxu0 0.0
    %2654 = vmatpush1.msra.mxu0 0.0
    %2655 = vmatprep.subr.mxu0 0.0
    %2656 = vmatpush1.msra.mxu0 0.0
    %2657 = vmatprep.subr.mxu0 0.0
    %2658 = vmatpush1.msra.mxu0 0.0
    %2659 = vmatprep.subr.mxu0 0.0
    %2660 = vmatpush1.msra.mxu0 0.0
    %2661 = vmatprep.subr.mxu0 0.0
    %2662 = vmatpush1.msra.mxu0 0.0
    %2663 = vmatprep.subr.mxu0 0.0
    %2664 = vmatpush1.msra.mxu0 0.0
    %2665 = vmatprep.subr.mxu0 0.0
    %2666 = vmatpush1.msra.mxu0 0.0
    %2667 = vmatprep.subr.mxu0 0.0
    %2668 = vmatpush1.msra.mxu0 0.0
    %2669 = vmatprep.subr.mxu0 0.0
    %2670 = vmatpush1.msra.mxu0 0.0
    %2671 = vmatprep.subr.mxu0 0.0
    %2672 = vmatpush1.msra.mxu0 0.0
    %2673 = vmatprep.subr.mxu0 0.0
    %2674 = vmatpush1.msra.mxu0 0.0
    %2675 = vmatprep.subr.mxu0 0.0
    %2676 = vmatpush1.msra.mxu0 0.0
    %2677 = vmatprep.subr.mxu0 0.0
    %2678 = vmatpush1.msra.mxu0 0.0
    %2679 = vmatprep.subr.mxu0 0.0
    %2680 = vmatpush1.msra.mxu0 0.0
    %2681 = vmatprep.subr.mxu0 0.0
    %2682 = vmatpush1.msra.mxu0 0.0
    %2683 = vmatprep.subr.mxu0 0.0
    %2684 = vmatpush1.msra.mxu0 0.0
    %2685 = vmatprep.subr.mxu0 0.0
    %2686 = vmatpush1.msra.mxu0 0.0
    %2687 = vmatprep.subr.mxu0 0.0
    %2688 = vmatpush1.msra.mxu0 0.0
    %2689 = vmatprep.subr.mxu0 0.0
    %2690 = vmatpush1.msra.mxu0 0.0
    %2691 = vmatprep.subr.mxu0 0.0
    %2692 = vmatpush1.msra.mxu0 0.0
    %2693 = vmatprep.subr.mxu0 0.0
    %2694 = vmatpush1.msra.mxu0 0.0
    %2695 = vmatprep.subr.mxu0 0.0
    %2696 = vmatpush1.msra.mxu0 0.0
    %2697 = vmatprep.mubr.f32.mxu0 0.0
    %2698 = vmatmul.mubr.f32.gmra.mrb[0].mxu0 %v2631
    %v2699 = vpop.f32.mrb[0].mxu0
    %v2700 = vadd.f32 0.0, %v2699
    %v2701 = vpop.f32.mrb[0].mxu0
    %v2702 = vadd.f32 0.0, %v2701
    %2703 = vdwg.mxu0
    %2704 = vmatprep.subr.mxu0 %v157
    %2705 = vmatpush1.msra.mxu0 %v156
    %2706 = vmatprep.subr.mxu0 %v552
    %2707 = vmatpush1.msra.mxu0 %v549
    %2708 = vmatprep.subr.mxu0 0.0
    %2709 = vmatpush1.msra.mxu0 0.0
    %2710 = vmatprep.subr.mxu0 0.0
    %2711 = vmatpush1.msra.mxu0 0.0
    %2712 = vmatprep.subr.mxu0 0.0
    %2713 = vmatpush1.msra.mxu0 0.0
    %2714 = vmatprep.subr.mxu0 0.0
    %2715 = vmatpush1.msra.mxu0 0.0
    %2716 = vmatprep.subr.mxu0 0.0
    %2717 = vmatpush1.msra.mxu0 0.0
    %2718 = vmatprep.subr.mxu0 0.0
    %2719 = vmatpush1.msra.mxu0 0.0
    %2720 = vmatprep.subr.mxu0 0.0
    %2721 = vmatpush1.msra.mxu0 0.0
    %2722 = vmatprep.subr.mxu0 0.0
    %2723 = vmatpush1.msra.mxu0 0.0
    %2724 = vmatprep.subr.mxu0 0.0
    %2725 = vmatpush1.msra.mxu0 0.0
    %2726 = vmatprep.subr.mxu0 0.0
    %2727 = vmatpush1.msra.mxu0 0.0
    %2728 = vmatprep.subr.mxu0 0.0
    %2729 = vmatpush1.msra.mxu0 0.0
    %2730 = vmatprep.subr.mxu0 0.0
    %2731 = vmatpush1.msra.mxu0 0.0
    %2732 = vmatprep.subr.mxu0 0.0
    %2733 = vmatpush1.msra.mxu0 0.0
    %2734 = vmatprep.subr.mxu0 0.0
    %2735 = vmatpush1.msra.mxu0 0.0
    %2736 = vmatprep.subr.mxu0 0.0
    %2737 = vmatpush1.msra.mxu0 0.0
    %2738 = vmatprep.subr.mxu0 0.0
    %2739 = vmatpush1.msra.mxu0 0.0
    %2740 = vmatprep.subr.mxu0 0.0
    %2741 = vmatpush1.msra.mxu0 0.0
    %2742 = vmatprep.subr.mxu0 0.0
    %2743 = vmatpush1.msra.mxu0 0.0
    %2744 = vmatprep.subr.mxu0 0.0
    %2745 = vmatpush1.msra.mxu0 0.0
    %2746 = vmatprep.subr.mxu0 0.0
    %2747 = vmatpush1.msra.mxu0 0.0
    %2748 = vmatprep.subr.mxu0 0.0
    %2749 = vmatpush1.msra.mxu0 0.0
    %2750 = vmatprep.subr.mxu0 0.0
    %2751 = vmatpush1.msra.mxu0 0.0
    %2752 = vmatprep.subr.mxu0 0.0
    %2753 = vmatpush1.msra.mxu0 0.0
    %2754 = vmatprep.subr.mxu0 0.0
    %2755 = vmatpush1.msra.mxu0 0.0
    %2756 = vmatprep.subr.mxu0 0.0
    %2757 = vmatpush1.msra.mxu0 0.0
    %2758 = vmatprep.subr.mxu0 0.0
    %2759 = vmatpush1.msra.mxu0 0.0
    %2760 = vmatprep.subr.mxu0 0.0
    %2761 = vmatpush1.msra.mxu0 0.0
    %2762 = vmatprep.subr.mxu0 0.0
    %2763 = vmatpush1.msra.mxu0 0.0
    %2764 = vmatprep.subr.mxu0 0.0
    %2765 = vmatpush1.msra.mxu0 0.0
    %2766 = vmatprep.subr.mxu0 0.0
    %2767 = vmatpush1.msra.mxu0 0.0
    %2768 = vmatprep.mubr.f32.mxu0 0.0
    %2769 = vmatmul.mubr.f32.gmra.mrb[0].mxu0 %v2631
    %v2770 = vpop.f32.mrb[0].mxu0
    %v2771 = vadd.f32 0.0, %v2770
    %v2772 = vpop.f32.mrb[0].mxu0
    %v2773 = vadd.f32 0.0, %v2772
    %2774 = vdwg.mxu0
    %2775 = vmatprep.subr.mxu0 %v159
    %2776 = vmatpush1.msra.mxu0 %v158
    %2777 = vmatprep.subr.mxu0 %v558
    %2778 = vmatpush1.msra.mxu0 %v555
    %2779 = vmatprep.subr.mxu0 0.0
    %2780 = vmatpush1.msra.mxu0 0.0
    %2781 = vmatprep.subr.mxu0 0.0
    %2782 = vmatpush1.msra.mxu0 0.0
    %2783 = vmatprep.subr.mxu0 0.0
    %2784 = vmatpush1.msra.mxu0 0.0
    %2785 = vmatprep.subr.mxu0 0.0
    %2786 = vmatpush1.msra.mxu0 0.0
    %2787 = vmatprep.subr.mxu0 0.0
    %2788 = vmatpush1.msra.mxu0 0.0
    %2789 = vmatprep.subr.mxu0 0.0
    %2790 = vmatpush1.msra.mxu0 0.0
    %2791 = vmatprep.subr.mxu0 0.0
    %2792 = vmatpush1.msra.mxu0 0.0
    %2793 = vmatprep.subr.mxu0 0.0
    %2794 = vmatpush1.msra.mxu0 0.0
    %2795 = vmatprep.subr.mxu0 0.0
    %2796 = vmatpush1.msra.mxu0 0.0
    %2797 = vmatprep.subr.mxu0 0.0
    %2798 = vmatpush1.msra.mxu0 0.0
    %2799 = vmatprep.subr.mxu0 0.0
    %2800 = vmatpush1.msra.mxu0 0.0
    %2801 = vmatprep.subr.mxu0 0.0
    %2802 = vmatpush1.msra.mxu0 0.0
    %2803 = vmatprep.subr.mxu0 0.0
    %2804 = vmatpush1.msra.mxu0 0.0
    %2805 = vmatprep.subr.mxu0 0.0
    %2806 = vmatpush1.msra.mxu0 0.0
    %2807 = vmatprep.subr.mxu0 0.0
    %2808 = vmatpush1.msra.mxu0 0.0
    %2809 = vmatprep.subr.mxu0 0.0
    %2810 = vmatpush1.msra.mxu0 0.0
    %2811 = vmatprep.subr.mxu0 0.0
    %2812 = vmatpush1.msra.mxu0 0.0
    %2813 = vmatprep.subr.mxu0 0.0
    %2814 = vmatpush1.msra.mxu0 0.0
    %2815 = vmatprep.subr.mxu0 0.0
    %2816 = vmatpush1.msra.mxu0 0.0
    %2817 = vmatprep.subr.mxu0 0.0
    %2818 = vmatpush1.msra.mxu0 0.0
    %2819 = vmatprep.subr.mxu0 0.0
    %2820 = vmatpush1.msra.mxu0 0.0
    %2821 = vmatprep.subr.mxu0 0.0
    %2822 = vmatpush1.msra.mxu0 0.0
    %2823 = vmatprep.subr.mxu0 0.0
    %2824 = vmatpush1.msra.mxu0 0.0
    %2825 = vmatprep.subr.mxu0 0.0
    %2826 = vmatpush1.msra.mxu0 0.0
    %2827 = vmatprep.subr.mxu0 0.0
    %2828 = vmatpush1.msra.mxu0 0.0
    %2829 = vmatprep.subr.mxu0 0.0
    %2830 = vmatpush1.msra.mxu0 0.0
    %2831 = vmatprep.subr.mxu0 0.0
    %2832 = vmatpush1.msra.mxu0 0.0
    %2833 = vmatprep.subr.mxu0 0.0
    %2834 = vmatpush1.msra.mxu0 0.0
    %2835 = vmatprep.subr.mxu0 0.0
    %2836 = vmatpush1.msra.mxu0 0.0
    %2837 = vmatprep.subr.mxu0 0.0
    %2838 = vmatpush1.msra.mxu0 0.0
    %2839 = vmatprep.mubr.f32.mxu0 0.0
    %2840 = vmatmul.mubr.f32.gmra.mrb[0].mxu0 %v2631
    %v2841 = vpop.f32.mrb[0].mxu0
    %v2842 = vadd.f32 0.0, %v2841
    %v2843 = vpop.f32.mrb[0].mxu0
    %v2844 = vadd.f32 0.0, %v2843
    %2845 = vdwg.mxu0
    %2846 = vmatprep.subr.mxu0 %v161
    %2847 = vmatpush1.msra.mxu0 %v160
    %2848 = vmatprep.subr.mxu0 %v564
    %2849 = vmatpush1.msra.mxu0 %v561
    %2850 = vmatprep.subr.mxu0 0.0
    %2851 = vmatpush1.msra.mxu0 0.0
    %2852 = vmatprep.subr.mxu0 0.0
    %2853 = vmatpush1.msra.mxu0 0.0
    %2854 = vmatprep.subr.mxu0 0.0
    %2855 = vmatpush1.msra.mxu0 0.0
    %2856 = vmatprep.subr.mxu0 0.0
    %2857 = vmatpush1.msra.mxu0 0.0
    %2858 = vmatprep.subr.mxu0 0.0
    %2859 = vmatpush1.msra.mxu0 0.0
    %2860 = vmatprep.subr.mxu0 0.0
    %2861 = vmatpush1.msra.mxu0 0.0
    %2862 = vmatprep.subr.mxu0 0.0
    %2863 = vmatpush1.msra.mxu0 0.0
    %2864 = vmatprep.subr.mxu0 0.0
    %2865 = vmatpush1.msra.mxu0 0.0
    %2866 = vmatprep.subr.mxu0 0.0
    %2867 = vmatpush1.msra.mxu0 0.0
    %2868 = vmatprep.subr.mxu0 0.0
    %2869 = vmatpush1.msra.mxu0 0.0
    %2870 = vmatprep.subr.mxu0 0.0
    %2871 = vmatpush1.msra.mxu0 0.0
    %2872 = vmatprep.subr.mxu0 0.0
    %2873 = vmatpush1.msra.mxu0 0.0
    %2874 = vmatprep.subr.mxu0 0.0
    %2875 = vmatpush1.msra.mxu0 0.0
    %2876 = vmatprep.subr.mxu0 0.0
    %2877 = vmatpush1.msra.mxu0 0.0
    %2878 = vmatprep.subr.mxu0 0.0
    %2879 = vmatpush1.msra.mxu0 0.0
    %2880 = vmatprep.subr.mxu0 0.0
    %2881 = vmatpush1.msra.mxu0 0.0
    %2882 = vmatprep.subr.mxu0 0.0
    %2883 = vmatpush1.msra.mxu0 0.0
    %2884 = vmatprep.subr.mxu0 0.0
    %2885 = vmatpush1.msra.mxu0 0.0
    %2886 = vmatprep.subr.mxu0 0.0
    %2887 = vmatpush1.msra.mxu0 0.0
    %2888 = vmatprep.subr.mxu0 0.0
    %2889 = vmatpush1.msra.mxu0 0.0
    %2890 = vmatprep.subr.mxu0 0.0
    %2891 = vmatpush1.msra.mxu0 0.0
    %2892 = vmatprep.subr.mxu0 0.0
    %2893 = vmatpush1.msra.mxu0 0.0
    %2894 = vmatprep.subr.mxu0 0.0
    %2895 = vmatpush1.msra.mxu0 0.0
    %2896 = vmatprep.subr.mxu0 0.0
    %2897 = vmatpush1.msra.mxu0 0.0
    %2898 = vmatprep.subr.mxu0 0.0
    %2899 = vmatpush1.msra.mxu0 0.0
    %2900 = vmatprep.subr.mxu0 0.0
    %2901 = vmatpush1.msra.mxu0 0.0
    %2902 = vmatprep.subr.mxu0 0.0
    %2903 = vmatpush1.msra.mxu0 0.0
    %2904 = vmatprep.subr.mxu0 0.0
    %2905 = vmatpush1.msra.mxu0 0.0
    %2906 = vmatprep.subr.mxu0 0.0
    %2907 = vmatpush1.msra.mxu0 0.0
    %2908 = vmatprep.subr.mxu0 0.0
    %2909 = vmatpush1.msra.mxu0 0.0
    %2910 = vmatprep.mubr.f32.mxu0 0.0
    %2911 = vmatmul.mubr.f32.gmra.mrb[0].mxu0 %v2631
    %v2912 = vpop.f32.mrb[0].mxu0
    %v2913 = vadd.f32 0.0, %v2912
    %v2914 = vpop.f32.mrb[0].mxu0
    %v2915 = vadd.f32 0.0, %v2914
    %2916 = vdwg.mxu0
    %vm2917 = vcmp.ge.f32.partialorder %v2700, 0.0
    %vm2918 = vcmp.ge.f32.partialorder %v2702, 0.0
    %vm2919 = vcmp.ge.f32.partialorder %v2771, 0.0
    %vm2920 = vcmp.ge.f32.partialorder %v2773, 0.0
    %vm2921 = vcmp.ge.f32.partialorder %v2842, 0.0
    %vm2922 = vcmp.ge.f32.partialorder %v2844, 0.0
    %vm2923 = vcmp.ge.f32.partialorder %v2913, 0.0
    %vm2924 = vcmp.ge.f32.partialorder %v2915, 0.0
    %v2925 = vsel %vm2917, 0.007, -0.007
    %v2926 = vsel %vm2918, 0.007, -0.007
    %v2927 = vsel %vm2919, 0.007, -0.007
    %v2928 = vsel %vm2920, 0.007, -0.007
    %v2929 = vsel %vm2921, 0.007, -0.007
    %v2930 = vsel %vm2922, 0.007, -0.007
    %v2931 = vsel %vm2923, 0.007, -0.007
    %v2932 = vsel %vm2924, 0.007, -0.007
    %v2941 = vcombine.low %v2925, %v2926
    %v2942 = vcombine.low %v2927, %v2928
    %v2944 = vunpack.c.l.s4 1983009808
    %v2945 = vunpack.c.0.s8 %v2944
    %v2946 = vlaneseq
    %v2947 = vshrl.u32 %v2946, 7
    %v2948 = vsub.s32 %v2945, %v2947
    %v2949 = vrot.slane %v2941, %v2948
    %v2951 = vunpack.c.l.s4 1983009808
    %v2952 = vunpack.c.0.s8 %v2951
    %v2953 = vlaneseq
    %v2954 = vshrl.u32 %v2953, 7
    %v2955 = vsub.s32 %v2952, %v2954
    %v2956 = vrot.slane %v2942, %v2955
    %v2957 = vcombine.low %v2949, %v2956
    %v2958 = vcombine.low %v2929, %v2930
    %v2959 = vcombine.low %v2931, %v2932
    %v2961 = vunpack.c.l.s4 1983009808
    %v2962 = vunpack.c.0.s8 %v2961
    %v2963 = vlaneseq
    %v2964 = vshrl.u32 %v2963, 7
    %v2965 = vsub.s32 %v2962, %v2964
    %v2966 = vrot.slane %v2958, %v2965
    %v2968 = vunpack.c.l.s4 1983009808
    %v2969 = vunpack.c.0.s8 %v2968
    %v2970 = vlaneseq
    %v2971 = vshrl.u32 %v2970, 7
    %v2972 = vsub.s32 %v2969, %v2971
    %v2973 = vrot.slane %v2959, %v2972
    %v2974 = vcombine.low %v2966, %v2973
    %v2977 = vadd.f32 %v2292, %v2957
    %v2978 = vadd.f32 %v2293, %v2974
    %v2979 = vmax.f32 %v2977, %v188
    %v2980 = vmax.f32 %v2978, %v189
    %v2981 = vmin.f32 %v2979, %v192
    %v2982 = vmin.f32 %v2980, %v193
    %v2985 = vcombine.high %v2981, %v2981
    %v2987 = vunpack.c.l.s4 1983009808
    %v2988 = vunpack.c.0.s8 %v2987
    %v2989 = vlaneseq
    %v2990 = vshrl.u32 %v2989, 7
    %v2991 = vsub.s32 %v2988, %v2990
    %v2992 = vrot.slane %v2981, %v2991
    %v2994 = vunpack.c.l.s4 1983009808
    %v2995 = vunpack.c.0.s8 %v2994
    %v2996 = vlaneseq
    %v2997 = vshrl.u32 %v2996, 7
    %v2998 = vsub.s32 %v2995, %v2997
    %v2999 = vrot.slane %v2985, %v2998
    %v3000 = vcombine.high %v2992, %v2992
    %v3001 = vcombine.high %v2999, %v2999
    %v3002 = vcombine.high %v2982, %v2982
    %v3004 = vunpack.c.l.s4 1983009808
    %v3005 = vunpack.c.0.s8 %v3004
    %v3006 = vlaneseq
    %v3007 = vshrl.u32 %v3006, 7
    %v3008 = vsub.s32 %v3005, %v3007
    %v3009 = vrot.slane %v2982, %v3008
    %v3011 = vunpack.c.l.s4 1983009808
    %v3012 = vunpack.c.0.s8 %v3011
    %v3013 = vlaneseq
    %v3014 = vshrl.u32 %v3013, 7
    %v3015 = vsub.s32 %v3012, %v3014
    %v3016 = vrot.slane %v3002, %v3015
    %v3017 = vcombine.high %v3009, %v3009
    %v3018 = vcombine.high %v3016, %v3016
    %3027 = vmatprep.subr.mxu0 0.0
    %3028 = vmatpush1.msra.mxu0 %v26
    %3029 = vmatprep.subr.mxu0 0.0
    %3030 = vmatpush1.msra.mxu0 %v27
    %3031 = vmatprep.subr.mxu0 0.0
    %3032 = vmatpush1.msra.mxu0 %v28
    %3033 = vmatprep.subr.mxu0 0.0
    %3034 = vmatpush1.msra.mxu0 %v29
    %3035 = vmatprep.subr.mxu0 0.0
    %3036 = vmatpush1.msra.mxu0 %v30
    %3037 = vmatprep.subr.mxu0 0.0
    %3038 = vmatpush1.msra.mxu0 %v31
    %3039 = vmatprep.subr.mxu0 0.0
    %3040 = vmatpush1.msra.mxu0 %v32
    %3041 = vmatprep.subr.mxu0 0.0
    %3042 = vmatpush1.msra.mxu0 %v33
    %3043 = vmatprep.subr.mxu0 0.0
    %3044 = vmatpush1.msra.mxu0 %v34
    %3045 = vmatprep.subr.mxu0 0.0
    %3046 = vmatpush1.msra.mxu0 %v35
    %3047 = vmatprep.subr.mxu0 0.0
    %3048 = vmatpush1.msra.mxu0 %v36
    %3049 = vmatprep.subr.mxu0 0.0
    %3050 = vmatpush1.msra.mxu0 %v37
    %3051 = vmatprep.subr.mxu0 0.0
    %3052 = vmatpush1.msra.mxu0 %v38
    %3053 = vmatprep.subr.mxu0 0.0
    %3054 = vmatpush1.msra.mxu0 %v39
    %3055 = vmatprep.subr.mxu0 0.0
    %3056 = vmatpush1.msra.mxu0 %v40
    %3057 = vmatprep.subr.mxu0 0.0
    %3058 = vmatpush1.msra.mxu0 %v41
    %3059 = vmatprep.subr.mxu0 0.0
    %3060 = vmatpush1.msra.mxu0 %v42
    %3061 = vmatprep.subr.mxu0 0.0
    %3062 = vmatpush1.msra.mxu0 %v43
    %3063 = vmatprep.subr.mxu0 0.0
    %3064 = vmatpush1.msra.mxu0 %v44
    %3065 = vmatprep.subr.mxu0 0.0
    %3066 = vmatpush1.msra.mxu0 %v45
    %3067 = vmatprep.subr.mxu0 0.0
    %3068 = vmatpush1.msra.mxu0 %v46
    %3069 = vmatprep.subr.mxu0 0.0
    %3070 = vmatpush1.msra.mxu0 %v47
    %3071 = vmatprep.subr.mxu0 0.0
    %3072 = vmatpush1.msra.mxu0 %v48
    %3073 = vmatprep.subr.mxu0 0.0
    %3074 = vmatpush1.msra.mxu0 %v49
    %3075 = vmatprep.subr.mxu0 0.0
    %3076 = vmatpush1.msra.mxu0 %v50
    %3077 = vmatprep.subr.mxu0 0.0
    %3078 = vmatpush1.msra.mxu0 %v51
    %3079 = vmatprep.subr.mxu0 0.0
    %3080 = vmatpush1.msra.mxu0 %v52
    %3081 = vmatprep.subr.mxu0 0.0
    %3082 = vmatpush1.msra.mxu0 %v53
    %3083 = vmatprep.subr.mxu0 0.0
    %3084 = vmatpush1.msra.mxu0 %v54
    %3085 = vmatprep.subr.mxu0 0.0
    %3086 = vmatpush1.msra.mxu0 %v55
    %3087 = vmatprep.subr.mxu0 0.0
    %3088 = vmatpush1.msra.mxu0 %v56
    %3089 = vmatprep.subr.mxu0 0.0
    %3090 = vmatpush1.msra.mxu0 %v57
    %3091 = vmatprep.mubr.f32.mxu0 %v3000
    %3092 = vmatmul.mubr.f32.gmra.mrb[0].mxu0 %v2992
    %v3093 = vpop.f32.mrb[0].mxu0
    %v3094 = vadd.f32 %v184, %v3093
    %v3095 = vpop.f32.mrb[0].mxu0
    %3096 = vdwg.mxu0
    %3097 = vmatprep.subr.mxu0 0.0
    %3098 = vmatpush1.msra.mxu0 %v58
    %3099 = vmatprep.subr.mxu0 0.0
    %3100 = vmatpush1.msra.mxu0 %v59
    %3101 = vmatprep.subr.mxu0 0.0
    %3102 = vmatpush1.msra.mxu0 %v60
    %3103 = vmatprep.subr.mxu0 0.0
    %3104 = vmatpush1.msra.mxu0 %v61
    %3105 = vmatprep.subr.mxu0 0.0
    %3106 = vmatpush1.msra.mxu0 %v62
    %3107 = vmatprep.subr.mxu0 0.0
    %3108 = vmatpush1.msra.mxu0 %v63
    %3109 = vmatprep.subr.mxu0 0.0
    %3110 = vmatpush1.msra.mxu0 %v64
    %3111 = vmatprep.subr.mxu0 0.0
    %3112 = vmatpush1.msra.mxu0 %v65
    %3113 = vmatprep.subr.mxu0 0.0
    %3114 = vmatpush1.msra.mxu0 %v66
    %3115 = vmatprep.subr.mxu0 0.0
    %3116 = vmatpush1.msra.mxu0 %v67
    %3117 = vmatprep.subr.mxu0 0.0
    %3118 = vmatpush1.msra.mxu0 %v68
    %3119 = vmatprep.subr.mxu0 0.0
    %3120 = vmatpush1.msra.mxu0 %v69
    %3121 = vmatprep.subr.mxu0 0.0
    %3122 = vmatpush1.msra.mxu0 %v70
    %3123 = vmatprep.subr.mxu0 0.0
    %3124 = vmatpush1.msra.mxu0 %v71
    %3125 = vmatprep.subr.mxu0 0.0
    %3126 = vmatpush1.msra.mxu0 %v72
    %3127 = vmatprep.subr.mxu0 0.0
    %3128 = vmatpush1.msra.mxu0 %v73
    %3129 = vmatprep.subr.mxu0 0.0
    %3130 = vmatpush1.msra.mxu0 %v74
    %3131 = vmatprep.subr.mxu0 0.0
    %3132 = vmatpush1.msra.mxu0 %v75
    %3133 = vmatprep.subr.mxu0 0.0
    %3134 = vmatpush1.msra.mxu0 %v76
    %3135 = vmatprep.subr.mxu0 0.0
    %3136 = vmatpush1.msra.mxu0 %v77
    %3137 = vmatprep.subr.mxu0 0.0
    %3138 = vmatpush1.msra.mxu0 %v78
    %3139 = vmatprep.subr.mxu0 0.0
    %3140 = vmatpush1.msra.mxu0 %v79
    %3141 = vmatprep.subr.mxu0 0.0
    %3142 = vmatpush1.msra.mxu0 %v80
    %3143 = vmatprep.subr.mxu0 0.0
    %3144 = vmatpush1.msra.mxu0 %v81
    %3145 = vmatprep.subr.mxu0 0.0
    %3146 = vmatpush1.msra.mxu0 %v82
    %3147 = vmatprep.subr.mxu0 0.0
    %3148 = vmatpush1.msra.mxu0 %v83
    %3149 = vmatprep.subr.mxu0 0.0
    %3150 = vmatpush1.msra.mxu0 %v84
    %3151 = vmatprep.subr.mxu0 0.0
    %3152 = vmatpush1.msra.mxu0 %v85
    %3153 = vmatprep.subr.mxu0 0.0
    %3154 = vmatpush1.msra.mxu0 %v86
    %3155 = vmatprep.subr.mxu0 0.0
    %3156 = vmatpush1.msra.mxu0 %v87
    %3157 = vmatprep.subr.mxu0 0.0
    %3158 = vmatpush1.msra.mxu0 %v88
    %3159 = vmatprep.subr.mxu0 0.0
    %3160 = vmatpush1.msra.mxu0 %v89
    %3161 = vmatprep.mubr.f32.mxu0 %v3001
    %3162 = vmatmul.mubr.f32.gmra.mrb[0].mxu0 %v2999
    %v3163 = vpop.f32.mrb[0].mxu0
    %v3164 = vadd.f32 %v3094, %v3163
    %v3165 = vpop.f32.mrb[0].mxu0
    %3166 = vdwg.mxu0
    %3167 = vmatprep.subr.mxu0 0.0
    %3168 = vmatpush1.msra.mxu0 %v90
    %3169 = vmatprep.subr.mxu0 0.0
    %3170 = vmatpush1.msra.mxu0 %v91
    %3171 = vmatprep.subr.mxu0 0.0
    %3172 = vmatpush1.msra.mxu0 %v92
    %3173 = vmatprep.subr.mxu0 0.0
    %3174 = vmatpush1.msra.mxu0 %v93
    %3175 = vmatprep.subr.mxu0 0.0
    %3176 = vmatpush1.msra.mxu0 %v94
    %3177 = vmatprep.subr.mxu0 0.0
    %3178 = vmatpush1.msra.mxu0 %v95
    %3179 = vmatprep.subr.mxu0 0.0
    %3180 = vmatpush1.msra.mxu0 %v96
    %3181 = vmatprep.subr.mxu0 0.0
    %3182 = vmatpush1.msra.mxu0 %v97
    %3183 = vmatprep.subr.mxu0 0.0
    %3184 = vmatpush1.msra.mxu0 %v98
    %3185 = vmatprep.subr.mxu0 0.0
    %3186 = vmatpush1.msra.mxu0 %v99
    %3187 = vmatprep.subr.mxu0 0.0
    %3188 = vmatpush1.msra.mxu0 %v100
    %3189 = vmatprep.subr.mxu0 0.0
    %3190 = vmatpush1.msra.mxu0 %v101
    %3191 = vmatprep.subr.mxu0 0.0
    %3192 = vmatpush1.msra.mxu0 %v102
    %3193 = vmatprep.subr.mxu0 0.0
    %3194 = vmatpush1.msra.mxu0 %v103
    %3195 = vmatprep.subr.mxu0 0.0
    %3196 = vmatpush1.msra.mxu0 %v104
    %3197 = vmatprep.subr.mxu0 0.0
    %3198 = vmatpush1.msra.mxu0 %v105
    %3199 = vmatprep.subr.mxu0 0.0
    %3200 = vmatpush1.msra.mxu0 %v106
    %3201 = vmatprep.subr.mxu0 0.0
    %3202 = vmatpush1.msra.mxu0 %v107
    %3203 = vmatprep.subr.mxu0 0.0
    %3204 = vmatpush1.msra.mxu0 %v108
    %3205 = vmatprep.subr.mxu0 0.0
    %3206 = vmatpush1.msra.mxu0 %v109
    %3207 = vmatprep.subr.mxu0 0.0
    %3208 = vmatpush1.msra.mxu0 %v110
    %3209 = vmatprep.subr.mxu0 0.0
    %3210 = vmatpush1.msra.mxu0 %v111
    %3211 = vmatprep.subr.mxu0 0.0
    %3212 = vmatpush1.msra.mxu0 %v112
    %3213 = vmatprep.subr.mxu0 0.0
    %3214 = vmatpush1.msra.mxu0 %v113
    %3215 = vmatprep.subr.mxu0 0.0
    %3216 = vmatpush1.msra.mxu0 %v114
    %3217 = vmatprep.subr.mxu0 0.0
    %3218 = vmatpush1.msra.mxu0 %v115
    %3219 = vmatprep.subr.mxu0 0.0
    %3220 = vmatpush1.msra.mxu0 %v116
    %3221 = vmatprep.subr.mxu0 0.0
    %3222 = vmatpush1.msra.mxu0 %v117
    %3223 = vmatprep.subr.mxu0 0.0
    %3224 = vmatpush1.msra.mxu0 %v118
    %3225 = vmatprep.subr.mxu0 0.0
    %3226 = vmatpush1.msra.mxu0 %v119
    %3227 = vmatprep.subr.mxu0 0.0
    %3228 = vmatpush1.msra.mxu0 %v120
    %3229 = vmatprep.subr.mxu0 0.0
    %3230 = vmatpush1.msra.mxu0 %v121
    %3231 = vmatprep.mubr.f32.mxu0 %v3017
    %3232 = vmatmul.mubr.f32.gmra.mrb[0].mxu0 %v3009
    %v3233 = vpop.f32.mrb[0].mxu0
    %v3234 = vadd.f32 %v3164, %v3233
    %v3235 = vpop.f32.mrb[0].mxu0
    %3236 = vdwg.mxu0
    %3237 = vmatprep.subr.mxu0 0.0
    %3238 = vmatpush1.msra.mxu0 %v122
    %3239 = vmatprep.subr.mxu0 0.0
    %3240 = vmatpush1.msra.mxu0 %v123
    %3241 = vmatprep.subr.mxu0 0.0
    %3242 = vmatpush1.msra.mxu0 %v124
    %3243 = vmatprep.subr.mxu0 0.0
    %3244 = vmatpush1.msra.mxu0 %v125
    %3245 = vmatprep.subr.mxu0 0.0
    %3246 = vmatpush1.msra.mxu0 %v126
    %3247 = vmatprep.subr.mxu0 0.0
    %3248 = vmatpush1.msra.mxu0 %v127
    %3249 = vmatprep.subr.mxu0 0.0
    %3250 = vmatpush1.msra.mxu0 %v128
    %3251 = vmatprep.subr.mxu0 0.0
    %3252 = vmatpush1.msra.mxu0 %v129
    %3253 = vmatprep.subr.mxu0 0.0
    %3254 = vmatpush1.msra.mxu0 %v130
    %3255 = vmatprep.subr.mxu0 0.0
    %3256 = vmatpush1.msra.mxu0 %v131
    %3257 = vmatprep.subr.mxu0 0.0
    %3258 = vmatpush1.msra.mxu0 %v132
    %3259 = vmatprep.subr.mxu0 0.0
    %3260 = vmatpush1.msra.mxu0 %v133
    %3261 = vmatprep.subr.mxu0 0.0
    %3262 = vmatpush1.msra.mxu0 %v134
    %3263 = vmatprep.subr.mxu0 0.0
    %3264 = vmatpush1.msra.mxu0 %v135
    %3265 = vmatprep.subr.mxu0 0.0
    %3266 = vmatpush1.msra.mxu0 %v136
    %3267 = vmatprep.subr.mxu0 0.0
    %3268 = vmatpush1.msra.mxu0 %v137
    %3269 = vmatprep.subr.mxu0 0.0
    %3270 = vmatpush1.msra.mxu0 %v138
    %3271 = vmatprep.subr.mxu0 0.0
    %3272 = vmatpush1.msra.mxu0 %v139
    %3273 = vmatprep.subr.mxu0 0.0
    %3274 = vmatpush1.msra.mxu0 %v140
    %3275 = vmatprep.subr.mxu0 0.0
    %3276 = vmatpush1.msra.mxu0 %v141
    %3277 = vmatprep.subr.mxu0 0.0
    %3278 = vmatpush1.msra.mxu0 %v142
    %3279 = vmatprep.subr.mxu0 0.0
    %3280 = vmatpush1.msra.mxu0 %v143
    %3281 = vmatprep.subr.mxu0 0.0
    %3282 = vmatpush1.msra.mxu0 %v144
    %3283 = vmatprep.subr.mxu0 0.0
    %3284 = vmatpush1.msra.mxu0 %v145
    %3285 = vmatprep.subr.mxu0 0.0
    %3286 = vmatpush1.msra.mxu0 %v146
    %3287 = vmatprep.subr.mxu0 0.0
    %3288 = vmatpush1.msra.mxu0 %v147
    %3289 = vmatprep.subr.mxu0 0.0
    %3290 = vmatpush1.msra.mxu0 %v148
    %3291 = vmatprep.subr.mxu0 0.0
    %3292 = vmatpush1.msra.mxu0 %v149
    %3293 = vmatprep.subr.mxu0 0.0
    %3294 = vmatpush1.msra.mxu0 %v150
    %3295 = vmatprep.subr.mxu0 0.0
    %3296 = vmatpush1.msra.mxu0 %v151
    %3297 = vmatprep.subr.mxu0 0.0
    %3298 = vmatpush1.msra.mxu0 %v152
    %3299 = vmatprep.subr.mxu0 0.0
    %3300 = vmatpush1.msra.mxu0 %v153
    %3301 = vmatprep.mubr.f32.mxu0 %v3018
    %3302 = vmatmul.mubr.f32.gmra.mrb[0].mxu0 %v3016
    %v3303 = vpop.f32.mrb[0].mxu0
    %v3304 = vadd.f32 %v3234, %v3303
    %v3305 = vpop.f32.mrb[0].mxu0
    %3306 = vdwg.mxu0
    %v3307 = vsel %vm524, %v3304, -inf
    %3308 = vmax.xlane.f32.xlu0 %v3307
    %v3309 = vpop.xlane.xlu0 %3308
    %v3310 = vsub.f32 %v3304, %v3309
    %v3311 = vmul.f32 %v3310, 1.442695
    %v3312 = vpow.pop %v3311
    %v3313 = vsel %vm524, %v3312, 0.0
    %3314 = vadd.xlane.f32.xlu0 %v3313
    %v3315 = vpop.xlane.xlu0 %3314
    %v3316 = vrcp.pop %v3315
    %v3317 = vmul.f32 %v3312, %v3316
    %v3318 = vsub.f32 %v3317, %v178
    %v3320 = vsel %vm537, %v3318, 0
    %3322 = vmatprep.subr.mxu0 %v155
    %3323 = vmatpush1.msra.mxu0 %v154
    %3324 = vmatprep.subr.mxu0 %v546
    %3325 = vmatpush1.msra.mxu0 %v543
    %3326 = vmatprep.subr.mxu0 0.0
    %3327 = vmatpush1.msra.mxu0 0.0
    %3328 = vmatprep.subr.mxu0 0.0
    %3329 = vmatpush1.msra.mxu0 0.0
    %3330 = vmatprep.subr.mxu0 0.0
    %3331 = vmatpush1.msra.mxu0 0.0
    %3332 = vmatprep.subr.mxu0 0.0
    %3333 = vmatpush1.msra.mxu0 0.0
    %3334 = vmatprep.subr.mxu0 0.0
    %3335 = vmatpush1.msra.mxu0 0.0
    %3336 = vmatprep.subr.mxu0 0.0
    %3337 = vmatpush1.msra.mxu0 0.0
    %3338 = vmatprep.subr.mxu0 0.0
    %3339 = vmatpush1.msra.mxu0 0.0
    %3340 = vmatprep.subr.mxu0 0.0
    %3341 = vmatpush1.msra.mxu0 0.0
    %3342 = vmatprep.subr.mxu0 0.0
    %3343 = vmatpush1.msra.mxu0 0.0
    %3344 = vmatprep.subr.mxu0 0.0
    %3345 = vmatpush1.msra.mxu0 0.0
    %3346 = vmatprep.subr.mxu0 0.0
    %3347 = vmatpush1.msra.mxu0 0.0
    %3348 = vmatprep.subr.mxu0 0.0
    %3349 = vmatpush1.msra.mxu0 0.0
    %3350 = vmatprep.subr.mxu0 0.0
    %3351 = vmatpush1.msra.mxu0 0.0
    %3352 = vmatprep.subr.mxu0 0.0
    %3353 = vmatpush1.msra.mxu0 0.0
    %3354 = vmatprep.subr.mxu0 0.0
    %3355 = vmatpush1.msra.mxu0 0.0
    %3356 = vmatprep.subr.mxu0 0.0
    %3357 = vmatpush1.msra.mxu0 0.0
    %3358 = vmatprep.subr.mxu0 0.0
    %3359 = vmatpush1.msra.mxu0 0.0
    %3360 = vmatprep.subr.mxu0 0.0
    %3361 = vmatpush1.msra.mxu0 0.0
    %3362 = vmatprep.subr.mxu0 0.0
    %3363 = vmatpush1.msra.mxu0 0.0
    %3364 = vmatprep.subr.mxu0 0.0
    %3365 = vmatpush1.msra.mxu0 0.0
    %3366 = vmatprep.subr.mxu0 0.0
    %3367 = vmatpush1.msra.mxu0 0.0
    %3368 = vmatprep.subr.mxu0 0.0
    %3369 = vmatpush1.msra.mxu0 0.0
    %3370 = vmatprep.subr.mxu0 0.0
    %3371 = vmatpush1.msra.mxu0 0.0
    %3372 = vmatprep.subr.mxu0 0.0
    %3373 = vmatpush1.msra.mxu0 0.0
    %3374 = vmatprep.subr.mxu0 0.0
    %3375 = vmatpush1.msra.mxu0 0.0
    %3376 = vmatprep.subr.mxu0 0.0
    %3377 = vmatpush1.msra.mxu0 0.0
    %3378 = vmatprep.subr.mxu0 0.0
    %3379 = vmatpush1.msra.mxu0 0.0
    %3380 = vmatprep.subr.mxu0 0.0
    %3381 = vmatpush1.msra.mxu0 0.0
    %3382 = vmatprep.subr.mxu0 0.0
    %3383 = vmatpush1.msra.mxu0 0.0
    %3384 = vmatprep.subr.mxu0 0.0
    %3385 = vmatpush1.msra.mxu0 0.0
    %3386 = vmatprep.mubr.f32.mxu0 0.0
    %3387 = vmatmul.mubr.f32.gmra.mrb[0].mxu0 %v3320
    %v3388 = vpop.f32.mrb[0].mxu0
    %v3389 = vadd.f32 0.0, %v3388
    %v3390 = vpop.f32.mrb[0].mxu0
    %v3391 = vadd.f32 0.0, %v3390
    %3392 = vdwg.mxu0
    %3393 = vmatprep.subr.mxu0 %v157
    %3394 = vmatpush1.msra.mxu0 %v156
    %3395 = vmatprep.subr.mxu0 %v552
    %3396 = vmatpush1.msra.mxu0 %v549
    %3397 = vmatprep.subr.mxu0 0.0
    %3398 = vmatpush1.msra.mxu0 0.0
    %3399 = vmatprep.subr.mxu0 0.0
    %3400 = vmatpush1.msra.mxu0 0.0
    %3401 = vmatprep.subr.mxu0 0.0
    %3402 = vmatpush1.msra.mxu0 0.0
    %3403 = vmatprep.subr.mxu0 0.0
    %3404 = vmatpush1.msra.mxu0 0.0
    %3405 = vmatprep.subr.mxu0 0.0
    %3406 = vmatpush1.msra.mxu0 0.0
    %3407 = vmatprep.subr.mxu0 0.0
    %3408 = vmatpush1.msra.mxu0 0.0
    %3409 = vmatprep.subr.mxu0 0.0
    %3410 = vmatpush1.msra.mxu0 0.0
    %3411 = vmatprep.subr.mxu0 0.0
    %3412 = vmatpush1.msra.mxu0 0.0
    %3413 = vmatprep.subr.mxu0 0.0
    %3414 = vmatpush1.msra.mxu0 0.0
    %3415 = vmatprep.subr.mxu0 0.0
    %3416 = vmatpush1.msra.mxu0 0.0
    %3417 = vmatprep.subr.mxu0 0.0
    %3418 = vmatpush1.msra.mxu0 0.0
    %3419 = vmatprep.subr.mxu0 0.0
    %3420 = vmatpush1.msra.mxu0 0.0
    %3421 = vmatprep.subr.mxu0 0.0
    %3422 = vmatpush1.msra.mxu0 0.0
    %3423 = vmatprep.subr.mxu0 0.0
    %3424 = vmatpush1.msra.mxu0 0.0
    %3425 = vmatprep.subr.mxu0 0.0
    %3426 = vmatpush1.msra.mxu0 0.0
    %3427 = vmatprep.subr.mxu0 0.0
    %3428 = vmatpush1.msra.mxu0 0.0
    %3429 = vmatprep.subr.mxu0 0.0
    %3430 = vmatpush1.msra.mxu0 0.0
    %3431 = vmatprep.subr.mxu0 0.0
    %3432 = vmatpush1.msra.mxu0 0.0
    %3433 = vmatprep.subr.mxu0 0.0
    %3434 = vmatpush1.msra.mxu0 0.0
    %3435 = vmatprep.subr.mxu0 0.0
    %3436 = vmatpush1.msra.mxu0 0.0
    %3437 = vmatprep.subr.mxu0 0.0
    %3438 = vmatpush1.msra.mxu0 0.0
    %3439 = vmatprep.subr.mxu0 0.0
    %3440 = vmatpush1.msra.mxu0 0.0
    %3441 = vmatprep.subr.mxu0 0.0
    %3442 = vmatpush1.msra.mxu0 0.0
    %3443 = vmatprep.subr.mxu0 0.0
    %3444 = vmatpush1.msra.mxu0 0.0
    %3445 = vmatprep.subr.mxu0 0.0
    %3446 = vmatpush1.msra.mxu0 0.0
    %3447 = vmatprep.subr.mxu0 0.0
    %3448 = vmatpush1.msra.mxu0 0.0
    %3449 = vmatprep.subr.mxu0 0.0
    %3450 = vmatpush1.msra.mxu0 0.0
    %3451 = vmatprep.subr.mxu0 0.0
    %3452 = vmatpush1.msra.mxu0 0.0
    %3453 = vmatprep.subr.mxu0 0.0
    %3454 = vmatpush1.msra.mxu0 0.0
    %3455 = vmatprep.subr.mxu0 0.0
    %3456 = vmatpush1.msra.mxu0 0.0
    %3457 = vmatprep.mubr.f32.mxu0 0.0
    %3458 = vmatmul.mubr.f32.gmra.mrb[0].mxu0 %v3320
    %v3459 = vpop.f32.mrb[0].mxu0
    %v3460 = vadd.f32 0.0, %v3459
    %v3461 = vpop.f32.mrb[0].mxu0
    %v3462 = vadd.f32 0.0, %v3461
    %3463 = vdwg.mxu0
    %3464 = vmatprep.subr.mxu0 %v159
    %3465 = vmatpush1.msra.mxu0 %v158
    %3466 = vmatprep.subr.mxu0 %v558
    %3467 = vmatpush1.msra.mxu0 %v555
    %3468 = vmatprep.subr.mxu0 0.0
    %3469 = vmatpush1.msra.mxu0 0.0
    %3470 = vmatprep.subr.mxu0 0.0
    %3471 = vmatpush1.msra.mxu0 0.0
    %3472 = vmatprep.subr.mxu0 0.0
    %3473 = vmatpush1.msra.mxu0 0.0
    %3474 = vmatprep.subr.mxu0 0.0
    %3475 = vmatpush1.msra.mxu0 0.0
    %3476 = vmatprep.subr.mxu0 0.0
    %3477 = vmatpush1.msra.mxu0 0.0
    %3478 = vmatprep.subr.mxu0 0.0
    %3479 = vmatpush1.msra.mxu0 0.0
    %3480 = vmatprep.subr.mxu0 0.0
    %3481 = vmatpush1.msra.mxu0 0.0
    %3482 = vmatprep.subr.mxu0 0.0
    %3483 = vmatpush1.msra.mxu0 0.0
    %3484 = vmatprep.subr.mxu0 0.0
    %3485 = vmatpush1.msra.mxu0 0.0
    %3486 = vmatprep.subr.mxu0 0.0
    %3487 = vmatpush1.msra.mxu0 0.0
    %3488 = vmatprep.subr.mxu0 0.0
    %3489 = vmatpush1.msra.mxu0 0.0
    %3490 = vmatprep.subr.mxu0 0.0
    %3491 = vmatpush1.msra.mxu0 0.0
    %3492 = vmatprep.subr.mxu0 0.0
    %3493 = vmatpush1.msra.mxu0 0.0
    %3494 = vmatprep.subr.mxu0 0.0
    %3495 = vmatpush1.msra.mxu0 0.0
    %3496 = vmatprep.subr.mxu0 0.0
    %3497 = vmatpush1.msra.mxu0 0.0
    %3498 = vmatprep.subr.mxu0 0.0
    %3499 = vmatpush1.msra.mxu0 0.0
    %3500 = vmatprep.subr.mxu0 0.0
    %3501 = vmatpush1.msra.mxu0 0.0
    %3502 = vmatprep.subr.mxu0 0.0
    %3503 = vmatpush1.msra.mxu0 0.0
    %3504 = vmatprep.subr.mxu0 0.0
    %3505 = vmatpush1.msra.mxu0 0.0
    %3506 = vmatprep.subr.mxu0 0.0
    %3507 = vmatpush1.msra.mxu0 0.0
    %3508 = vmatprep.subr.mxu0 0.0
    %3509 = vmatpush1.msra.mxu0 0.0
    %3510 = vmatprep.subr.mxu0 0.0
    %3511 = vmatpush1.msra.mxu0 0.0
    %3512 = vmatprep.subr.mxu0 0.0
    %3513 = vmatpush1.msra.mxu0 0.0
    %3514 = vmatprep.subr.mxu0 0.0
    %3515 = vmatpush1.msra.mxu0 0.0
    %3516 = vmatprep.subr.mxu0 0.0
    %3517 = vmatpush1.msra.mxu0 0.0
    %3518 = vmatprep.subr.mxu0 0.0
    %3519 = vmatpush1.msra.mxu0 0.0
    %3520 = vmatprep.subr.mxu0 0.0
    %3521 = vmatpush1.msra.mxu0 0.0
    %3522 = vmatprep.subr.mxu0 0.0
    %3523 = vmatpush1.msra.mxu0 0.0
    %3524 = vmatprep.subr.mxu0 0.0
    %3525 = vmatpush1.msra.mxu0 0.0
    %3526 = vmatprep.subr.mxu0 0.0
    %3527 = vmatpush1.msra.mxu0 0.0
    %3528 = vmatprep.mubr.f32.mxu0 0.0
    %3529 = vmatmul.mubr.f32.gmra.mrb[0].mxu0 %v3320
    %v3530 = vpop.f32.mrb[0].mxu0
    %v3531 = vadd.f32 0.0, %v3530
    %v3532 = vpop.f32.mrb[0].mxu0
    %v3533 = vadd.f32 0.0, %v3532
    %3534 = vdwg.mxu0
    %3535 = vmatprep.subr.mxu0 %v161
    %3536 = vmatpush1.msra.mxu0 %v160
    %3537 = vmatprep.subr.mxu0 %v564
    %3538 = vmatpush1.msra.mxu0 %v561
    %3539 = vmatprep.subr.mxu0 0.0
    %3540 = vmatpush1.msra.mxu0 0.0
    %3541 = vmatprep.subr.mxu0 0.0
    %3542 = vmatpush1.msra.mxu0 0.0
    %3543 = vmatprep.subr.mxu0 0.0
    %3544 = vmatpush1.msra.mxu0 0.0
    %3545 = vmatprep.subr.mxu0 0.0
    %3546 = vmatpush1.msra.mxu0 0.0
    %3547 = vmatprep.subr.mxu0 0.0
    %3548 = vmatpush1.msra.mxu0 0.0
    %3549 = vmatprep.subr.mxu0 0.0
    %3550 = vmatpush1.msra.mxu0 0.0
    %3551 = vmatprep.subr.mxu0 0.0
    %3552 = vmatpush1.msra.mxu0 0.0
    %3553 = vmatprep.subr.mxu0 0.0
    %3554 = vmatpush1.msra.mxu0 0.0
    %3555 = vmatprep.subr.mxu0 0.0
    %3556 = vmatpush1.msra.mxu0 0.0
    %3557 = vmatprep.subr.mxu0 0.0
    %3558 = vmatpush1.msra.mxu0 0.0
    %3559 = vmatprep.subr.mxu0 0.0
    %3560 = vmatpush1.msra.mxu0 0.0
    %3561 = vmatprep.subr.mxu0 0.0
    %3562 = vmatpush1.msra.mxu0 0.0
    %3563 = vmatprep.subr.mxu0 0.0
    %3564 = vmatpush1.msra.mxu0 0.0
    %3565 = vmatprep.subr.mxu0 0.0
    %3566 = vmatpush1.msra.mxu0 0.0
    %3567 = vmatprep.subr.mxu0 0.0
    %3568 = vmatpush1.msra.mxu0 0.0
    %3569 = vmatprep.subr.mxu0 0.0
    %3570 = vmatpush1.msra.mxu0 0.0
    %3571 = vmatprep.subr.mxu0 0.0
    %3572 = vmatpush1.msra.mxu0 0.0
    %3573 = vmatprep.subr.mxu0 0.0
    %3574 = vmatpush1.msra.mxu0 0.0
    %3575 = vmatprep.subr.mxu0 0.0
    %3576 = vmatpush1.msra.mxu0 0.0
    %3577 = vmatprep.subr.mxu0 0.0
    %3578 = vmatpush1.msra.mxu0 0.0
    %3579 = vmatprep.subr.mxu0 0.0
    %3580 = vmatpush1.msra.mxu0 0.0
    %3581 = vmatprep.subr.mxu0 0.0
    %3582 = vmatpush1.msra.mxu0 0.0
    %3583 = vmatprep.subr.mxu0 0.0
    %3584 = vmatpush1.msra.mxu0 0.0
    %3585 = vmatprep.subr.mxu0 0.0
    %3586 = vmatpush1.msra.mxu0 0.0
    %3587 = vmatprep.subr.mxu0 0.0
    %3588 = vmatpush1.msra.mxu0 0.0
    %3589 = vmatprep.subr.mxu0 0.0
    %3590 = vmatpush1.msra.mxu0 0.0
    %3591 = vmatprep.subr.mxu0 0.0
    %3592 = vmatpush1.msra.mxu0 0.0
    %3593 = vmatprep.subr.mxu0 0.0
    %3594 = vmatpush1.msra.mxu0 0.0
    %3595 = vmatprep.subr.mxu0 0.0
    %3596 = vmatpush1.msra.mxu0 0.0
    %3597 = vmatprep.subr.mxu0 0.0
    %3598 = vmatpush1.msra.mxu0 0.0
    %3599 = vmatprep.mubr.f32.mxu0 0.0
    %3600 = vmatmul.mubr.f32.gmra.mrb[0].mxu0 %v3320
    %v3601 = vpop.f32.mrb[0].mxu0
    %v3602 = vadd.f32 0.0, %v3601
    %v3603 = vpop.f32.mrb[0].mxu0
    %v3604 = vadd.f32 0.0, %v3603
    %3605 = vdwg.mxu0
    %vm3606 = vcmp.ge.f32.partialorder %v3389, 0.0
    %vm3607 = vcmp.ge.f32.partialorder %v3391, 0.0
    %vm3608 = vcmp.ge.f32.partialorder %v3460, 0.0
    %vm3609 = vcmp.ge.f32.partialorder %v3462, 0.0
    %vm3610 = vcmp.ge.f32.partialorder %v3531, 0.0
    %vm3611 = vcmp.ge.f32.partialorder %v3533, 0.0
    %vm3612 = vcmp.ge.f32.partialorder %v3602, 0.0
    %vm3613 = vcmp.ge.f32.partialorder %v3604, 0.0
    %v3614 = vsel %vm3606, 0.007, -0.007
    %v3615 = vsel %vm3607, 0.007, -0.007
    %v3616 = vsel %vm3608, 0.007, -0.007
    %v3617 = vsel %vm3609, 0.007, -0.007
    %v3618 = vsel %vm3610, 0.007, -0.007
    %v3619 = vsel %vm3611, 0.007, -0.007
    %v3620 = vsel %vm3612, 0.007, -0.007
    %v3621 = vsel %vm3613, 0.007, -0.007
    %v3630 = vcombine.low %v3614, %v3615
    %v3631 = vcombine.low %v3616, %v3617
    %v3633 = vunpack.c.l.s4 1983009808
    %v3634 = vunpack.c.0.s8 %v3633
    %v3635 = vlaneseq
    %v3636 = vshrl.u32 %v3635, 7
    %v3637 = vsub.s32 %v3634, %v3636
    %v3638 = vrot.slane %v3630, %v3637
    %v3640 = vunpack.c.l.s4 1983009808
    %v3641 = vunpack.c.0.s8 %v3640
    %v3642 = vlaneseq
    %v3643 = vshrl.u32 %v3642, 7
    %v3644 = vsub.s32 %v3641, %v3643
    %v3645 = vrot.slane %v3631, %v3644
    %v3646 = vcombine.low %v3638, %v3645
    %v3647 = vcombine.low %v3618, %v3619
    %v3648 = vcombine.low %v3620, %v3621
    %v3650 = vunpack.c.l.s4 1983009808
    %v3651 = vunpack.c.0.s8 %v3650
    %v3652 = vlaneseq
    %v3653 = vshrl.u32 %v3652, 7
    %v3654 = vsub.s32 %v3651, %v3653
    %v3655 = vrot.slane %v3647, %v3654
    %v3657 = vunpack.c.l.s4 1983009808
    %v3658 = vunpack.c.0.s8 %v3657
    %v3659 = vlaneseq
    %v3660 = vshrl.u32 %v3659, 7
    %v3661 = vsub.s32 %v3658, %v3660
    %v3662 = vrot.slane %v3648, %v3661
    %v3663 = vcombine.low %v3655, %v3662
    %v3666 = vadd.f32 %v2981, %v3646
    %v3667 = vadd.f32 %v2982, %v3663
    %v3668 = vmax.f32 %v3666, %v188
    %v3669 = vmax.f32 %v3667, %v189
    %v3670 = vmin.f32 %v3668, %v192
    %v3671 = vmin.f32 %v3669, %v193
    %v3674 = vcombine.high %v3670, %v3670
    %v3676 = vunpack.c.l.s4 1983009808
    %v3677 = vunpack.c.0.s8 %v3676
    %v3678 = vlaneseq
    %v3679 = vshrl.u32 %v3678, 7
    %v3680 = vsub.s32 %v3677, %v3679
    %v3681 = vrot.slane %v3670, %v3680
    %v3683 = vunpack.c.l.s4 1983009808
    %v3684 = vunpack.c.0.s8 %v3683
    %v3685 = vlaneseq
    %v3686 = vshrl.u32 %v3685, 7
    %v3687 = vsub.s32 %v3684, %v3686
    %v3688 = vrot.slane %v3674, %v3687
    %v3689 = vcombine.high %v3681, %v3681
    %v3690 = vcombine.high %v3688, %v3688
    %v3691 = vcombine.high %v3671, %v3671
    %v3693 = vunpack.c.l.s4 1983009808
    %v3694 = vunpack.c.0.s8 %v3693
    %v3695 = vlaneseq
    %v3696 = vshrl.u32 %v3695, 7
    %v3697 = vsub.s32 %v3694, %v3696
    %v3698 = vrot.slane %v3671, %v3697
    %v3700 = vunpack.c.l.s4 1983009808
    %v3701 = vunpack.c.0.s8 %v3700
    %v3702 = vlaneseq
    %v3703 = vshrl.u32 %v3702, 7
    %v3704 = vsub.s32 %v3701, %v3703
    %v3705 = vrot.slane %v3691, %v3704
    %v3706 = vcombine.high %v3698, %v3698
    %v3707 = vcombine.high %v3705, %v3705
    %3716 = vmatprep.subr.mxu0 0.0
    %3717 = vmatpush1.msra.mxu0 %v26
    %3718 = vmatprep.subr.mxu0 0.0
    %3719 = vmatpush1.msra.mxu0 %v27
    %3720 = vmatprep.subr.mxu0 0.0
    %3721 = vmatpush1.msra.mxu0 %v28
    %3722 = vmatprep.subr.mxu0 0.0
    %3723 = vmatpush1.msra.mxu0 %v29
    %3724 = vmatprep.subr.mxu0 0.0
    %3725 = vmatpush1.msra.mxu0 %v30
    %3726 = vmatprep.subr.mxu0 0.0
    %3727 = vmatpush1.msra.mxu0 %v31
    %3728 = vmatprep.subr.mxu0 0.0
    %3729 = vmatpush1.msra.mxu0 %v32
    %3730 = vmatprep.subr.mxu0 0.0
    %3731 = vmatpush1.msra.mxu0 %v33
    %3732 = vmatprep.subr.mxu0 0.0
    %3733 = vmatpush1.msra.mxu0 %v34
    %3734 = vmatprep.subr.mxu0 0.0
    %3735 = vmatpush1.msra.mxu0 %v35
    %3736 = vmatprep.subr.mxu0 0.0
    %3737 = vmatpush1.msra.mxu0 %v36
    %3738 = vmatprep.subr.mxu0 0.0
    %3739 = vmatpush1.msra.mxu0 %v37
    %3740 = vmatprep.subr.mxu0 0.0
    %3741 = vmatpush1.msra.mxu0 %v38
    %3742 = vmatprep.subr.mxu0 0.0
    %3743 = vmatpush1.msra.mxu0 %v39
    %3744 = vmatprep.subr.mxu0 0.0
    %3745 = vmatpush1.msra.mxu0 %v40
    %3746 = vmatprep.subr.mxu0 0.0
    %3747 = vmatpush1.msra.mxu0 %v41
    %3748 = vmatprep.subr.mxu0 0.0
    %3749 = vmatpush1.msra.mxu0 %v42
    %3750 = vmatprep.subr.mxu0 0.0
    %3751 = vmatpush1.msra.mxu0 %v43
    %3752 = vmatprep.subr.mxu0 0.0
    %3753 = vmatpush1.msra.mxu0 %v44
    %3754 = vmatprep.subr.mxu0 0.0
    %3755 = vmatpush1.msra.mxu0 %v45
    %3756 = vmatprep.subr.mxu0 0.0
    %3757 = vmatpush1.msra.mxu0 %v46
    %3758 = vmatprep.subr.mxu0 0.0
    %3759 = vmatpush1.msra.mxu0 %v47
    %3760 = vmatprep.subr.mxu0 0.0
    %3761 = vmatpush1.msra.mxu0 %v48
    %3762 = vmatprep.subr.mxu0 0.0
    %3763 = vmatpush1.msra.mxu0 %v49
    %3764 = vmatprep.subr.mxu0 0.0
    %3765 = vmatpush1.msra.mxu0 %v50
    %3766 = vmatprep.subr.mxu0 0.0
    %3767 = vmatpush1.msra.mxu0 %v51
    %3768 = vmatprep.subr.mxu0 0.0
    %3769 = vmatpush1.msra.mxu0 %v52
    %3770 = vmatprep.subr.mxu0 0.0
    %3771 = vmatpush1.msra.mxu0 %v53
    %3772 = vmatprep.subr.mxu0 0.0
    %3773 = vmatpush1.msra.mxu0 %v54
    %3774 = vmatprep.subr.mxu0 0.0
    %3775 = vmatpush1.msra.mxu0 %v55
    %3776 = vmatprep.subr.mxu0 0.0
    %3777 = vmatpush1.msra.mxu0 %v56
    %3778 = vmatprep.subr.mxu0 0.0
    %3779 = vmatpush1.msra.mxu0 %v57
    %3780 = vmatprep.mubr.f32.mxu0 %v3689
    %3781 = vmatmul.mubr.f32.gmra.mrb[0].mxu0 %v3681
    %v3782 = vpop.f32.mrb[0].mxu0
    %v3783 = vadd.f32 %v184, %v3782
    %v3784 = vpop.f32.mrb[0].mxu0
    %3785 = vdwg.mxu0
    %3786 = vmatprep.subr.mxu0 0.0
    %3787 = vmatpush1.msra.mxu0 %v58
    %3788 = vmatprep.subr.mxu0 0.0
    %3789 = vmatpush1.msra.mxu0 %v59
    %3790 = vmatprep.subr.mxu0 0.0
    %3791 = vmatpush1.msra.mxu0 %v60
    %3792 = vmatprep.subr.mxu0 0.0
    %3793 = vmatpush1.msra.mxu0 %v61
    %3794 = vmatprep.subr.mxu0 0.0
    %3795 = vmatpush1.msra.mxu0 %v62
    %3796 = vmatprep.subr.mxu0 0.0
    %3797 = vmatpush1.msra.mxu0 %v63
    %3798 = vmatprep.subr.mxu0 0.0
    %3799 = vmatpush1.msra.mxu0 %v64
    %3800 = vmatprep.subr.mxu0 0.0
    %3801 = vmatpush1.msra.mxu0 %v65
    %3802 = vmatprep.subr.mxu0 0.0
    %3803 = vmatpush1.msra.mxu0 %v66
    %3804 = vmatprep.subr.mxu0 0.0
    %3805 = vmatpush1.msra.mxu0 %v67
    %3806 = vmatprep.subr.mxu0 0.0
    %3807 = vmatpush1.msra.mxu0 %v68
    %3808 = vmatprep.subr.mxu0 0.0
    %3809 = vmatpush1.msra.mxu0 %v69
    %3810 = vmatprep.subr.mxu0 0.0
    %3811 = vmatpush1.msra.mxu0 %v70
    %3812 = vmatprep.subr.mxu0 0.0
    %3813 = vmatpush1.msra.mxu0 %v71
    %3814 = vmatprep.subr.mxu0 0.0
    %3815 = vmatpush1.msra.mxu0 %v72
    %3816 = vmatprep.subr.mxu0 0.0
    %3817 = vmatpush1.msra.mxu0 %v73
    %3818 = vmatprep.subr.mxu0 0.0
    %3819 = vmatpush1.msra.mxu0 %v74
    %3820 = vmatprep.subr.mxu0 0.0
    %3821 = vmatpush1.msra.mxu0 %v75
    %3822 = vmatprep.subr.mxu0 0.0
    %3823 = vmatpush1.msra.mxu0 %v76
    %3824 = vmatprep.subr.mxu0 0.0
    %3825 = vmatpush1.msra.mxu0 %v77
    %3826 = vmatprep.subr.mxu0 0.0
    %3827 = vmatpush1.msra.mxu0 %v78
    %3828 = vmatprep.subr.mxu0 0.0
    %3829 = vmatpush1.msra.mxu0 %v79
    %3830 = vmatprep.subr.mxu0 0.0
    %3831 = vmatpush1.msra.mxu0 %v80
    %3832 = vmatprep.subr.mxu0 0.0
    %3833 = vmatpush1.msra.mxu0 %v81
    %3834 = vmatprep.subr.mxu0 0.0
    %3835 = vmatpush1.msra.mxu0 %v82
    %3836 = vmatprep.subr.mxu0 0.0
    %3837 = vmatpush1.msra.mxu0 %v83
    %3838 = vmatprep.subr.mxu0 0.0
    %3839 = vmatpush1.msra.mxu0 %v84
    %3840 = vmatprep.subr.mxu0 0.0
    %3841 = vmatpush1.msra.mxu0 %v85
    %3842 = vmatprep.subr.mxu0 0.0
    %3843 = vmatpush1.msra.mxu0 %v86
    %3844 = vmatprep.subr.mxu0 0.0
    %3845 = vmatpush1.msra.mxu0 %v87
    %3846 = vmatprep.subr.mxu0 0.0
    %3847 = vmatpush1.msra.mxu0 %v88
    %3848 = vmatprep.subr.mxu0 0.0
    %3849 = vmatpush1.msra.mxu0 %v89
    %3850 = vmatprep.mubr.f32.mxu0 %v3690
    %3851 = vmatmul.mubr.f32.gmra.mrb[0].mxu0 %v3688
    %v3852 = vpop.f32.mrb[0].mxu0
    %v3853 = vadd.f32 %v3783, %v3852
    %v3854 = vpop.f32.mrb[0].mxu0
    %3855 = vdwg.mxu0
    %3856 = vmatprep.subr.mxu0 0.0
    %3857 = vmatpush1.msra.mxu0 %v90
    %3858 = vmatprep.subr.mxu0 0.0
    %3859 = vmatpush1.msra.mxu0 %v91
    %3860 = vmatprep.subr.mxu0 0.0
    %3861 = vmatpush1.msra.mxu0 %v92
    %3862 = vmatprep.subr.mxu0 0.0
    %3863 = vmatpush1.msra.mxu0 %v93
    %3864 = vmatprep.subr.mxu0 0.0
    %3865 = vmatpush1.msra.mxu0 %v94
    %3866 = vmatprep.subr.mxu0 0.0
    %3867 = vmatpush1.msra.mxu0 %v95
    %3868 = vmatprep.subr.mxu0 0.0
    %3869 = vmatpush1.msra.mxu0 %v96
    %3870 = vmatprep.subr.mxu0 0.0
    %3871 = vmatpush1.msra.mxu0 %v97
    %3872 = vmatprep.subr.mxu0 0.0
    %3873 = vmatpush1.msra.mxu0 %v98
    %3874 = vmatprep.subr.mxu0 0.0
    %3875 = vmatpush1.msra.mxu0 %v99
    %3876 = vmatprep.subr.mxu0 0.0
    %3877 = vmatpush1.msra.mxu0 %v100
    %3878 = vmatprep.subr.mxu0 0.0
    %3879 = vmatpush1.msra.mxu0 %v101
    %3880 = vmatprep.subr.mxu0 0.0
    %3881 = vmatpush1.msra.mxu0 %v102
    %3882 = vmatprep.subr.mxu0 0.0
    %3883 = vmatpush1.msra.mxu0 %v103
    %3884 = vmatprep.subr.mxu0 0.0
    %3885 = vmatpush1.msra.mxu0 %v104
    %3886 = vmatprep.subr.mxu0 0.0
    %3887 = vmatpush1.msra.mxu0 %v105
    %3888 = vmatprep.subr.mxu0 0.0
    %3889 = vmatpush1.msra.mxu0 %v106
    %3890 = vmatprep.subr.mxu0 0.0
    %3891 = vmatpush1.msra.mxu0 %v107
    %3892 = vmatprep.subr.mxu0 0.0
    %3893 = vmatpush1.msra.mxu0 %v108
    %3894 = vmatprep.subr.mxu0 0.0
    %3895 = vmatpush1.msra.mxu0 %v109
    %3896 = vmatprep.subr.mxu0 0.0
    %3897 = vmatpush1.msra.mxu0 %v110
    %3898 = vmatprep.subr.mxu0 0.0
    %3899 = vmatpush1.msra.mxu0 %v111
    %3900 = vmatprep.subr.mxu0 0.0
    %3901 = vmatpush1.msra.mxu0 %v112
    %3902 = vmatprep.subr.mxu0 0.0
    %3903 = vmatpush1.msra.mxu0 %v113
    %3904 = vmatprep.subr.mxu0 0.0
    %3905 = vmatpush1.msra.mxu0 %v114
    %3906 = vmatprep.subr.mxu0 0.0
    %3907 = vmatpush1.msra.mxu0 %v115
    %3908 = vmatprep.subr.mxu0 0.0
    %3909 = vmatpush1.msra.mxu0 %v116
    %3910 = vmatprep.subr.mxu0 0.0
    %3911 = vmatpush1.msra.mxu0 %v117
    %3912 = vmatprep.subr.mxu0 0.0
    %3913 = vmatpush1.msra.mxu0 %v118
    %3914 = vmatprep.subr.mxu0 0.0
    %3915 = vmatpush1.msra.mxu0 %v119
    %3916 = vmatprep.subr.mxu0 0.0
    %3917 = vmatpush1.msra.mxu0 %v120
    %3918 = vmatprep.subr.mxu0 0.0
    %3919 = vmatpush1.msra.mxu0 %v121
    %3920 = vmatprep.mubr.f32.mxu0 %v3706
    %3921 = vmatmul.mubr.f32.gmra.mrb[0].mxu0 %v3698
    %v3922 = vpop.f32.mrb[0].mxu0
    %v3923 = vadd.f32 %v3853, %v3922
    %v3924 = vpop.f32.mrb[0].mxu0
    %3925 = vdwg.mxu0
    %3926 = vmatprep.subr.mxu0 0.0
    %3927 = vmatpush1.msra.mxu0 %v122
    %3928 = vmatprep.subr.mxu0 0.0
    %3929 = vmatpush1.msra.mxu0 %v123
    %3930 = vmatprep.subr.mxu0 0.0
    %3931 = vmatpush1.msra.mxu0 %v124
    %3932 = vmatprep.subr.mxu0 0.0
    %3933 = vmatpush1.msra.mxu0 %v125
    %3934 = vmatprep.subr.mxu0 0.0
    %3935 = vmatpush1.msra.mxu0 %v126
    %3936 = vmatprep.subr.mxu0 0.0
    %3937 = vmatpush1.msra.mxu0 %v127
    %3938 = vmatprep.subr.mxu0 0.0
    %3939 = vmatpush1.msra.mxu0 %v128
    %3940 = vmatprep.subr.mxu0 0.0
    %3941 = vmatpush1.msra.mxu0 %v129
    %3942 = vmatprep.subr.mxu0 0.0
    %3943 = vmatpush1.msra.mxu0 %v130
    %3944 = vmatprep.subr.mxu0 0.0
    %3945 = vmatpush1.msra.mxu0 %v131
    %3946 = vmatprep.subr.mxu0 0.0
    %3947 = vmatpush1.msra.mxu0 %v132
    %3948 = vmatprep.subr.mxu0 0.0
    %3949 = vmatpush1.msra.mxu0 %v133
    %3950 = vmatprep.subr.mxu0 0.0
    %3951 = vmatpush1.msra.mxu0 %v134
    %3952 = vmatprep.subr.mxu0 0.0
    %3953 = vmatpush1.msra.mxu0 %v135
    %3954 = vmatprep.subr.mxu0 0.0
    %3955 = vmatpush1.msra.mxu0 %v136
    %3956 = vmatprep.subr.mxu0 0.0
    %3957 = vmatpush1.msra.mxu0 %v137
    %3958 = vmatprep.subr.mxu0 0.0
    %3959 = vmatpush1.msra.mxu0 %v138
    %3960 = vmatprep.subr.mxu0 0.0
    %3961 = vmatpush1.msra.mxu0 %v139
    %3962 = vmatprep.subr.mxu0 0.0
    %3963 = vmatpush1.msra.mxu0 %v140
    %3964 = vmatprep.subr.mxu0 0.0
    %3965 = vmatpush1.msra.mxu0 %v141
    %3966 = vmatprep.subr.mxu0 0.0
    %3967 = vmatpush1.msra.mxu0 %v142
    %3968 = vmatprep.subr.mxu0 0.0
    %3969 = vmatpush1.msra.mxu0 %v143
    %3970 = vmatprep.subr.mxu0 0.0
    %3971 = vmatpush1.msra.mxu0 %v144
    %3972 = vmatprep.subr.mxu0 0.0
    %3973 = vmatpush1.msra.mxu0 %v145
    %3974 = vmatprep.subr.mxu0 0.0
    %3975 = vmatpush1.msra.mxu0 %v146
    %3976 = vmatprep.subr.mxu0 0.0
    %3977 = vmatpush1.msra.mxu0 %v147
    %3978 = vmatprep.subr.mxu0 0.0
    %3979 = vmatpush1.msra.mxu0 %v148
    %3980 = vmatprep.subr.mxu0 0.0
    %3981 = vmatpush1.msra.mxu0 %v149
    %3982 = vmatprep.subr.mxu0 0.0
    %3983 = vmatpush1.msra.mxu0 %v150
    %3984 = vmatprep.subr.mxu0 0.0
    %3985 = vmatpush1.msra.mxu0 %v151
    %3986 = vmatprep.subr.mxu0 0.0
    %3987 = vmatpush1.msra.mxu0 %v152
    %3988 = vmatprep.subr.mxu0 0.0
    %3989 = vmatpush1.msra.mxu0 %v153
    %3990 = vmatprep.mubr.f32.mxu0 %v3707
    %3991 = vmatmul.mubr.f32.gmra.mrb[0].mxu0 %v3705
    %v3992 = vpop.f32.mrb[0].mxu0
    %v3993 = vadd.f32 %v3923, %v3992
    %v3994 = vpop.f32.mrb[0].mxu0
    %3995 = vdwg.mxu0
    %v3996 = vsel %vm524, %v3993, -inf
    %3997 = vmax.xlane.f32.xlu0 %v3996
    %v3998 = vpop.xlane.xlu0 %3997
    %v3999 = vsub.f32 %v3993, %v3998
    %v4000 = vmul.f32 %v3999, 1.442695
    %v4001 = vpow.pop %v4000
    %v4002 = vsel %vm524, %v4001, 0.0
    %4003 = vadd.xlane.f32.xlu0 %v4002
    %v4004 = vpop.xlane.xlu0 %4003
    %v4005 = vrcp.pop %v4004
    %v4006 = vmul.f32 %v4001, %v4005
    %v4007 = vsub.f32 %v4006, %v178
    %v4009 = vsel %vm537, %v4007, 0
    %4011 = vmatprep.subr.mxu0 %v155
    %4012 = vmatpush1.msra.mxu0 %v154
    %4013 = vmatprep.subr.mxu0 %v546
    %4014 = vmatpush1.msra.mxu0 %v543
    %4015 = vmatprep.subr.mxu0 0.0
    %4016 = vmatpush1.msra.mxu0 0.0
    %4017 = vmatprep.subr.mxu0 0.0
    %4018 = vmatpush1.msra.mxu0 0.0
    %4019 = vmatprep.subr.mxu0 0.0
    %4020 = vmatpush1.msra.mxu0 0.0
    %4021 = vmatprep.subr.mxu0 0.0
    %4022 = vmatpush1.msra.mxu0 0.0
    %4023 = vmatprep.subr.mxu0 0.0
    %4024 = vmatpush1.msra.mxu0 0.0
    %4025 = vmatprep.subr.mxu0 0.0
    %4026 = vmatpush1.msra.mxu0 0.0
    %4027 = vmatprep.subr.mxu0 0.0
    %4028 = vmatpush1.msra.mxu0 0.0
    %4029 = vmatprep.subr.mxu0 0.0
    %4030 = vmatpush1.msra.mxu0 0.0
    %4031 = vmatprep.subr.mxu0 0.0
    %4032 = vmatpush1.msra.mxu0 0.0
    %4033 = vmatprep.subr.mxu0 0.0
    %4034 = vmatpush1.msra.mxu0 0.0
    %4035 = vmatprep.subr.mxu0 0.0
    %4036 = vmatpush1.msra.mxu0 0.0
    %4037 = vmatprep.subr.mxu0 0.0
    %4038 = vmatpush1.msra.mxu0 0.0
    %4039 = vmatprep.subr.mxu0 0.0
    %4040 = vmatpush1.msra.mxu0 0.0
    %4041 = vmatprep.subr.mxu0 0.0
    %4042 = vmatpush1.msra.mxu0 0.0
    %4043 = vmatprep.subr.mxu0 0.0
    %4044 = vmatpush1.msra.mxu0 0.0
    %4045 = vmatprep.subr.mxu0 0.0
    %4046 = vmatpush1.msra.mxu0 0.0
    %4047 = vmatprep.subr.mxu0 0.0
    %4048 = vmatpush1.msra.mxu0 0.0
    %4049 = vmatprep.subr.mxu0 0.0
    %4050 = vmatpush1.msra.mxu0 0.0
    %4051 = vmatprep.subr.mxu0 0.0
    %4052 = vmatpush1.msra.mxu0 0.0
    %4053 = vmatprep.subr.mxu0 0.0
    %4054 = vmatpush1.msra.mxu0 0.0
    %4055 = vmatprep.subr.mxu0 0.0
    %4056 = vmatpush1.msra.mxu0 0.0
    %4057 = vmatprep.subr.mxu0 0.0
    %4058 = vmatpush1.msra.mxu0 0.0
    %4059 = vmatprep.subr.mxu0 0.0
    %4060 = vmatpush1.msra.mxu0 0.0
    %4061 = vmatprep.subr.mxu0 0.0
    %4062 = vmatpush1.msra.mxu0 0.0
    %4063 = vmatprep.subr.mxu0 0.0
    %4064 = vmatpush1.msra.mxu0 0.0
    %4065 = vmatprep.subr.mxu0 0.0
    %4066 = vmatpush1.msra.mxu0 0.0
    %4067 = vmatprep.subr.mxu0 0.0
    %4068 = vmatpush1.msra.mxu0 0.0
    %4069 = vmatprep.subr.mxu0 0.0
    %4070 = vmatpush1.msra.mxu0 0.0
    %4071 = vmatprep.subr.mxu0 0.0
    %4072 = vmatpush1.msra.mxu0 0.0
    %4073 = vmatprep.subr.mxu0 0.0
    %4074 = vmatpush1.msra.mxu0 0.0
    %4075 = vmatprep.mubr.f32.mxu0 0.0
    %4076 = vmatmul.mubr.f32.gmra.mrb[0].mxu0 %v4009
    %v4077 = vpop.f32.mrb[0].mxu0
    %v4078 = vadd.f32 0.0, %v4077
    %v4079 = vpop.f32.mrb[0].mxu0
    %v4080 = vadd.f32 0.0, %v4079
    %4081 = vdwg.mxu0
    %4082 = vmatprep.subr.mxu0 %v157
    %4083 = vmatpush1.msra.mxu0 %v156
    %4084 = vmatprep.subr.mxu0 %v552
    %4085 = vmatpush1.msra.mxu0 %v549
    %4086 = vmatprep.subr.mxu0 0.0
    %4087 = vmatpush1.msra.mxu0 0.0
    %4088 = vmatprep.subr.mxu0 0.0
    %4089 = vmatpush1.msra.mxu0 0.0
    %4090 = vmatprep.subr.mxu0 0.0
    %4091 = vmatpush1.msra.mxu0 0.0
    %4092 = vmatprep.subr.mxu0 0.0
    %4093 = vmatpush1.msra.mxu0 0.0
    %4094 = vmatprep.subr.mxu0 0.0
    %4095 = vmatpush1.msra.mxu0 0.0
    %4096 = vmatprep.subr.mxu0 0.0
    %4097 = vmatpush1.msra.mxu0 0.0
    %4098 = vmatprep.subr.mxu0 0.0
    %4099 = vmatpush1.msra.mxu0 0.0
    %4100 = vmatprep.subr.mxu0 0.0
    %4101 = vmatpush1.msra.mxu0 0.0
    %4102 = vmatprep.subr.mxu0 0.0
    %4103 = vmatpush1.msra.mxu0 0.0
    %4104 = vmatprep.subr.mxu0 0.0
    %4105 = vmatpush1.msra.mxu0 0.0
    %4106 = vmatprep.subr.mxu0 0.0
    %4107 = vmatpush1.msra.mxu0 0.0
    %4108 = vmatprep.subr.mxu0 0.0
    %4109 = vmatpush1.msra.mxu0 0.0
    %4110 = vmatprep.subr.mxu0 0.0
    %4111 = vmatpush1.msra.mxu0 0.0
    %4112 = vmatprep.subr.mxu0 0.0
    %4113 = vmatpush1.msra.mxu0 0.0
    %4114 = vmatprep.subr.mxu0 0.0
    %4115 = vmatpush1.msra.mxu0 0.0
    %4116 = vmatprep.subr.mxu0 0.0
    %4117 = vmatpush1.msra.mxu0 0.0
    %4118 = vmatprep.subr.mxu0 0.0
    %4119 = vmatpush1.msra.mxu0 0.0
    %4120 = vmatprep.subr.mxu0 0.0
    %4121 = vmatpush1.msra.mxu0 0.0
    %4122 = vmatprep.subr.mxu0 0.0
    %4123 = vmatpush1.msra.mxu0 0.0
    %4124 = vmatprep.subr.mxu0 0.0
    %4125 = vmatpush1.msra.mxu0 0.0
    %4126 = vmatprep.subr.mxu0 0.0
    %4127 = vmatpush1.msra.mxu0 0.0
    %4128 = vmatprep.subr.mxu0 0.0
    %4129 = vmatpush1.msra.mxu0 0.0
    %4130 = vmatprep.subr.mxu0 0.0
    %4131 = vmatpush1.msra.mxu0 0.0
    %4132 = vmatprep.subr.mxu0 0.0
    %4133 = vmatpush1.msra.mxu0 0.0
    %4134 = vmatprep.subr.mxu0 0.0
    %4135 = vmatpush1.msra.mxu0 0.0
    %4136 = vmatprep.subr.mxu0 0.0
    %4137 = vmatpush1.msra.mxu0 0.0
    %4138 = vmatprep.subr.mxu0 0.0
    %4139 = vmatpush1.msra.mxu0 0.0
    %4140 = vmatprep.subr.mxu0 0.0
    %4141 = vmatpush1.msra.mxu0 0.0
    %4142 = vmatprep.subr.mxu0 0.0
    %4143 = vmatpush1.msra.mxu0 0.0
    %4144 = vmatprep.subr.mxu0 0.0
    %4145 = vmatpush1.msra.mxu0 0.0
    %4146 = vmatprep.mubr.f32.mxu0 0.0
    %4147 = vmatmul.mubr.f32.gmra.mrb[0].mxu0 %v4009
    %v4148 = vpop.f32.mrb[0].mxu0
    %v4149 = vadd.f32 0.0, %v4148
    %v4150 = vpop.f32.mrb[0].mxu0
    %v4151 = vadd.f32 0.0, %v4150
    %4152 = vdwg.mxu0
    %4153 = vmatprep.subr.mxu0 %v159
    %4154 = vmatpush1.msra.mxu0 %v158
    %4155 = vmatprep.subr.mxu0 %v558
    %4156 = vmatpush1.msra.mxu0 %v555
    %4157 = vmatprep.subr.mxu0 0.0
    %4158 = vmatpush1.msra.mxu0 0.0
    %4159 = vmatprep.subr.mxu0 0.0
    %4160 = vmatpush1.msra.mxu0 0.0
    %4161 = vmatprep.subr.mxu0 0.0
    %4162 = vmatpush1.msra.mxu0 0.0
    %4163 = vmatprep.subr.mxu0 0.0
    %4164 = vmatpush1.msra.mxu0 0.0
    %4165 = vmatprep.subr.mxu0 0.0
    %4166 = vmatpush1.msra.mxu0 0.0
    %4167 = vmatprep.subr.mxu0 0.0
    %4168 = vmatpush1.msra.mxu0 0.0
    %4169 = vmatprep.subr.mxu0 0.0
    %4170 = vmatpush1.msra.mxu0 0.0
    %4171 = vmatprep.subr.mxu0 0.0
    %4172 = vmatpush1.msra.mxu0 0.0
    %4173 = vmatprep.subr.mxu0 0.0
    %4174 = vmatpush1.msra.mxu0 0.0
    %4175 = vmatprep.subr.mxu0 0.0
    %4176 = vmatpush1.msra.mxu0 0.0
    %4177 = vmatprep.subr.mxu0 0.0
    %4178 = vmatpush1.msra.mxu0 0.0
    %4179 = vmatprep.subr.mxu0 0.0
    %4180 = vmatpush1.msra.mxu0 0.0
    %4181 = vmatprep.subr.mxu0 0.0
    %4182 = vmatpush1.msra.mxu0 0.0
    %4183 = vmatprep.subr.mxu0 0.0
    %4184 = vmatpush1.msra.mxu0 0.0
    %4185 = vmatprep.subr.mxu0 0.0
    %4186 = vmatpush1.msra.mxu0 0.0
    %4187 = vmatprep.subr.mxu0 0.0
    %4188 = vmatpush1.msra.mxu0 0.0
    %4189 = vmatprep.subr.mxu0 0.0
    %4190 = vmatpush1.msra.mxu0 0.0
    %4191 = vmatprep.subr.mxu0 0.0
    %4192 = vmatpush1.msra.mxu0 0.0
    %4193 = vmatprep.subr.mxu0 0.0
    %4194 = vmatpush1.msra.mxu0 0.0
    %4195 = vmatprep.subr.mxu0 0.0
    %4196 = vmatpush1.msra.mxu0 0.0
    %4197 = vmatprep.subr.mxu0 0.0
    %4198 = vmatpush1.msra.mxu0 0.0
    %4199 = vmatprep.subr.mxu0 0.0
    %4200 = vmatpush1.msra.mxu0 0.0
    %4201 = vmatprep.subr.mxu0 0.0
    %4202 = vmatpush1.msra.mxu0 0.0
    %4203 = vmatprep.subr.mxu0 0.0
    %4204 = vmatpush1.msra.mxu0 0.0
    %4205 = vmatprep.subr.mxu0 0.0
    %4206 = vmatpush1.msra.mxu0 0.0
    %4207 = vmatprep.subr.mxu0 0.0
    %4208 = vmatpush1.msra.mxu0 0.0
    %4209 = vmatprep.subr.mxu0 0.0
    %4210 = vmatpush1.msra.mxu0 0.0
    %4211 = vmatprep.subr.mxu0 0.0
    %4212 = vmatpush1.msra.mxu0 0.0
    %4213 = vmatprep.subr.mxu0 0.0
    %4214 = vmatpush1.msra.mxu0 0.0
    %4215 = vmatprep.subr.mxu0 0.0
    %4216 = vmatpush1.msra.mxu0 0.0
    %4217 = vmatprep.mubr.f32.mxu0 0.0
    %4218 = vmatmul.mubr.f32.gmra.mrb[0].mxu0 %v4009
    %v4219 = vpop.f32.mrb[0].mxu0
    %v4220 = vadd.f32 0.0, %v4219
    %v4221 = vpop.f32.mrb[0].mxu0
    %v4222 = vadd.f32 0.0, %v4221
    %4223 = vdwg.mxu0
    %4224 = vmatprep.subr.mxu0 %v161
    %4225 = vmatpush1.msra.mxu0 %v160
    %4226 = vmatprep.subr.mxu0 %v564
    %4227 = vmatpush1.msra.mxu0 %v561
    %4228 = vmatprep.subr.mxu0 0.0
    %4229 = vmatpush1.msra.mxu0 0.0
    %4230 = vmatprep.subr.mxu0 0.0
    %4231 = vmatpush1.msra.mxu0 0.0
    %4232 = vmatprep.subr.mxu0 0.0
    %4233 = vmatpush1.msra.mxu0 0.0
    %4234 = vmatprep.subr.mxu0 0.0
    %4235 = vmatpush1.msra.mxu0 0.0
    %4236 = vmatprep.subr.mxu0 0.0
    %4237 = vmatpush1.msra.mxu0 0.0
    %4238 = vmatprep.subr.mxu0 0.0
    %4239 = vmatpush1.msra.mxu0 0.0
    %4240 = vmatprep.subr.mxu0 0.0
    %4241 = vmatpush1.msra.mxu0 0.0
    %4242 = vmatprep.subr.mxu0 0.0
    %4243 = vmatpush1.msra.mxu0 0.0
    %4244 = vmatprep.subr.mxu0 0.0
    %4245 = vmatpush1.msra.mxu0 0.0
    %4246 = vmatprep.subr.mxu0 0.0
    %4247 = vmatpush1.msra.mxu0 0.0
    %4248 = vmatprep.subr.mxu0 0.0
    %4249 = vmatpush1.msra.mxu0 0.0
    %4250 = vmatprep.subr.mxu0 0.0
    %4251 = vmatpush1.msra.mxu0 0.0
    %4252 = vmatprep.subr.mxu0 0.0
    %4253 = vmatpush1.msra.mxu0 0.0
    %4254 = vmatprep.subr.mxu0 0.0
    %4255 = vmatpush1.msra.mxu0 0.0
    %4256 = vmatprep.subr.mxu0 0.0
    %4257 = vmatpush1.msra.mxu0 0.0
    %4258 = vmatprep.subr.mxu0 0.0
    %4259 = vmatpush1.msra.mxu0 0.0
    %4260 = vmatprep.subr.mxu0 0.0
    %4261 = vmatpush1.msra.mxu0 0.0
    %4262 = vmatprep.subr.mxu0 0.0
    %4263 = vmatpush1.msra.mxu0 0.0
    %4264 = vmatprep.subr.mxu0 0.0
    %4265 = vmatpush1.msra.mxu0 0.0
    %4266 = vmatprep.subr.mxu0 0.0
    %4267 = vmatpush1.msra.mxu0 0.0
    %4268 = vmatprep.subr.mxu0 0.0
    %4269 = vmatpush1.msra.mxu0 0.0
    %4270 = vmatprep.subr.mxu0 0.0
    %4271 = vmatpush1.msra.mxu0 0.0
    %4272 = vmatprep.subr.mxu0 0.0
    %4273 = vmatpush1.msra.mxu0 0.0
    %4274 = vmatprep.subr.mxu0 0.0
    %4275 = vmatpush1.msra.mxu0 0.0
    %4276 = vmatprep.subr.mxu0 0.0
    %4277 = vmatpush1.msra.mxu0 0.0
    %4278 = vmatprep.subr.mxu0 0.0
    %4279 = vmatpush1.msra.mxu0 0.0
    %4280 = vmatprep.subr.mxu0 0.0
    %4281 = vmatpush1.msra.mxu0 0.0
    %4282 = vmatprep.subr.mxu0 0.0
    %4283 = vmatpush1.msra.mxu0 0.0
    %4284 = vmatprep.subr.mxu0 0.0
    %4285 = vmatpush1.msra.mxu0 0.0
    %4286 = vmatprep.subr.mxu0 0.0
    %4287 = vmatpush1.msra.mxu0 0.0
    %4288 = vmatprep.mubr.f32.mxu0 0.0
    %4289 = vmatmul.mubr.f32.gmra.mrb[0].mxu0 %v4009
    %v4290 = vpop.f32.mrb[0].mxu0
    %v4291 = vadd.f32 0.0, %v4290
    %v4292 = vpop.f32.mrb[0].mxu0
    %v4293 = vadd.f32 0.0, %v4292
    %4294 = vdwg.mxu0
    %vm4295 = vcmp.ge.f32.partialorder %v4078, 0.0
    %vm4296 = vcmp.ge.f32.partialorder %v4080, 0.0
    %vm4297 = vcmp.ge.f32.partialorder %v4149, 0.0
    %vm4298 = vcmp.ge.f32.partialorder %v4151, 0.0
    %vm4299 = vcmp.ge.f32.partialorder %v4220, 0.0
    %vm4300 = vcmp.ge.f32.partialorder %v4222, 0.0
    %vm4301 = vcmp.ge.f32.partialorder %v4291, 0.0
    %vm4302 = vcmp.ge.f32.partialorder %v4293, 0.0
    %v4303 = vsel %vm4295, 0.007, -0.007
    %v4304 = vsel %vm4296, 0.007, -0.007
    %v4305 = vsel %vm4297, 0.007, -0.007
    %v4306 = vsel %vm4298, 0.007, -0.007
    %v4307 = vsel %vm4299, 0.007, -0.007
    %v4308 = vsel %vm4300, 0.007, -0.007
    %v4309 = vsel %vm4301, 0.007, -0.007
    %v4310 = vsel %vm4302, 0.007, -0.007
    %v4319 = vcombine.low %v4303, %v4304
    %v4320 = vcombine.low %v4305, %v4306
    %v4322 = vunpack.c.l.s4 1983009808
    %v4323 = vunpack.c.0.s8 %v4322
    %v4324 = vlaneseq
    %v4325 = vshrl.u32 %v4324, 7
    %v4326 = vsub.s32 %v4323, %v4325
    %v4327 = vrot.slane %v4319, %v4326
    %v4329 = vunpack.c.l.s4 1983009808
    %v4330 = vunpack.c.0.s8 %v4329
    %v4331 = vlaneseq
    %v4332 = vshrl.u32 %v4331, 7
    %v4333 = vsub.s32 %v4330, %v4332
    %v4334 = vrot.slane %v4320, %v4333
    %v4335 = vcombine.low %v4327, %v4334
    %v4336 = vcombine.low %v4307, %v4308
    %v4337 = vcombine.low %v4309, %v4310
    %v4339 = vunpack.c.l.s4 1983009808
    %v4340 = vunpack.c.0.s8 %v4339
    %v4341 = vlaneseq
    %v4342 = vshrl.u32 %v4341, 7
    %v4343 = vsub.s32 %v4340, %v4342
    %v4344 = vrot.slane %v4336, %v4343
    %v4346 = vunpack.c.l.s4 1983009808
    %v4347 = vunpack.c.0.s8 %v4346
    %v4348 = vlaneseq
    %v4349 = vshrl.u32 %v4348, 7
    %v4350 = vsub.s32 %v4347, %v4349
    %v4351 = vrot.slane %v4337, %v4350
    %v4352 = vcombine.low %v4344, %v4351
    %v4355 = vadd.f32 %v3670, %v4335
    %v4356 = vadd.f32 %v3671, %v4352
    %v4357 = vmax.f32 %v4355, %v188
    %v4358 = vmax.f32 %v4356, %v189
    %v4359 = vmin.f32 %v4357, %v192
    %v4360 = vmin.f32 %v4358, %v193
    %v4363 = vcombine.high %v4359, %v4359
    %v4365 = vunpack.c.l.s4 1983009808
    %v4366 = vunpack.c.0.s8 %v4365
    %v4367 = vlaneseq
    %v4368 = vshrl.u32 %v4367, 7
    %v4369 = vsub.s32 %v4366, %v4368
    %v4370 = vrot.slane %v4359, %v4369
    %v4372 = vunpack.c.l.s4 1983009808
    %v4373 = vunpack.c.0.s8 %v4372
    %v4374 = vlaneseq
    %v4375 = vshrl.u32 %v4374, 7
    %v4376 = vsub.s32 %v4373, %v4375
    %v4377 = vrot.slane %v4363, %v4376
    %v4378 = vcombine.high %v4370, %v4370
    %v4379 = vcombine.high %v4377, %v4377
    %v4380 = vcombine.high %v4360, %v4360
    %v4382 = vunpack.c.l.s4 1983009808
    %v4383 = vunpack.c.0.s8 %v4382
    %v4384 = vlaneseq
    %v4385 = vshrl.u32 %v4384, 7
    %v4386 = vsub.s32 %v4383, %v4385
    %v4387 = vrot.slane %v4360, %v4386
    %v4389 = vunpack.c.l.s4 1983009808
    %v4390 = vunpack.c.0.s8 %v4389
    %v4391 = vlaneseq
    %v4392 = vshrl.u32 %v4391, 7
    %v4393 = vsub.s32 %v4390, %v4392
    %v4394 = vrot.slane %v4380, %v4393
    %v4395 = vcombine.high %v4387, %v4387
    %v4396 = vcombine.high %v4394, %v4394
    %4405 = vmatprep.subr.mxu0 0.0
    %4406 = vmatpush1.msra.mxu0 %v26
    %4407 = vmatprep.subr.mxu0 0.0
    %4408 = vmatpush1.msra.mxu0 %v27
    %4409 = vmatprep.subr.mxu0 0.0
    %4410 = vmatpush1.msra.mxu0 %v28
    %4411 = vmatprep.subr.mxu0 0.0
    %4412 = vmatpush1.msra.mxu0 %v29
    %4413 = vmatprep.subr.mxu0 0.0
    %4414 = vmatpush1.msra.mxu0 %v30
    %4415 = vmatprep.subr.mxu0 0.0
    %4416 = vmatpush1.msra.mxu0 %v31
    %4417 = vmatprep.subr.mxu0 0.0
    %4418 = vmatpush1.msra.mxu0 %v32
    %4419 = vmatprep.subr.mxu0 0.0
    %4420 = vmatpush1.msra.mxu0 %v33
    %4421 = vmatprep.subr.mxu0 0.0
    %4422 = vmatpush1.msra.mxu0 %v34
    %4423 = vmatprep.subr.mxu0 0.0
    %4424 = vmatpush1.msra.mxu0 %v35
    %4425 = vmatprep.subr.mxu0 0.0
    %4426 = vmatpush1.msra.mxu0 %v36
    %4427 = vmatprep.subr.mxu0 0.0
    %4428 = vmatpush1.msra.mxu0 %v37
    %4429 = vmatprep.subr.mxu0 0.0
    %4430 = vmatpush1.msra.mxu0 %v38
    %4431 = vmatprep.subr.mxu0 0.0
    %4432 = vmatpush1.msra.mxu0 %v39
    %4433 = vmatprep.subr.mxu0 0.0
    %4434 = vmatpush1.msra.mxu0 %v40
    %4435 = vmatprep.subr.mxu0 0.0
    %4436 = vmatpush1.msra.mxu0 %v41
    %4437 = vmatprep.subr.mxu0 0.0
    %4438 = vmatpush1.msra.mxu0 %v42
    %4439 = vmatprep.subr.mxu0 0.0
    %4440 = vmatpush1.msra.mxu0 %v43
    %4441 = vmatprep.subr.mxu0 0.0
    %4442 = vmatpush1.msra.mxu0 %v44
    %4443 = vmatprep.subr.mxu0 0.0
    %4444 = vmatpush1.msra.mxu0 %v45
    %4445 = vmatprep.subr.mxu0 0.0
    %4446 = vmatpush1.msra.mxu0 %v46
    %4447 = vmatprep.subr.mxu0 0.0
    %4448 = vmatpush1.msra.mxu0 %v47
    %4449 = vmatprep.subr.mxu0 0.0
    %4450 = vmatpush1.msra.mxu0 %v48
    %4451 = vmatprep.subr.mxu0 0.0
    %4452 = vmatpush1.msra.mxu0 %v49
    %4453 = vmatprep.subr.mxu0 0.0
    %4454 = vmatpush1.msra.mxu0 %v50
    %4455 = vmatprep.subr.mxu0 0.0
    %4456 = vmatpush1.msra.mxu0 %v51
    %4457 = vmatprep.subr.mxu0 0.0
    %4458 = vmatpush1.msra.mxu0 %v52
    %4459 = vmatprep.subr.mxu0 0.0
    %4460 = vmatpush1.msra.mxu0 %v53
    %4461 = vmatprep.subr.mxu0 0.0
    %4462 = vmatpush1.msra.mxu0 %v54
    %4463 = vmatprep.subr.mxu0 0.0
    %4464 = vmatpush1.msra.mxu0 %v55
    %4465 = vmatprep.subr.mxu0 0.0
    %4466 = vmatpush1.msra.mxu0 %v56
    %4467 = vmatprep.subr.mxu0 0.0
    %4468 = vmatpush1.msra.mxu0 %v57
    %4469 = vmatprep.mubr.f32.mxu0 %v4378
    %4470 = vmatmul.mubr.f32.gmra.mrb[0].mxu0 %v4370
    %v4471 = vpop.f32.mrb[0].mxu0
    %v4472 = vadd.f32 %v184, %v4471
    %v4473 = vpop.f32.mrb[0].mxu0
    %4474 = vdwg.mxu0
    %4475 = vmatprep.subr.mxu0 0.0
    %4476 = vmatpush1.msra.mxu0 %v58
    %4477 = vmatprep.subr.mxu0 0.0
    %4478 = vmatpush1.msra.mxu0 %v59
    %4479 = vmatprep.subr.mxu0 0.0
    %4480 = vmatpush1.msra.mxu0 %v60
    %4481 = vmatprep.subr.mxu0 0.0
    %4482 = vmatpush1.msra.mxu0 %v61
    %4483 = vmatprep.subr.mxu0 0.0
    %4484 = vmatpush1.msra.mxu0 %v62
    %4485 = vmatprep.subr.mxu0 0.0
    %4486 = vmatpush1.msra.mxu0 %v63
    %4487 = vmatprep.subr.mxu0 0.0
    %4488 = vmatpush1.msra.mxu0 %v64
    %4489 = vmatprep.subr.mxu0 0.0
    %4490 = vmatpush1.msra.mxu0 %v65
    %4491 = vmatprep.subr.mxu0 0.0
    %4492 = vmatpush1.msra.mxu0 %v66
    %4493 = vmatprep.subr.mxu0 0.0
    %4494 = vmatpush1.msra.mxu0 %v67
    %4495 = vmatprep.subr.mxu0 0.0
    %4496 = vmatpush1.msra.mxu0 %v68
    %4497 = vmatprep.subr.mxu0 0.0
    %4498 = vmatpush1.msra.mxu0 %v69
    %4499 = vmatprep.subr.mxu0 0.0
    %4500 = vmatpush1.msra.mxu0 %v70
    %4501 = vmatprep.subr.mxu0 0.0
    %4502 = vmatpush1.msra.mxu0 %v71
    %4503 = vmatprep.subr.mxu0 0.0
    %4504 = vmatpush1.msra.mxu0 %v72
    %4505 = vmatprep.subr.mxu0 0.0
    %4506 = vmatpush1.msra.mxu0 %v73
    %4507 = vmatprep.subr.mxu0 0.0
    %4508 = vmatpush1.msra.mxu0 %v74
    %4509 = vmatprep.subr.mxu0 0.0
    %4510 = vmatpush1.msra.mxu0 %v75
    %4511 = vmatprep.subr.mxu0 0.0
    %4512 = vmatpush1.msra.mxu0 %v76
    %4513 = vmatprep.subr.mxu0 0.0
    %4514 = vmatpush1.msra.mxu0 %v77
    %4515 = vmatprep.subr.mxu0 0.0
    %4516 = vmatpush1.msra.mxu0 %v78
    %4517 = vmatprep.subr.mxu0 0.0
    %4518 = vmatpush1.msra.mxu0 %v79
    %4519 = vmatprep.subr.mxu0 0.0
    %4520 = vmatpush1.msra.mxu0 %v80
    %4521 = vmatprep.subr.mxu0 0.0
    %4522 = vmatpush1.msra.mxu0 %v81
    %4523 = vmatprep.subr.mxu0 0.0
    %4524 = vmatpush1.msra.mxu0 %v82
    %4525 = vmatprep.subr.mxu0 0.0
    %4526 = vmatpush1.msra.mxu0 %v83
    %4527 = vmatprep.subr.mxu0 0.0
    %4528 = vmatpush1.msra.mxu0 %v84
    %4529 = vmatprep.subr.mxu0 0.0
    %4530 = vmatpush1.msra.mxu0 %v85
    %4531 = vmatprep.subr.mxu0 0.0
    %4532 = vmatpush1.msra.mxu0 %v86
    %4533 = vmatprep.subr.mxu0 0.0
    %4534 = vmatpush1.msra.mxu0 %v87
    %4535 = vmatprep.subr.mxu0 0.0
    %4536 = vmatpush1.msra.mxu0 %v88
    %4537 = vmatprep.subr.mxu0 0.0
    %4538 = vmatpush1.msra.mxu0 %v89
    %4539 = vmatprep.mubr.f32.mxu0 %v4379
    %4540 = vmatmul.mubr.f32.gmra.mrb[0].mxu0 %v4377
    %v4541 = vpop.f32.mrb[0].mxu0
    %v4542 = vadd.f32 %v4472, %v4541
    %v4543 = vpop.f32.mrb[0].mxu0
    %4544 = vdwg.mxu0
    %4545 = vmatprep.subr.mxu0 0.0
    %4546 = vmatpush1.msra.mxu0 %v90
    %4547 = vmatprep.subr.mxu0 0.0
    %4548 = vmatpush1.msra.mxu0 %v91
    %4549 = vmatprep.subr.mxu0 0.0
    %4550 = vmatpush1.msra.mxu0 %v92
    %4551 = vmatprep.subr.mxu0 0.0
    %4552 = vmatpush1.msra.mxu0 %v93
    %4553 = vmatprep.subr.mxu0 0.0
    %4554 = vmatpush1.msra.mxu0 %v94
    %4555 = vmatprep.subr.mxu0 0.0
    %4556 = vmatpush1.msra.mxu0 %v95
    %4557 = vmatprep.subr.mxu0 0.0
    %4558 = vmatpush1.msra.mxu0 %v96
    %4559 = vmatprep.subr.mxu0 0.0
    %4560 = vmatpush1.msra.mxu0 %v97
    %4561 = vmatprep.subr.mxu0 0.0
    %4562 = vmatpush1.msra.mxu0 %v98
    %4563 = vmatprep.subr.mxu0 0.0
    %4564 = vmatpush1.msra.mxu0 %v99
    %4565 = vmatprep.subr.mxu0 0.0
    %4566 = vmatpush1.msra.mxu0 %v100
    %4567 = vmatprep.subr.mxu0 0.0
    %4568 = vmatpush1.msra.mxu0 %v101
    %4569 = vmatprep.subr.mxu0 0.0
    %4570 = vmatpush1.msra.mxu0 %v102
    %4571 = vmatprep.subr.mxu0 0.0
    %4572 = vmatpush1.msra.mxu0 %v103
    %4573 = vmatprep.subr.mxu0 0.0
    %4574 = vmatpush1.msra.mxu0 %v104
    %4575 = vmatprep.subr.mxu0 0.0
    %4576 = vmatpush1.msra.mxu0 %v105
    %4577 = vmatprep.subr.mxu0 0.0
    %4578 = vmatpush1.msra.mxu0 %v106
    %4579 = vmatprep.subr.mxu0 0.0
    %4580 = vmatpush1.msra.mxu0 %v107
    %4581 = vmatprep.subr.mxu0 0.0
    %4582 = vmatpush1.msra.mxu0 %v108
    %4583 = vmatprep.subr.mxu0 0.0
    %4584 = vmatpush1.msra.mxu0 %v109
    %4585 = vmatprep.subr.mxu0 0.0
    %4586 = vmatpush1.msra.mxu0 %v110
    %4587 = vmatprep.subr.mxu0 0.0
    %4588 = vmatpush1.msra.mxu0 %v111
    %4589 = vmatprep.subr.mxu0 0.0
    %4590 = vmatpush1.msra.mxu0 %v112
    %4591 = vmatprep.subr.mxu0 0.0
    %4592 = vmatpush1.msra.mxu0 %v113
    %4593 = vmatprep.subr.mxu0 0.0
    %4594 = vmatpush1.msra.mxu0 %v114
    %4595 = vmatprep.subr.mxu0 0.0
    %4596 = vmatpush1.msra.mxu0 %v115
    %4597 = vmatprep.subr.mxu0 0.0
    %4598 = vmatpush1.msra.mxu0 %v116
    %4599 = vmatprep.subr.mxu0 0.0
    %4600 = vmatpush1.msra.mxu0 %v117
    %4601 = vmatprep.subr.mxu0 0.0
    %4602 = vmatpush1.msra.mxu0 %v118
    %4603 = vmatprep.subr.mxu0 0.0
    %4604 = vmatpush1.msra.mxu0 %v119
    %4605 = vmatprep.subr.mxu0 0.0
    %4606 = vmatpush1.msra.mxu0 %v120
    %4607 = vmatprep.subr.mxu0 0.0
    %4608 = vmatpush1.msra.mxu0 %v121
    %4609 = vmatprep.mubr.f32.mxu0 %v4395
    %4610 = vmatmul.mubr.f32.gmra.mrb[0].mxu0 %v4387
    %v4611 = vpop.f32.mrb[0].mxu0
    %v4612 = vadd.f32 %v4542, %v4611
    %v4613 = vpop.f32.mrb[0].mxu0
    %4614 = vdwg.mxu0
    %4615 = vmatprep.subr.mxu0 0.0
    %4616 = vmatpush1.msra.mxu0 %v122
    %4617 = vmatprep.subr.mxu0 0.0
    %4618 = vmatpush1.msra.mxu0 %v123
    %4619 = vmatprep.subr.mxu0 0.0
    %4620 = vmatpush1.msra.mxu0 %v124
    %4621 = vmatprep.subr.mxu0 0.0
    %4622 = vmatpush1.msra.mxu0 %v125
    %4623 = vmatprep.subr.mxu0 0.0
    %4624 = vmatpush1.msra.mxu0 %v126
    %4625 = vmatprep.subr.mxu0 0.0
    %4626 = vmatpush1.msra.mxu0 %v127
    %4627 = vmatprep.subr.mxu0 0.0
    %4628 = vmatpush1.msra.mxu0 %v128
    %4629 = vmatprep.subr.mxu0 0.0
    %4630 = vmatpush1.msra.mxu0 %v129
    %4631 = vmatprep.subr.mxu0 0.0
    %4632 = vmatpush1.msra.mxu0 %v130
    %4633 = vmatprep.subr.mxu0 0.0
    %4634 = vmatpush1.msra.mxu0 %v131
    %4635 = vmatprep.subr.mxu0 0.0
    %4636 = vmatpush1.msra.mxu0 %v132
    %4637 = vmatprep.subr.mxu0 0.0
    %4638 = vmatpush1.msra.mxu0 %v133
    %4639 = vmatprep.subr.mxu0 0.0
    %4640 = vmatpush1.msra.mxu0 %v134
    %4641 = vmatprep.subr.mxu0 0.0
    %4642 = vmatpush1.msra.mxu0 %v135
    %4643 = vmatprep.subr.mxu0 0.0
    %4644 = vmatpush1.msra.mxu0 %v136
    %4645 = vmatprep.subr.mxu0 0.0
    %4646 = vmatpush1.msra.mxu0 %v137
    %4647 = vmatprep.subr.mxu0 0.0
    %4648 = vmatpush1.msra.mxu0 %v138
    %4649 = vmatprep.subr.mxu0 0.0
    %4650 = vmatpush1.msra.mxu0 %v139
    %4651 = vmatprep.subr.mxu0 0.0
    %4652 = vmatpush1.msra.mxu0 %v140
    %4653 = vmatprep.subr.mxu0 0.0
    %4654 = vmatpush1.msra.mxu0 %v141
    %4655 = vmatprep.subr.mxu0 0.0
    %4656 = vmatpush1.msra.mxu0 %v142
    %4657 = vmatprep.subr.mxu0 0.0
    %4658 = vmatpush1.msra.mxu0 %v143
    %4659 = vmatprep.subr.mxu0 0.0
    %4660 = vmatpush1.msra.mxu0 %v144
    %4661 = vmatprep.subr.mxu0 0.0
    %4662 = vmatpush1.msra.mxu0 %v145
    %4663 = vmatprep.subr.mxu0 0.0
    %4664 = vmatpush1.msra.mxu0 %v146
    %4665 = vmatprep.subr.mxu0 0.0
    %4666 = vmatpush1.msra.mxu0 %v147
    %4667 = vmatprep.subr.mxu0 0.0
    %4668 = vmatpush1.msra.mxu0 %v148
    %4669 = vmatprep.subr.mxu0 0.0
    %4670 = vmatpush1.msra.mxu0 %v149
    %4671 = vmatprep.subr.mxu0 0.0
    %4672 = vmatpush1.msra.mxu0 %v150
    %4673 = vmatprep.subr.mxu0 0.0
    %4674 = vmatpush1.msra.mxu0 %v151
    %4675 = vmatprep.subr.mxu0 0.0
    %4676 = vmatpush1.msra.mxu0 %v152
    %4677 = vmatprep.subr.mxu0 0.0
    %4678 = vmatpush1.msra.mxu0 %v153
    %4679 = vmatprep.mubr.f32.mxu0 %v4396
    %4680 = vmatmul.mubr.f32.gmra.mrb[0].mxu0 %v4394
    %v4681 = vpop.f32.mrb[0].mxu0
    %v4682 = vadd.f32 %v4612, %v4681
    %v4683 = vpop.f32.mrb[0].mxu0
    %4684 = vdwg.mxu0
    %v4685 = vsel %vm524, %v4682, -inf
    %4686 = vmax.xlane.f32.xlu0 %v4685
    %v4687 = vpop.xlane.xlu0 %4686
    %v4688 = vsub.f32 %v4682, %v4687
    %v4689 = vmul.f32 %v4688, 1.442695
    %v4690 = vpow.pop %v4689
    %v4691 = vsel %vm524, %v4690, 0.0
    %4692 = vadd.xlane.f32.xlu0 %v4691
    %v4693 = vpop.xlane.xlu0 %4692
    %v4694 = vrcp.pop %v4693
    %v4695 = vmul.f32 %v4690, %v4694
    %v4696 = vsub.f32 %v4695, %v178
    %v4698 = vsel %vm537, %v4696, 0
    %4700 = vmatprep.subr.mxu0 %v155
    %4701 = vmatpush1.msra.mxu0 %v154
    %4702 = vmatprep.subr.mxu0 %v546
    %4703 = vmatpush1.msra.mxu0 %v543
    %4704 = vmatprep.subr.mxu0 0.0
    %4705 = vmatpush1.msra.mxu0 0.0
    %4706 = vmatprep.subr.mxu0 0.0
    %4707 = vmatpush1.msra.mxu0 0.0
    %4708 = vmatprep.subr.mxu0 0.0
    %4709 = vmatpush1.msra.mxu0 0.0
    %4710 = vmatprep.subr.mxu0 0.0
    %4711 = vmatpush1.msra.mxu0 0.0
    %4712 = vmatprep.subr.mxu0 0.0
    %4713 = vmatpush1.msra.mxu0 0.0
    %4714 = vmatprep.subr.mxu0 0.0
    %4715 = vmatpush1.msra.mxu0 0.0
    %4716 = vmatprep.subr.mxu0 0.0
    %4717 = vmatpush1.msra.mxu0 0.0
    %4718 = vmatprep.subr.mxu0 0.0
    %4719 = vmatpush1.msra.mxu0 0.0
    %4720 = vmatprep.subr.mxu0 0.0
    %4721 = vmatpush1.msra.mxu0 0.0
    %4722 = vmatprep.subr.mxu0 0.0
    %4723 = vmatpush1.msra.mxu0 0.0
    %4724 = vmatprep.subr.mxu0 0.0
    %4725 = vmatpush1.msra.mxu0 0.0
    %4726 = vmatprep.subr.mxu0 0.0
    %4727 = vmatpush1.msra.mxu0 0.0
    %4728 = vmatprep.subr.mxu0 0.0
    %4729 = vmatpush1.msra.mxu0 0.0
    %4730 = vmatprep.subr.mxu0 0.0
    %4731 = vmatpush1.msra.mxu0 0.0
    %4732 = vmatprep.subr.mxu0 0.0
    %4733 = vmatpush1.msra.mxu0 0.0
    %4734 = vmatprep.subr.mxu0 0.0
    %4735 = vmatpush1.msra.mxu0 0.0
    %4736 = vmatprep.subr.mxu0 0.0
    %4737 = vmatpush1.msra.mxu0 0.0
    %4738 = vmatprep.subr.mxu0 0.0
    %4739 = vmatpush1.msra.mxu0 0.0
    %4740 = vmatprep.subr.mxu0 0.0
    %4741 = vmatpush1.msra.mxu0 0.0
    %4742 = vmatprep.subr.mxu0 0.0
    %4743 = vmatpush1.msra.mxu0 0.0
    %4744 = vmatprep.subr.mxu0 0.0
    %4745 = vmatpush1.msra.mxu0 0.0
    %4746 = vmatprep.subr.mxu0 0.0
    %4747 = vmatpush1.msra.mxu0 0.0
    %4748 = vmatprep.subr.mxu0 0.0
    %4749 = vmatpush1.msra.mxu0 0.0
    %4750 = vmatprep.subr.mxu0 0.0
    %4751 = vmatpush1.msra.mxu0 0.0
    %4752 = vmatprep.subr.mxu0 0.0
    %4753 = vmatpush1.msra.mxu0 0.0
    %4754 = vmatprep.subr.mxu0 0.0
    %4755 = vmatpush1.msra.mxu0 0.0
    %4756 = vmatprep.subr.mxu0 0.0
    %4757 = vmatpush1.msra.mxu0 0.0
    %4758 = vmatprep.subr.mxu0 0.0
    %4759 = vmatpush1.msra.mxu0 0.0
    %4760 = vmatprep.subr.mxu0 0.0
    %4761 = vmatpush1.msra.mxu0 0.0
    %4762 = vmatprep.subr.mxu0 0.0
    %4763 = vmatpush1.msra.mxu0 0.0
    %4764 = vmatprep.mubr.f32.mxu0 0.0
    %4765 = vmatmul.mubr.f32.gmra.mrb[0].mxu0 %v4698
    %v4766 = vpop.f32.mrb[0].mxu0
    %v4767 = vadd.f32 0.0, %v4766
    %v4768 = vpop.f32.mrb[0].mxu0
    %v4769 = vadd.f32 0.0, %v4768
    %4770 = vdwg.mxu0
    %4771 = vmatprep.subr.mxu0 %v157
    %4772 = vmatpush1.msra.mxu0 %v156
    %4773 = vmatprep.subr.mxu0 %v552
    %4774 = vmatpush1.msra.mxu0 %v549
    %4775 = vmatprep.subr.mxu0 0.0
    %4776 = vmatpush1.msra.mxu0 0.0
    %4777 = vmatprep.subr.mxu0 0.0
    %4778 = vmatpush1.msra.mxu0 0.0
    %4779 = vmatprep.subr.mxu0 0.0
    %4780 = vmatpush1.msra.mxu0 0.0
    %4781 = vmatprep.subr.mxu0 0.0
    %4782 = vmatpush1.msra.mxu0 0.0
    %4783 = vmatprep.subr.mxu0 0.0
    %4784 = vmatpush1.msra.mxu0 0.0
    %4785 = vmatprep.subr.mxu0 0.0
    %4786 = vmatpush1.msra.mxu0 0.0
    %4787 = vmatprep.subr.mxu0 0.0
    %4788 = vmatpush1.msra.mxu0 0.0
    %4789 = vmatprep.subr.mxu0 0.0
    %4790 = vmatpush1.msra.mxu0 0.0
    %4791 = vmatprep.subr.mxu0 0.0
    %4792 = vmatpush1.msra.mxu0 0.0
    %4793 = vmatprep.subr.mxu0 0.0
    %4794 = vmatpush1.msra.mxu0 0.0
    %4795 = vmatprep.subr.mxu0 0.0
    %4796 = vmatpush1.msra.mxu0 0.0
    %4797 = vmatprep.subr.mxu0 0.0
    %4798 = vmatpush1.msra.mxu0 0.0
    %4799 = vmatprep.subr.mxu0 0.0
    %4800 = vmatpush1.msra.mxu0 0.0
    %4801 = vmatprep.subr.mxu0 0.0
    %4802 = vmatpush1.msra.mxu0 0.0
    %4803 = vmatprep.subr.mxu0 0.0
    %4804 = vmatpush1.msra.mxu0 0.0
    %4805 = vmatprep.subr.mxu0 0.0
    %4806 = vmatpush1.msra.mxu0 0.0
    %4807 = vmatprep.subr.mxu0 0.0
    %4808 = vmatpush1.msra.mxu0 0.0
    %4809 = vmatprep.subr.mxu0 0.0
    %4810 = vmatpush1.msra.mxu0 0.0
    %4811 = vmatprep.subr.mxu0 0.0
    %4812 = vmatpush1.msra.mxu0 0.0
    %4813 = vmatprep.subr.mxu0 0.0
    %4814 = vmatpush1.msra.mxu0 0.0
    %4815 = vmatprep.subr.mxu0 0.0
    %4816 = vmatpush1.msra.mxu0 0.0
    %4817 = vmatprep.subr.mxu0 0.0
    %4818 = vmatpush1.msra.mxu0 0.0
    %4819 = vmatprep.subr.mxu0 0.0
    %4820 = vmatpush1.msra.mxu0 0.0
    %4821 = vmatprep.subr.mxu0 0.0
    %4822 = vmatpush1.msra.mxu0 0.0
    %4823 = vmatprep.subr.mxu0 0.0
    %4824 = vmatpush1.msra.mxu0 0.0
    %4825 = vmatprep.subr.mxu0 0.0
    %4826 = vmatpush1.msra.mxu0 0.0
    %4827 = vmatprep.subr.mxu0 0.0
    %4828 = vmatpush1.msra.mxu0 0.0
    %4829 = vmatprep.subr.mxu0 0.0
    %4830 = vmatpush1.msra.mxu0 0.0
    %4831 = vmatprep.subr.mxu0 0.0
    %4832 = vmatpush1.msra.mxu0 0.0
    %4833 = vmatprep.subr.mxu0 0.0
    %4834 = vmatpush1.msra.mxu0 0.0
    %4835 = vmatprep.mubr.f32.mxu0 0.0
    %4836 = vmatmul.mubr.f32.gmra.mrb[0].mxu0 %v4698
    %v4837 = vpop.f32.mrb[0].mxu0
    %v4838 = vadd.f32 0.0, %v4837
    %v4839 = vpop.f32.mrb[0].mxu0
    %v4840 = vadd.f32 0.0, %v4839
    %4841 = vdwg.mxu0
    %4842 = vmatprep.subr.mxu0 %v159
    %4843 = vmatpush1.msra.mxu0 %v158
    %4844 = vmatprep.subr.mxu0 %v558
    %4845 = vmatpush1.msra.mxu0 %v555
    %4846 = vmatprep.subr.mxu0 0.0
    %4847 = vmatpush1.msra.mxu0 0.0
    %4848 = vmatprep.subr.mxu0 0.0
    %4849 = vmatpush1.msra.mxu0 0.0
    %4850 = vmatprep.subr.mxu0 0.0
    %4851 = vmatpush1.msra.mxu0 0.0
    %4852 = vmatprep.subr.mxu0 0.0
    %4853 = vmatpush1.msra.mxu0 0.0
    %4854 = vmatprep.subr.mxu0 0.0
    %4855 = vmatpush1.msra.mxu0 0.0
    %4856 = vmatprep.subr.mxu0 0.0
    %4857 = vmatpush1.msra.mxu0 0.0
    %4858 = vmatprep.subr.mxu0 0.0
    %4859 = vmatpush1.msra.mxu0 0.0
    %4860 = vmatprep.subr.mxu0 0.0
    %4861 = vmatpush1.msra.mxu0 0.0
    %4862 = vmatprep.subr.mxu0 0.0
    %4863 = vmatpush1.msra.mxu0 0.0
    %4864 = vmatprep.subr.mxu0 0.0
    %4865 = vmatpush1.msra.mxu0 0.0
    %4866 = vmatprep.subr.mxu0 0.0
    %4867 = vmatpush1.msra.mxu0 0.0
    %4868 = vmatprep.subr.mxu0 0.0
    %4869 = vmatpush1.msra.mxu0 0.0
    %4870 = vmatprep.subr.mxu0 0.0
    %4871 = vmatpush1.msra.mxu0 0.0
    %4872 = vmatprep.subr.mxu0 0.0
    %4873 = vmatpush1.msra.mxu0 0.0
    %4874 = vmatprep.subr.mxu0 0.0
    %4875 = vmatpush1.msra.mxu0 0.0
    %4876 = vmatprep.subr.mxu0 0.0
    %4877 = vmatpush1.msra.mxu0 0.0
    %4878 = vmatprep.subr.mxu0 0.0
    %4879 = vmatpush1.msra.mxu0 0.0
    %4880 = vmatprep.subr.mxu0 0.0
    %4881 = vmatpush1.msra.mxu0 0.0
    %4882 = vmatprep.subr.mxu0 0.0
    %4883 = vmatpush1.msra.mxu0 0.0
    %4884 = vmatprep.subr.mxu0 0.0
    %4885 = vmatpush1.msra.mxu0 0.0
    %4886 = vmatprep.subr.mxu0 0.0
    %4887 = vmatpush1.msra.mxu0 0.0
    %4888 = vmatprep.subr.mxu0 0.0
    %4889 = vmatpush1.msra.mxu0 0.0
    %4890 = vmatprep.subr.mxu0 0.0
    %4891 = vmatpush1.msra.mxu0 0.0
    %4892 = vmatprep.subr.mxu0 0.0
    %4893 = vmatpush1.msra.mxu0 0.0
    %4894 = vmatprep.subr.mxu0 0.0
    %4895 = vmatpush1.msra.mxu0 0.0
    %4896 = vmatprep.subr.mxu0 0.0
    %4897 = vmatpush1.msra.mxu0 0.0
    %4898 = vmatprep.subr.mxu0 0.0
    %4899 = vmatpush1.msra.mxu0 0.0
    %4900 = vmatprep.subr.mxu0 0.0
    %4901 = vmatpush1.msra.mxu0 0.0
    %4902 = vmatprep.subr.mxu0 0.0
    %4903 = vmatpush1.msra.mxu0 0.0
    %4904 = vmatprep.subr.mxu0 0.0
    %4905 = vmatpush1.msra.mxu0 0.0
    %4906 = vmatprep.mubr.f32.mxu0 0.0
    %4907 = vmatmul.mubr.f32.gmra.mrb[0].mxu0 %v4698
    %v4908 = vpop.f32.mrb[0].mxu0
    %v4909 = vadd.f32 0.0, %v4908
    %v4910 = vpop.f32.mrb[0].mxu0
    %v4911 = vadd.f32 0.0, %v4910
    %4912 = vdwg.mxu0
    %4913 = vmatprep.subr.mxu0 %v161
    %4914 = vmatpush1.msra.mxu0 %v160
    %4915 = vmatprep.subr.mxu0 %v564
    %4916 = vmatpush1.msra.mxu0 %v561
    %4917 = vmatprep.subr.mxu0 0.0
    %4918 = vmatpush1.msra.mxu0 0.0
    %4919 = vmatprep.subr.mxu0 0.0
    %4920 = vmatpush1.msra.mxu0 0.0
    %4921 = vmatprep.subr.mxu0 0.0
    %4922 = vmatpush1.msra.mxu0 0.0
    %4923 = vmatprep.subr.mxu0 0.0
    %4924 = vmatpush1.msra.mxu0 0.0
    %4925 = vmatprep.subr.mxu0 0.0
    %4926 = vmatpush1.msra.mxu0 0.0
    %4927 = vmatprep.subr.mxu0 0.0
    %4928 = vmatpush1.msra.mxu0 0.0
    %4929 = vmatprep.subr.mxu0 0.0
    %4930 = vmatpush1.msra.mxu0 0.0
    %4931 = vmatprep.subr.mxu0 0.0
    %4932 = vmatpush1.msra.mxu0 0.0
    %4933 = vmatprep.subr.mxu0 0.0
    %4934 = vmatpush1.msra.mxu0 0.0
    %4935 = vmatprep.subr.mxu0 0.0
    %4936 = vmatpush1.msra.mxu0 0.0
    %4937 = vmatprep.subr.mxu0 0.0
    %4938 = vmatpush1.msra.mxu0 0.0
    %4939 = vmatprep.subr.mxu0 0.0
    %4940 = vmatpush1.msra.mxu0 0.0
    %4941 = vmatprep.subr.mxu0 0.0
    %4942 = vmatpush1.msra.mxu0 0.0
    %4943 = vmatprep.subr.mxu0 0.0
    %4944 = vmatpush1.msra.mxu0 0.0
    %4945 = vmatprep.subr.mxu0 0.0
    %4946 = vmatpush1.msra.mxu0 0.0
    %4947 = vmatprep.subr.mxu0 0.0
    %4948 = vmatpush1.msra.mxu0 0.0
    %4949 = vmatprep.subr.mxu0 0.0
    %4950 = vmatpush1.msra.mxu0 0.0
    %4951 = vmatprep.subr.mxu0 0.0
    %4952 = vmatpush1.msra.mxu0 0.0
    %4953 = vmatprep.subr.mxu0 0.0
    %4954 = vmatpush1.msra.mxu0 0.0
    %4955 = vmatprep.subr.mxu0 0.0
    %4956 = vmatpush1.msra.mxu0 0.0
    %4957 = vmatprep.subr.mxu0 0.0
    %4958 = vmatpush1.msra.mxu0 0.0
    %4959 = vmatprep.subr.mxu0 0.0
    %4960 = vmatpush1.msra.mxu0 0.0
    %4961 = vmatprep.subr.mxu0 0.0
    %4962 = vmatpush1.msra.mxu0 0.0
    %4963 = vmatprep.subr.mxu0 0.0
    %4964 = vmatpush1.msra.mxu0 0.0
    %4965 = vmatprep.subr.mxu0 0.0
    %4966 = vmatpush1.msra.mxu0 0.0
    %4967 = vmatprep.subr.mxu0 0.0
    %4968 = vmatpush1.msra.mxu0 0.0
    %4969 = vmatprep.subr.mxu0 0.0
    %4970 = vmatpush1.msra.mxu0 0.0
    %4971 = vmatprep.subr.mxu0 0.0
    %4972 = vmatpush1.msra.mxu0 0.0
    %4973 = vmatprep.subr.mxu0 0.0
    %4974 = vmatpush1.msra.mxu0 0.0
    %4975 = vmatprep.subr.mxu0 0.0
    %4976 = vmatpush1.msra.mxu0 0.0
    %4977 = vmatprep.mubr.f32.mxu0 0.0
    %4978 = vmatmul.mubr.f32.gmra.mrb[0].mxu0 %v4698
    %v4979 = vpop.f32.mrb[0].mxu0
    %v4980 = vadd.f32 0.0, %v4979
    %v4981 = vpop.f32.mrb[0].mxu0
    %v4982 = vadd.f32 0.0, %v4981
    %4983 = vdwg.mxu0
    %vm4984 = vcmp.ge.f32.partialorder %v4767, 0.0
    %vm4985 = vcmp.ge.f32.partialorder %v4769, 0.0
    %vm4986 = vcmp.ge.f32.partialorder %v4838, 0.0
    %vm4987 = vcmp.ge.f32.partialorder %v4840, 0.0
    %vm4988 = vcmp.ge.f32.partialorder %v4909, 0.0
    %vm4989 = vcmp.ge.f32.partialorder %v4911, 0.0
    %vm4990 = vcmp.ge.f32.partialorder %v4980, 0.0
    %vm4991 = vcmp.ge.f32.partialorder %v4982, 0.0
    %v4992 = vsel %vm4984, 0.007, -0.007
    %v4993 = vsel %vm4985, 0.007, -0.007
    %v4994 = vsel %vm4986, 0.007, -0.007
    %v4995 = vsel %vm4987, 0.007, -0.007
    %v4996 = vsel %vm4988, 0.007, -0.007
    %v4997 = vsel %vm4989, 0.007, -0.007
    %v4998 = vsel %vm4990, 0.007, -0.007
    %v4999 = vsel %vm4991, 0.007, -0.007
    %v5008 = vcombine.low %v4992, %v4993
    %v5009 = vcombine.low %v4994, %v4995
    %v5011 = vunpack.c.l.s4 1983009808
    %v5012 = vunpack.c.0.s8 %v5011
    %v5013 = vlaneseq
    %v5014 = vshrl.u32 %v5013, 7
    %v5015 = vsub.s32 %v5012, %v5014
    %v5016 = vrot.slane %v5008, %v5015
    %v5018 = vunpack.c.l.s4 1983009808
    %v5019 = vunpack.c.0.s8 %v5018
    %v5020 = vlaneseq
    %v5021 = vshrl.u32 %v5020, 7
    %v5022 = vsub.s32 %v5019, %v5021
    %v5023 = vrot.slane %v5009, %v5022
    %v5024 = vcombine.low %v5016, %v5023
    %v5025 = vcombine.low %v4996, %v4997
    %v5026 = vcombine.low %v4998, %v4999
    %v5028 = vunpack.c.l.s4 1983009808
    %v5029 = vunpack.c.0.s8 %v5028
    %v5030 = vlaneseq
    %v5031 = vshrl.u32 %v5030, 7
    %v5032 = vsub.s32 %v5029, %v5031
    %v5033 = vrot.slane %v5025, %v5032
    %v5035 = vunpack.c.l.s4 1983009808
    %v5036 = vunpack.c.0.s8 %v5035
    %v5037 = vlaneseq
    %v5038 = vshrl.u32 %v5037, 7
    %v5039 = vsub.s32 %v5036, %v5038
    %v5040 = vrot.slane %v5026, %v5039
    %v5041 = vcombine.low %v5033, %v5040
    %v5044 = vadd.f32 %v4359, %v5024
    %v5045 = vadd.f32 %v4360, %v5041
    %v5046 = vmax.f32 %v5044, %v188
    %v5047 = vmax.f32 %v5045, %v189
    %v5048 = vmin.f32 %v5046, %v192
    %v5049 = vmin.f32 %v5047, %v193
    %v5052 = vcombine.high %v5048, %v5048
    %v5054 = vunpack.c.l.s4 1983009808
    %v5055 = vunpack.c.0.s8 %v5054
    %v5056 = vlaneseq
    %v5057 = vshrl.u32 %v5056, 7
    %v5058 = vsub.s32 %v5055, %v5057
    %v5059 = vrot.slane %v5048, %v5058
    %v5061 = vunpack.c.l.s4 1983009808
    %v5062 = vunpack.c.0.s8 %v5061
    %v5063 = vlaneseq
    %v5064 = vshrl.u32 %v5063, 7
    %v5065 = vsub.s32 %v5062, %v5064
    %v5066 = vrot.slane %v5052, %v5065
    %v5067 = vcombine.high %v5059, %v5059
    %v5068 = vcombine.high %v5066, %v5066
    %v5069 = vcombine.high %v5049, %v5049
    %v5071 = vunpack.c.l.s4 1983009808
    %v5072 = vunpack.c.0.s8 %v5071
    %v5073 = vlaneseq
    %v5074 = vshrl.u32 %v5073, 7
    %v5075 = vsub.s32 %v5072, %v5074
    %v5076 = vrot.slane %v5049, %v5075
    %v5078 = vunpack.c.l.s4 1983009808
    %v5079 = vunpack.c.0.s8 %v5078
    %v5080 = vlaneseq
    %v5081 = vshrl.u32 %v5080, 7
    %v5082 = vsub.s32 %v5079, %v5081
    %v5083 = vrot.slane %v5069, %v5082
    %v5084 = vcombine.high %v5076, %v5076
    %v5085 = vcombine.high %v5083, %v5083
    %5094 = vmatprep.subr.mxu0 0.0
    %5095 = vmatpush1.msra.mxu0 %v26
    %5096 = vmatprep.subr.mxu0 0.0
    %5097 = vmatpush1.msra.mxu0 %v27
    %5098 = vmatprep.subr.mxu0 0.0
    %5099 = vmatpush1.msra.mxu0 %v28
    %5100 = vmatprep.subr.mxu0 0.0
    %5101 = vmatpush1.msra.mxu0 %v29
    %5102 = vmatprep.subr.mxu0 0.0
    %5103 = vmatpush1.msra.mxu0 %v30
    %5104 = vmatprep.subr.mxu0 0.0
    %5105 = vmatpush1.msra.mxu0 %v31
    %5106 = vmatprep.subr.mxu0 0.0
    %5107 = vmatpush1.msra.mxu0 %v32
    %5108 = vmatprep.subr.mxu0 0.0
    %5109 = vmatpush1.msra.mxu0 %v33
    %5110 = vmatprep.subr.mxu0 0.0
    %5111 = vmatpush1.msra.mxu0 %v34
    %5112 = vmatprep.subr.mxu0 0.0
    %5113 = vmatpush1.msra.mxu0 %v35
    %5114 = vmatprep.subr.mxu0 0.0
    %5115 = vmatpush1.msra.mxu0 %v36
    %5116 = vmatprep.subr.mxu0 0.0
    %5117 = vmatpush1.msra.mxu0 %v37
    %5118 = vmatprep.subr.mxu0 0.0
    %5119 = vmatpush1.msra.mxu0 %v38
    %5120 = vmatprep.subr.mxu0 0.0
    %5121 = vmatpush1.msra.mxu0 %v39
    %5122 = vmatprep.subr.mxu0 0.0
    %5123 = vmatpush1.msra.mxu0 %v40
    %5124 = vmatprep.subr.mxu0 0.0
    %5125 = vmatpush1.msra.mxu0 %v41
    %5126 = vmatprep.subr.mxu0 0.0
    %5127 = vmatpush1.msra.mxu0 %v42
    %5128 = vmatprep.subr.mxu0 0.0
    %5129 = vmatpush1.msra.mxu0 %v43
    %5130 = vmatprep.subr.mxu0 0.0
    %5131 = vmatpush1.msra.mxu0 %v44
    %5132 = vmatprep.subr.mxu0 0.0
    %5133 = vmatpush1.msra.mxu0 %v45
    %5134 = vmatprep.subr.mxu0 0.0
    %5135 = vmatpush1.msra.mxu0 %v46
    %5136 = vmatprep.subr.mxu0 0.0
    %5137 = vmatpush1.msra.mxu0 %v47
    %5138 = vmatprep.subr.mxu0 0.0
    %5139 = vmatpush1.msra.mxu0 %v48
    %5140 = vmatprep.subr.mxu0 0.0
    %5141 = vmatpush1.msra.mxu0 %v49
    %5142 = vmatprep.subr.mxu0 0.0
    %5143 = vmatpush1.msra.mxu0 %v50
    %5144 = vmatprep.subr.mxu0 0.0
    %5145 = vmatpush1.msra.mxu0 %v51
    %5146 = vmatprep.subr.mxu0 0.0
    %5147 = vmatpush1.msra.mxu0 %v52
    %5148 = vmatprep.subr.mxu0 0.0
    %5149 = vmatpush1.msra.mxu0 %v53
    %5150 = vmatprep.subr.mxu0 0.0
    %5151 = vmatpush1.msra.mxu0 %v54
    %5152 = vmatprep.subr.mxu0 0.0
    %5153 = vmatpush1.msra.mxu0 %v55
    %5154 = vmatprep.subr.mxu0 0.0
    %5155 = vmatpush1.msra.mxu0 %v56
    %5156 = vmatprep.subr.mxu0 0.0
    %5157 = vmatpush1.msra.mxu0 %v57
    %5158 = vmatprep.mubr.f32.mxu0 %v5067
    %5159 = vmatmul.mubr.f32.gmra.mrb[0].mxu0 %v5059
    %v5160 = vpop.f32.mrb[0].mxu0
    %v5161 = vadd.f32 %v184, %v5160
    %v5162 = vpop.f32.mrb[0].mxu0
    %5163 = vdwg.mxu0
    %5164 = vmatprep.subr.mxu0 0.0
    %5165 = vmatpush1.msra.mxu0 %v58
    %5166 = vmatprep.subr.mxu0 0.0
    %5167 = vmatpush1.msra.mxu0 %v59
    %5168 = vmatprep.subr.mxu0 0.0
    %5169 = vmatpush1.msra.mxu0 %v60
    %5170 = vmatprep.subr.mxu0 0.0
    %5171 = vmatpush1.msra.mxu0 %v61
    %5172 = vmatprep.subr.mxu0 0.0
    %5173 = vmatpush1.msra.mxu0 %v62
    %5174 = vmatprep.subr.mxu0 0.0
    %5175 = vmatpush1.msra.mxu0 %v63
    %5176 = vmatprep.subr.mxu0 0.0
    %5177 = vmatpush1.msra.mxu0 %v64
    %5178 = vmatprep.subr.mxu0 0.0
    %5179 = vmatpush1.msra.mxu0 %v65
    %5180 = vmatprep.subr.mxu0 0.0
    %5181 = vmatpush1.msra.mxu0 %v66
    %5182 = vmatprep.subr.mxu0 0.0
    %5183 = vmatpush1.msra.mxu0 %v67
    %5184 = vmatprep.subr.mxu0 0.0
    %5185 = vmatpush1.msra.mxu0 %v68
    %5186 = vmatprep.subr.mxu0 0.0
    %5187 = vmatpush1.msra.mxu0 %v69
    %5188 = vmatprep.subr.mxu0 0.0
    %5189 = vmatpush1.msra.mxu0 %v70
    %5190 = vmatprep.subr.mxu0 0.0
    %5191 = vmatpush1.msra.mxu0 %v71
    %5192 = vmatprep.subr.mxu0 0.0
    %5193 = vmatpush1.msra.mxu0 %v72
    %5194 = vmatprep.subr.mxu0 0.0
    %5195 = vmatpush1.msra.mxu0 %v73
    %5196 = vmatprep.subr.mxu0 0.0
    %5197 = vmatpush1.msra.mxu0 %v74
    %5198 = vmatprep.subr.mxu0 0.0
    %5199 = vmatpush1.msra.mxu0 %v75
    %5200 = vmatprep.subr.mxu0 0.0
    %5201 = vmatpush1.msra.mxu0 %v76
    %5202 = vmatprep.subr.mxu0 0.0
    %5203 = vmatpush1.msra.mxu0 %v77
    %5204 = vmatprep.subr.mxu0 0.0
    %5205 = vmatpush1.msra.mxu0 %v78
    %5206 = vmatprep.subr.mxu0 0.0
    %5207 = vmatpush1.msra.mxu0 %v79
    %5208 = vmatprep.subr.mxu0 0.0
    %5209 = vmatpush1.msra.mxu0 %v80
    %5210 = vmatprep.subr.mxu0 0.0
    %5211 = vmatpush1.msra.mxu0 %v81
    %5212 = vmatprep.subr.mxu0 0.0
    %5213 = vmatpush1.msra.mxu0 %v82
    %5214 = vmatprep.subr.mxu0 0.0
    %5215 = vmatpush1.msra.mxu0 %v83
    %5216 = vmatprep.subr.mxu0 0.0
    %5217 = vmatpush1.msra.mxu0 %v84
    %5218 = vmatprep.subr.mxu0 0.0
    %5219 = vmatpush1.msra.mxu0 %v85
    %5220 = vmatprep.subr.mxu0 0.0
    %5221 = vmatpush1.msra.mxu0 %v86
    %5222 = vmatprep.subr.mxu0 0.0
    %5223 = vmatpush1.msra.mxu0 %v87
    %5224 = vmatprep.subr.mxu0 0.0
    %5225 = vmatpush1.msra.mxu0 %v88
    %5226 = vmatprep.subr.mxu0 0.0
    %5227 = vmatpush1.msra.mxu0 %v89
    %5228 = vmatprep.mubr.f32.mxu0 %v5068
    %5229 = vmatmul.mubr.f32.gmra.mrb[0].mxu0 %v5066
    %v5230 = vpop.f32.mrb[0].mxu0
    %v5231 = vadd.f32 %v5161, %v5230
    %v5232 = vpop.f32.mrb[0].mxu0
    %5233 = vdwg.mxu0
    %5234 = vmatprep.subr.mxu0 0.0
    %5235 = vmatpush1.msra.mxu0 %v90
    %5236 = vmatprep.subr.mxu0 0.0
    %5237 = vmatpush1.msra.mxu0 %v91
    %5238 = vmatprep.subr.mxu0 0.0
    %5239 = vmatpush1.msra.mxu0 %v92
    %5240 = vmatprep.subr.mxu0 0.0
    %5241 = vmatpush1.msra.mxu0 %v93
    %5242 = vmatprep.subr.mxu0 0.0
    %5243 = vmatpush1.msra.mxu0 %v94
    %5244 = vmatprep.subr.mxu0 0.0
    %5245 = vmatpush1.msra.mxu0 %v95
    %5246 = vmatprep.subr.mxu0 0.0
    %5247 = vmatpush1.msra.mxu0 %v96
    %5248 = vmatprep.subr.mxu0 0.0
    %5249 = vmatpush1.msra.mxu0 %v97
    %5250 = vmatprep.subr.mxu0 0.0
    %5251 = vmatpush1.msra.mxu0 %v98
    %5252 = vmatprep.subr.mxu0 0.0
    %5253 = vmatpush1.msra.mxu0 %v99
    %5254 = vmatprep.subr.mxu0 0.0
    %5255 = vmatpush1.msra.mxu0 %v100
    %5256 = vmatprep.subr.mxu0 0.0
    %5257 = vmatpush1.msra.mxu0 %v101
    %5258 = vmatprep.subr.mxu0 0.0
    %5259 = vmatpush1.msra.mxu0 %v102
    %5260 = vmatprep.subr.mxu0 0.0
    %5261 = vmatpush1.msra.mxu0 %v103
    %5262 = vmatprep.subr.mxu0 0.0
    %5263 = vmatpush1.msra.mxu0 %v104
    %5264 = vmatprep.subr.mxu0 0.0
    %5265 = vmatpush1.msra.mxu0 %v105
    %5266 = vmatprep.subr.mxu0 0.0
    %5267 = vmatpush1.msra.mxu0 %v106
    %5268 = vmatprep.subr.mxu0 0.0
    %5269 = vmatpush1.msra.mxu0 %v107
    %5270 = vmatprep.subr.mxu0 0.0
    %5271 = vmatpush1.msra.mxu0 %v108
    %5272 = vmatprep.subr.mxu0 0.0
    %5273 = vmatpush1.msra.mxu0 %v109
    %5274 = vmatprep.subr.mxu0 0.0
    %5275 = vmatpush1.msra.mxu0 %v110
    %5276 = vmatprep.subr.mxu0 0.0
    %5277 = vmatpush1.msra.mxu0 %v111
    %5278 = vmatprep.subr.mxu0 0.0
    %5279 = vmatpush1.msra.mxu0 %v112
    %5280 = vmatprep.subr.mxu0 0.0
    %5281 = vmatpush1.msra.mxu0 %v113
    %5282 = vmatprep.subr.mxu0 0.0
    %5283 = vmatpush1.msra.mxu0 %v114
    %5284 = vmatprep.subr.mxu0 0.0
    %5285 = vmatpush1.msra.mxu0 %v115
    %5286 = vmatprep.subr.mxu0 0.0
    %5287 = vmatpush1.msra.mxu0 %v116
    %5288 = vmatprep.subr.mxu0 0.0
    %5289 = vmatpush1.msra.mxu0 %v117
    %5290 = vmatprep.subr.mxu0 0.0
    %5291 = vmatpush1.msra.mxu0 %v118
    %5292 = vmatprep.subr.mxu0 0.0
    %5293 = vmatpush1.msra.mxu0 %v119
    %5294 = vmatprep.subr.mxu0 0.0
    %5295 = vmatpush1.msra.mxu0 %v120
    %5296 = vmatprep.subr.mxu0 0.0
    %5297 = vmatpush1.msra.mxu0 %v121
    %5298 = vmatprep.mubr.f32.mxu0 %v5084
    %5299 = vmatmul.mubr.f32.gmra.mrb[0].mxu0 %v5076
    %v5300 = vpop.f32.mrb[0].mxu0
    %v5301 = vadd.f32 %v5231, %v5300
    %v5302 = vpop.f32.mrb[0].mxu0
    %5303 = vdwg.mxu0
    %5304 = vmatprep.subr.mxu0 0.0
    %5305 = vmatpush1.msra.mxu0 %v122
    %5306 = vmatprep.subr.mxu0 0.0
    %5307 = vmatpush1.msra.mxu0 %v123
    %5308 = vmatprep.subr.mxu0 0.0
    %5309 = vmatpush1.msra.mxu0 %v124
    %5310 = vmatprep.subr.mxu0 0.0
    %5311 = vmatpush1.msra.mxu0 %v125
    %5312 = vmatprep.subr.mxu0 0.0
    %5313 = vmatpush1.msra.mxu0 %v126
    %5314 = vmatprep.subr.mxu0 0.0
    %5315 = vmatpush1.msra.mxu0 %v127
    %5316 = vmatprep.subr.mxu0 0.0
    %5317 = vmatpush1.msra.mxu0 %v128
    %5318 = vmatprep.subr.mxu0 0.0
    %5319 = vmatpush1.msra.mxu0 %v129
    %5320 = vmatprep.subr.mxu0 0.0
    %5321 = vmatpush1.msra.mxu0 %v130
    %5322 = vmatprep.subr.mxu0 0.0
    %5323 = vmatpush1.msra.mxu0 %v131
    %5324 = vmatprep.subr.mxu0 0.0
    %5325 = vmatpush1.msra.mxu0 %v132
    %5326 = vmatprep.subr.mxu0 0.0
    %5327 = vmatpush1.msra.mxu0 %v133
    %5328 = vmatprep.subr.mxu0 0.0
    %5329 = vmatpush1.msra.mxu0 %v134
    %5330 = vmatprep.subr.mxu0 0.0
    %5331 = vmatpush1.msra.mxu0 %v135
    %5332 = vmatprep.subr.mxu0 0.0
    %5333 = vmatpush1.msra.mxu0 %v136
    %5334 = vmatprep.subr.mxu0 0.0
    %5335 = vmatpush1.msra.mxu0 %v137
    %5336 = vmatprep.subr.mxu0 0.0
    %5337 = vmatpush1.msra.mxu0 %v138
    %5338 = vmatprep.subr.mxu0 0.0
    %5339 = vmatpush1.msra.mxu0 %v139
    %5340 = vmatprep.subr.mxu0 0.0
    %5341 = vmatpush1.msra.mxu0 %v140
    %5342 = vmatprep.subr.mxu0 0.0
    %5343 = vmatpush1.msra.mxu0 %v141
    %5344 = vmatprep.subr.mxu0 0.0
    %5345 = vmatpush1.msra.mxu0 %v142
    %5346 = vmatprep.subr.mxu0 0.0
    %5347 = vmatpush1.msra.mxu0 %v143
    %5348 = vmatprep.subr.mxu0 0.0
    %5349 = vmatpush1.msra.mxu0 %v144
    %5350 = vmatprep.subr.mxu0 0.0
    %5351 = vmatpush1.msra.mxu0 %v145
    %5352 = vmatprep.subr.mxu0 0.0
    %5353 = vmatpush1.msra.mxu0 %v146
    %5354 = vmatprep.subr.mxu0 0.0
    %5355 = vmatpush1.msra.mxu0 %v147
    %5356 = vmatprep.subr.mxu0 0.0
    %5357 = vmatpush1.msra.mxu0 %v148
    %5358 = vmatprep.subr.mxu0 0.0
    %5359 = vmatpush1.msra.mxu0 %v149
    %5360 = vmatprep.subr.mxu0 0.0
    %5361 = vmatpush1.msra.mxu0 %v150
    %5362 = vmatprep.subr.mxu0 0.0
    %5363 = vmatpush1.msra.mxu0 %v151
    %5364 = vmatprep.subr.mxu0 0.0
    %5365 = vmatpush1.msra.mxu0 %v152
    %5366 = vmatprep.subr.mxu0 0.0
    %5367 = vmatpush1.msra.mxu0 %v153
    %5368 = vmatprep.mubr.f32.mxu0 %v5085
    %5369 = vmatmul.mubr.f32.gmra.mrb[0].mxu0 %v5083
    %v5370 = vpop.f32.mrb[0].mxu0
    %v5371 = vadd.f32 %v5301, %v5370
    %v5372 = vpop.f32.mrb[0].mxu0
    %5373 = vdwg.mxu0
    %v5374 = vsel %vm524, %v5371, -inf
    %5375 = vmax.xlane.f32.xlu0 %v5374
    %v5376 = vpop.xlane.xlu0 %5375
    %v5377 = vsub.f32 %v5371, %v5376
    %v5378 = vmul.f32 %v5377, 1.442695
    %v5379 = vpow.pop %v5378
    %v5380 = vsel %vm524, %v5379, 0.0
    %5381 = vadd.xlane.f32.xlu0 %v5380
    %v5382 = vpop.xlane.xlu0 %5381
    %v5383 = vrcp.pop %v5382
    %v5384 = vmul.f32 %v5379, %v5383
    %v5385 = vsub.f32 %v5384, %v178
    %v5387 = vsel %vm537, %v5385, 0
    %5389 = vmatprep.subr.mxu0 %v155
    %5390 = vmatpush1.msra.mxu0 %v154
    %5391 = vmatprep.subr.mxu0 %v546
    %5392 = vmatpush1.msra.mxu0 %v543
    %5393 = vmatprep.subr.mxu0 0.0
    %5394 = vmatpush1.msra.mxu0 0.0
    %5395 = vmatprep.subr.mxu0 0.0
    %5396 = vmatpush1.msra.mxu0 0.0
    %5397 = vmatprep.subr.mxu0 0.0
    %5398 = vmatpush1.msra.mxu0 0.0
    %5399 = vmatprep.subr.mxu0 0.0
    %5400 = vmatpush1.msra.mxu0 0.0
    %5401 = vmatprep.subr.mxu0 0.0
    %5402 = vmatpush1.msra.mxu0 0.0
    %5403 = vmatprep.subr.mxu0 0.0
    %5404 = vmatpush1.msra.mxu0 0.0
    %5405 = vmatprep.subr.mxu0 0.0
    %5406 = vmatpush1.msra.mxu0 0.0
    %5407 = vmatprep.subr.mxu0 0.0
    %5408 = vmatpush1.msra.mxu0 0.0
    %5409 = vmatprep.subr.mxu0 0.0
    %5410 = vmatpush1.msra.mxu0 0.0
    %5411 = vmatprep.subr.mxu0 0.0
    %5412 = vmatpush1.msra.mxu0 0.0
    %5413 = vmatprep.subr.mxu0 0.0
    %5414 = vmatpush1.msra.mxu0 0.0
    %5415 = vmatprep.subr.mxu0 0.0
    %5416 = vmatpush1.msra.mxu0 0.0
    %5417 = vmatprep.subr.mxu0 0.0
    %5418 = vmatpush1.msra.mxu0 0.0
    %5419 = vmatprep.subr.mxu0 0.0
    %5420 = vmatpush1.msra.mxu0 0.0
    %5421 = vmatprep.subr.mxu0 0.0
    %5422 = vmatpush1.msra.mxu0 0.0
    %5423 = vmatprep.subr.mxu0 0.0
    %5424 = vmatpush1.msra.mxu0 0.0
    %5425 = vmatprep.subr.mxu0 0.0
    %5426 = vmatpush1.msra.mxu0 0.0
    %5427 = vmatprep.subr.mxu0 0.0
    %5428 = vmatpush1.msra.mxu0 0.0
    %5429 = vmatprep.subr.mxu0 0.0
    %5430 = vmatpush1.msra.mxu0 0.0
    %5431 = vmatprep.subr.mxu0 0.0
    %5432 = vmatpush1.msra.mxu0 0.0
    %5433 = vmatprep.subr.mxu0 0.0
    %5434 = vmatpush1.msra.mxu0 0.0
    %5435 = vmatprep.subr.mxu0 0.0
    %5436 = vmatpush1.msra.mxu0 0.0
    %5437 = vmatprep.subr.mxu0 0.0
    %5438 = vmatpush1.msra.mxu0 0.0
    %5439 = vmatprep.subr.mxu0 0.0
    %5440 = vmatpush1.msra.mxu0 0.0
    %5441 = vmatprep.subr.mxu0 0.0
    %5442 = vmatpush1.msra.mxu0 0.0
    %5443 = vmatprep.subr.mxu0 0.0
    %5444 = vmatpush1.msra.mxu0 0.0
    %5445 = vmatprep.subr.mxu0 0.0
    %5446 = vmatpush1.msra.mxu0 0.0
    %5447 = vmatprep.subr.mxu0 0.0
    %5448 = vmatpush1.msra.mxu0 0.0
    %5449 = vmatprep.subr.mxu0 0.0
    %5450 = vmatpush1.msra.mxu0 0.0
    %5451 = vmatprep.subr.mxu0 0.0
    %5452 = vmatpush1.msra.mxu0 0.0
    %5453 = vmatprep.mubr.f32.mxu0 0.0
    %5454 = vmatmul.mubr.f32.gmra.mrb[0].mxu0 %v5387
    %v5455 = vpop.f32.mrb[0].mxu0
    %v5456 = vadd.f32 0.0, %v5455
    %v5457 = vpop.f32.mrb[0].mxu0
    %v5458 = vadd.f32 0.0, %v5457
    %5459 = vdwg.mxu0
    %5460 = vmatprep.subr.mxu0 %v157
    %5461 = vmatpush1.msra.mxu0 %v156
    %5462 = vmatprep.subr.mxu0 %v552
    %5463 = vmatpush1.msra.mxu0 %v549
    %5464 = vmatprep.subr.mxu0 0.0
    %5465 = vmatpush1.msra.mxu0 0.0
    %5466 = vmatprep.subr.mxu0 0.0
    %5467 = vmatpush1.msra.mxu0 0.0
    %5468 = vmatprep.subr.mxu0 0.0
    %5469 = vmatpush1.msra.mxu0 0.0
    %5470 = vmatprep.subr.mxu0 0.0
    %5471 = vmatpush1.msra.mxu0 0.0
    %5472 = vmatprep.subr.mxu0 0.0
    %5473 = vmatpush1.msra.mxu0 0.0
    %5474 = vmatprep.subr.mxu0 0.0
    %5475 = vmatpush1.msra.mxu0 0.0
    %5476 = vmatprep.subr.mxu0 0.0
    %5477 = vmatpush1.msra.mxu0 0.0
    %5478 = vmatprep.subr.mxu0 0.0
    %5479 = vmatpush1.msra.mxu0 0.0
    %5480 = vmatprep.subr.mxu0 0.0
    %5481 = vmatpush1.msra.mxu0 0.0
    %5482 = vmatprep.subr.mxu0 0.0
    %5483 = vmatpush1.msra.mxu0 0.0
    %5484 = vmatprep.subr.mxu0 0.0
    %5485 = vmatpush1.msra.mxu0 0.0
    %5486 = vmatprep.subr.mxu0 0.0
    %5487 = vmatpush1.msra.mxu0 0.0
    %5488 = vmatprep.subr.mxu0 0.0
    %5489 = vmatpush1.msra.mxu0 0.0
    %5490 = vmatprep.subr.mxu0 0.0
    %5491 = vmatpush1.msra.mxu0 0.0
    %5492 = vmatprep.subr.mxu0 0.0
    %5493 = vmatpush1.msra.mxu0 0.0
    %5494 = vmatprep.subr.mxu0 0.0
    %5495 = vmatpush1.msra.mxu0 0.0
    %5496 = vmatprep.subr.mxu0 0.0
    %5497 = vmatpush1.msra.mxu0 0.0
    %5498 = vmatprep.subr.mxu0 0.0
    %5499 = vmatpush1.msra.mxu0 0.0
    %5500 = vmatprep.subr.mxu0 0.0
    %5501 = vmatpush1.msra.mxu0 0.0
    %5502 = vmatprep.subr.mxu0 0.0
    %5503 = vmatpush1.msra.mxu0 0.0
    %5504 = vmatprep.subr.mxu0 0.0
    %5505 = vmatpush1.msra.mxu0 0.0
    %5506 = vmatprep.subr.mxu0 0.0
    %5507 = vmatpush1.msra.mxu0 0.0
    %5508 = vmatprep.subr.mxu0 0.0
    %5509 = vmatpush1.msra.mxu0 0.0
    %5510 = vmatprep.subr.mxu0 0.0
    %5511 = vmatpush1.msra.mxu0 0.0
    %5512 = vmatprep.subr.mxu0 0.0
    %5513 = vmatpush1.msra.mxu0 0.0
    %5514 = vmatprep.subr.mxu0 0.0
    %5515 = vmatpush1.msra.mxu0 0.0
    %5516 = vmatprep.subr.mxu0 0.0
    %5517 = vmatpush1.msra.mxu0 0.0
    %5518 = vmatprep.subr.mxu0 0.0
    %5519 = vmatpush1.msra.mxu0 0.0
    %5520 = vmatprep.subr.mxu0 0.0
    %5521 = vmatpush1.msra.mxu0 0.0
    %5522 = vmatprep.subr.mxu0 0.0
    %5523 = vmatpush1.msra.mxu0 0.0
    %5524 = vmatprep.mubr.f32.mxu0 0.0
    %5525 = vmatmul.mubr.f32.gmra.mrb[0].mxu0 %v5387
    %v5526 = vpop.f32.mrb[0].mxu0
    %v5527 = vadd.f32 0.0, %v5526
    %v5528 = vpop.f32.mrb[0].mxu0
    %v5529 = vadd.f32 0.0, %v5528
    %5530 = vdwg.mxu0
    %5531 = vmatprep.subr.mxu0 %v159
    %5532 = vmatpush1.msra.mxu0 %v158
    %5533 = vmatprep.subr.mxu0 %v558
    %5534 = vmatpush1.msra.mxu0 %v555
    %5535 = vmatprep.subr.mxu0 0.0
    %5536 = vmatpush1.msra.mxu0 0.0
    %5537 = vmatprep.subr.mxu0 0.0
    %5538 = vmatpush1.msra.mxu0 0.0
    %5539 = vmatprep.subr.mxu0 0.0
    %5540 = vmatpush1.msra.mxu0 0.0
    %5541 = vmatprep.subr.mxu0 0.0
    %5542 = vmatpush1.msra.mxu0 0.0
    %5543 = vmatprep.subr.mxu0 0.0
    %5544 = vmatpush1.msra.mxu0 0.0
    %5545 = vmatprep.subr.mxu0 0.0
    %5546 = vmatpush1.msra.mxu0 0.0
    %5547 = vmatprep.subr.mxu0 0.0
    %5548 = vmatpush1.msra.mxu0 0.0
    %5549 = vmatprep.subr.mxu0 0.0
    %5550 = vmatpush1.msra.mxu0 0.0
    %5551 = vmatprep.subr.mxu0 0.0
    %5552 = vmatpush1.msra.mxu0 0.0
    %5553 = vmatprep.subr.mxu0 0.0
    %5554 = vmatpush1.msra.mxu0 0.0
    %5555 = vmatprep.subr.mxu0 0.0
    %5556 = vmatpush1.msra.mxu0 0.0
    %5557 = vmatprep.subr.mxu0 0.0
    %5558 = vmatpush1.msra.mxu0 0.0
    %5559 = vmatprep.subr.mxu0 0.0
    %5560 = vmatpush1.msra.mxu0 0.0
    %5561 = vmatprep.subr.mxu0 0.0
    %5562 = vmatpush1.msra.mxu0 0.0
    %5563 = vmatprep.subr.mxu0 0.0
    %5564 = vmatpush1.msra.mxu0 0.0
    %5565 = vmatprep.subr.mxu0 0.0
    %5566 = vmatpush1.msra.mxu0 0.0
    %5567 = vmatprep.subr.mxu0 0.0
    %5568 = vmatpush1.msra.mxu0 0.0
    %5569 = vmatprep.subr.mxu0 0.0
    %5570 = vmatpush1.msra.mxu0 0.0
    %5571 = vmatprep.subr.mxu0 0.0
    %5572 = vmatpush1.msra.mxu0 0.0
    %5573 = vmatprep.subr.mxu0 0.0
    %5574 = vmatpush1.msra.mxu0 0.0
    %5575 = vmatprep.subr.mxu0 0.0
    %5576 = vmatpush1.msra.mxu0 0.0
    %5577 = vmatprep.subr.mxu0 0.0
    %5578 = vmatpush1.msra.mxu0 0.0
    %5579 = vmatprep.subr.mxu0 0.0
    %5580 = vmatpush1.msra.mxu0 0.0
    %5581 = vmatprep.subr.mxu0 0.0
    %5582 = vmatpush1.msra.mxu0 0.0
    %5583 = vmatprep.subr.mxu0 0.0
    %5584 = vmatpush1.msra.mxu0 0.0
    %5585 = vmatprep.subr.mxu0 0.0
    %5586 = vmatpush1.msra.mxu0 0.0
    %5587 = vmatprep.subr.mxu0 0.0
    %5588 = vmatpush1.msra.mxu0 0.0
    %5589 = vmatprep.subr.mxu0 0.0
    %5590 = vmatpush1.msra.mxu0 0.0
    %5591 = vmatprep.subr.mxu0 0.0
    %5592 = vmatpush1.msra.mxu0 0.0
    %5593 = vmatprep.subr.mxu0 0.0
    %5594 = vmatpush1.msra.mxu0 0.0
    %5595 = vmatprep.mubr.f32.mxu0 0.0
    %5596 = vmatmul.mubr.f32.gmra.mrb[0].mxu0 %v5387
    %v5597 = vpop.f32.mrb[0].mxu0
    %v5598 = vadd.f32 0.0, %v5597
    %v5599 = vpop.f32.mrb[0].mxu0
    %v5600 = vadd.f32 0.0, %v5599
    %5601 = vdwg.mxu0
    %5602 = vmatprep.subr.mxu0 %v161
    %5603 = vmatpush1.msra.mxu0 %v160
    %5604 = vmatprep.subr.mxu0 %v564
    %5605 = vmatpush1.msra.mxu0 %v561
    %5606 = vmatprep.subr.mxu0 0.0
    %5607 = vmatpush1.msra.mxu0 0.0
    %5608 = vmatprep.subr.mxu0 0.0
    %5609 = vmatpush1.msra.mxu0 0.0
    %5610 = vmatprep.subr.mxu0 0.0
    %5611 = vmatpush1.msra.mxu0 0.0
    %5612 = vmatprep.subr.mxu0 0.0
    %5613 = vmatpush1.msra.mxu0 0.0
    %5614 = vmatprep.subr.mxu0 0.0
    %5615 = vmatpush1.msra.mxu0 0.0
    %5616 = vmatprep.subr.mxu0 0.0
    %5617 = vmatpush1.msra.mxu0 0.0
    %5618 = vmatprep.subr.mxu0 0.0
    %5619 = vmatpush1.msra.mxu0 0.0
    %5620 = vmatprep.subr.mxu0 0.0
    %5621 = vmatpush1.msra.mxu0 0.0
    %5622 = vmatprep.subr.mxu0 0.0
    %5623 = vmatpush1.msra.mxu0 0.0
    %5624 = vmatprep.subr.mxu0 0.0
    %5625 = vmatpush1.msra.mxu0 0.0
    %5626 = vmatprep.subr.mxu0 0.0
    %5627 = vmatpush1.msra.mxu0 0.0
    %5628 = vmatprep.subr.mxu0 0.0
    %5629 = vmatpush1.msra.mxu0 0.0
    %5630 = vmatprep.subr.mxu0 0.0
    %5631 = vmatpush1.msra.mxu0 0.0
    %5632 = vmatprep.subr.mxu0 0.0
    %5633 = vmatpush1.msra.mxu0 0.0
    %5634 = vmatprep.subr.mxu0 0.0
    %5635 = vmatpush1.msra.mxu0 0.0
    %5636 = vmatprep.subr.mxu0 0.0
    %5637 = vmatpush1.msra.mxu0 0.0
    %5638 = vmatprep.subr.mxu0 0.0
    %5639 = vmatpush1.msra.mxu0 0.0
    %5640 = vmatprep.subr.mxu0 0.0
    %5641 = vmatpush1.msra.mxu0 0.0
    %5642 = vmatprep.subr.mxu0 0.0
    %5643 = vmatpush1.msra.mxu0 0.0
    %5644 = vmatprep.subr.mxu0 0.0
    %5645 = vmatpush1.msra.mxu0 0.0
    %5646 = vmatprep.subr.mxu0 0.0
    %5647 = vmatpush1.msra.mxu0 0.0
    %5648 = vmatprep.subr.mxu0 0.0
    %5649 = vmatpush1.msra.mxu0 0.0
    %5650 = vmatprep.subr.mxu0 0.0
    %5651 = vmatpush1.msra.mxu0 0.0
    %5652 = vmatprep.subr.mxu0 0.0
    %5653 = vmatpush1.msra.mxu0 0.0
    %5654 = vmatprep.subr.mxu0 0.0
    %5655 = vmatpush1.msra.mxu0 0.0
    %5656 = vmatprep.subr.mxu0 0.0
    %5657 = vmatpush1.msra.mxu0 0.0
    %5658 = vmatprep.subr.mxu0 0.0
    %5659 = vmatpush1.msra.mxu0 0.0
    %5660 = vmatprep.subr.mxu0 0.0
    %5661 = vmatpush1.msra.mxu0 0.0
    %5662 = vmatprep.subr.mxu0 0.0
    %5663 = vmatpush1.msra.mxu0 0.0
    %5664 = vmatprep.subr.mxu0 0.0
    %5665 = vmatpush1.msra.mxu0 0.0
    %5666 = vmatprep.mubr.f32.mxu0 0.0
    %5667 = vmatmul.mubr.f32.gmra.mrb[0].mxu0 %v5387
    %v5668 = vpop.f32.mrb[0].mxu0
    %v5669 = vadd.f32 0.0, %v5668
    %v5670 = vpop.f32.mrb[0].mxu0
    %v5671 = vadd.f32 0.0, %v5670
    %5672 = vdwg.mxu0
    %vm5673 = vcmp.ge.f32.partialorder %v5456, 0.0
    %vm5674 = vcmp.ge.f32.partialorder %v5458, 0.0
    %vm5675 = vcmp.ge.f32.partialorder %v5527, 0.0
    %vm5676 = vcmp.ge.f32.partialorder %v5529, 0.0
    %vm5677 = vcmp.ge.f32.partialorder %v5598, 0.0
    %vm5678 = vcmp.ge.f32.partialorder %v5600, 0.0
    %vm5679 = vcmp.ge.f32.partialorder %v5669, 0.0
    %vm5680 = vcmp.ge.f32.partialorder %v5671, 0.0
    %v5681 = vsel %vm5673, 0.007, -0.007
    %v5682 = vsel %vm5674, 0.007, -0.007
    %v5683 = vsel %vm5675, 0.007, -0.007
    %v5684 = vsel %vm5676, 0.007, -0.007
    %v5685 = vsel %vm5677, 0.007, -0.007
    %v5686 = vsel %vm5678, 0.007, -0.007
    %v5687 = vsel %vm5679, 0.007, -0.007
    %v5688 = vsel %vm5680, 0.007, -0.007
    %v5697 = vcombine.low %v5681, %v5682
    %v5698 = vcombine.low %v5683, %v5684
    %v5700 = vunpack.c.l.s4 1983009808
    %v5701 = vunpack.c.0.s8 %v5700
    %v5702 = vlaneseq
    %v5703 = vshrl.u32 %v5702, 7
    %v5704 = vsub.s32 %v5701, %v5703
    %v5705 = vrot.slane %v5697, %v5704
    %v5707 = vunpack.c.l.s4 1983009808
    %v5708 = vunpack.c.0.s8 %v5707
    %v5709 = vlaneseq
    %v5710 = vshrl.u32 %v5709, 7
    %v5711 = vsub.s32 %v5708, %v5710
    %v5712 = vrot.slane %v5698, %v5711
    %v5713 = vcombine.low %v5705, %v5712
    %v5714 = vcombine.low %v5685, %v5686
    %v5715 = vcombine.low %v5687, %v5688
    %v5717 = vunpack.c.l.s4 1983009808
    %v5718 = vunpack.c.0.s8 %v5717
    %v5719 = vlaneseq
    %v5720 = vshrl.u32 %v5719, 7
    %v5721 = vsub.s32 %v5718, %v5720
    %v5722 = vrot.slane %v5714, %v5721
    %v5724 = vunpack.c.l.s4 1983009808
    %v5725 = vunpack.c.0.s8 %v5724
    %v5726 = vlaneseq
    %v5727 = vshrl.u32 %v5726, 7
    %v5728 = vsub.s32 %v5725, %v5727
    %v5729 = vrot.slane %v5715, %v5728
    %v5730 = vcombine.low %v5722, %v5729
    %v5733 = vadd.f32 %v5048, %v5713
    %v5734 = vadd.f32 %v5049, %v5730
    %v5735 = vmax.f32 %v5733, %v188
    %v5736 = vmax.f32 %v5734, %v189
    %v5737 = vmin.f32 %v5735, %v192
    %v5738 = vmin.f32 %v5736, %v193
    %v5741 = vcombine.high %v5737, %v5737
    %v5743 = vunpack.c.l.s4 1983009808
    %v5744 = vunpack.c.0.s8 %v5743
    %v5745 = vlaneseq
    %v5746 = vshrl.u32 %v5745, 7
    %v5747 = vsub.s32 %v5744, %v5746
    %v5748 = vrot.slane %v5737, %v5747
    %v5750 = vunpack.c.l.s4 1983009808
    %v5751 = vunpack.c.0.s8 %v5750
    %v5752 = vlaneseq
    %v5753 = vshrl.u32 %v5752, 7
    %v5754 = vsub.s32 %v5751, %v5753
    %v5755 = vrot.slane %v5741, %v5754
    %v5756 = vcombine.high %v5748, %v5748
    %v5757 = vcombine.high %v5755, %v5755
    %v5758 = vcombine.high %v5738, %v5738
    %v5760 = vunpack.c.l.s4 1983009808
    %v5761 = vunpack.c.0.s8 %v5760
    %v5762 = vlaneseq
    %v5763 = vshrl.u32 %v5762, 7
    %v5764 = vsub.s32 %v5761, %v5763
    %v5765 = vrot.slane %v5738, %v5764
    %v5767 = vunpack.c.l.s4 1983009808
    %v5768 = vunpack.c.0.s8 %v5767
    %v5769 = vlaneseq
    %v5770 = vshrl.u32 %v5769, 7
    %v5771 = vsub.s32 %v5768, %v5770
    %v5772 = vrot.slane %v5758, %v5771
    %v5773 = vcombine.high %v5765, %v5765
    %v5774 = vcombine.high %v5772, %v5772
    %5783 = vmatprep.subr.mxu0 0.0
    %5784 = vmatpush1.msra.mxu0 %v26
    %5785 = vmatprep.subr.mxu0 0.0
    %5786 = vmatpush1.msra.mxu0 %v27
    %5787 = vmatprep.subr.mxu0 0.0
    %5788 = vmatpush1.msra.mxu0 %v28
    %5789 = vmatprep.subr.mxu0 0.0
    %5790 = vmatpush1.msra.mxu0 %v29
    %5791 = vmatprep.subr.mxu0 0.0
    %5792 = vmatpush1.msra.mxu0 %v30
    %5793 = vmatprep.subr.mxu0 0.0
    %5794 = vmatpush1.msra.mxu0 %v31
    %5795 = vmatprep.subr.mxu0 0.0
    %5796 = vmatpush1.msra.mxu0 %v32
    %5797 = vmatprep.subr.mxu0 0.0
    %5798 = vmatpush1.msra.mxu0 %v33
    %5799 = vmatprep.subr.mxu0 0.0
    %5800 = vmatpush1.msra.mxu0 %v34
    %5801 = vmatprep.subr.mxu0 0.0
    %5802 = vmatpush1.msra.mxu0 %v35
    %5803 = vmatprep.subr.mxu0 0.0
    %5804 = vmatpush1.msra.mxu0 %v36
    %5805 = vmatprep.subr.mxu0 0.0
    %5806 = vmatpush1.msra.mxu0 %v37
    %5807 = vmatprep.subr.mxu0 0.0
    %5808 = vmatpush1.msra.mxu0 %v38
    %5809 = vmatprep.subr.mxu0 0.0
    %5810 = vmatpush1.msra.mxu0 %v39
    %5811 = vmatprep.subr.mxu0 0.0
    %5812 = vmatpush1.msra.mxu0 %v40
    %5813 = vmatprep.subr.mxu0 0.0
    %5814 = vmatpush1.msra.mxu0 %v41
    %5815 = vmatprep.subr.mxu0 0.0
    %5816 = vmatpush1.msra.mxu0 %v42
    %5817 = vmatprep.subr.mxu0 0.0
    %5818 = vmatpush1.msra.mxu0 %v43
    %5819 = vmatprep.subr.mxu0 0.0
    %5820 = vmatpush1.msra.mxu0 %v44
    %5821 = vmatprep.subr.mxu0 0.0
    %5822 = vmatpush1.msra.mxu0 %v45
    %5823 = vmatprep.subr.mxu0 0.0
    %5824 = vmatpush1.msra.mxu0 %v46
    %5825 = vmatprep.subr.mxu0 0.0
    %5826 = vmatpush1.msra.mxu0 %v47
    %5827 = vmatprep.subr.mxu0 0.0
    %5828 = vmatpush1.msra.mxu0 %v48
    %5829 = vmatprep.subr.mxu0 0.0
    %5830 = vmatpush1.msra.mxu0 %v49
    %5831 = vmatprep.subr.mxu0 0.0
    %5832 = vmatpush1.msra.mxu0 %v50
    %5833 = vmatprep.subr.mxu0 0.0
    %5834 = vmatpush1.msra.mxu0 %v51
    %5835 = vmatprep.subr.mxu0 0.0
    %5836 = vmatpush1.msra.mxu0 %v52
    %5837 = vmatprep.subr.mxu0 0.0
    %5838 = vmatpush1.msra.mxu0 %v53
    %5839 = vmatprep.subr.mxu0 0.0
    %5840 = vmatpush1.msra.mxu0 %v54
    %5841 = vmatprep.subr.mxu0 0.0
    %5842 = vmatpush1.msra.mxu0 %v55
    %5843 = vmatprep.subr.mxu0 0.0
    %5844 = vmatpush1.msra.mxu0 %v56
    %5845 = vmatprep.subr.mxu0 0.0
    %5846 = vmatpush1.msra.mxu0 %v57
    %5847 = vmatprep.mubr.f32.mxu0 %v5756
    %5848 = vmatmul.mubr.f32.gmra.mrb[0].mxu0 %v5748
    %v5849 = vpop.f32.mrb[0].mxu0
    %v5850 = vadd.f32 %v184, %v5849
    %v5851 = vpop.f32.mrb[0].mxu0
    %5852 = vdwg.mxu0
    %5853 = vmatprep.subr.mxu0 0.0
    %5854 = vmatpush1.msra.mxu0 %v58
    %5855 = vmatprep.subr.mxu0 0.0
    %5856 = vmatpush1.msra.mxu0 %v59
    %5857 = vmatprep.subr.mxu0 0.0
    %5858 = vmatpush1.msra.mxu0 %v60
    %5859 = vmatprep.subr.mxu0 0.0
    %5860 = vmatpush1.msra.mxu0 %v61
    %5861 = vmatprep.subr.mxu0 0.0
    %5862 = vmatpush1.msra.mxu0 %v62
    %5863 = vmatprep.subr.mxu0 0.0
    %5864 = vmatpush1.msra.mxu0 %v63
    %5865 = vmatprep.subr.mxu0 0.0
    %5866 = vmatpush1.msra.mxu0 %v64
    %5867 = vmatprep.subr.mxu0 0.0
    %5868 = vmatpush1.msra.mxu0 %v65
    %5869 = vmatprep.subr.mxu0 0.0
    %5870 = vmatpush1.msra.mxu0 %v66
    %5871 = vmatprep.subr.mxu0 0.0
    %5872 = vmatpush1.msra.mxu0 %v67
    %5873 = vmatprep.subr.mxu0 0.0
    %5874 = vmatpush1.msra.mxu0 %v68
    %5875 = vmatprep.subr.mxu0 0.0
    %5876 = vmatpush1.msra.mxu0 %v69
    %5877 = vmatprep.subr.mxu0 0.0
    %5878 = vmatpush1.msra.mxu0 %v70
    %5879 = vmatprep.subr.mxu0 0.0
    %5880 = vmatpush1.msra.mxu0 %v71
    %5881 = vmatprep.subr.mxu0 0.0
    %5882 = vmatpush1.msra.mxu0 %v72
    %5883 = vmatprep.subr.mxu0 0.0
    %5884 = vmatpush1.msra.mxu0 %v73
    %5885 = vmatprep.subr.mxu0 0.0
    %5886 = vmatpush1.msra.mxu0 %v74
    %5887 = vmatprep.subr.mxu0 0.0
    %5888 = vmatpush1.msra.mxu0 %v75
    %5889 = vmatprep.subr.mxu0 0.0
    %5890 = vmatpush1.msra.mxu0 %v76
    %5891 = vmatprep.subr.mxu0 0.0
    %5892 = vmatpush1.msra.mxu0 %v77
    %5893 = vmatprep.subr.mxu0 0.0
    %5894 = vmatpush1.msra.mxu0 %v78
    %5895 = vmatprep.subr.mxu0 0.0
    %5896 = vmatpush1.msra.mxu0 %v79
    %5897 = vmatprep.subr.mxu0 0.0
    %5898 = vmatpush1.msra.mxu0 %v80
    %5899 = vmatprep.subr.mxu0 0.0
    %5900 = vmatpush1.msra.mxu0 %v81
    %5901 = vmatprep.subr.mxu0 0.0
    %5902 = vmatpush1.msra.mxu0 %v82
    %5903 = vmatprep.subr.mxu0 0.0
    %5904 = vmatpush1.msra.mxu0 %v83
    %5905 = vmatprep.subr.mxu0 0.0
    %5906 = vmatpush1.msra.mxu0 %v84
    %5907 = vmatprep.subr.mxu0 0.0
    %5908 = vmatpush1.msra.mxu0 %v85
    %5909 = vmatprep.subr.mxu0 0.0
    %5910 = vmatpush1.msra.mxu0 %v86
    %5911 = vmatprep.subr.mxu0 0.0
    %5912 = vmatpush1.msra.mxu0 %v87
    %5913 = vmatprep.subr.mxu0 0.0
    %5914 = vmatpush1.msra.mxu0 %v88
    %5915 = vmatprep.subr.mxu0 0.0
    %5916 = vmatpush1.msra.mxu0 %v89
    %5917 = vmatprep.mubr.f32.mxu0 %v5757
    %5918 = vmatmul.mubr.f32.gmra.mrb[0].mxu0 %v5755
    %v5919 = vpop.f32.mrb[0].mxu0
    %v5920 = vadd.f32 %v5850, %v5919
    %v5921 = vpop.f32.mrb[0].mxu0
    %5922 = vdwg.mxu0
    %5923 = vmatprep.subr.mxu0 0.0
    %5924 = vmatpush1.msra.mxu0 %v90
    %5925 = vmatprep.subr.mxu0 0.0
    %5926 = vmatpush1.msra.mxu0 %v91
    %5927 = vmatprep.subr.mxu0 0.0
    %5928 = vmatpush1.msra.mxu0 %v92
    %5929 = vmatprep.subr.mxu0 0.0
    %5930 = vmatpush1.msra.mxu0 %v93
    %5931 = vmatprep.subr.mxu0 0.0
    %5932 = vmatpush1.msra.mxu0 %v94
    %5933 = vmatprep.subr.mxu0 0.0
    %5934 = vmatpush1.msra.mxu0 %v95
    %5935 = vmatprep.subr.mxu0 0.0
    %5936 = vmatpush1.msra.mxu0 %v96
    %5937 = vmatprep.subr.mxu0 0.0
    %5938 = vmatpush1.msra.mxu0 %v97
    %5939 = vmatprep.subr.mxu0 0.0
    %5940 = vmatpush1.msra.mxu0 %v98
    %5941 = vmatprep.subr.mxu0 0.0
    %5942 = vmatpush1.msra.mxu0 %v99
    %5943 = vmatprep.subr.mxu0 0.0
    %5944 = vmatpush1.msra.mxu0 %v100
    %5945 = vmatprep.subr.mxu0 0.0
    %5946 = vmatpush1.msra.mxu0 %v101
    %5947 = vmatprep.subr.mxu0 0.0
    %5948 = vmatpush1.msra.mxu0 %v102
    %5949 = vmatprep.subr.mxu0 0.0
    %5950 = vmatpush1.msra.mxu0 %v103
    %5951 = vmatprep.subr.mxu0 0.0
    %5952 = vmatpush1.msra.mxu0 %v104
    %5953 = vmatprep.subr.mxu0 0.0
    %5954 = vmatpush1.msra.mxu0 %v105
    %5955 = vmatprep.subr.mxu0 0.0
    %5956 = vmatpush1.msra.mxu0 %v106
    %5957 = vmatprep.subr.mxu0 0.0
    %5958 = vmatpush1.msra.mxu0 %v107
    %5959 = vmatprep.subr.mxu0 0.0
    %5960 = vmatpush1.msra.mxu0 %v108
    %5961 = vmatprep.subr.mxu0 0.0
    %5962 = vmatpush1.msra.mxu0 %v109
    %5963 = vmatprep.subr.mxu0 0.0
    %5964 = vmatpush1.msra.mxu0 %v110
    %5965 = vmatprep.subr.mxu0 0.0
    %5966 = vmatpush1.msra.mxu0 %v111
    %5967 = vmatprep.subr.mxu0 0.0
    %5968 = vmatpush1.msra.mxu0 %v112
    %5969 = vmatprep.subr.mxu0 0.0
    %5970 = vmatpush1.msra.mxu0 %v113
    %5971 = vmatprep.subr.mxu0 0.0
    %5972 = vmatpush1.msra.mxu0 %v114
    %5973 = vmatprep.subr.mxu0 0.0
    %5974 = vmatpush1.msra.mxu0 %v115
    %5975 = vmatprep.subr.mxu0 0.0
    %5976 = vmatpush1.msra.mxu0 %v116
    %5977 = vmatprep.subr.mxu0 0.0
    %5978 = vmatpush1.msra.mxu0 %v117
    %5979 = vmatprep.subr.mxu0 0.0
    %5980 = vmatpush1.msra.mxu0 %v118
    %5981 = vmatprep.subr.mxu0 0.0
    %5982 = vmatpush1.msra.mxu0 %v119
    %5983 = vmatprep.subr.mxu0 0.0
    %5984 = vmatpush1.msra.mxu0 %v120
    %5985 = vmatprep.subr.mxu0 0.0
    %5986 = vmatpush1.msra.mxu0 %v121
    %5987 = vmatprep.mubr.f32.mxu0 %v5773
    %5988 = vmatmul.mubr.f32.gmra.mrb[0].mxu0 %v5765
    %v5989 = vpop.f32.mrb[0].mxu0
    %v5990 = vadd.f32 %v5920, %v5989
    %v5991 = vpop.f32.mrb[0].mxu0
    %5992 = vdwg.mxu0
    %5993 = vmatprep.subr.mxu0 0.0
    %5994 = vmatpush1.msra.mxu0 %v122
    %5995 = vmatprep.subr.mxu0 0.0
    %5996 = vmatpush1.msra.mxu0 %v123
    %5997 = vmatprep.subr.mxu0 0.0
    %5998 = vmatpush1.msra.mxu0 %v124
    %5999 = vmatprep.subr.mxu0 0.0
    %6000 = vmatpush1.msra.mxu0 %v125
    %6001 = vmatprep.subr.mxu0 0.0
    %6002 = vmatpush1.msra.mxu0 %v126
    %6003 = vmatprep.subr.mxu0 0.0
    %6004 = vmatpush1.msra.mxu0 %v127
    %6005 = vmatprep.subr.mxu0 0.0
    %6006 = vmatpush1.msra.mxu0 %v128
    %6007 = vmatprep.subr.mxu0 0.0
    %6008 = vmatpush1.msra.mxu0 %v129
    %6009 = vmatprep.subr.mxu0 0.0
    %6010 = vmatpush1.msra.mxu0 %v130
    %6011 = vmatprep.subr.mxu0 0.0
    %6012 = vmatpush1.msra.mxu0 %v131
    %6013 = vmatprep.subr.mxu0 0.0
    %6014 = vmatpush1.msra.mxu0 %v132
    %6015 = vmatprep.subr.mxu0 0.0
    %6016 = vmatpush1.msra.mxu0 %v133
    %6017 = vmatprep.subr.mxu0 0.0
    %6018 = vmatpush1.msra.mxu0 %v134
    %6019 = vmatprep.subr.mxu0 0.0
    %6020 = vmatpush1.msra.mxu0 %v135
    %6021 = vmatprep.subr.mxu0 0.0
    %6022 = vmatpush1.msra.mxu0 %v136
    %6023 = vmatprep.subr.mxu0 0.0
    %6024 = vmatpush1.msra.mxu0 %v137
    %6025 = vmatprep.subr.mxu0 0.0
    %6026 = vmatpush1.msra.mxu0 %v138
    %6027 = vmatprep.subr.mxu0 0.0
    %6028 = vmatpush1.msra.mxu0 %v139
    %6029 = vmatprep.subr.mxu0 0.0
    %6030 = vmatpush1.msra.mxu0 %v140
    %6031 = vmatprep.subr.mxu0 0.0
    %6032 = vmatpush1.msra.mxu0 %v141
    %6033 = vmatprep.subr.mxu0 0.0
    %6034 = vmatpush1.msra.mxu0 %v142
    %6035 = vmatprep.subr.mxu0 0.0
    %6036 = vmatpush1.msra.mxu0 %v143
    %6037 = vmatprep.subr.mxu0 0.0
    %6038 = vmatpush1.msra.mxu0 %v144
    %6039 = vmatprep.subr.mxu0 0.0
    %6040 = vmatpush1.msra.mxu0 %v145
    %6041 = vmatprep.subr.mxu0 0.0
    %6042 = vmatpush1.msra.mxu0 %v146
    %6043 = vmatprep.subr.mxu0 0.0
    %6044 = vmatpush1.msra.mxu0 %v147
    %6045 = vmatprep.subr.mxu0 0.0
    %6046 = vmatpush1.msra.mxu0 %v148
    %6047 = vmatprep.subr.mxu0 0.0
    %6048 = vmatpush1.msra.mxu0 %v149
    %6049 = vmatprep.subr.mxu0 0.0
    %6050 = vmatpush1.msra.mxu0 %v150
    %6051 = vmatprep.subr.mxu0 0.0
    %6052 = vmatpush1.msra.mxu0 %v151
    %6053 = vmatprep.subr.mxu0 0.0
    %6054 = vmatpush1.msra.mxu0 %v152
    %6055 = vmatprep.subr.mxu0 0.0
    %6056 = vmatpush1.msra.mxu0 %v153
    %6057 = vmatprep.mubr.f32.mxu0 %v5774
    %6058 = vmatmul.mubr.f32.gmra.mrb[0].mxu0 %v5772
    %v6059 = vpop.f32.mrb[0].mxu0
    %v6060 = vadd.f32 %v5990, %v6059
    %v6061 = vpop.f32.mrb[0].mxu0
    %6062 = vdwg.mxu0
    %v6063 = vsel %vm524, %v6060, -inf
    %6064 = vmax.xlane.f32.xlu0 %v6063
    %v6065 = vpop.xlane.xlu0 %6064
    %v6066 = vsub.f32 %v6060, %v6065
    %v6067 = vmul.f32 %v6066, 1.442695
    %v6068 = vpow.pop %v6067
    %v6069 = vsel %vm524, %v6068, 0.0
    %6070 = vadd.xlane.f32.xlu0 %v6069
    %v6071 = vpop.xlane.xlu0 %6070
    %v6072 = vrcp.pop %v6071
    %v6073 = vmul.f32 %v6068, %v6072
    %v6074 = vsub.f32 %v6073, %v178
    %v6076 = vsel %vm537, %v6074, 0
    %6078 = vmatprep.subr.mxu0 %v155
    %6079 = vmatpush1.msra.mxu0 %v154
    %6080 = vmatprep.subr.mxu0 %v546
    %6081 = vmatpush1.msra.mxu0 %v543
    %6082 = vmatprep.subr.mxu0 0.0
    %6083 = vmatpush1.msra.mxu0 0.0
    %6084 = vmatprep.subr.mxu0 0.0
    %6085 = vmatpush1.msra.mxu0 0.0
    %6086 = vmatprep.subr.mxu0 0.0
    %6087 = vmatpush1.msra.mxu0 0.0
    %6088 = vmatprep.subr.mxu0 0.0
    %6089 = vmatpush1.msra.mxu0 0.0
    %6090 = vmatprep.subr.mxu0 0.0
    %6091 = vmatpush1.msra.mxu0 0.0
    %6092 = vmatprep.subr.mxu0 0.0
    %6093 = vmatpush1.msra.mxu0 0.0
    %6094 = vmatprep.subr.mxu0 0.0
    %6095 = vmatpush1.msra.mxu0 0.0
    %6096 = vmatprep.subr.mxu0 0.0
    %6097 = vmatpush1.msra.mxu0 0.0
    %6098 = vmatprep.subr.mxu0 0.0
    %6099 = vmatpush1.msra.mxu0 0.0
    %6100 = vmatprep.subr.mxu0 0.0
    %6101 = vmatpush1.msra.mxu0 0.0
    %6102 = vmatprep.subr.mxu0 0.0
    %6103 = vmatpush1.msra.mxu0 0.0
    %6104 = vmatprep.subr.mxu0 0.0
    %6105 = vmatpush1.msra.mxu0 0.0
    %6106 = vmatprep.subr.mxu0 0.0
    %6107 = vmatpush1.msra.mxu0 0.0
    %6108 = vmatprep.subr.mxu0 0.0
    %6109 = vmatpush1.msra.mxu0 0.0
    %6110 = vmatprep.subr.mxu0 0.0
    %6111 = vmatpush1.msra.mxu0 0.0
    %6112 = vmatprep.subr.mxu0 0.0
    %6113 = vmatpush1.msra.mxu0 0.0
    %6114 = vmatprep.subr.mxu0 0.0
    %6115 = vmatpush1.msra.mxu0 0.0
    %6116 = vmatprep.subr.mxu0 0.0
    %6117 = vmatpush1.msra.mxu0 0.0
    %6118 = vmatprep.subr.mxu0 0.0
    %6119 = vmatpush1.msra.mxu0 0.0
    %6120 = vmatprep.subr.mxu0 0.0
    %6121 = vmatpush1.msra.mxu0 0.0
    %6122 = vmatprep.subr.mxu0 0.0
    %6123 = vmatpush1.msra.mxu0 0.0
    %6124 = vmatprep.subr.mxu0 0.0
    %6125 = vmatpush1.msra.mxu0 0.0
    %6126 = vmatprep.subr.mxu0 0.0
    %6127 = vmatpush1.msra.mxu0 0.0
    %6128 = vmatprep.subr.mxu0 0.0
    %6129 = vmatpush1.msra.mxu0 0.0
    %6130 = vmatprep.subr.mxu0 0.0
    %6131 = vmatpush1.msra.mxu0 0.0
    %6132 = vmatprep.subr.mxu0 0.0
    %6133 = vmatpush1.msra.mxu0 0.0
    %6134 = vmatprep.subr.mxu0 0.0
    %6135 = vmatpush1.msra.mxu0 0.0
    %6136 = vmatprep.subr.mxu0 0.0
    %6137 = vmatpush1.msra.mxu0 0.0
    %6138 = vmatprep.subr.mxu0 0.0
    %6139 = vmatpush1.msra.mxu0 0.0
    %6140 = vmatprep.subr.mxu0 0.0
    %6141 = vmatpush1.msra.mxu0 0.0
    %6142 = vmatprep.mubr.f32.mxu0 0.0
    %6143 = vmatmul.mubr.f32.gmra.mrb[0].mxu0 %v6076
    %v6144 = vpop.f32.mrb[0].mxu0
    %v6145 = vadd.f32 0.0, %v6144
    %v6146 = vpop.f32.mrb[0].mxu0
    %v6147 = vadd.f32 0.0, %v6146
    %6148 = vdwg.mxu0
    %6149 = vmatprep.subr.mxu0 %v157
    %6150 = vmatpush1.msra.mxu0 %v156
    %6151 = vmatprep.subr.mxu0 %v552
    %6152 = vmatpush1.msra.mxu0 %v549
    %6153 = vmatprep.subr.mxu0 0.0
    %6154 = vmatpush1.msra.mxu0 0.0
    %6155 = vmatprep.subr.mxu0 0.0
    %6156 = vmatpush1.msra.mxu0 0.0
    %6157 = vmatprep.subr.mxu0 0.0
    %6158 = vmatpush1.msra.mxu0 0.0
    %6159 = vmatprep.subr.mxu0 0.0
    %6160 = vmatpush1.msra.mxu0 0.0
    %6161 = vmatprep.subr.mxu0 0.0
    %6162 = vmatpush1.msra.mxu0 0.0
    %6163 = vmatprep.subr.mxu0 0.0
    %6164 = vmatpush1.msra.mxu0 0.0
    %6165 = vmatprep.subr.mxu0 0.0
    %6166 = vmatpush1.msra.mxu0 0.0
    %6167 = vmatprep.subr.mxu0 0.0
    %6168 = vmatpush1.msra.mxu0 0.0
    %6169 = vmatprep.subr.mxu0 0.0
    %6170 = vmatpush1.msra.mxu0 0.0
    %6171 = vmatprep.subr.mxu0 0.0
    %6172 = vmatpush1.msra.mxu0 0.0
    %6173 = vmatprep.subr.mxu0 0.0
    %6174 = vmatpush1.msra.mxu0 0.0
    %6175 = vmatprep.subr.mxu0 0.0
    %6176 = vmatpush1.msra.mxu0 0.0
    %6177 = vmatprep.subr.mxu0 0.0
    %6178 = vmatpush1.msra.mxu0 0.0
    %6179 = vmatprep.subr.mxu0 0.0
    %6180 = vmatpush1.msra.mxu0 0.0
    %6181 = vmatprep.subr.mxu0 0.0
    %6182 = vmatpush1.msra.mxu0 0.0
    %6183 = vmatprep.subr.mxu0 0.0
    %6184 = vmatpush1.msra.mxu0 0.0
    %6185 = vmatprep.subr.mxu0 0.0
    %6186 = vmatpush1.msra.mxu0 0.0
    %6187 = vmatprep.subr.mxu0 0.0
    %6188 = vmatpush1.msra.mxu0 0.0
    %6189 = vmatprep.subr.mxu0 0.0
    %6190 = vmatpush1.msra.mxu0 0.0
    %6191 = vmatprep.subr.mxu0 0.0
    %6192 = vmatpush1.msra.mxu0 0.0
    %6193 = vmatprep.subr.mxu0 0.0
    %6194 = vmatpush1.msra.mxu0 0.0
    %6195 = vmatprep.subr.mxu0 0.0
    %6196 = vmatpush1.msra.mxu0 0.0
    %6197 = vmatprep.subr.mxu0 0.0
    %6198 = vmatpush1.msra.mxu0 0.0
    %6199 = vmatprep.subr.mxu0 0.0
    %6200 = vmatpush1.msra.mxu0 0.0
    %6201 = vmatprep.subr.mxu0 0.0
    %6202 = vmatpush1.msra.mxu0 0.0
    %6203 = vmatprep.subr.mxu0 0.0
    %6204 = vmatpush1.msra.mxu0 0.0
    %6205 = vmatprep.subr.mxu0 0.0
    %6206 = vmatpush1.msra.mxu0 0.0
    %6207 = vmatprep.subr.mxu0 0.0
    %6208 = vmatpush1.msra.mxu0 0.0
    %6209 = vmatprep.subr.mxu0 0.0
    %6210 = vmatpush1.msra.mxu0 0.0
    %6211 = vmatprep.subr.mxu0 0.0
    %6212 = vmatpush1.msra.mxu0 0.0
    %6213 = vmatprep.mubr.f32.mxu0 0.0
    %6214 = vmatmul.mubr.f32.gmra.mrb[0].mxu0 %v6076
    %v6215 = vpop.f32.mrb[0].mxu0
    %v6216 = vadd.f32 0.0, %v6215
    %v6217 = vpop.f32.mrb[0].mxu0
    %v6218 = vadd.f32 0.0, %v6217
    %6219 = vdwg.mxu0
    %6220 = vmatprep.subr.mxu0 %v159
    %6221 = vmatpush1.msra.mxu0 %v158
    %6222 = vmatprep.subr.mxu0 %v558
    %6223 = vmatpush1.msra.mxu0 %v555
    %6224 = vmatprep.subr.mxu0 0.0
    %6225 = vmatpush1.msra.mxu0 0.0
    %6226 = vmatprep.subr.mxu0 0.0
    %6227 = vmatpush1.msra.mxu0 0.0
    %6228 = vmatprep.subr.mxu0 0.0
    %6229 = vmatpush1.msra.mxu0 0.0
    %6230 = vmatprep.subr.mxu0 0.0
    %6231 = vmatpush1.msra.mxu0 0.0
    %6232 = vmatprep.subr.mxu0 0.0
    %6233 = vmatpush1.msra.mxu0 0.0
    %6234 = vmatprep.subr.mxu0 0.0
    %6235 = vmatpush1.msra.mxu0 0.0
    %6236 = vmatprep.subr.mxu0 0.0
    %6237 = vmatpush1.msra.mxu0 0.0
    %6238 = vmatprep.subr.mxu0 0.0
    %6239 = vmatpush1.msra.mxu0 0.0
    %6240 = vmatprep.subr.mxu0 0.0
    %6241 = vmatpush1.msra.mxu0 0.0
    %6242 = vmatprep.subr.mxu0 0.0
    %6243 = vmatpush1.msra.mxu0 0.0
    %6244 = vmatprep.subr.mxu0 0.0
    %6245 = vmatpush1.msra.mxu0 0.0
    %6246 = vmatprep.subr.mxu0 0.0
    %6247 = vmatpush1.msra.mxu0 0.0
    %6248 = vmatprep.subr.mxu0 0.0
    %6249 = vmatpush1.msra.mxu0 0.0
    %6250 = vmatprep.subr.mxu0 0.0
    %6251 = vmatpush1.msra.mxu0 0.0
    %6252 = vmatprep.subr.mxu0 0.0
    %6253 = vmatpush1.msra.mxu0 0.0
    %6254 = vmatprep.subr.mxu0 0.0
    %6255 = vmatpush1.msra.mxu0 0.0
    %6256 = vmatprep.subr.mxu0 0.0
    %6257 = vmatpush1.msra.mxu0 0.0
    %6258 = vmatprep.subr.mxu0 0.0
    %6259 = vmatpush1.msra.mxu0 0.0
    %6260 = vmatprep.subr.mxu0 0.0
    %6261 = vmatpush1.msra.mxu0 0.0
    %6262 = vmatprep.subr.mxu0 0.0
    %6263 = vmatpush1.msra.mxu0 0.0
    %6264 = vmatprep.subr.mxu0 0.0
    %6265 = vmatpush1.msra.mxu0 0.0
    %6266 = vmatprep.subr.mxu0 0.0
    %6267 = vmatpush1.msra.mxu0 0.0
    %6268 = vmatprep.subr.mxu0 0.0
    %6269 = vmatpush1.msra.mxu0 0.0
    %6270 = vmatprep.subr.mxu0 0.0
    %6271 = vmatpush1.msra.mxu0 0.0
    %6272 = vmatprep.subr.mxu0 0.0
    %6273 = vmatpush1.msra.mxu0 0.0
    %6274 = vmatprep.subr.mxu0 0.0
    %6275 = vmatpush1.msra.mxu0 0.0
    %6276 = vmatprep.subr.mxu0 0.0
    %6277 = vmatpush1.msra.mxu0 0.0
    %6278 = vmatprep.subr.mxu0 0.0
    %6279 = vmatpush1.msra.mxu0 0.0
    %6280 = vmatprep.subr.mxu0 0.0
    %6281 = vmatpush1.msra.mxu0 0.0
    %6282 = vmatprep.subr.mxu0 0.0
    %6283 = vmatpush1.msra.mxu0 0.0
    %6284 = vmatprep.mubr.f32.mxu0 0.0
    %6285 = vmatmul.mubr.f32.gmra.mrb[0].mxu0 %v6076
    %v6286 = vpop.f32.mrb[0].mxu0
    %v6287 = vadd.f32 0.0, %v6286
    %v6288 = vpop.f32.mrb[0].mxu0
    %v6289 = vadd.f32 0.0, %v6288
    %6290 = vdwg.mxu0
    %6291 = vmatprep.subr.mxu0 %v161
    %6292 = vmatpush1.msra.mxu0 %v160
    %6293 = vmatprep.subr.mxu0 %v564
    %6294 = vmatpush1.msra.mxu0 %v561
    %6295 = vmatprep.subr.mxu0 0.0
    %6296 = vmatpush1.msra.mxu0 0.0
    %6297 = vmatprep.subr.mxu0 0.0
    %6298 = vmatpush1.msra.mxu0 0.0
    %6299 = vmatprep.subr.mxu0 0.0
    %6300 = vmatpush1.msra.mxu0 0.0
    %6301 = vmatprep.subr.mxu0 0.0
    %6302 = vmatpush1.msra.mxu0 0.0
    %6303 = vmatprep.subr.mxu0 0.0
    %6304 = vmatpush1.msra.mxu0 0.0
    %6305 = vmatprep.subr.mxu0 0.0
    %6306 = vmatpush1.msra.mxu0 0.0
    %6307 = vmatprep.subr.mxu0 0.0
    %6308 = vmatpush1.msra.mxu0 0.0
    %6309 = vmatprep.subr.mxu0 0.0
    %6310 = vmatpush1.msra.mxu0 0.0
    %6311 = vmatprep.subr.mxu0 0.0
    %6312 = vmatpush1.msra.mxu0 0.0
    %6313 = vmatprep.subr.mxu0 0.0
    %6314 = vmatpush1.msra.mxu0 0.0
    %6315 = vmatprep.subr.mxu0 0.0
    %6316 = vmatpush1.msra.mxu0 0.0
    %6317 = vmatprep.subr.mxu0 0.0
    %6318 = vmatpush1.msra.mxu0 0.0
    %6319 = vmatprep.subr.mxu0 0.0
    %6320 = vmatpush1.msra.mxu0 0.0
    %6321 = vmatprep.subr.mxu0 0.0
    %6322 = vmatpush1.msra.mxu0 0.0
    %6323 = vmatprep.subr.mxu0 0.0
    %6324 = vmatpush1.msra.mxu0 0.0
    %6325 = vmatprep.subr.mxu0 0.0
    %6326 = vmatpush1.msra.mxu0 0.0
    %6327 = vmatprep.subr.mxu0 0.0
    %6328 = vmatpush1.msra.mxu0 0.0
    %6329 = vmatprep.subr.mxu0 0.0
    %6330 = vmatpush1.msra.mxu0 0.0
    %6331 = vmatprep.subr.mxu0 0.0
    %6332 = vmatpush1.msra.mxu0 0.0
    %6333 = vmatprep.subr.mxu0 0.0
    %6334 = vmatpush1.msra.mxu0 0.0
    %6335 = vmatprep.subr.mxu0 0.0
    %6336 = vmatpush1.msra.mxu0 0.0
    %6337 = vmatprep.subr.mxu0 0.0
    %6338 = vmatpush1.msra.mxu0 0.0
    %6339 = vmatprep.subr.mxu0 0.0
    %6340 = vmatpush1.msra.mxu0 0.0
    %6341 = vmatprep.subr.mxu0 0.0
    %6342 = vmatpush1.msra.mxu0 0.0
    %6343 = vmatprep.subr.mxu0 0.0
    %6344 = vmatpush1.msra.mxu0 0.0
    %6345 = vmatprep.subr.mxu0 0.0
    %6346 = vmatpush1.msra.mxu0 0.0
    %6347 = vmatprep.subr.mxu0 0.0
    %6348 = vmatpush1.msra.mxu0 0.0
    %6349 = vmatprep.subr.mxu0 0.0
    %6350 = vmatpush1.msra.mxu0 0.0
    %6351 = vmatprep.subr.mxu0 0.0
    %6352 = vmatpush1.msra.mxu0 0.0
    %6353 = vmatprep.subr.mxu0 0.0
    %6354 = vmatpush1.msra.mxu0 0.0
    %6355 = vmatprep.mubr.f32.mxu0 0.0
    %6356 = vmatmul.mubr.f32.gmra.mrb[0].mxu0 %v6076
    %v6357 = vpop.f32.mrb[0].mxu0
    %v6358 = vadd.f32 0.0, %v6357
    %v6359 = vpop.f32.mrb[0].mxu0
    %v6360 = vadd.f32 0.0, %v6359
    %6361 = vdwg.mxu0
    %vm6362 = vcmp.ge.f32.partialorder %v6145, 0.0
    %vm6363 = vcmp.ge.f32.partialorder %v6147, 0.0
    %vm6364 = vcmp.ge.f32.partialorder %v6216, 0.0
    %vm6365 = vcmp.ge.f32.partialorder %v6218, 0.0
    %vm6366 = vcmp.ge.f32.partialorder %v6287, 0.0
    %vm6367 = vcmp.ge.f32.partialorder %v6289, 0.0
    %vm6368 = vcmp.ge.f32.partialorder %v6358, 0.0
    %vm6369 = vcmp.ge.f32.partialorder %v6360, 0.0
    %v6370 = vsel %vm6362, 0.007, -0.007
    %v6371 = vsel %vm6363, 0.007, -0.007
    %v6372 = vsel %vm6364, 0.007, -0.007
    %v6373 = vsel %vm6365, 0.007, -0.007
    %v6374 = vsel %vm6366, 0.007, -0.007
    %v6375 = vsel %vm6367, 0.007, -0.007
    %v6376 = vsel %vm6368, 0.007, -0.007
    %v6377 = vsel %vm6369, 0.007, -0.007
    %v6386 = vcombine.low %v6370, %v6371
    %v6387 = vcombine.low %v6372, %v6373
    %v6389 = vunpack.c.l.s4 1983009808
    %v6390 = vunpack.c.0.s8 %v6389
    %v6391 = vlaneseq
    %v6392 = vshrl.u32 %v6391, 7
    %v6393 = vsub.s32 %v6390, %v6392
    %v6394 = vrot.slane %v6386, %v6393
    %v6396 = vunpack.c.l.s4 1983009808
    %v6397 = vunpack.c.0.s8 %v6396
    %v6398 = vlaneseq
    %v6399 = vshrl.u32 %v6398, 7
    %v6400 = vsub.s32 %v6397, %v6399
    %v6401 = vrot.slane %v6387, %v6400
    %v6402 = vcombine.low %v6394, %v6401
    %v6403 = vcombine.low %v6374, %v6375
    %v6404 = vcombine.low %v6376, %v6377
    %v6406 = vunpack.c.l.s4 1983009808
    %v6407 = vunpack.c.0.s8 %v6406
    %v6408 = vlaneseq
    %v6409 = vshrl.u32 %v6408, 7
    %v6410 = vsub.s32 %v6407, %v6409
    %v6411 = vrot.slane %v6403, %v6410
    %v6413 = vunpack.c.l.s4 1983009808
    %v6414 = vunpack.c.0.s8 %v6413
    %v6415 = vlaneseq
    %v6416 = vshrl.u32 %v6415, 7
    %v6417 = vsub.s32 %v6414, %v6416
    %v6418 = vrot.slane %v6404, %v6417
    %v6419 = vcombine.low %v6411, %v6418
    %v6422 = vadd.f32 %v5737, %v6402
    %v6423 = vadd.f32 %v5738, %v6419
    %v6424 = vmax.f32 %v6422, %v188
    %v6425 = vmax.f32 %v6423, %v189
    %v6426 = vmin.f32 %v6424, %v192
    %v6427 = vmin.f32 %v6425, %v193
    %v6430 = vcombine.high %v6426, %v6426
    %v6432 = vunpack.c.l.s4 1983009808
    %v6433 = vunpack.c.0.s8 %v6432
    %v6434 = vlaneseq
    %v6435 = vshrl.u32 %v6434, 7
    %v6436 = vsub.s32 %v6433, %v6435
    %v6437 = vrot.slane %v6426, %v6436
    %v6439 = vunpack.c.l.s4 1983009808
    %v6440 = vunpack.c.0.s8 %v6439
    %v6441 = vlaneseq
    %v6442 = vshrl.u32 %v6441, 7
    %v6443 = vsub.s32 %v6440, %v6442
    %v6444 = vrot.slane %v6430, %v6443
    %v6445 = vcombine.high %v6437, %v6437
    %v6446 = vcombine.high %v6444, %v6444
    %v6447 = vcombine.high %v6427, %v6427
    %v6449 = vunpack.c.l.s4 1983009808
    %v6450 = vunpack.c.0.s8 %v6449
    %v6451 = vlaneseq
    %v6452 = vshrl.u32 %v6451, 7
    %v6453 = vsub.s32 %v6450, %v6452
    %v6454 = vrot.slane %v6427, %v6453
    %v6456 = vunpack.c.l.s4 1983009808
    %v6457 = vunpack.c.0.s8 %v6456
    %v6458 = vlaneseq
    %v6459 = vshrl.u32 %v6458, 7
    %v6460 = vsub.s32 %v6457, %v6459
    %v6461 = vrot.slane %v6447, %v6460
    %v6462 = vcombine.high %v6454, %v6454
    %v6463 = vcombine.high %v6461, %v6461
    %6472 = vmatprep.subr.mxu0 0.0
    %6473 = vmatpush1.msra.mxu0 %v26
    %6474 = vmatprep.subr.mxu0 0.0
    %6475 = vmatpush1.msra.mxu0 %v27
    %6476 = vmatprep.subr.mxu0 0.0
    %6477 = vmatpush1.msra.mxu0 %v28
    %6478 = vmatprep.subr.mxu0 0.0
    %6479 = vmatpush1.msra.mxu0 %v29
    %6480 = vmatprep.subr.mxu0 0.0
    %6481 = vmatpush1.msra.mxu0 %v30
    %6482 = vmatprep.subr.mxu0 0.0
    %6483 = vmatpush1.msra.mxu0 %v31
    %6484 = vmatprep.subr.mxu0 0.0
    %6485 = vmatpush1.msra.mxu0 %v32
    %6486 = vmatprep.subr.mxu0 0.0
    %6487 = vmatpush1.msra.mxu0 %v33
    %6488 = vmatprep.subr.mxu0 0.0
    %6489 = vmatpush1.msra.mxu0 %v34
    %6490 = vmatprep.subr.mxu0 0.0
    %6491 = vmatpush1.msra.mxu0 %v35
    %6492 = vmatprep.subr.mxu0 0.0
    %6493 = vmatpush1.msra.mxu0 %v36
    %6494 = vmatprep.subr.mxu0 0.0
    %6495 = vmatpush1.msra.mxu0 %v37
    %6496 = vmatprep.subr.mxu0 0.0
    %6497 = vmatpush1.msra.mxu0 %v38
    %6498 = vmatprep.subr.mxu0 0.0
    %6499 = vmatpush1.msra.mxu0 %v39
    %6500 = vmatprep.subr.mxu0 0.0
    %6501 = vmatpush1.msra.mxu0 %v40
    %6502 = vmatprep.subr.mxu0 0.0
    %6503 = vmatpush1.msra.mxu0 %v41
    %6504 = vmatprep.subr.mxu0 0.0
    %6505 = vmatpush1.msra.mxu0 %v42
    %6506 = vmatprep.subr.mxu0 0.0
    %6507 = vmatpush1.msra.mxu0 %v43
    %6508 = vmatprep.subr.mxu0 0.0
    %6509 = vmatpush1.msra.mxu0 %v44
    %6510 = vmatprep.subr.mxu0 0.0
    %6511 = vmatpush1.msra.mxu0 %v45
    %6512 = vmatprep.subr.mxu0 0.0
    %6513 = vmatpush1.msra.mxu0 %v46
    %6514 = vmatprep.subr.mxu0 0.0
    %6515 = vmatpush1.msra.mxu0 %v47
    %6516 = vmatprep.subr.mxu0 0.0
    %6517 = vmatpush1.msra.mxu0 %v48
    %6518 = vmatprep.subr.mxu0 0.0
    %6519 = vmatpush1.msra.mxu0 %v49
    %6520 = vmatprep.subr.mxu0 0.0
    %6521 = vmatpush1.msra.mxu0 %v50
    %6522 = vmatprep.subr.mxu0 0.0
    %6523 = vmatpush1.msra.mxu0 %v51
    %6524 = vmatprep.subr.mxu0 0.0
    %6525 = vmatpush1.msra.mxu0 %v52
    %6526 = vmatprep.subr.mxu0 0.0
    %6527 = vmatpush1.msra.mxu0 %v53
    %6528 = vmatprep.subr.mxu0 0.0
    %6529 = vmatpush1.msra.mxu0 %v54
    %6530 = vmatprep.subr.mxu0 0.0
    %6531 = vmatpush1.msra.mxu0 %v55
    %6532 = vmatprep.subr.mxu0 0.0
    %6533 = vmatpush1.msra.mxu0 %v56
    %6534 = vmatprep.subr.mxu0 0.0
    %6535 = vmatpush1.msra.mxu0 %v57
    %6536 = vmatprep.mubr.f32.mxu0 %v6445
    %6537 = vmatmul.mubr.f32.gmra.mrb[0].mxu0 %v6437
    %v6538 = vpop.f32.mrb[0].mxu0
    %v6539 = vadd.f32 %v184, %v6538
    %v6540 = vpop.f32.mrb[0].mxu0
    %6541 = vdwg.mxu0
    %6542 = vmatprep.subr.mxu0 0.0
    %6543 = vmatpush1.msra.mxu0 %v58
    %6544 = vmatprep.subr.mxu0 0.0
    %6545 = vmatpush1.msra.mxu0 %v59
    %6546 = vmatprep.subr.mxu0 0.0
    %6547 = vmatpush1.msra.mxu0 %v60
    %6548 = vmatprep.subr.mxu0 0.0
    %6549 = vmatpush1.msra.mxu0 %v61
    %6550 = vmatprep.subr.mxu0 0.0
    %6551 = vmatpush1.msra.mxu0 %v62
    %6552 = vmatprep.subr.mxu0 0.0
    %6553 = vmatpush1.msra.mxu0 %v63
    %6554 = vmatprep.subr.mxu0 0.0
    %6555 = vmatpush1.msra.mxu0 %v64
    %6556 = vmatprep.subr.mxu0 0.0
    %6557 = vmatpush1.msra.mxu0 %v65
    %6558 = vmatprep.subr.mxu0 0.0
    %6559 = vmatpush1.msra.mxu0 %v66
    %6560 = vmatprep.subr.mxu0 0.0
    %6561 = vmatpush1.msra.mxu0 %v67
    %6562 = vmatprep.subr.mxu0 0.0
    %6563 = vmatpush1.msra.mxu0 %v68
    %6564 = vmatprep.subr.mxu0 0.0
    %6565 = vmatpush1.msra.mxu0 %v69
    %6566 = vmatprep.subr.mxu0 0.0
    %6567 = vmatpush1.msra.mxu0 %v70
    %6568 = vmatprep.subr.mxu0 0.0
    %6569 = vmatpush1.msra.mxu0 %v71
    %6570 = vmatprep.subr.mxu0 0.0
    %6571 = vmatpush1.msra.mxu0 %v72
    %6572 = vmatprep.subr.mxu0 0.0
    %6573 = vmatpush1.msra.mxu0 %v73
    %6574 = vmatprep.subr.mxu0 0.0
    %6575 = vmatpush1.msra.mxu0 %v74
    %6576 = vmatprep.subr.mxu0 0.0
    %6577 = vmatpush1.msra.mxu0 %v75
    %6578 = vmatprep.subr.mxu0 0.0
    %6579 = vmatpush1.msra.mxu0 %v76
    %6580 = vmatprep.subr.mxu0 0.0
    %6581 = vmatpush1.msra.mxu0 %v77
    %6582 = vmatprep.subr.mxu0 0.0
    %6583 = vmatpush1.msra.mxu0 %v78
    %6584 = vmatprep.subr.mxu0 0.0
    %6585 = vmatpush1.msra.mxu0 %v79
    %6586 = vmatprep.subr.mxu0 0.0
    %6587 = vmatpush1.msra.mxu0 %v80
    %6588 = vmatprep.subr.mxu0 0.0
    %6589 = vmatpush1.msra.mxu0 %v81
    %6590 = vmatprep.subr.mxu0 0.0
    %6591 = vmatpush1.msra.mxu0 %v82
    %6592 = vmatprep.subr.mxu0 0.0
    %6593 = vmatpush1.msra.mxu0 %v83
    %6594 = vmatprep.subr.mxu0 0.0
    %6595 = vmatpush1.msra.mxu0 %v84
    %6596 = vmatprep.subr.mxu0 0.0
    %6597 = vmatpush1.msra.mxu0 %v85
    %6598 = vmatprep.subr.mxu0 0.0
    %6599 = vmatpush1.msra.mxu0 %v86
    %6600 = vmatprep.subr.mxu0 0.0
    %6601 = vmatpush1.msra.mxu0 %v87
    %6602 = vmatprep.subr.mxu0 0.0
    %6603 = vmatpush1.msra.mxu0 %v88
    %6604 = vmatprep.subr.mxu0 0.0
    %6605 = vmatpush1.msra.mxu0 %v89
    %6606 = vmatprep.mubr.f32.mxu0 %v6446
    %6607 = vmatmul.mubr.f32.gmra.mrb[0].mxu0 %v6444
    %v6608 = vpop.f32.mrb[0].mxu0
    %v6609 = vadd.f32 %v6539, %v6608
    %v6610 = vpop.f32.mrb[0].mxu0
    %6611 = vdwg.mxu0
    %6612 = vmatprep.subr.mxu0 0.0
    %6613 = vmatpush1.msra.mxu0 %v90
    %6614 = vmatprep.subr.mxu0 0.0
    %6615 = vmatpush1.msra.mxu0 %v91
    %6616 = vmatprep.subr.mxu0 0.0
    %6617 = vmatpush1.msra.mxu0 %v92
    %6618 = vmatprep.subr.mxu0 0.0
    %6619 = vmatpush1.msra.mxu0 %v93
    %6620 = vmatprep.subr.mxu0 0.0
    %6621 = vmatpush1.msra.mxu0 %v94
    %6622 = vmatprep.subr.mxu0 0.0
    %6623 = vmatpush1.msra.mxu0 %v95
    %6624 = vmatprep.subr.mxu0 0.0
    %6625 = vmatpush1.msra.mxu0 %v96
    %6626 = vmatprep.subr.mxu0 0.0
    %6627 = vmatpush1.msra.mxu0 %v97
    %6628 = vmatprep.subr.mxu0 0.0
    %6629 = vmatpush1.msra.mxu0 %v98
    %6630 = vmatprep.subr.mxu0 0.0
    %6631 = vmatpush1.msra.mxu0 %v99
    %6632 = vmatprep.subr.mxu0 0.0
    %6633 = vmatpush1.msra.mxu0 %v100
    %6634 = vmatprep.subr.mxu0 0.0
    %6635 = vmatpush1.msra.mxu0 %v101
    %6636 = vmatprep.subr.mxu0 0.0
    %6637 = vmatpush1.msra.mxu0 %v102
    %6638 = vmatprep.subr.mxu0 0.0
    %6639 = vmatpush1.msra.mxu0 %v103
    %6640 = vmatprep.subr.mxu0 0.0
    %6641 = vmatpush1.msra.mxu0 %v104
    %6642 = vmatprep.subr.mxu0 0.0
    %6643 = vmatpush1.msra.mxu0 %v105
    %6644 = vmatprep.subr.mxu0 0.0
    %6645 = vmatpush1.msra.mxu0 %v106
    %6646 = vmatprep.subr.mxu0 0.0
    %6647 = vmatpush1.msra.mxu0 %v107
    %6648 = vmatprep.subr.mxu0 0.0
    %6649 = vmatpush1.msra.mxu0 %v108
    %6650 = vmatprep.subr.mxu0 0.0
    %6651 = vmatpush1.msra.mxu0 %v109
    %6652 = vmatprep.subr.mxu0 0.0
    %6653 = vmatpush1.msra.mxu0 %v110
    %6654 = vmatprep.subr.mxu0 0.0
    %6655 = vmatpush1.msra.mxu0 %v111
    %6656 = vmatprep.subr.mxu0 0.0
    %6657 = vmatpush1.msra.mxu0 %v112
    %6658 = vmatprep.subr.mxu0 0.0
    %6659 = vmatpush1.msra.mxu0 %v113
    %6660 = vmatprep.subr.mxu0 0.0
    %6661 = vmatpush1.msra.mxu0 %v114
    %6662 = vmatprep.subr.mxu0 0.0
    %6663 = vmatpush1.msra.mxu0 %v115
    %6664 = vmatprep.subr.mxu0 0.0
    %6665 = vmatpush1.msra.mxu0 %v116
    %6666 = vmatprep.subr.mxu0 0.0
    %6667 = vmatpush1.msra.mxu0 %v117
    %6668 = vmatprep.subr.mxu0 0.0
    %6669 = vmatpush1.msra.mxu0 %v118
    %6670 = vmatprep.subr.mxu0 0.0
    %6671 = vmatpush1.msra.mxu0 %v119
    %6672 = vmatprep.subr.mxu0 0.0
    %6673 = vmatpush1.msra.mxu0 %v120
    %6674 = vmatprep.subr.mxu0 0.0
    %6675 = vmatpush1.msra.mxu0 %v121
    %6676 = vmatprep.mubr.f32.mxu0 %v6462
    %6677 = vmatmul.mubr.f32.gmra.mrb[0].mxu0 %v6454
    %v6678 = vpop.f32.mrb[0].mxu0
    %v6679 = vadd.f32 %v6609, %v6678
    %v6680 = vpop.f32.mrb[0].mxu0
    %6681 = vdwg.mxu0
    %6682 = vmatprep.subr.mxu0 0.0
    %6683 = vmatpush1.msra.mxu0 %v122
    %6684 = vmatprep.subr.mxu0 0.0
    %6685 = vmatpush1.msra.mxu0 %v123
    %6686 = vmatprep.subr.mxu0 0.0
    %6687 = vmatpush1.msra.mxu0 %v124
    %6688 = vmatprep.subr.mxu0 0.0
    %6689 = vmatpush1.msra.mxu0 %v125
    %6690 = vmatprep.subr.mxu0 0.0
    %6691 = vmatpush1.msra.mxu0 %v126
    %6692 = vmatprep.subr.mxu0 0.0
    %6693 = vmatpush1.msra.mxu0 %v127
    %6694 = vmatprep.subr.mxu0 0.0
    %6695 = vmatpush1.msra.mxu0 %v128
    %6696 = vmatprep.subr.mxu0 0.0
    %6697 = vmatpush1.msra.mxu0 %v129
    %6698 = vmatprep.subr.mxu0 0.0
    %6699 = vmatpush1.msra.mxu0 %v130
    %6700 = vmatprep.subr.mxu0 0.0
    %6701 = vmatpush1.msra.mxu0 %v131
    %6702 = vmatprep.subr.mxu0 0.0
    %6703 = vmatpush1.msra.mxu0 %v132
    %6704 = vmatprep.subr.mxu0 0.0
    %6705 = vmatpush1.msra.mxu0 %v133
    %6706 = vmatprep.subr.mxu0 0.0
    %6707 = vmatpush1.msra.mxu0 %v134
    %6708 = vmatprep.subr.mxu0 0.0
    %6709 = vmatpush1.msra.mxu0 %v135
    %6710 = vmatprep.subr.mxu0 0.0
    %6711 = vmatpush1.msra.mxu0 %v136
    %6712 = vmatprep.subr.mxu0 0.0
    %6713 = vmatpush1.msra.mxu0 %v137
    %6714 = vmatprep.subr.mxu0 0.0
    %6715 = vmatpush1.msra.mxu0 %v138
    %6716 = vmatprep.subr.mxu0 0.0
    %6717 = vmatpush1.msra.mxu0 %v139
    %6718 = vmatprep.subr.mxu0 0.0
    %6719 = vmatpush1.msra.mxu0 %v140
    %6720 = vmatprep.subr.mxu0 0.0
    %6721 = vmatpush1.msra.mxu0 %v141
    %6722 = vmatprep.subr.mxu0 0.0
    %6723 = vmatpush1.msra.mxu0 %v142
    %6724 = vmatprep.subr.mxu0 0.0
    %6725 = vmatpush1.msra.mxu0 %v143
    %6726 = vmatprep.subr.mxu0 0.0
    %6727 = vmatpush1.msra.mxu0 %v144
    %6728 = vmatprep.subr.mxu0 0.0
    %6729 = vmatpush1.msra.mxu0 %v145
    %6730 = vmatprep.subr.mxu0 0.0
    %6731 = vmatpush1.msra.mxu0 %v146
    %6732 = vmatprep.subr.mxu0 0.0
    %6733 = vmatpush1.msra.mxu0 %v147
    %6734 = vmatprep.subr.mxu0 0.0
    %6735 = vmatpush1.msra.mxu0 %v148
    %6736 = vmatprep.subr.mxu0 0.0
    %6737 = vmatpush1.msra.mxu0 %v149
    %6738 = vmatprep.subr.mxu0 0.0
    %6739 = vmatpush1.msra.mxu0 %v150
    %6740 = vmatprep.subr.mxu0 0.0
    %6741 = vmatpush1.msra.mxu0 %v151
    %6742 = vmatprep.subr.mxu0 0.0
    %6743 = vmatpush1.msra.mxu0 %v152
    %6744 = vmatprep.subr.mxu0 0.0
    %6745 = vmatpush1.msra.mxu0 %v153
    %6746 = vmatprep.mubr.f32.mxu0 %v6463
    %6747 = vmatmul.mubr.f32.gmra.mrb[0].mxu0 %v6461
    %v6748 = vpop.f32.mrb[0].mxu0
    %v6749 = vadd.f32 %v6679, %v6748
    %v6750 = vpop.f32.mrb[0].mxu0
    %6751 = vdwg.mxu0
    %v6752 = vsel %vm524, %v6749, -inf
    %6753 = vmax.xlane.f32.xlu0 %v6752
    %v6754 = vpop.xlane.xlu0 %6753
    %v6755 = vsub.f32 %v6749, %v6754
    %v6756 = vmul.f32 %v6755, 1.442695
    %v6757 = vpow.pop %v6756
    %v6758 = vsel %vm524, %v6757, 0.0
    %6759 = vadd.xlane.f32.xlu0 %v6758
    %v6760 = vpop.xlane.xlu0 %6759
    %v6761 = vrcp.pop %v6760
    %v6762 = vmul.f32 %v6757, %v6761
    %v6763 = vsub.f32 %v6762, %v178
    %v6765 = vsel %vm537, %v6763, 0
    %6767 = vmatprep.subr.mxu0 %v155
    %6768 = vmatpush1.msra.mxu0 %v154
    %6769 = vmatprep.subr.mxu0 %v546
    %6770 = vmatpush1.msra.mxu0 %v543
    %6771 = vmatprep.subr.mxu0 0.0
    %6772 = vmatpush1.msra.mxu0 0.0
    %6773 = vmatprep.subr.mxu0 0.0
    %6774 = vmatpush1.msra.mxu0 0.0
    %6775 = vmatprep.subr.mxu0 0.0
    %6776 = vmatpush1.msra.mxu0 0.0
    %6777 = vmatprep.subr.mxu0 0.0
    %6778 = vmatpush1.msra.mxu0 0.0
    %6779 = vmatprep.subr.mxu0 0.0
    %6780 = vmatpush1.msra.mxu0 0.0
    %6781 = vmatprep.subr.mxu0 0.0
    %6782 = vmatpush1.msra.mxu0 0.0
    %6783 = vmatprep.subr.mxu0 0.0
    %6784 = vmatpush1.msra.mxu0 0.0
    %6785 = vmatprep.subr.mxu0 0.0
    %6786 = vmatpush1.msra.mxu0 0.0
    %6787 = vmatprep.subr.mxu0 0.0
    %6788 = vmatpush1.msra.mxu0 0.0
    %6789 = vmatprep.subr.mxu0 0.0
    %6790 = vmatpush1.msra.mxu0 0.0
    %6791 = vmatprep.subr.mxu0 0.0
    %6792 = vmatpush1.msra.mxu0 0.0
    %6793 = vmatprep.subr.mxu0 0.0
    %6794 = vmatpush1.msra.mxu0 0.0
    %6795 = vmatprep.subr.mxu0 0.0
    %6796 = vmatpush1.msra.mxu0 0.0
    %6797 = vmatprep.subr.mxu0 0.0
    %6798 = vmatpush1.msra.mxu0 0.0
    %6799 = vmatprep.subr.mxu0 0.0
    %6800 = vmatpush1.msra.mxu0 0.0
    %6801 = vmatprep.subr.mxu0 0.0
    %6802 = vmatpush1.msra.mxu0 0.0
    %6803 = vmatprep.subr.mxu0 0.0
    %6804 = vmatpush1.msra.mxu0 0.0
    %6805 = vmatprep.subr.mxu0 0.0
    %6806 = vmatpush1.msra.mxu0 0.0
    %6807 = vmatprep.subr.mxu0 0.0
    %6808 = vmatpush1.msra.mxu0 0.0
    %6809 = vmatprep.subr.mxu0 0.0
    %6810 = vmatpush1.msra.mxu0 0.0
    %6811 = vmatprep.subr.mxu0 0.0
    %6812 = vmatpush1.msra.mxu0 0.0
    %6813 = vmatprep.subr.mxu0 0.0
    %6814 = vmatpush1.msra.mxu0 0.0
    %6815 = vmatprep.subr.mxu0 0.0
    %6816 = vmatpush1.msra.mxu0 0.0
    %6817 = vmatprep.subr.mxu0 0.0
    %6818 = vmatpush1.msra.mxu0 0.0
    %6819 = vmatprep.subr.mxu0 0.0
    %6820 = vmatpush1.msra.mxu0 0.0
    %6821 = vmatprep.subr.mxu0 0.0
    %6822 = vmatpush1.msra.mxu0 0.0
    %6823 = vmatprep.subr.mxu0 0.0
    %6824 = vmatpush1.msra.mxu0 0.0
    %6825 = vmatprep.subr.mxu0 0.0
    %6826 = vmatpush1.msra.mxu0 0.0
    %6827 = vmatprep.subr.mxu0 0.0
    %6828 = vmatpush1.msra.mxu0 0.0
    %6829 = vmatprep.subr.mxu0 0.0
    %6830 = vmatpush1.msra.mxu0 0.0
    %6831 = vmatprep.mubr.f32.mxu0 0.0
    %6832 = vmatmul.mubr.f32.gmra.mrb[0].mxu0 %v6765
    %v6833 = vpop.f32.mrb[0].mxu0
    %v6834 = vadd.f32 0.0, %v6833
    %v6835 = vpop.f32.mrb[0].mxu0
    %v6836 = vadd.f32 0.0, %v6835
    %6837 = vdwg.mxu0
    %6838 = vmatprep.subr.mxu0 %v157
    %6839 = vmatpush1.msra.mxu0 %v156
    %6840 = vmatprep.subr.mxu0 %v552
    %6841 = vmatpush1.msra.mxu0 %v549
    %6842 = vmatprep.subr.mxu0 0.0
    %6843 = vmatpush1.msra.mxu0 0.0
    %6844 = vmatprep.subr.mxu0 0.0
    %6845 = vmatpush1.msra.mxu0 0.0
    %6846 = vmatprep.subr.mxu0 0.0
    %6847 = vmatpush1.msra.mxu0 0.0
    %6848 = vmatprep.subr.mxu0 0.0
    %6849 = vmatpush1.msra.mxu0 0.0
    %6850 = vmatprep.subr.mxu0 0.0
    %6851 = vmatpush1.msra.mxu0 0.0
    %6852 = vmatprep.subr.mxu0 0.0
    %6853 = vmatpush1.msra.mxu0 0.0
    %6854 = vmatprep.subr.mxu0 0.0
    %6855 = vmatpush1.msra.mxu0 0.0
    %6856 = vmatprep.subr.mxu0 0.0
    %6857 = vmatpush1.msra.mxu0 0.0
    %6858 = vmatprep.subr.mxu0 0.0
    %6859 = vmatpush1.msra.mxu0 0.0
    %6860 = vmatprep.subr.mxu0 0.0
    %6861 = vmatpush1.msra.mxu0 0.0
    %6862 = vmatprep.subr.mxu0 0.0
    %6863 = vmatpush1.msra.mxu0 0.0
    %6864 = vmatprep.subr.mxu0 0.0
    %6865 = vmatpush1.msra.mxu0 0.0
    %6866 = vmatprep.subr.mxu0 0.0
    %6867 = vmatpush1.msra.mxu0 0.0
    %6868 = vmatprep.subr.mxu0 0.0
    %6869 = vmatpush1.msra.mxu0 0.0
    %6870 = vmatprep.subr.mxu0 0.0
    %6871 = vmatpush1.msra.mxu0 0.0
    %6872 = vmatprep.subr.mxu0 0.0
    %6873 = vmatpush1.msra.mxu0 0.0
    %6874 = vmatprep.subr.mxu0 0.0
    %6875 = vmatpush1.msra.mxu0 0.0
    %6876 = vmatprep.subr.mxu0 0.0
    %6877 = vmatpush1.msra.mxu0 0.0
    %6878 = vmatprep.subr.mxu0 0.0
    %6879 = vmatpush1.msra.mxu0 0.0
    %6880 = vmatprep.subr.mxu0 0.0
    %6881 = vmatpush1.msra.mxu0 0.0
    %6882 = vmatprep.subr.mxu0 0.0
    %6883 = vmatpush1.msra.mxu0 0.0
    %6884 = vmatprep.subr.mxu0 0.0
    %6885 = vmatpush1.msra.mxu0 0.0
    %6886 = vmatprep.subr.mxu0 0.0
    %6887 = vmatpush1.msra.mxu0 0.0
    %6888 = vmatprep.subr.mxu0 0.0
    %6889 = vmatpush1.msra.mxu0 0.0
    %6890 = vmatprep.subr.mxu0 0.0
    %6891 = vmatpush1.msra.mxu0 0.0
    %6892 = vmatprep.subr.mxu0 0.0
    %6893 = vmatpush1.msra.mxu0 0.0
    %6894 = vmatprep.subr.mxu0 0.0
    %6895 = vmatpush1.msra.mxu0 0.0
    %6896 = vmatprep.subr.mxu0 0.0
    %6897 = vmatpush1.msra.mxu0 0.0
    %6898 = vmatprep.subr.mxu0 0.0
    %6899 = vmatpush1.msra.mxu0 0.0
    %6900 = vmatprep.subr.mxu0 0.0
    %6901 = vmatpush1.msra.mxu0 0.0
    %6902 = vmatprep.mubr.f32.mxu0 0.0
    %6903 = vmatmul.mubr.f32.gmra.mrb[0].mxu0 %v6765
    %v6904 = vpop.f32.mrb[0].mxu0
    %v6905 = vadd.f32 0.0, %v6904
    %v6906 = vpop.f32.mrb[0].mxu0
    %v6907 = vadd.f32 0.0, %v6906
    %6908 = vdwg.mxu0
    %6909 = vmatprep.subr.mxu0 %v159
    %6910 = vmatpush1.msra.mxu0 %v158
    %6911 = vmatprep.subr.mxu0 %v558
    %6912 = vmatpush1.msra.mxu0 %v555
    %6913 = vmatprep.subr.mxu0 0.0
    %6914 = vmatpush1.msra.mxu0 0.0
    %6915 = vmatprep.subr.mxu0 0.0
    %6916 = vmatpush1.msra.mxu0 0.0
    %6917 = vmatprep.subr.mxu0 0.0
    %6918 = vmatpush1.msra.mxu0 0.0
    %6919 = vmatprep.subr.mxu0 0.0
    %6920 = vmatpush1.msra.mxu0 0.0
    %6921 = vmatprep.subr.mxu0 0.0
    %6922 = vmatpush1.msra.mxu0 0.0
    %6923 = vmatprep.subr.mxu0 0.0
    %6924 = vmatpush1.msra.mxu0 0.0
    %6925 = vmatprep.subr.mxu0 0.0
    %6926 = vmatpush1.msra.mxu0 0.0
    %6927 = vmatprep.subr.mxu0 0.0
    %6928 = vmatpush1.msra.mxu0 0.0
    %6929 = vmatprep.subr.mxu0 0.0
    %6930 = vmatpush1.msra.mxu0 0.0
    %6931 = vmatprep.subr.mxu0 0.0
    %6932 = vmatpush1.msra.mxu0 0.0
    %6933 = vmatprep.subr.mxu0 0.0
    %6934 = vmatpush1.msra.mxu0 0.0
    %6935 = vmatprep.subr.mxu0 0.0
    %6936 = vmatpush1.msra.mxu0 0.0
    %6937 = vmatprep.subr.mxu0 0.0
    %6938 = vmatpush1.msra.mxu0 0.0
    %6939 = vmatprep.subr.mxu0 0.0
    %6940 = vmatpush1.msra.mxu0 0.0
    %6941 = vmatprep.subr.mxu0 0.0
    %6942 = vmatpush1.msra.mxu0 0.0
    %6943 = vmatprep.subr.mxu0 0.0
    %6944 = vmatpush1.msra.mxu0 0.0
    %6945 = vmatprep.subr.mxu0 0.0
    %6946 = vmatpush1.msra.mxu0 0.0
    %6947 = vmatprep.subr.mxu0 0.0
    %6948 = vmatpush1.msra.mxu0 0.0
    %6949 = vmatprep.subr.mxu0 0.0
    %6950 = vmatpush1.msra.mxu0 0.0
    %6951 = vmatprep.subr.mxu0 0.0
    %6952 = vmatpush1.msra.mxu0 0.0
    %6953 = vmatprep.subr.mxu0 0.0
    %6954 = vmatpush1.msra.mxu0 0.0
    %6955 = vmatprep.subr.mxu0 0.0
    %6956 = vmatpush1.msra.mxu0 0.0
    %6957 = vmatprep.subr.mxu0 0.0
    %6958 = vmatpush1.msra.mxu0 0.0
    %6959 = vmatprep.subr.mxu0 0.0
    %6960 = vmatpush1.msra.mxu0 0.0
    %6961 = vmatprep.subr.mxu0 0.0
    %6962 = vmatpush1.msra.mxu0 0.0
    %6963 = vmatprep.subr.mxu0 0.0
    %6964 = vmatpush1.msra.mxu0 0.0
    %6965 = vmatprep.subr.mxu0 0.0
    %6966 = vmatpush1.msra.mxu0 0.0
    %6967 = vmatprep.subr.mxu0 0.0
    %6968 = vmatpush1.msra.mxu0 0.0
    %6969 = vmatprep.subr.mxu0 0.0
    %6970 = vmatpush1.msra.mxu0 0.0
    %6971 = vmatprep.subr.mxu0 0.0
    %6972 = vmatpush1.msra.mxu0 0.0
    %6973 = vmatprep.mubr.f32.mxu0 0.0
    %6974 = vmatmul.mubr.f32.gmra.mrb[0].mxu0 %v6765
    %v6975 = vpop.f32.mrb[0].mxu0
    %v6976 = vadd.f32 0.0, %v6975
    %v6977 = vpop.f32.mrb[0].mxu0
    %v6978 = vadd.f32 0.0, %v6977
    %6979 = vdwg.mxu0
    %6980 = vmatprep.subr.mxu0 %v161
    %6981 = vmatpush1.msra.mxu0 %v160
    %6982 = vmatprep.subr.mxu0 %v564
    %6983 = vmatpush1.msra.mxu0 %v561
    %6984 = vmatprep.subr.mxu0 0.0
    %6985 = vmatpush1.msra.mxu0 0.0
    %6986 = vmatprep.subr.mxu0 0.0
    %6987 = vmatpush1.msra.mxu0 0.0
    %6988 = vmatprep.subr.mxu0 0.0
    %6989 = vmatpush1.msra.mxu0 0.0
    %6990 = vmatprep.subr.mxu0 0.0
    %6991 = vmatpush1.msra.mxu0 0.0
    %6992 = vmatprep.subr.mxu0 0.0
    %6993 = vmatpush1.msra.mxu0 0.0
    %6994 = vmatprep.subr.mxu0 0.0
    %6995 = vmatpush1.msra.mxu0 0.0
    %6996 = vmatprep.subr.mxu0 0.0
    %6997 = vmatpush1.msra.mxu0 0.0
    %6998 = vmatprep.subr.mxu0 0.0
    %6999 = vmatpush1.msra.mxu0 0.0
    %7000 = vmatprep.subr.mxu0 0.0
    %7001 = vmatpush1.msra.mxu0 0.0
    %7002 = vmatprep.subr.mxu0 0.0
    %7003 = vmatpush1.msra.mxu0 0.0
    %7004 = vmatprep.subr.mxu0 0.0
    %7005 = vmatpush1.msra.mxu0 0.0
    %7006 = vmatprep.subr.mxu0 0.0
    %7007 = vmatpush1.msra.mxu0 0.0
    %7008 = vmatprep.subr.mxu0 0.0
    %7009 = vmatpush1.msra.mxu0 0.0
    %7010 = vmatprep.subr.mxu0 0.0
    %7011 = vmatpush1.msra.mxu0 0.0
    %7012 = vmatprep.subr.mxu0 0.0
    %7013 = vmatpush1.msra.mxu0 0.0
    %7014 = vmatprep.subr.mxu0 0.0
    %7015 = vmatpush1.msra.mxu0 0.0
    %7016 = vmatprep.subr.mxu0 0.0
    %7017 = vmatpush1.msra.mxu0 0.0
    %7018 = vmatprep.subr.mxu0 0.0
    %7019 = vmatpush1.msra.mxu0 0.0
    %7020 = vmatprep.subr.mxu0 0.0
    %7021 = vmatpush1.msra.mxu0 0.0
    %7022 = vmatprep.subr.mxu0 0.0
    %7023 = vmatpush1.msra.mxu0 0.0
    %7024 = vmatprep.subr.mxu0 0.0
    %7025 = vmatpush1.msra.mxu0 0.0
    %7026 = vmatprep.subr.mxu0 0.0
    %7027 = vmatpush1.msra.mxu0 0.0
    %7028 = vmatprep.subr.mxu0 0.0
    %7029 = vmatpush1.msra.mxu0 0.0
    %7030 = vmatprep.subr.mxu0 0.0
    %7031 = vmatpush1.msra.mxu0 0.0
    %7032 = vmatprep.subr.mxu0 0.0
    %7033 = vmatpush1.msra.mxu0 0.0
    %7034 = vmatprep.subr.mxu0 0.0
    %7035 = vmatpush1.msra.mxu0 0.0
    %7036 = vmatprep.subr.mxu0 0.0
    %7037 = vmatpush1.msra.mxu0 0.0
    %7038 = vmatprep.subr.mxu0 0.0
    %7039 = vmatpush1.msra.mxu0 0.0
    %7040 = vmatprep.subr.mxu0 0.0
    %7041 = vmatpush1.msra.mxu0 0.0
    %7042 = vmatprep.subr.mxu0 0.0
    %7043 = vmatpush1.msra.mxu0 0.0
    %7044 = vmatprep.mubr.f32.mxu0 0.0
    %7045 = vmatmul.mubr.f32.gmra.mrb[0].mxu0 %v6765
    %v7046 = vpop.f32.mrb[0].mxu0
    %v7047 = vadd.f32 0.0, %v7046
    %v7048 = vpop.f32.mrb[0].mxu0
    %v7049 = vadd.f32 0.0, %v7048
    %7050 = vdwg.mxu0
    %vm7051 = vcmp.ge.f32.partialorder %v6834, 0.0
    %vm7052 = vcmp.ge.f32.partialorder %v6836, 0.0
    %vm7053 = vcmp.ge.f32.partialorder %v6905, 0.0
    %vm7054 = vcmp.ge.f32.partialorder %v6907, 0.0
    %vm7055 = vcmp.ge.f32.partialorder %v6976, 0.0
    %vm7056 = vcmp.ge.f32.partialorder %v6978, 0.0
    %vm7057 = vcmp.ge.f32.partialorder %v7047, 0.0
    %vm7058 = vcmp.ge.f32.partialorder %v7049, 0.0
    %v7059 = vsel %vm7051, 0.007, -0.007
    %v7060 = vsel %vm7052, 0.007, -0.007
    %v7061 = vsel %vm7053, 0.007, -0.007
    %v7062 = vsel %vm7054, 0.007, -0.007
    %v7063 = vsel %vm7055, 0.007, -0.007
    %v7064 = vsel %vm7056, 0.007, -0.007
    %v7065 = vsel %vm7057, 0.007, -0.007
    %v7066 = vsel %vm7058, 0.007, -0.007
    %v7075 = vcombine.low %v7059, %v7060
    %v7076 = vcombine.low %v7061, %v7062
    %v7078 = vunpack.c.l.s4 1983009808
    %v7079 = vunpack.c.0.s8 %v7078
    %v7080 = vlaneseq
    %v7081 = vshrl.u32 %v7080, 7
    %v7082 = vsub.s32 %v7079, %v7081
    %v7083 = vrot.slane %v7075, %v7082
    %v7085 = vunpack.c.l.s4 1983009808
    %v7086 = vunpack.c.0.s8 %v7085
    %v7087 = vlaneseq
    %v7088 = vshrl.u32 %v7087, 7
    %v7089 = vsub.s32 %v7086, %v7088
    %v7090 = vrot.slane %v7076, %v7089
    %v7091 = vcombine.low %v7083, %v7090
    %v7092 = vcombine.low %v7063, %v7064
    %v7093 = vcombine.low %v7065, %v7066
    %v7095 = vunpack.c.l.s4 1983009808
    %v7096 = vunpack.c.0.s8 %v7095
    %v7097 = vlaneseq
    %v7098 = vshrl.u32 %v7097, 7
    %v7099 = vsub.s32 %v7096, %v7098
    %v7100 = vrot.slane %v7092, %v7099
    %v7102 = vunpack.c.l.s4 1983009808
    %v7103 = vunpack.c.0.s8 %v7102
    %v7104 = vlaneseq
    %v7105 = vshrl.u32 %v7104, 7
    %v7106 = vsub.s32 %v7103, %v7105
    %v7107 = vrot.slane %v7093, %v7106
    %v7108 = vcombine.low %v7100, %v7107
    %v7111 = vadd.f32 %v6426, %v7091
    %v7112 = vadd.f32 %v6427, %v7108
    %v7113 = vmax.f32 %v7111, %v188
    %v7114 = vmax.f32 %v7112, %v189
    %v7115 = vmin.f32 %v7113, %v192
    %v7116 = vmin.f32 %v7114, %v193
    %v7119 = vcombine.high %v7115, %v7115
    %v7121 = vunpack.c.l.s4 1983009808
    %v7122 = vunpack.c.0.s8 %v7121
    %v7123 = vlaneseq
    %v7124 = vshrl.u32 %v7123, 7
    %v7125 = vsub.s32 %v7122, %v7124
    %v7126 = vrot.slane %v7115, %v7125
    %v7128 = vunpack.c.l.s4 1983009808
    %v7129 = vunpack.c.0.s8 %v7128
    %v7130 = vlaneseq
    %v7131 = vshrl.u32 %v7130, 7
    %v7132 = vsub.s32 %v7129, %v7131
    %v7133 = vrot.slane %v7119, %v7132
    %v7134 = vcombine.high %v7126, %v7126
    %v7135 = vcombine.high %v7133, %v7133
    %v7136 = vcombine.high %v7116, %v7116
    %v7138 = vunpack.c.l.s4 1983009808
    %v7139 = vunpack.c.0.s8 %v7138
    %v7140 = vlaneseq
    %v7141 = vshrl.u32 %v7140, 7
    %v7142 = vsub.s32 %v7139, %v7141
    %v7143 = vrot.slane %v7116, %v7142
    %v7145 = vunpack.c.l.s4 1983009808
    %v7146 = vunpack.c.0.s8 %v7145
    %v7147 = vlaneseq
    %v7148 = vshrl.u32 %v7147, 7
    %v7149 = vsub.s32 %v7146, %v7148
    %v7150 = vrot.slane %v7136, %v7149
    %v7151 = vcombine.high %v7143, %v7143
    %v7152 = vcombine.high %v7150, %v7150
    %7161 = vmatprep.subr.mxu0 0.0
    %7162 = vmatpush1.msra.mxu0 %v26
    %7163 = vmatprep.subr.mxu0 0.0
    %7164 = vmatpush1.msra.mxu0 %v27
    %7165 = vmatprep.subr.mxu0 0.0
    %7166 = vmatpush1.msra.mxu0 %v28
    %7167 = vmatprep.subr.mxu0 0.0
    %7168 = vmatpush1.msra.mxu0 %v29
    %7169 = vmatprep.subr.mxu0 0.0
    %7170 = vmatpush1.msra.mxu0 %v30
    %7171 = vmatprep.subr.mxu0 0.0
    %7172 = vmatpush1.msra.mxu0 %v31
    %7173 = vmatprep.subr.mxu0 0.0
    %7174 = vmatpush1.msra.mxu0 %v32
    %7175 = vmatprep.subr.mxu0 0.0
    %7176 = vmatpush1.msra.mxu0 %v33
    %7177 = vmatprep.subr.mxu0 0.0
    %7178 = vmatpush1.msra.mxu0 %v34
    %7179 = vmatprep.subr.mxu0 0.0
    %7180 = vmatpush1.msra.mxu0 %v35
    %7181 = vmatprep.subr.mxu0 0.0
    %7182 = vmatpush1.msra.mxu0 %v36
    %7183 = vmatprep.subr.mxu0 0.0
    %7184 = vmatpush1.msra.mxu0 %v37
    %7185 = vmatprep.subr.mxu0 0.0
    %7186 = vmatpush1.msra.mxu0 %v38
    %7187 = vmatprep.subr.mxu0 0.0
    %7188 = vmatpush1.msra.mxu0 %v39
    %7189 = vmatprep.subr.mxu0 0.0
    %7190 = vmatpush1.msra.mxu0 %v40
    %7191 = vmatprep.subr.mxu0 0.0
    %7192 = vmatpush1.msra.mxu0 %v41
    %7193 = vmatprep.subr.mxu0 0.0
    %7194 = vmatpush1.msra.mxu0 %v42
    %7195 = vmatprep.subr.mxu0 0.0
    %7196 = vmatpush1.msra.mxu0 %v43
    %7197 = vmatprep.subr.mxu0 0.0
    %7198 = vmatpush1.msra.mxu0 %v44
    %7199 = vmatprep.subr.mxu0 0.0
    %7200 = vmatpush1.msra.mxu0 %v45
    %7201 = vmatprep.subr.mxu0 0.0
    %7202 = vmatpush1.msra.mxu0 %v46
    %7203 = vmatprep.subr.mxu0 0.0
    %7204 = vmatpush1.msra.mxu0 %v47
    %7205 = vmatprep.subr.mxu0 0.0
    %7206 = vmatpush1.msra.mxu0 %v48
    %7207 = vmatprep.subr.mxu0 0.0
    %7208 = vmatpush1.msra.mxu0 %v49
    %7209 = vmatprep.subr.mxu0 0.0
    %7210 = vmatpush1.msra.mxu0 %v50
    %7211 = vmatprep.subr.mxu0 0.0
    %7212 = vmatpush1.msra.mxu0 %v51
    %7213 = vmatprep.subr.mxu0 0.0
    %7214 = vmatpush1.msra.mxu0 %v52
    %7215 = vmatprep.subr.mxu0 0.0
    %7216 = vmatpush1.msra.mxu0 %v53
    %7217 = vmatprep.subr.mxu0 0.0
    %7218 = vmatpush1.msra.mxu0 %v54
    %7219 = vmatprep.subr.mxu0 0.0
    %7220 = vmatpush1.msra.mxu0 %v55
    %7221 = vmatprep.subr.mxu0 0.0
    %7222 = vmatpush1.msra.mxu0 %v56
    %7223 = vmatprep.subr.mxu0 0.0
    %7224 = vmatpush1.msra.mxu0 %v57
    %7225 = vmatprep.mubr.f32.mxu0 %v7134
    %7226 = vmatmul.mubr.f32.gmra.mrb[0].mxu0 %v7126
    %v7227 = vpop.f32.mrb[0].mxu0
    %v7228 = vadd.f32 %v184, %v7227
    %v7229 = vpop.f32.mrb[0].mxu0
    %7230 = vdwg.mxu0
    %7231 = vmatprep.subr.mxu0 0.0
    %7232 = vmatpush1.msra.mxu0 %v58
    %7233 = vmatprep.subr.mxu0 0.0
    %7234 = vmatpush1.msra.mxu0 %v59
    %7235 = vmatprep.subr.mxu0 0.0
    %7236 = vmatpush1.msra.mxu0 %v60
    %7237 = vmatprep.subr.mxu0 0.0
    %7238 = vmatpush1.msra.mxu0 %v61
    %7239 = vmatprep.subr.mxu0 0.0
    %7240 = vmatpush1.msra.mxu0 %v62
    %7241 = vmatprep.subr.mxu0 0.0
    %7242 = vmatpush1.msra.mxu0 %v63
    %7243 = vmatprep.subr.mxu0 0.0
    %7244 = vmatpush1.msra.mxu0 %v64
    %7245 = vmatprep.subr.mxu0 0.0
    %7246 = vmatpush1.msra.mxu0 %v65
    %7247 = vmatprep.subr.mxu0 0.0
    %7248 = vmatpush1.msra.mxu0 %v66
    %7249 = vmatprep.subr.mxu0 0.0
    %7250 = vmatpush1.msra.mxu0 %v67
    %7251 = vmatprep.subr.mxu0 0.0
    %7252 = vmatpush1.msra.mxu0 %v68
    %7253 = vmatprep.subr.mxu0 0.0
    %7254 = vmatpush1.msra.mxu0 %v69
    %7255 = vmatprep.subr.mxu0 0.0
    %7256 = vmatpush1.msra.mxu0 %v70
    %7257 = vmatprep.subr.mxu0 0.0
    %7258 = vmatpush1.msra.mxu0 %v71
    %7259 = vmatprep.subr.mxu0 0.0
    %7260 = vmatpush1.msra.mxu0 %v72
    %7261 = vmatprep.subr.mxu0 0.0
    %7262 = vmatpush1.msra.mxu0 %v73
    %7263 = vmatprep.subr.mxu0 0.0
    %7264 = vmatpush1.msra.mxu0 %v74
    %7265 = vmatprep.subr.mxu0 0.0
    %7266 = vmatpush1.msra.mxu0 %v75
    %7267 = vmatprep.subr.mxu0 0.0
    %7268 = vmatpush1.msra.mxu0 %v76
    %7269 = vmatprep.subr.mxu0 0.0
    %7270 = vmatpush1.msra.mxu0 %v77
    %7271 = vmatprep.subr.mxu0 0.0
    %7272 = vmatpush1.msra.mxu0 %v78
    %7273 = vmatprep.subr.mxu0 0.0
    %7274 = vmatpush1.msra.mxu0 %v79
    %7275 = vmatprep.subr.mxu0 0.0
    %7276 = vmatpush1.msra.mxu0 %v80
    %7277 = vmatprep.subr.mxu0 0.0
    %7278 = vmatpush1.msra.mxu0 %v81
    %7279 = vmatprep.subr.mxu0 0.0
    %7280 = vmatpush1.msra.mxu0 %v82
    %7281 = vmatprep.subr.mxu0 0.0
    %7282 = vmatpush1.msra.mxu0 %v83
    %7283 = vmatprep.subr.mxu0 0.0
    %7284 = vmatpush1.msra.mxu0 %v84
    %7285 = vmatprep.subr.mxu0 0.0
    %7286 = vmatpush1.msra.mxu0 %v85
    %7287 = vmatprep.subr.mxu0 0.0
    %7288 = vmatpush1.msra.mxu0 %v86
    %7289 = vmatprep.subr.mxu0 0.0
    %7290 = vmatpush1.msra.mxu0 %v87
    %7291 = vmatprep.subr.mxu0 0.0
    %7292 = vmatpush1.msra.mxu0 %v88
    %7293 = vmatprep.subr.mxu0 0.0
    %7294 = vmatpush1.msra.mxu0 %v89
    %7295 = vmatprep.mubr.f32.mxu0 %v7135
    %7296 = vmatmul.mubr.f32.gmra.mrb[0].mxu0 %v7133
    %v7297 = vpop.f32.mrb[0].mxu0
    %v7298 = vadd.f32 %v7228, %v7297
    %v7299 = vpop.f32.mrb[0].mxu0
    %7300 = vdwg.mxu0
    %7301 = vmatprep.subr.mxu0 0.0
    %7302 = vmatpush1.msra.mxu0 %v90
    %7303 = vmatprep.subr.mxu0 0.0
    %7304 = vmatpush1.msra.mxu0 %v91
    %7305 = vmatprep.subr.mxu0 0.0
    %7306 = vmatpush1.msra.mxu0 %v92
    %7307 = vmatprep.subr.mxu0 0.0
    %7308 = vmatpush1.msra.mxu0 %v93
    %7309 = vmatprep.subr.mxu0 0.0
    %7310 = vmatpush1.msra.mxu0 %v94
    %7311 = vmatprep.subr.mxu0 0.0
    %7312 = vmatpush1.msra.mxu0 %v95
    %7313 = vmatprep.subr.mxu0 0.0
    %7314 = vmatpush1.msra.mxu0 %v96
    %7315 = vmatprep.subr.mxu0 0.0
    %7316 = vmatpush1.msra.mxu0 %v97
    %7317 = vmatprep.subr.mxu0 0.0
    %7318 = vmatpush1.msra.mxu0 %v98
    %7319 = vmatprep.subr.mxu0 0.0
    %7320 = vmatpush1.msra.mxu0 %v99
    %7321 = vmatprep.subr.mxu0 0.0
    %7322 = vmatpush1.msra.mxu0 %v100
    %7323 = vmatprep.subr.mxu0 0.0
    %7324 = vmatpush1.msra.mxu0 %v101
    %7325 = vmatprep.subr.mxu0 0.0
    %7326 = vmatpush1.msra.mxu0 %v102
    %7327 = vmatprep.subr.mxu0 0.0
    %7328 = vmatpush1.msra.mxu0 %v103
    %7329 = vmatprep.subr.mxu0 0.0
    %7330 = vmatpush1.msra.mxu0 %v104
    %7331 = vmatprep.subr.mxu0 0.0
    %7332 = vmatpush1.msra.mxu0 %v105
    %7333 = vmatprep.subr.mxu0 0.0
    %7334 = vmatpush1.msra.mxu0 %v106
    %7335 = vmatprep.subr.mxu0 0.0
    %7336 = vmatpush1.msra.mxu0 %v107
    %7337 = vmatprep.subr.mxu0 0.0
    %7338 = vmatpush1.msra.mxu0 %v108
    %7339 = vmatprep.subr.mxu0 0.0
    %7340 = vmatpush1.msra.mxu0 %v109
    %7341 = vmatprep.subr.mxu0 0.0
    %7342 = vmatpush1.msra.mxu0 %v110
    %7343 = vmatprep.subr.mxu0 0.0
    %7344 = vmatpush1.msra.mxu0 %v111
    %7345 = vmatprep.subr.mxu0 0.0
    %7346 = vmatpush1.msra.mxu0 %v112
    %7347 = vmatprep.subr.mxu0 0.0
    %7348 = vmatpush1.msra.mxu0 %v113
    %7349 = vmatprep.subr.mxu0 0.0
    %7350 = vmatpush1.msra.mxu0 %v114
    %7351 = vmatprep.subr.mxu0 0.0
    %7352 = vmatpush1.msra.mxu0 %v115
    %7353 = vmatprep.subr.mxu0 0.0
    %7354 = vmatpush1.msra.mxu0 %v116
    %7355 = vmatprep.subr.mxu0 0.0
    %7356 = vmatpush1.msra.mxu0 %v117
    %7357 = vmatprep.subr.mxu0 0.0
    %7358 = vmatpush1.msra.mxu0 %v118
    %7359 = vmatprep.subr.mxu0 0.0
    %7360 = vmatpush1.msra.mxu0 %v119
    %7361 = vmatprep.subr.mxu0 0.0
    %7362 = vmatpush1.msra.mxu0 %v120
    %7363 = vmatprep.subr.mxu0 0.0
    %7364 = vmatpush1.msra.mxu0 %v121
    %7365 = vmatprep.mubr.f32.mxu0 %v7151
    %7366 = vmatmul.mubr.f32.gmra.mrb[0].mxu0 %v7143
    %v7367 = vpop.f32.mrb[0].mxu0
    %v7368 = vadd.f32 %v7298, %v7367
    %v7369 = vpop.f32.mrb[0].mxu0
    %7370 = vdwg.mxu0
    %7371 = vmatprep.subr.mxu0 0.0
    %7372 = vmatpush1.msra.mxu0 %v122
    %7373 = vmatprep.subr.mxu0 0.0
    %7374 = vmatpush1.msra.mxu0 %v123
    %7375 = vmatprep.subr.mxu0 0.0
    %7376 = vmatpush1.msra.mxu0 %v124
    %7377 = vmatprep.subr.mxu0 0.0
    %7378 = vmatpush1.msra.mxu0 %v125
    %7379 = vmatprep.subr.mxu0 0.0
    %7380 = vmatpush1.msra.mxu0 %v126
    %7381 = vmatprep.subr.mxu0 0.0
    %7382 = vmatpush1.msra.mxu0 %v127
    %7383 = vmatprep.subr.mxu0 0.0
    %7384 = vmatpush1.msra.mxu0 %v128
    %7385 = vmatprep.subr.mxu0 0.0
    %7386 = vmatpush1.msra.mxu0 %v129
    %7387 = vmatprep.subr.mxu0 0.0
    %7388 = vmatpush1.msra.mxu0 %v130
    %7389 = vmatprep.subr.mxu0 0.0
    %7390 = vmatpush1.msra.mxu0 %v131
    %7391 = vmatprep.subr.mxu0 0.0
    %7392 = vmatpush1.msra.mxu0 %v132
    %7393 = vmatprep.subr.mxu0 0.0
    %7394 = vmatpush1.msra.mxu0 %v133
    %7395 = vmatprep.subr.mxu0 0.0
    %7396 = vmatpush1.msra.mxu0 %v134
    %7397 = vmatprep.subr.mxu0 0.0
    %7398 = vmatpush1.msra.mxu0 %v135
    %7399 = vmatprep.subr.mxu0 0.0
    %7400 = vmatpush1.msra.mxu0 %v136
    %7401 = vmatprep.subr.mxu0 0.0
    %7402 = vmatpush1.msra.mxu0 %v137
    %7403 = vmatprep.subr.mxu0 0.0
    %7404 = vmatpush1.msra.mxu0 %v138
    %7405 = vmatprep.subr.mxu0 0.0
    %7406 = vmatpush1.msra.mxu0 %v139
    %7407 = vmatprep.subr.mxu0 0.0
    %7408 = vmatpush1.msra.mxu0 %v140
    %7409 = vmatprep.subr.mxu0 0.0
    %7410 = vmatpush1.msra.mxu0 %v141
    %7411 = vmatprep.subr.mxu0 0.0
    %7412 = vmatpush1.msra.mxu0 %v142
    %7413 = vmatprep.subr.mxu0 0.0
    %7414 = vmatpush1.msra.mxu0 %v143
    %7415 = vmatprep.subr.mxu0 0.0
    %7416 = vmatpush1.msra.mxu0 %v144
    %7417 = vmatprep.subr.mxu0 0.0
    %7418 = vmatpush1.msra.mxu0 %v145
    %7419 = vmatprep.subr.mxu0 0.0
    %7420 = vmatpush1.msra.mxu0 %v146
    %7421 = vmatprep.subr.mxu0 0.0
    %7422 = vmatpush1.msra.mxu0 %v147
    %7423 = vmatprep.subr.mxu0 0.0
    %7424 = vmatpush1.msra.mxu0 %v148
    %7425 = vmatprep.subr.mxu0 0.0
    %7426 = vmatpush1.msra.mxu0 %v149
    %7427 = vmatprep.subr.mxu0 0.0
    %7428 = vmatpush1.msra.mxu0 %v150
    %7429 = vmatprep.subr.mxu0 0.0
    %7430 = vmatpush1.msra.mxu0 %v151
    %7431 = vmatprep.subr.mxu0 0.0
    %7432 = vmatpush1.msra.mxu0 %v152
    %7433 = vmatprep.subr.mxu0 0.0
    %7434 = vmatpush1.msra.mxu0 %v153
    %7435 = vmatprep.mubr.f32.mxu0 %v7152
    %7436 = vmatmul.mubr.f32.gmra.mrb[0].mxu0 %v7150
    %v7437 = vpop.f32.mrb[0].mxu0
    %v7438 = vadd.f32 %v7368, %v7437
    %v7439 = vpop.f32.mrb[0].mxu0
    %7440 = vdwg.mxu0
    %v7441 = vsel %vm524, %v7438, -inf
    %7442 = vmax.xlane.f32.xlu0 %v7441
    %v7443 = vpop.xlane.xlu0 %7442
    %v7444 = vsub.f32 %v7438, %v7443
    %v7445 = vmul.f32 %v7444, 1.442695
    %v7446 = vpow.pop %v7445
    %v7447 = vsel %vm524, %v7446, 0.0
    %7448 = vadd.xlane.f32.xlu0 %v7447
    %v7449 = vpop.xlane.xlu0 %7448
    %v7450 = vlog2.pop %v7449
    %v7451 = vmul.f32 %v7450, 0.6931472
    %v7452 = vsub.f32 %v7444, %v7451
    %v7453 = vmul.f32 %v178, %v7452
    %v7454 = vsel %vm524, %v7453, 0.0
    %7455 = vadd.xlane.f32.xlu0 %v7454
    %v7456 = vpop.xlane.xlu0 %7455
    %v7457 = vsub.f32 0.0, %v7456
    %7458 = vst [vmem:[#allocation2] sm:$0x3] %v7457
    // Predicated region
    $region26: #{tpu_custom_call.1} parent=1 // pred_check
      _
    $region27: #{tpu_custom_call.1} parent=1 // pred_check_branch
      %7460 = sbr.rel (0) target = $region29
    $region28: #{tpu_custom_call.1} parent=1 // pred_region
      %s7462 = ssub.s32 32, 32
      %7463 = vsyncadd [#allocation3], %s7462
      %s7465 = sshll.u32 [#allocation2], 4
      %s7466 = int_to_ptr.vmem [resolvable:$true] %s7465
      %7468 = dma.vmem_to_hbm [thread:$0]  %s7466, 32, %s6, [#allocation3]
    $region29: #{tpu_custom_call.1} parent=1 // pred_fallthru
      _
    // Predicated region
    $region30: #{tpu_custom_call.1} parent=1 // pred_check
      _
    $region31: #{tpu_custom_call.1} parent=1 // pred_check_branch
      %7470 = sbr.rel (0) target = $region33
    $region32: #{tpu_custom_call.1} parent=1 // pred_region
      %7471 = dma.done [#allocation3], 32
    $region33: #{tpu_custom_call.1} parent=1 // pred_fallthru
      _
    %7472 = vsyncpa [#allocation3], 1

</llo_original>
